<compile_context>
chip_gen: v6e
topology: v6e:2x2x1
jax: 0.10.0
libtpu: 0.0.40
codegen_flags: <defaults>
</compile_context>

<pallas_src>
import functools

import jax
import jax.numpy as jnp
from jax.experimental import pallas as pl
from jax.experimental.pallas import tpu as pltpu

IN_FEATURES = 32 * 32 * 3   # 3072
OUT_FEATURES = 10
N_PAD = 128                 # lane-padded output width (10 real columns)
TM = 256                    # rows of x per grid step (sublane multiple)


def _linear_relu_kernel(x_ref, w_ref, b_ref, o_ref):
    # x_ref: (TM, K) f32   w_ref: (K, N_PAD) bf16   b_ref: (1, N_PAD) f32
    # o_ref: (TM, N_PAD) f32
    x_bf16 = x_ref[...].astype(jnp.bfloat16)          # native bf16 MXU path
    acc = jnp.dot(x_bf16, w_ref[...], preferred_element_type=jnp.float32)
    acc = acc + b_ref[...]
    o_ref[...] = jnp.maximum(acc, 0.0).astype(o_ref.dtype)


def prepare_params(weight, bias):
    """One-time parameter prep (hoisted out of the forward hot path).

    weight: (10, 3072) f32, bias: (10,) f32
    Returns w_p: (3072, 128) bf16, b_p: (1, 128) f32.
    """
    w_p = jnp.zeros((IN_FEATURES, N_PAD), jnp.bfloat16)
    w_p = w_p.at[:, :OUT_FEATURES].set(weight.T.astype(jnp.bfloat16))
    b_p = jnp.zeros((1, N_PAD), jnp.float32)
    b_p = b_p.at[0, :OUT_FEATURES].set(bias)
    return w_p, b_p


@functools.partial(jax.jit, static_argnames=("tm",))
def lazynet_forward(x, w_p, b_p, *, tm=TM):
    """x: (N, 3, 32, 32) f32 (NCHW).  Returns (N, 10) f32:
       relu(x.view(-1, 3072) @ W.T + b)."""
    x_flat = x.reshape(-1, IN_FEATURES)        # matches torch .view(-1, 3072)
    m = x_flat.shape[0]
    grid_m = pl.cdiv(m, tm)

    cost = pl.CostEstimate(
        flops=2 * m * IN_FEATURES * N_PAD,
        transcendentals=0,
        bytes_accessed=(x_flat.size * 4 + w_p.size * 2
                        + b_p.size * 4 + m * N_PAD * 4),
    )

    out_p = pl.pallas_call(
        _linear_relu_kernel,
        out_shape=jax.ShapeDtypeStruct((m, N_PAD), jnp.float32),
        grid_spec=pltpu.PrefetchScalarGridSpec(
            num_scalar_prefetch=0,
            grid=(grid_m,),
            in_specs=[
                pl.BlockSpec((tm, IN_FEATURES), lambda i: (i, 0)),   # x tile
                pl.BlockSpec((IN_FEATURES, N_PAD), lambda i: (0, 0)),  # weight (resident)
                pl.BlockSpec((1, N_PAD), lambda i: (0, 0)),            # bias (resident)
            ],
            out_specs=pl.BlockSpec((tm, N_PAD), lambda i: (i, 0)),
        ),
        compiler_params=pltpu.CompilerParams(
            dimension_semantics=("parallel",),      # shards M across v7x's 2 TCs
            vmem_limit_bytes=32 * 1024 * 1024,      # explicit, fits v5e/v6e/v7x
        ),
        cost_estimate=cost,
    )(x_flat, w_p, b_p)

    return out_p[:, :OUT_FEATURES]


if __name__ == "__main__":
    key = jax.random.PRNGKey(0)
    kx, kw, kb = jax.random.split(key, 3)

    # Small deterministic example: batch=2, CIFAR-like (3, 32, 32) NCHW input.
    x = jax.random.normal(kx, (2, 3, 32, 32), jnp.float32)

    # Deterministic init mimicking nn.Linear's uniform(-1/sqrt(K), 1/sqrt(K)).
    bound = 1.0 / jnp.sqrt(jnp.float32(IN_FEATURES))
    weight = jax.random.uniform(kw, (OUT_FEATURES, IN_FEATURES), jnp.float32,
                                minval=-bound, maxval=bound)
    bias = jax.random.uniform(kb, (OUT_FEATURES,), jnp.float32,
                              minval=-bound, maxval=bound)

    # One-time parameter prep (outside the hot path).
    w_p, b_p = prepare_params(weight, bias)

    out = lazynet_forward(x, w_p, b_p)
    out = jax.block_until_ready(out)
    assert out.shape == (2, OUT_FEATURES)

    x_flat = x.reshape(-1, IN_FEATURES)

    # Tight check against a reference that uses the same bf16-input / f32-accum
    # matmul semantics as the kernel.
    ref_bf16 = jnp.maximum(
        jnp.dot(x_flat.astype(jnp.bfloat16), weight.T.astype(jnp.bfloat16),
                preferred_element_type=jnp.float32) + bias, 0.0)
    assert jnp.allclose(out, ref_bf16, atol=1e-3, rtol=1e-3)

    # Sanity check against the full-f32 PyTorch-equivalent reference
    # (looser tolerance accounts for the bf16 input quantization).
    ref_f32 = jnp.maximum(x_flat @ weight.T + bias, 0.0)
    assert jnp.allclose(out, ref_f32, atol=3e-2, rtol=3e-2)

    print("KERNEL_OK")
</pallas_src>

<mosaic_0001>
module attributes {stable_mosaic.version = 11 : i64} {
  func.func @_linear_relu_kernel(%arg0: i32, %arg1: memref<256x3072xf32, #tpu.memory_space<vmem>>, %arg2: memref<3072x128xbf16, #tpu.memory_space<vmem>>, %arg3: memref<1x128xf32, #tpu.memory_space<vmem>>, %arg4: memref<256x128xf32, #tpu.memory_space<vmem>>) attributes {dimension_semantics = [#tpu.dimension_semantics<parallel>], iteration_bounds = array<i64: 1>, scalar_prefetch = 0 : i64, scratch_operands = 0 : i64, tpu.core_type = #tpu.core_type<tc>, window_params = [{transform_indices = @transform_0, window_bounds = array<i64: 256, 3072>}, {pipeline_mode = #tpu.pipeline_mode<synchronous>, transform_indices = @transform_1, window_bounds = array<i64: 3072, 128>}, {pipeline_mode = #tpu.pipeline_mode<synchronous>, transform_indices = @transform_2, window_bounds = array<i64: 1, 128>}, {transform_indices = @transform_3, window_bounds = array<i64: 256, 128>}]} {
    %c0 = arith.constant 0 : index
    %c0_0 = arith.constant 0 : index
    %0 = vector.load %arg1[%c0, %c0_0] : memref<256x3072xf32, #tpu.memory_space<vmem>>, vector<256x3072xf32>
    %1 = arith.truncf %0 : vector<256x3072xf32> to vector<256x3072xbf16>
    %c0_1 = arith.constant 0 : index
    %c0_2 = arith.constant 0 : index
    %2 = vector.load %arg2[%c0_1, %c0_2] : memref<3072x128xbf16, #tpu.memory_space<vmem>>, vector<3072x128xbf16>
    %cst = arith.constant dense<0.000000e+00> : vector<256x128xf32>
    %3 = tpu.matmul %1, %2, %cst {dimension_numbers = #tpu.dot_dimension_numbers<[1], [0], [0], [1], [0, 0, 1, 1], [], []>} : vector<256x3072xbf16>, vector<3072x128xbf16>, vector<256x128xf32> -> vector<256x128xf32>
    %c0_3 = arith.constant 0 : index
    %c0_4 = arith.constant 0 : index
    %4 = vector.load %arg3[%c0_3, %c0_4] : memref<1x128xf32, #tpu.memory_space<vmem>>, vector<1x128xf32>
    %5 = vector.broadcast %4 : vector<1x128xf32> to vector<256x128xf32>
    %6 = arith.addf %3, %5 : vector<256x128xf32>
    %cst_5 = arith.constant 0.000000e+00 : f32
    %7 = vector.broadcast %cst_5 : f32 to vector<256x128xf32>
    %8 = arith.maximumf %6, %7 : vector<256x128xf32>
    %c0_6 = arith.constant 0 : index
    %c0_7 = arith.constant 0 : index
    %9 = vector.load %arg4[%c0_6, %c0_7] : memref<256x128xf32, #tpu.memory_space<vmem>>, vector<256x128xf32>
    tpu.vector_store %arg4[%c0_6, %c0_7], %8 {strides = array<i32>} : memref<256x128xf32, #tpu.memory_space<vmem>>, vector<256x128xf32>,
    return
  }
  func.func @transform_0(%arg0: i32) -> (i32, i32) {
    %c0_i32 = arith.constant 0 : i32
    %c0_i32_0 = arith.constant 0 : i32
    return %arg0, %c0_i32 : i32, i32
  }
  func.func @transform_1(%arg0: i32) -> (i32, i32) {
    %c0_i32 = arith.constant 0 : i32
    %c0_i32_0 = arith.constant 0 : i32
    %c0_i32_1 = arith.constant 0 : i32
    return %c0_i32, %c0_i32_0 : i32, i32
  }
  func.func @transform_2(%arg0: i32) -> (i32, i32) {
    %c0_i32 = arith.constant 0 : i32
    %c0_i32_0 = arith.constant 0 : i32
    %c0_i32_1 = arith.constant 0 : i32
    return %c0_i32, %c0_i32_0 : i32, i32
  }
  func.func @transform_3(%arg0: i32) -> (i32, i32) {
    %c0_i32 = arith.constant 0 : i32
    %c0_i32_0 = arith.constant 0 : i32
    return %arg0, %c0_i32 : i32, i32
  }
}

</mosaic_0001>

<llo_original>
// kernel: lazynet_forward.1
$region0: #{lazynet_forward.1}
  #allocation0 [shape = 'u32[]', space=smem, size = 0x4, offset = 0x4, fixed_abs, tag = 'smem constant byte address 0x4 - core index']
  #allocation1 [shape = 'u32[144,128]{1,0:T(1,128)}', space=vmem, size = 0x12000, scoped, tag = 'internal scratch']
  %s0 = inlined_call_operand.vmem [shape: f32[2,3072], index: 0, kind: input, shape index: {}]
  %s1 = inlined_call_operand.hbm [shape: bf16[3072,128], index: 1, kind: input, shape index: {}]
  %s2 = inlined_call_operand.vmem [shape: f32[1,128], index: 2, kind: input, shape index: {}]
  %s3 = inlined_call_operand.hbm [shape: f32[2,128], index: 3, kind: output, shape index: {}]
  %s4 = sld [smem:[#allocation0]]
  $region26: #{lazynet_forward.1} parent=0
    _
  %s6 = ssub.s32 1, %s4
  %s7 = scalar_select 0, %s6, %s4
  $region1: #{lazynet_forward.1} parent=0
    #allocation2 [shape = 'u8[786432]{0}', space=vmem, size = 0xc0000, scoped, tag = 'input window, operand 1, single buffered']
    #allocation3 [shape = 's32[1]{0}', space=sflag, size = 0x4, scoped, tag = 'scoped memory for lazynet_forward.1']
    #allocation4 [shape = 's32[1]{0}', space=sflag, size = 0x4, scoped, tag = 'scoped memory for lazynet_forward.1']
    #allocation5 [shape = 'u8[131072]{0}', space=vmem, size = 0x20000, scoped, tag = 'output window, operand 0, single buffered']
    %8 = vsyncpa [#allocation3], 0
    %9 = vsyncpa [#allocation4], 0
    // Predicated region
    $region2: #{lazynet_forward.1} parent=1 // pred_check
      _
    $region3: #{lazynet_forward.1} parent=1 // pred_check_branch
      %11 = sbr.rel (0) target = $region5
    $region4: #{lazynet_forward.1} parent=1 // pred_region
      _
    $region5: #{lazynet_forward.1} parent=1 // pred_fallthru
      _
    // Predicated region
    $region6: #{lazynet_forward.1} parent=1 // pred_check
      _
    $region7: #{lazynet_forward.1} parent=1 // pred_check_branch
      %13 = sbr.rel (0) target = $region9
    $region8: #{lazynet_forward.1} parent=1 // pred_region
      %s15 = ssub.s32 24576, 24576
      %16 = vsyncadd [#allocation3], %s15
      %s17 = sshll.u32 [#allocation2], 4
      %s18 = int_to_ptr.vmem [resolvable:$true] %s17
      %23 = dma.hbm_to_vmem [thread:$0]  %s1, 24576, %s18, [#allocation3], 64, 64, 4
    $region9: #{lazynet_forward.1} parent=1 // pred_fallthru
      _
    // Predicated region
    $region10: #{lazynet_forward.1} parent=1 // pred_check
      _
    $region11: #{lazynet_forward.1} parent=1 // pred_check_branch
      %25 = sbr.rel (0) target = $region13
    $region12: #{lazynet_forward.1} parent=1 // pred_region
      _
    $region13: #{lazynet_forward.1} parent=1 // pred_fallthru
      _
    // Predicated region
    $region14: #{lazynet_forward.1} parent=1 // pred_check
      _
    $region15: #{lazynet_forward.1} parent=1 // pred_check_branch
      %27 = sbr.rel (0) target = $region17
    $region16: #{lazynet_forward.1} parent=1 // pred_region
      %28 = dma.done [#allocation3], 24576
    $region17: #{lazynet_forward.1} parent=1 // pred_fallthru
      _
    %v30 = vld [vmem:[%s0] sm:$0xff]
    %v31 = vld [vmem:[%s0 + $0x8] sm:$0xff]
    %v32 = vld [vmem:[%s0 + $0x10] sm:$0xff]
    %v33 = vld [vmem:[%s0 + $0x18] sm:$0xff]
    %v34 = vld [vmem:[%s0 + $0x20] sm:$0xff]
    %v35 = vld [vmem:[%s0 + $0x28] sm:$0xff]
    %v36 = vld [vmem:[%s0 + $0x30] sm:$0xff]
    %v37 = vld [vmem:[%s0 + $0x38] sm:$0xff]
    %v38 = vld [vmem:[%s0 + $0x40] sm:$0xff]
    %v39 = vld [vmem:[%s0 + $0x48] sm:$0xff]
    %v40 = vld [vmem:[%s0 + $0x50] sm:$0xff]
    %v41 = vld [vmem:[%s0 + $0x58] sm:$0xff]
    %v42 = vld [vmem:[%s0 + $0x60] sm:$0xff]
    %v43 = vld [vmem:[%s0 + $0x68] sm:$0xff]
    %v44 = vld [vmem:[%s0 + $0x70] sm:$0xff]
    %v45 = vld [vmem:[%s0 + $0x78] sm:$0xff]
    %v46 = vld [vmem:[%s0 + $0x80] sm:$0xff]
    %v47 = vld [vmem:[%s0 + $0x88] sm:$0xff]
    %v48 = vld [vmem:[%s0 + $0x90] sm:$0xff]
    %v49 = vld [vmem:[%s0 + $0x98] sm:$0xff]
    %v50 = vld [vmem:[%s0 + $0xa0] sm:$0xff]
    %v51 = vld [vmem:[%s0 + $0xa8] sm:$0xff]
    %v52 = vld [vmem:[%s0 + $0xb0] sm:$0xff]
    %v53 = vld [vmem:[%s0 + $0xb8] sm:$0xff]
    %v54 = vld [vmem:[%s0 + $0xc0] sm:$0xff]
    %v55 = vld [vmem:[%s0 + $0xc8] sm:$0xff]
    %v56 = vld [vmem:[%s0 + $0xd0] sm:$0xff]
    %v57 = vld [vmem:[%s0 + $0xd8] sm:$0xff]
    %v58 = vld [vmem:[%s0 + $0xe0] sm:$0xff]
    %v59 = vld [vmem:[%s0 + $0xe8] sm:$0xff]
    %v60 = vld [vmem:[%s0 + $0xf0] sm:$0xff]
    %v61 = vld [vmem:[%s0 + $0xf8] sm:$0xff]
    %v62 = vld [vmem:[%s0 + $0x100] sm:$0xff]
    %v63 = vld [vmem:[%s0 + $0x108] sm:$0xff]
    %v64 = vld [vmem:[%s0 + $0x110] sm:$0xff]
    %v65 = vld [vmem:[%s0 + $0x118] sm:$0xff]
    %v66 = vld [vmem:[%s0 + $0x120] sm:$0xff]
    %v67 = vld [vmem:[%s0 + $0x128] sm:$0xff]
    %v68 = vld [vmem:[%s0 + $0x130] sm:$0xff]
    %v69 = vld [vmem:[%s0 + $0x138] sm:$0xff]
    %v70 = vld [vmem:[%s0 + $0x140] sm:$0xff]
    %v71 = vld [vmem:[%s0 + $0x148] sm:$0xff]
    %v72 = vld [vmem:[%s0 + $0x150] sm:$0xff]
    %v73 = vld [vmem:[%s0 + $0x158] sm:$0xff]
    %v74 = vld [vmem:[%s0 + $0x160] sm:$0xff]
    %v75 = vld [vmem:[%s0 + $0x168] sm:$0xff]
    %v76 = vld [vmem:[%s0 + $0x170] sm:$0xff]
    %v77 = vld [vmem:[%s0 + $0x178] sm:$0xff]
    %v78 = vld [vmem:[%s0 + $0x180] sm:$0xff]
    %v79 = vld [vmem:[%s0 + $0x188] sm:$0xff]
    %v80 = vld [vmem:[%s0 + $0x190] sm:$0xff]
    %v81 = vld [vmem:[%s0 + $0x198] sm:$0xff]
    %v82 = vld [vmem:[%s0 + $0x1a0] sm:$0xff]
    %v83 = vld [vmem:[%s0 + $0x1a8] sm:$0xff]
    %v84 = vld [vmem:[%s0 + $0x1b0] sm:$0xff]
    %v85 = vld [vmem:[%s0 + $0x1b8] sm:$0xff]
    %v86 = vld [vmem:[%s0 + $0x1c0] sm:$0xff]
    %v87 = vld [vmem:[%s0 + $0x1c8] sm:$0xff]
    %v88 = vld [vmem:[%s0 + $0x1d0] sm:$0xff]
    %v89 = vld [vmem:[%s0 + $0x1d8] sm:$0xff]
    %v90 = vld [vmem:[%s0 + $0x1e0] sm:$0xff]
    %v91 = vld [vmem:[%s0 + $0x1e8] sm:$0xff]
    %v92 = vld [vmem:[%s0 + $0x1f0] sm:$0xff]
    %v93 = vld [vmem:[%s0 + $0x1f8] sm:$0xff]
    %v94 = vld [vmem:[%s0 + $0x200] sm:$0xff]
    %v95 = vld [vmem:[%s0 + $0x208] sm:$0xff]
    %v96 = vld [vmem:[%s0 + $0x210] sm:$0xff]
    %v97 = vld [vmem:[%s0 + $0x218] sm:$0xff]
    %v98 = vld [vmem:[%s0 + $0x220] sm:$0xff]
    %v99 = vld [vmem:[%s0 + $0x228] sm:$0xff]
    %v100 = vld [vmem:[%s0 + $0x230] sm:$0xff]
    %v101 = vld [vmem:[%s0 + $0x238] sm:$0xff]
    %v102 = vld [vmem:[%s0 + $0x240] sm:$0xff]
    %v103 = vld [vmem:[%s0 + $0x248] sm:$0xff]
    %v104 = vld [vmem:[%s0 + $0x250] sm:$0xff]
    %v105 = vld [vmem:[%s0 + $0x258] sm:$0xff]
    %v106 = vld [vmem:[%s0 + $0x260] sm:$0xff]
    %v107 = vld [vmem:[%s0 + $0x268] sm:$0xff]
    %v108 = vld [vmem:[%s0 + $0x270] sm:$0xff]
    %v109 = vld [vmem:[%s0 + $0x278] sm:$0xff]
    %v110 = vld [vmem:[%s0 + $0x280] sm:$0xff]
    %v111 = vld [vmem:[%s0 + $0x288] sm:$0xff]
    %v112 = vld [vmem:[%s0 + $0x290] sm:$0xff]
    %v113 = vld [vmem:[%s0 + $0x298] sm:$0xff]
    %v114 = vld [vmem:[%s0 + $0x2a0] sm:$0xff]
    %v115 = vld [vmem:[%s0 + $0x2a8] sm:$0xff]
    %v116 = vld [vmem:[%s0 + $0x2b0] sm:$0xff]
    %v117 = vld [vmem:[%s0 + $0x2b8] sm:$0xff]
    %v118 = vld [vmem:[%s0 + $0x2c0] sm:$0xff]
    %v119 = vld [vmem:[%s0 + $0x2c8] sm:$0xff]
    %v120 = vld [vmem:[%s0 + $0x2d0] sm:$0xff]
    %v121 = vld [vmem:[%s0 + $0x2d8] sm:$0xff]
    %v122 = vld [vmem:[%s0 + $0x2e0] sm:$0xff]
    %v123 = vld [vmem:[%s0 + $0x2e8] sm:$0xff]
    %v124 = vld [vmem:[%s0 + $0x2f0] sm:$0xff]
    %v125 = vld [vmem:[%s0 + $0x2f8] sm:$0xff]
    %v126 = vld [vmem:[%s0 + $0x300] sm:$0xff]
    %v127 = vld [vmem:[%s0 + $0x308] sm:$0xff]
    %v128 = vld [vmem:[%s0 + $0x310] sm:$0xff]
    %v129 = vld [vmem:[%s0 + $0x318] sm:$0xff]
    %v130 = vld [vmem:[%s0 + $0x320] sm:$0xff]
    %v131 = vld [vmem:[%s0 + $0x328] sm:$0xff]
    %v132 = vld [vmem:[%s0 + $0x330] sm:$0xff]
    %v133 = vld [vmem:[%s0 + $0x338] sm:$0xff]
    %v134 = vld [vmem:[%s0 + $0x340] sm:$0xff]
    %v135 = vld [vmem:[%s0 + $0x348] sm:$0xff]
    %v136 = vld [vmem:[%s0 + $0x350] sm:$0xff]
    %v137 = vld [vmem:[%s0 + $0x358] sm:$0xff]
    %v138 = vld [vmem:[%s0 + $0x360] sm:$0xff]
    %v139 = vld [vmem:[%s0 + $0x368] sm:$0xff]
    %v140 = vld [vmem:[%s0 + $0x370] sm:$0xff]
    %v141 = vld [vmem:[%s0 + $0x378] sm:$0xff]
    %v142 = vld [vmem:[%s0 + $0x380] sm:$0xff]
    %v143 = vld [vmem:[%s0 + $0x388] sm:$0xff]
    %v144 = vld [vmem:[%s0 + $0x390] sm:$0xff]
    %v145 = vld [vmem:[%s0 + $0x398] sm:$0xff]
    %v146 = vld [vmem:[%s0 + $0x3a0] sm:$0xff]
    %v147 = vld [vmem:[%s0 + $0x3a8] sm:$0xff]
    %v148 = vld [vmem:[%s0 + $0x3b0] sm:$0xff]
    %v149 = vld [vmem:[%s0 + $0x3b8] sm:$0xff]
    %v150 = vld [vmem:[%s0 + $0x3c0] sm:$0xff]
    %v151 = vld [vmem:[%s0 + $0x3c8] sm:$0xff]
    %v152 = vld [vmem:[%s0 + $0x3d0] sm:$0xff]
    %v153 = vld [vmem:[%s0 + $0x3d8] sm:$0xff]
    %v154 = vld [vmem:[%s0 + $0x3e0] sm:$0xff]
    %v155 = vld [vmem:[%s0 + $0x3e8] sm:$0xff]
    %v156 = vld [vmem:[%s0 + $0x3f0] sm:$0xff]
    %v157 = vld [vmem:[%s0 + $0x3f8] sm:$0xff]
    %v158 = vld [vmem:[%s0 + $0x400] sm:$0xff]
    %v159 = vld [vmem:[%s0 + $0x408] sm:$0xff]
    %v160 = vld [vmem:[%s0 + $0x410] sm:$0xff]
    %v161 = vld [vmem:[%s0 + $0x418] sm:$0xff]
    %v162 = vld [vmem:[%s0 + $0x420] sm:$0xff]
    %v163 = vld [vmem:[%s0 + $0x428] sm:$0xff]
    %v164 = vld [vmem:[%s0 + $0x430] sm:$0xff]
    %v165 = vld [vmem:[%s0 + $0x438] sm:$0xff]
    %v166 = vld [vmem:[%s0 + $0x440] sm:$0xff]
    %v167 = vld [vmem:[%s0 + $0x448] sm:$0xff]
    %v168 = vld [vmem:[%s0 + $0x450] sm:$0xff]
    %v169 = vld [vmem:[%s0 + $0x458] sm:$0xff]
    %v170 = vld [vmem:[%s0 + $0x460] sm:$0xff]
    %v171 = vld [vmem:[%s0 + $0x468] sm:$0xff]
    %v172 = vld [vmem:[%s0 + $0x470] sm:$0xff]
    %v173 = vld [vmem:[%s0 + $0x478] sm:$0xff]
    %v174 = vld [vmem:[%s0 + $0x480] sm:$0xff]
    %v175 = vld [vmem:[%s0 + $0x488] sm:$0xff]
    %v176 = vld [vmem:[%s0 + $0x490] sm:$0xff]
    %v177 = vld [vmem:[%s0 + $0x498] sm:$0xff]
    %v178 = vld [vmem:[%s0 + $0x4a0] sm:$0xff]
    %v179 = vld [vmem:[%s0 + $0x4a8] sm:$0xff]
    %v180 = vld [vmem:[%s0 + $0x4b0] sm:$0xff]
    %v181 = vld [vmem:[%s0 + $0x4b8] sm:$0xff]
    %v182 = vld [vmem:[%s0 + $0x4c0] sm:$0xff]
    %v183 = vld [vmem:[%s0 + $0x4c8] sm:$0xff]
    %v184 = vld [vmem:[%s0 + $0x4d0] sm:$0xff]
    %v185 = vld [vmem:[%s0 + $0x4d8] sm:$0xff]
    %v186 = vld [vmem:[%s0 + $0x4e0] sm:$0xff]
    %v187 = vld [vmem:[%s0 + $0x4e8] sm:$0xff]
    %v188 = vld [vmem:[%s0 + $0x4f0] sm:$0xff]
    %v189 = vld [vmem:[%s0 + $0x4f8] sm:$0xff]
    %v190 = vld [vmem:[%s0 + $0x500] sm:$0xff]
    %v191 = vld [vmem:[%s0 + $0x508] sm:$0xff]
    %v192 = vld [vmem:[%s0 + $0x510] sm:$0xff]
    %v193 = vld [vmem:[%s0 + $0x518] sm:$0xff]
    %v194 = vld [vmem:[%s0 + $0x520] sm:$0xff]
    %v195 = vld [vmem:[%s0 + $0x528] sm:$0xff]
    %v196 = vld [vmem:[%s0 + $0x530] sm:$0xff]
    %v197 = vld [vmem:[%s0 + $0x538] sm:$0xff]
    %v198 = vld [vmem:[%s0 + $0x540] sm:$0xff]
    %v199 = vld [vmem:[%s0 + $0x548] sm:$0xff]
    %v200 = vld [vmem:[%s0 + $0x550] sm:$0xff]
    %v201 = vld [vmem:[%s0 + $0x558] sm:$0xff]
    %v202 = vld [vmem:[%s0 + $0x560] sm:$0xff]
    %v203 = vld [vmem:[%s0 + $0x568] sm:$0xff]
    %v204 = vld [vmem:[%s0 + $0x570] sm:$0xff]
    %v205 = vld [vmem:[%s0 + $0x578] sm:$0xff]
    %v206 = vld [vmem:[%s0 + $0x580] sm:$0xff]
    %v207 = vld [vmem:[%s0 + $0x588] sm:$0xff]
    %v208 = vld [vmem:[%s0 + $0x590] sm:$0xff]
    %v209 = vld [vmem:[%s0 + $0x598] sm:$0xff]
    %v210 = vld [vmem:[%s0 + $0x5a0] sm:$0xff]
    %v211 = vld [vmem:[%s0 + $0x5a8] sm:$0xff]
    %v212 = vld [vmem:[%s0 + $0x5b0] sm:$0xff]
    %v213 = vld [vmem:[%s0 + $0x5b8] sm:$0xff]
    %v214 = vld [vmem:[%s0 + $0x5c0] sm:$0xff]
    %v215 = vld [vmem:[%s0 + $0x5c8] sm:$0xff]
    %v216 = vld [vmem:[%s0 + $0x5d0] sm:$0xff]
    %v217 = vld [vmem:[%s0 + $0x5d8] sm:$0xff]
    %v218 = vld [vmem:[%s0 + $0x5e0] sm:$0xff]
    %v219 = vld [vmem:[%s0 + $0x5e8] sm:$0xff]
    %v220 = vld [vmem:[%s0 + $0x5f0] sm:$0xff]
    %v221 = vld [vmem:[%s0 + $0x5f8] sm:$0xff]
    %v222 = vld [vmem:[%s0 + $0x600] sm:$0xff]
    %v223 = vld [vmem:[%s0 + $0x608] sm:$0xff]
    %v224 = vld [vmem:[%s0 + $0x610] sm:$0xff]
    %v225 = vld [vmem:[%s0 + $0x618] sm:$0xff]
    %v226 = vld [vmem:[%s0 + $0x620] sm:$0xff]
    %v227 = vld [vmem:[%s0 + $0x628] sm:$0xff]
    %v228 = vld [vmem:[%s0 + $0x630] sm:$0xff]
    %v229 = vld [vmem:[%s0 + $0x638] sm:$0xff]
    %v230 = vld [vmem:[%s0 + $0x640] sm:$0xff]
    %v231 = vld [vmem:[%s0 + $0x648] sm:$0xff]
    %v232 = vld [vmem:[%s0 + $0x650] sm:$0xff]
    %v233 = vld [vmem:[%s0 + $0x658] sm:$0xff]
    %v234 = vld [vmem:[%s0 + $0x660] sm:$0xff]
    %v235 = vld [vmem:[%s0 + $0x668] sm:$0xff]
    %v236 = vld [vmem:[%s0 + $0x670] sm:$0xff]
    %v237 = vld [vmem:[%s0 + $0x678] sm:$0xff]
    %v238 = vld [vmem:[%s0 + $0x680] sm:$0xff]
    %v239 = vld [vmem:[%s0 + $0x688] sm:$0xff]
    %v240 = vld [vmem:[%s0 + $0x690] sm:$0xff]
    %v241 = vld [vmem:[%s0 + $0x698] sm:$0xff]
    %v242 = vld [vmem:[%s0 + $0x6a0] sm:$0xff]
    %v243 = vld [vmem:[%s0 + $0x6a8] sm:$0xff]
    %v244 = vld [vmem:[%s0 + $0x6b0] sm:$0xff]
    %v245 = vld [vmem:[%s0 + $0x6b8] sm:$0xff]
    %v246 = vld [vmem:[%s0 + $0x6c0] sm:$0xff]
    %v247 = vld [vmem:[%s0 + $0x6c8] sm:$0xff]
    %v248 = vld [vmem:[%s0 + $0x6d0] sm:$0xff]
    %v249 = vld [vmem:[%s0 + $0x6d8] sm:$0xff]
    %v250 = vld [vmem:[%s0 + $0x6e0] sm:$0xff]
    %v251 = vld [vmem:[%s0 + $0x6e8] sm:$0xff]
    %v252 = vld [vmem:[%s0 + $0x6f0] sm:$0xff]
    %v253 = vld [vmem:[%s0 + $0x6f8] sm:$0xff]
    %v254 = vld [vmem:[%s0 + $0x700] sm:$0xff]
    %v255 = vld [vmem:[%s0 + $0x708] sm:$0xff]
    %v256 = vld [vmem:[%s0 + $0x710] sm:$0xff]
    %v257 = vld [vmem:[%s0 + $0x718] sm:$0xff]
    %v258 = vld [vmem:[%s0 + $0x720] sm:$0xff]
    %v259 = vld [vmem:[%s0 + $0x728] sm:$0xff]
    %v260 = vld [vmem:[%s0 + $0x730] sm:$0xff]
    %v261 = vld [vmem:[%s0 + $0x738] sm:$0xff]
    %v262 = vld [vmem:[%s0 + $0x740] sm:$0xff]
    %v263 = vld [vmem:[%s0 + $0x748] sm:$0xff]
    %v264 = vld [vmem:[%s0 + $0x750] sm:$0xff]
    %v265 = vld [vmem:[%s0 + $0x758] sm:$0xff]
    %v266 = vld [vmem:[%s0 + $0x760] sm:$0xff]
    %v267 = vld [vmem:[%s0 + $0x768] sm:$0xff]
    %v268 = vld [vmem:[%s0 + $0x770] sm:$0xff]
    %v269 = vld [vmem:[%s0 + $0x778] sm:$0xff]
    %v270 = vld [vmem:[%s0 + $0x780] sm:$0xff]
    %v271 = vld [vmem:[%s0 + $0x788] sm:$0xff]
    %v272 = vld [vmem:[%s0 + $0x790] sm:$0xff]
    %v273 = vld [vmem:[%s0 + $0x798] sm:$0xff]
    %v274 = vld [vmem:[%s0 + $0x7a0] sm:$0xff]
    %v275 = vld [vmem:[%s0 + $0x7a8] sm:$0xff]
    %v276 = vld [vmem:[%s0 + $0x7b0] sm:$0xff]
    %v277 = vld [vmem:[%s0 + $0x7b8] sm:$0xff]
    %v278 = vld [vmem:[%s0 + $0x7c0] sm:$0xff]
    %v279 = vld [vmem:[%s0 + $0x7c8] sm:$0xff]
    %v280 = vld [vmem:[%s0 + $0x7d0] sm:$0xff]
    %v281 = vld [vmem:[%s0 + $0x7d8] sm:$0xff]
    %v282 = vld [vmem:[%s0 + $0x7e0] sm:$0xff]
    %v283 = vld [vmem:[%s0 + $0x7e8] sm:$0xff]
    %v284 = vld [vmem:[%s0 + $0x7f0] sm:$0xff]
    %v285 = vld [vmem:[%s0 + $0x7f8] sm:$0xff]
    %v286 = vld [vmem:[%s0 + $0x800] sm:$0xff]
    %v287 = vld [vmem:[%s0 + $0x808] sm:$0xff]
    %v288 = vld [vmem:[%s0 + $0x810] sm:$0xff]
    %v289 = vld [vmem:[%s0 + $0x818] sm:$0xff]
    %v290 = vld [vmem:[%s0 + $0x820] sm:$0xff]
    %v291 = vld [vmem:[%s0 + $0x828] sm:$0xff]
    %v292 = vld [vmem:[%s0 + $0x830] sm:$0xff]
    %v293 = vld [vmem:[%s0 + $0x838] sm:$0xff]
    %v294 = vld [vmem:[%s0 + $0x840] sm:$0xff]
    %v295 = vld [vmem:[%s0 + $0x848] sm:$0xff]
    %v296 = vld [vmem:[%s0 + $0x850] sm:$0xff]
    %v297 = vld [vmem:[%s0 + $0x858] sm:$0xff]
    %v298 = vld [vmem:[%s0 + $0x860] sm:$0xff]
    %v299 = vld [vmem:[%s0 + $0x868] sm:$0xff]
    %v300 = vld [vmem:[%s0 + $0x870] sm:$0xff]
    %v301 = vld [vmem:[%s0 + $0x878] sm:$0xff]
    %v302 = vld [vmem:[%s0 + $0x880] sm:$0xff]
    %v303 = vld [vmem:[%s0 + $0x888] sm:$0xff]
    %v304 = vld [vmem:[%s0 + $0x890] sm:$0xff]
    %v305 = vld [vmem:[%s0 + $0x898] sm:$0xff]
    %v306 = vld [vmem:[%s0 + $0x8a0] sm:$0xff]
    %v307 = vld [vmem:[%s0 + $0x8a8] sm:$0xff]
    %v308 = vld [vmem:[%s0 + $0x8b0] sm:$0xff]
    %v309 = vld [vmem:[%s0 + $0x8b8] sm:$0xff]
    %v310 = vld [vmem:[%s0 + $0x8c0] sm:$0xff]
    %v311 = vld [vmem:[%s0 + $0x8c8] sm:$0xff]
    %v312 = vld [vmem:[%s0 + $0x8d0] sm:$0xff]
    %v313 = vld [vmem:[%s0 + $0x8d8] sm:$0xff]
    %v314 = vld [vmem:[%s0 + $0x8e0] sm:$0xff]
    %v315 = vld [vmem:[%s0 + $0x8e8] sm:$0xff]
    %v316 = vld [vmem:[%s0 + $0x8f0] sm:$0xff]
    %v317 = vld [vmem:[%s0 + $0x8f8] sm:$0xff]
    %v318 = vld [vmem:[%s0 + $0x900] sm:$0xff]
    %v319 = vld [vmem:[%s0 + $0x908] sm:$0xff]
    %v320 = vld [vmem:[%s0 + $0x910] sm:$0xff]
    %v321 = vld [vmem:[%s0 + $0x918] sm:$0xff]
    %v322 = vld [vmem:[%s0 + $0x920] sm:$0xff]
    %v323 = vld [vmem:[%s0 + $0x928] sm:$0xff]
    %v324 = vld [vmem:[%s0 + $0x930] sm:$0xff]
    %v325 = vld [vmem:[%s0 + $0x938] sm:$0xff]
    %v326 = vld [vmem:[%s0 + $0x940] sm:$0xff]
    %v327 = vld [vmem:[%s0 + $0x948] sm:$0xff]
    %v328 = vld [vmem:[%s0 + $0x950] sm:$0xff]
    %v329 = vld [vmem:[%s0 + $0x958] sm:$0xff]
    %v330 = vld [vmem:[%s0 + $0x960] sm:$0xff]
    %v331 = vld [vmem:[%s0 + $0x968] sm:$0xff]
    %v332 = vld [vmem:[%s0 + $0x970] sm:$0xff]
    %v333 = vld [vmem:[%s0 + $0x978] sm:$0xff]
    %v334 = vld [vmem:[%s0 + $0x980] sm:$0xff]
    %v335 = vld [vmem:[%s0 + $0x988] sm:$0xff]
    %v336 = vld [vmem:[%s0 + $0x990] sm:$0xff]
    %v337 = vld [vmem:[%s0 + $0x998] sm:$0xff]
    %v338 = vld [vmem:[%s0 + $0x9a0] sm:$0xff]
    %v339 = vld [vmem:[%s0 + $0x9a8] sm:$0xff]
    %v340 = vld [vmem:[%s0 + $0x9b0] sm:$0xff]
    %v341 = vld [vmem:[%s0 + $0x9b8] sm:$0xff]
    %v342 = vld [vmem:[%s0 + $0x9c0] sm:$0xff]
    %v343 = vld [vmem:[%s0 + $0x9c8] sm:$0xff]
    %v344 = vld [vmem:[%s0 + $0x9d0] sm:$0xff]
    %v345 = vld [vmem:[%s0 + $0x9d8] sm:$0xff]
    %v346 = vld [vmem:[%s0 + $0x9e0] sm:$0xff]
    %v347 = vld [vmem:[%s0 + $0x9e8] sm:$0xff]
    %v348 = vld [vmem:[%s0 + $0x9f0] sm:$0xff]
    %v349 = vld [vmem:[%s0 + $0x9f8] sm:$0xff]
    %v350 = vld [vmem:[%s0 + $0xa00] sm:$0xff]
    %v351 = vld [vmem:[%s0 + $0xa08] sm:$0xff]
    %v352 = vld [vmem:[%s0 + $0xa10] sm:$0xff]
    %v353 = vld [vmem:[%s0 + $0xa18] sm:$0xff]
    %v354 = vld [vmem:[%s0 + $0xa20] sm:$0xff]
    %v355 = vld [vmem:[%s0 + $0xa28] sm:$0xff]
    %v356 = vld [vmem:[%s0 + $0xa30] sm:$0xff]
    %v357 = vld [vmem:[%s0 + $0xa38] sm:$0xff]
    %v358 = vld [vmem:[%s0 + $0xa40] sm:$0xff]
    %v359 = vld [vmem:[%s0 + $0xa48] sm:$0xff]
    %v360 = vld [vmem:[%s0 + $0xa50] sm:$0xff]
    %v361 = vld [vmem:[%s0 + $0xa58] sm:$0xff]
    %v362 = vld [vmem:[%s0 + $0xa60] sm:$0xff]
    %v363 = vld [vmem:[%s0 + $0xa68] sm:$0xff]
    %v364 = vld [vmem:[%s0 + $0xa70] sm:$0xff]
    %v365 = vld [vmem:[%s0 + $0xa78] sm:$0xff]
    %v366 = vld [vmem:[%s0 + $0xa80] sm:$0xff]
    %v367 = vld [vmem:[%s0 + $0xa88] sm:$0xff]
    %v368 = vld [vmem:[%s0 + $0xa90] sm:$0xff]
    %v369 = vld [vmem:[%s0 + $0xa98] sm:$0xff]
    %v370 = vld [vmem:[%s0 + $0xaa0] sm:$0xff]
    %v371 = vld [vmem:[%s0 + $0xaa8] sm:$0xff]
    %v372 = vld [vmem:[%s0 + $0xab0] sm:$0xff]
    %v373 = vld [vmem:[%s0 + $0xab8] sm:$0xff]
    %v374 = vld [vmem:[%s0 + $0xac0] sm:$0xff]
    %v375 = vld [vmem:[%s0 + $0xac8] sm:$0xff]
    %v376 = vld [vmem:[%s0 + $0xad0] sm:$0xff]
    %v377 = vld [vmem:[%s0 + $0xad8] sm:$0xff]
    %v378 = vld [vmem:[%s0 + $0xae0] sm:$0xff]
    %v379 = vld [vmem:[%s0 + $0xae8] sm:$0xff]
    %v380 = vld [vmem:[%s0 + $0xaf0] sm:$0xff]
    %v381 = vld [vmem:[%s0 + $0xaf8] sm:$0xff]
    %v382 = vld [vmem:[%s0 + $0xb00] sm:$0xff]
    %v383 = vld [vmem:[%s0 + $0xb08] sm:$0xff]
    %v384 = vld [vmem:[%s0 + $0xb10] sm:$0xff]
    %v385 = vld [vmem:[%s0 + $0xb18] sm:$0xff]
    %v386 = vld [vmem:[%s0 + $0xb20] sm:$0xff]
    %v387 = vld [vmem:[%s0 + $0xb28] sm:$0xff]
    %v388 = vld [vmem:[%s0 + $0xb30] sm:$0xff]
    %v389 = vld [vmem:[%s0 + $0xb38] sm:$0xff]
    %v390 = vld [vmem:[%s0 + $0xb40] sm:$0xff]
    %v391 = vld [vmem:[%s0 + $0xb48] sm:$0xff]
    %v392 = vld [vmem:[%s0 + $0xb50] sm:$0xff]
    %v393 = vld [vmem:[%s0 + $0xb58] sm:$0xff]
    %v394 = vld [vmem:[%s0 + $0xb60] sm:$0xff]
    %v395 = vld [vmem:[%s0 + $0xb68] sm:$0xff]
    %v396 = vld [vmem:[%s0 + $0xb70] sm:$0xff]
    %v397 = vld [vmem:[%s0 + $0xb78] sm:$0xff]
    %v398 = vld [vmem:[%s0 + $0xb80] sm:$0xff]
    %v399 = vld [vmem:[%s0 + $0xb88] sm:$0xff]
    %v400 = vld [vmem:[%s0 + $0xb90] sm:$0xff]
    %v401 = vld [vmem:[%s0 + $0xb98] sm:$0xff]
    %v402 = vld [vmem:[%s0 + $0xba0] sm:$0xff]
    %v403 = vld [vmem:[%s0 + $0xba8] sm:$0xff]
    %v404 = vld [vmem:[%s0 + $0xbb0] sm:$0xff]
    %v405 = vld [vmem:[%s0 + $0xbb8] sm:$0xff]
    %v406 = vld [vmem:[%s0 + $0xbc0] sm:$0xff]
    %v407 = vld [vmem:[%s0 + $0xbc8] sm:$0xff]
    %v408 = vld [vmem:[%s0 + $0xbd0] sm:$0xff]
    %v409 = vld [vmem:[%s0 + $0xbd8] sm:$0xff]
    %v410 = vld [vmem:[%s0 + $0xbe0] sm:$0xff]
    %v411 = vld [vmem:[%s0 + $0xbe8] sm:$0xff]
    %v412 = vld [vmem:[%s0 + $0xbf0] sm:$0xff]
    %v413 = vld [vmem:[%s0 + $0xbf8] sm:$0xff]
    %v414 = vld [vmem:[%s0 + $0xc00] sm:$0xff]
    %v415 = vld [vmem:[%s0 + $0xc08] sm:$0xff]
    %v416 = vld [vmem:[%s0 + $0xc10] sm:$0xff]
    %v417 = vld [vmem:[%s0 + $0xc18] sm:$0xff]
    %v418 = vld [vmem:[%s0 + $0xc20] sm:$0xff]
    %v419 = vld [vmem:[%s0 + $0xc28] sm:$0xff]
    %v420 = vld [vmem:[%s0 + $0xc30] sm:$0xff]
    %v421 = vld [vmem:[%s0 + $0xc38] sm:$0xff]
    %v422 = vld [vmem:[%s0 + $0xc40] sm:$0xff]
    %v423 = vld [vmem:[%s0 + $0xc48] sm:$0xff]
    %v424 = vld [vmem:[%s0 + $0xc50] sm:$0xff]
    %v425 = vld [vmem:[%s0 + $0xc58] sm:$0xff]
    %v426 = vld [vmem:[%s0 + $0xc60] sm:$0xff]
    %v427 = vld [vmem:[%s0 + $0xc68] sm:$0xff]
    %v428 = vld [vmem:[%s0 + $0xc70] sm:$0xff]
    %v429 = vld [vmem:[%s0 + $0xc78] sm:$0xff]
    %v430 = vld [vmem:[%s0 + $0xc80] sm:$0xff]
    %v431 = vld [vmem:[%s0 + $0xc88] sm:$0xff]
    %v432 = vld [vmem:[%s0 + $0xc90] sm:$0xff]
    %v433 = vld [vmem:[%s0 + $0xc98] sm:$0xff]
    %v434 = vld [vmem:[%s0 + $0xca0] sm:$0xff]
    %v435 = vld [vmem:[%s0 + $0xca8] sm:$0xff]
    %v436 = vld [vmem:[%s0 + $0xcb0] sm:$0xff]
    %v437 = vld [vmem:[%s0 + $0xcb8] sm:$0xff]
    %v438 = vld [vmem:[%s0 + $0xcc0] sm:$0xff]
    %v439 = vld [vmem:[%s0 + $0xcc8] sm:$0xff]
    %v440 = vld [vmem:[%s0 + $0xcd0] sm:$0xff]
    %v441 = vld [vmem:[%s0 + $0xcd8] sm:$0xff]
    %v442 = vld [vmem:[%s0 + $0xce0] sm:$0xff]
    %v443 = vld [vmem:[%s0 + $0xce8] sm:$0xff]
    %v444 = vld [vmem:[%s0 + $0xcf0] sm:$0xff]
    %v445 = vld [vmem:[%s0 + $0xcf8] sm:$0xff]
    %v446 = vld [vmem:[%s0 + $0xd00] sm:$0xff]
    %v447 = vld [vmem:[%s0 + $0xd08] sm:$0xff]
    %v448 = vld [vmem:[%s0 + $0xd10] sm:$0xff]
    %v449 = vld [vmem:[%s0 + $0xd18] sm:$0xff]
    %v450 = vld [vmem:[%s0 + $0xd20] sm:$0xff]
    %v451 = vld [vmem:[%s0 + $0xd28] sm:$0xff]
    %v452 = vld [vmem:[%s0 + $0xd30] sm:$0xff]
    %v453 = vld [vmem:[%s0 + $0xd38] sm:$0xff]
    %v454 = vld [vmem:[%s0 + $0xd40] sm:$0xff]
    %v455 = vld [vmem:[%s0 + $0xd48] sm:$0xff]
    %v456 = vld [vmem:[%s0 + $0xd50] sm:$0xff]
    %v457 = vld [vmem:[%s0 + $0xd58] sm:$0xff]
    %v458 = vld [vmem:[%s0 + $0xd60] sm:$0xff]
    %v459 = vld [vmem:[%s0 + $0xd68] sm:$0xff]
    %v460 = vld [vmem:[%s0 + $0xd70] sm:$0xff]
    %v461 = vld [vmem:[%s0 + $0xd78] sm:$0xff]
    %v462 = vld [vmem:[%s0 + $0xd80] sm:$0xff]
    %v463 = vld [vmem:[%s0 + $0xd88] sm:$0xff]
    %v464 = vld [vmem:[%s0 + $0xd90] sm:$0xff]
    %v465 = vld [vmem:[%s0 + $0xd98] sm:$0xff]
    %v466 = vld [vmem:[%s0 + $0xda0] sm:$0xff]
    %v467 = vld [vmem:[%s0 + $0xda8] sm:$0xff]
    %v468 = vld [vmem:[%s0 + $0xdb0] sm:$0xff]
    %v469 = vld [vmem:[%s0 + $0xdb8] sm:$0xff]
    %v470 = vld [vmem:[%s0 + $0xdc0] sm:$0xff]
    %v471 = vld [vmem:[%s0 + $0xdc8] sm:$0xff]
    %v472 = vld [vmem:[%s0 + $0xdd0] sm:$0xff]
    %v473 = vld [vmem:[%s0 + $0xdd8] sm:$0xff]
    %v474 = vld [vmem:[%s0 + $0xde0] sm:$0xff]
    %v475 = vld [vmem:[%s0 + $0xde8] sm:$0xff]
    %v476 = vld [vmem:[%s0 + $0xdf0] sm:$0xff]
    %v477 = vld [vmem:[%s0 + $0xdf8] sm:$0xff]
    %v478 = vld [vmem:[%s0 + $0xe00] sm:$0xff]
    %v479 = vld [vmem:[%s0 + $0xe08] sm:$0xff]
    %v480 = vld [vmem:[%s0 + $0xe10] sm:$0xff]
    %v481 = vld [vmem:[%s0 + $0xe18] sm:$0xff]
    %v482 = vld [vmem:[%s0 + $0xe20] sm:$0xff]
    %v483 = vld [vmem:[%s0 + $0xe28] sm:$0xff]
    %v484 = vld [vmem:[%s0 + $0xe30] sm:$0xff]
    %v485 = vld [vmem:[%s0 + $0xe38] sm:$0xff]
    %v486 = vld [vmem:[%s0 + $0xe40] sm:$0xff]
    %v487 = vld [vmem:[%s0 + $0xe48] sm:$0xff]
    %v488 = vld [vmem:[%s0 + $0xe50] sm:$0xff]
    %v489 = vld [vmem:[%s0 + $0xe58] sm:$0xff]
    %v490 = vld [vmem:[%s0 + $0xe60] sm:$0xff]
    %v491 = vld [vmem:[%s0 + $0xe68] sm:$0xff]
    %v492 = vld [vmem:[%s0 + $0xe70] sm:$0xff]
    %v493 = vld [vmem:[%s0 + $0xe78] sm:$0xff]
    %v494 = vld [vmem:[%s0 + $0xe80] sm:$0xff]
    %v495 = vld [vmem:[%s0 + $0xe88] sm:$0xff]
    %v496 = vld [vmem:[%s0 + $0xe90] sm:$0xff]
    %v497 = vld [vmem:[%s0 + $0xe98] sm:$0xff]
    %v498 = vld [vmem:[%s0 + $0xea0] sm:$0xff]
    %v499 = vld [vmem:[%s0 + $0xea8] sm:$0xff]
    %v500 = vld [vmem:[%s0 + $0xeb0] sm:$0xff]
    %v501 = vld [vmem:[%s0 + $0xeb8] sm:$0xff]
    %v502 = vld [vmem:[%s0 + $0xec0] sm:$0xff]
    %v503 = vld [vmem:[%s0 + $0xec8] sm:$0xff]
    %v504 = vld [vmem:[%s0 + $0xed0] sm:$0xff]
    %v505 = vld [vmem:[%s0 + $0xed8] sm:$0xff]
    %v506 = vld [vmem:[%s0 + $0xee0] sm:$0xff]
    %v507 = vld [vmem:[%s0 + $0xee8] sm:$0xff]
    %v508 = vld [vmem:[%s0 + $0xef0] sm:$0xff]
    %v509 = vld [vmem:[%s0 + $0xef8] sm:$0xff]
    %v510 = vld [vmem:[%s0 + $0xf00] sm:$0xff]
    %v511 = vld [vmem:[%s0 + $0xf08] sm:$0xff]
    %v512 = vld [vmem:[%s0 + $0xf10] sm:$0xff]
    %v513 = vld [vmem:[%s0 + $0xf18] sm:$0xff]
    %v514 = vld [vmem:[%s0 + $0xf20] sm:$0xff]
    %v515 = vld [vmem:[%s0 + $0xf28] sm:$0xff]
    %v516 = vld [vmem:[%s0 + $0xf30] sm:$0xff]
    %v517 = vld [vmem:[%s0 + $0xf38] sm:$0xff]
    %v518 = vld [vmem:[%s0 + $0xf40] sm:$0xff]
    %v519 = vld [vmem:[%s0 + $0xf48] sm:$0xff]
    %v520 = vld [vmem:[%s0 + $0xf50] sm:$0xff]
    %v521 = vld [vmem:[%s0 + $0xf58] sm:$0xff]
    %v522 = vld [vmem:[%s0 + $0xf60] sm:$0xff]
    %v523 = vld [vmem:[%s0 + $0xf68] sm:$0xff]
    %v524 = vld [vmem:[%s0 + $0xf70] sm:$0xff]
    %v525 = vld [vmem:[%s0 + $0xf78] sm:$0xff]
    %v526 = vld [vmem:[%s0 + $0xf80] sm:$0xff]
    %v527 = vld [vmem:[%s0 + $0xf88] sm:$0xff]
    %v528 = vld [vmem:[%s0 + $0xf90] sm:$0xff]
    %v529 = vld [vmem:[%s0 + $0xf98] sm:$0xff]
    %v530 = vld [vmem:[%s0 + $0xfa0] sm:$0xff]
    %v531 = vld [vmem:[%s0 + $0xfa8] sm:$0xff]
    %v532 = vld [vmem:[%s0 + $0xfb0] sm:$0xff]
    %v533 = vld [vmem:[%s0 + $0xfb8] sm:$0xff]
    %v534 = vld [vmem:[%s0 + $0xfc0] sm:$0xff]
    %v535 = vld [vmem:[%s0 + $0xfc8] sm:$0xff]
    %v536 = vld [vmem:[%s0 + $0xfd0] sm:$0xff]
    %v537 = vld [vmem:[%s0 + $0xfd8] sm:$0xff]
    %v538 = vld [vmem:[%s0 + $0xfe0] sm:$0xff]
    %v539 = vld [vmem:[%s0 + $0xfe8] sm:$0xff]
    %v540 = vld [vmem:[%s0 + $0xff0] sm:$0xff]
    %v541 = vld [vmem:[%s0 + $0xff8] sm:$0xff]
    %v542 = vld [vmem:[%s0 + $0x1000] sm:$0xff]
    %v543 = vld [vmem:[%s0 + $0x1008] sm:$0xff]
    %v544 = vld [vmem:[%s0 + $0x1010] sm:$0xff]
    %v545 = vld [vmem:[%s0 + $0x1018] sm:$0xff]
    %v546 = vld [vmem:[%s0 + $0x1020] sm:$0xff]
    %v547 = vld [vmem:[%s0 + $0x1028] sm:$0xff]
    %v548 = vld [vmem:[%s0 + $0x1030] sm:$0xff]
    %v549 = vld [vmem:[%s0 + $0x1038] sm:$0xff]
    %v550 = vld [vmem:[%s0 + $0x1040] sm:$0xff]
    %v551 = vld [vmem:[%s0 + $0x1048] sm:$0xff]
    %v552 = vld [vmem:[%s0 + $0x1050] sm:$0xff]
    %v553 = vld [vmem:[%s0 + $0x1058] sm:$0xff]
    %v554 = vld [vmem:[%s0 + $0x1060] sm:$0xff]
    %v555 = vld [vmem:[%s0 + $0x1068] sm:$0xff]
    %v556 = vld [vmem:[%s0 + $0x1070] sm:$0xff]
    %v557 = vld [vmem:[%s0 + $0x1078] sm:$0xff]
    %v558 = vld [vmem:[%s0 + $0x1080] sm:$0xff]
    %v559 = vld [vmem:[%s0 + $0x1088] sm:$0xff]
    %v560 = vld [vmem:[%s0 + $0x1090] sm:$0xff]
    %v561 = vld [vmem:[%s0 + $0x1098] sm:$0xff]
    %v562 = vld [vmem:[%s0 + $0x10a0] sm:$0xff]
    %v563 = vld [vmem:[%s0 + $0x10a8] sm:$0xff]
    %v564 = vld [vmem:[%s0 + $0x10b0] sm:$0xff]
    %v565 = vld [vmem:[%s0 + $0x10b8] sm:$0xff]
    %v566 = vld [vmem:[%s0 + $0x10c0] sm:$0xff]
    %v567 = vld [vmem:[%s0 + $0x10c8] sm:$0xff]
    %v568 = vld [vmem:[%s0 + $0x10d0] sm:$0xff]
    %v569 = vld [vmem:[%s0 + $0x10d8] sm:$0xff]
    %v570 = vld [vmem:[%s0 + $0x10e0] sm:$0xff]
    %v571 = vld [vmem:[%s0 + $0x10e8] sm:$0xff]
    %v572 = vld [vmem:[%s0 + $0x10f0] sm:$0xff]
    %v573 = vld [vmem:[%s0 + $0x10f8] sm:$0xff]
    %v574 = vld [vmem:[%s0 + $0x1100] sm:$0xff]
    %v575 = vld [vmem:[%s0 + $0x1108] sm:$0xff]
    %v576 = vld [vmem:[%s0 + $0x1110] sm:$0xff]
    %v577 = vld [vmem:[%s0 + $0x1118] sm:$0xff]
    %v578 = vld [vmem:[%s0 + $0x1120] sm:$0xff]
    %v579 = vld [vmem:[%s0 + $0x1128] sm:$0xff]
    %v580 = vld [vmem:[%s0 + $0x1130] sm:$0xff]
    %v581 = vld [vmem:[%s0 + $0x1138] sm:$0xff]
    %v582 = vld [vmem:[%s0 + $0x1140] sm:$0xff]
    %v583 = vld [vmem:[%s0 + $0x1148] sm:$0xff]
    %v584 = vld [vmem:[%s0 + $0x1150] sm:$0xff]
    %v585 = vld [vmem:[%s0 + $0x1158] sm:$0xff]
    %v586 = vld [vmem:[%s0 + $0x1160] sm:$0xff]
    %v587 = vld [vmem:[%s0 + $0x1168] sm:$0xff]
    %v588 = vld [vmem:[%s0 + $0x1170] sm:$0xff]
    %v589 = vld [vmem:[%s0 + $0x1178] sm:$0xff]
    %v590 = vld [vmem:[%s0 + $0x1180] sm:$0xff]
    %v591 = vld [vmem:[%s0 + $0x1188] sm:$0xff]
    %v592 = vld [vmem:[%s0 + $0x1190] sm:$0xff]
    %v593 = vld [vmem:[%s0 + $0x1198] sm:$0xff]
    %v594 = vld [vmem:[%s0 + $0x11a0] sm:$0xff]
    %v595 = vld [vmem:[%s0 + $0x11a8] sm:$0xff]
    %v596 = vld [vmem:[%s0 + $0x11b0] sm:$0xff]
    %v597 = vld [vmem:[%s0 + $0x11b8] sm:$0xff]
    %v598 = vld [vmem:[%s0 + $0x11c0] sm:$0xff]
    %v599 = vld [vmem:[%s0 + $0x11c8] sm:$0xff]
    %v600 = vld [vmem:[%s0 + $0x11d0] sm:$0xff]
    %v601 = vld [vmem:[%s0 + $0x11d8] sm:$0xff]
    %v602 = vld [vmem:[%s0 + $0x11e0] sm:$0xff]
    %v603 = vld [vmem:[%s0 + $0x11e8] sm:$0xff]
    %v604 = vld [vmem:[%s0 + $0x11f0] sm:$0xff]
    %v605 = vld [vmem:[%s0 + $0x11f8] sm:$0xff]
    %v606 = vld [vmem:[%s0 + $0x1200] sm:$0xff]
    %v607 = vld [vmem:[%s0 + $0x1208] sm:$0xff]
    %v608 = vld [vmem:[%s0 + $0x1210] sm:$0xff]
    %v609 = vld [vmem:[%s0 + $0x1218] sm:$0xff]
    %v610 = vld [vmem:[%s0 + $0x1220] sm:$0xff]
    %v611 = vld [vmem:[%s0 + $0x1228] sm:$0xff]
    %v612 = vld [vmem:[%s0 + $0x1230] sm:$0xff]
    %v613 = vld [vmem:[%s0 + $0x1238] sm:$0xff]
    %v614 = vld [vmem:[%s0 + $0x1240] sm:$0xff]
    %v615 = vld [vmem:[%s0 + $0x1248] sm:$0xff]
    %v616 = vld [vmem:[%s0 + $0x1250] sm:$0xff]
    %v617 = vld [vmem:[%s0 + $0x1258] sm:$0xff]
    %v618 = vld [vmem:[%s0 + $0x1260] sm:$0xff]
    %v619 = vld [vmem:[%s0 + $0x1268] sm:$0xff]
    %v620 = vld [vmem:[%s0 + $0x1270] sm:$0xff]
    %v621 = vld [vmem:[%s0 + $0x1278] sm:$0xff]
    %v622 = vld [vmem:[%s0 + $0x1280] sm:$0xff]
    %v623 = vld [vmem:[%s0 + $0x1288] sm:$0xff]
    %v624 = vld [vmem:[%s0 + $0x1290] sm:$0xff]
    %v625 = vld [vmem:[%s0 + $0x1298] sm:$0xff]
    %v626 = vld [vmem:[%s0 + $0x12a0] sm:$0xff]
    %v627 = vld [vmem:[%s0 + $0x12a8] sm:$0xff]
    %v628 = vld [vmem:[%s0 + $0x12b0] sm:$0xff]
    %v629 = vld [vmem:[%s0 + $0x12b8] sm:$0xff]
    %v630 = vld [vmem:[%s0 + $0x12c0] sm:$0xff]
    %v631 = vld [vmem:[%s0 + $0x12c8] sm:$0xff]
    %v632 = vld [vmem:[%s0 + $0x12d0] sm:$0xff]
    %v633 = vld [vmem:[%s0 + $0x12d8] sm:$0xff]
    %v634 = vld [vmem:[%s0 + $0x12e0] sm:$0xff]
    %v635 = vld [vmem:[%s0 + $0x12e8] sm:$0xff]
    %v636 = vld [vmem:[%s0 + $0x12f0] sm:$0xff]
    %v637 = vld [vmem:[%s0 + $0x12f8] sm:$0xff]
    %v638 = vld [vmem:[%s0 + $0x1300] sm:$0xff]
    %v639 = vld [vmem:[%s0 + $0x1308] sm:$0xff]
    %v640 = vld [vmem:[%s0 + $0x1310] sm:$0xff]
    %v641 = vld [vmem:[%s0 + $0x1318] sm:$0xff]
    %v642 = vld [vmem:[%s0 + $0x1320] sm:$0xff]
    %v643 = vld [vmem:[%s0 + $0x1328] sm:$0xff]
    %v644 = vld [vmem:[%s0 + $0x1330] sm:$0xff]
    %v645 = vld [vmem:[%s0 + $0x1338] sm:$0xff]
    %v646 = vld [vmem:[%s0 + $0x1340] sm:$0xff]
    %v647 = vld [vmem:[%s0 + $0x1348] sm:$0xff]
    %v648 = vld [vmem:[%s0 + $0x1350] sm:$0xff]
    %v649 = vld [vmem:[%s0 + $0x1358] sm:$0xff]
    %v650 = vld [vmem:[%s0 + $0x1360] sm:$0xff]
    %v651 = vld [vmem:[%s0 + $0x1368] sm:$0xff]
    %v652 = vld [vmem:[%s0 + $0x1370] sm:$0xff]
    %v653 = vld [vmem:[%s0 + $0x1378] sm:$0xff]
    %v654 = vld [vmem:[%s0 + $0x1380] sm:$0xff]
    %v655 = vld [vmem:[%s0 + $0x1388] sm:$0xff]
    %v656 = vld [vmem:[%s0 + $0x1390] sm:$0xff]
    %v657 = vld [vmem:[%s0 + $0x1398] sm:$0xff]
    %v658 = vld [vmem:[%s0 + $0x13a0] sm:$0xff]
    %v659 = vld [vmem:[%s0 + $0x13a8] sm:$0xff]
    %v660 = vld [vmem:[%s0 + $0x13b0] sm:$0xff]
    %v661 = vld [vmem:[%s0 + $0x13b8] sm:$0xff]
    %v662 = vld [vmem:[%s0 + $0x13c0] sm:$0xff]
    %v663 = vld [vmem:[%s0 + $0x13c8] sm:$0xff]
    %v664 = vld [vmem:[%s0 + $0x13d0] sm:$0xff]
    %v665 = vld [vmem:[%s0 + $0x13d8] sm:$0xff]
    %v666 = vld [vmem:[%s0 + $0x13e0] sm:$0xff]
    %v667 = vld [vmem:[%s0 + $0x13e8] sm:$0xff]
    %v668 = vld [vmem:[%s0 + $0x13f0] sm:$0xff]
    %v669 = vld [vmem:[%s0 + $0x13f8] sm:$0xff]
    %v670 = vld [vmem:[%s0 + $0x1400] sm:$0xff]
    %v671 = vld [vmem:[%s0 + $0x1408] sm:$0xff]
    %v672 = vld [vmem:[%s0 + $0x1410] sm:$0xff]
    %v673 = vld [vmem:[%s0 + $0x1418] sm:$0xff]
    %v674 = vld [vmem:[%s0 + $0x1420] sm:$0xff]
    %v675 = vld [vmem:[%s0 + $0x1428] sm:$0xff]
    %v676 = vld [vmem:[%s0 + $0x1430] sm:$0xff]
    %v677 = vld [vmem:[%s0 + $0x1438] sm:$0xff]
    %v678 = vld [vmem:[%s0 + $0x1440] sm:$0xff]
    %v679 = vld [vmem:[%s0 + $0x1448] sm:$0xff]
    %v680 = vld [vmem:[%s0 + $0x1450] sm:$0xff]
    %v681 = vld [vmem:[%s0 + $0x1458] sm:$0xff]
    %v682 = vld [vmem:[%s0 + $0x1460] sm:$0xff]
    %v683 = vld [vmem:[%s0 + $0x1468] sm:$0xff]
    %v684 = vld [vmem:[%s0 + $0x1470] sm:$0xff]
    %v685 = vld [vmem:[%s0 + $0x1478] sm:$0xff]
    %v686 = vld [vmem:[%s0 + $0x1480] sm:$0xff]
    %v687 = vld [vmem:[%s0 + $0x1488] sm:$0xff]
    %v688 = vld [vmem:[%s0 + $0x1490] sm:$0xff]
    %v689 = vld [vmem:[%s0 + $0x1498] sm:$0xff]
    %v690 = vld [vmem:[%s0 + $0x14a0] sm:$0xff]
    %v691 = vld [vmem:[%s0 + $0x14a8] sm:$0xff]
    %v692 = vld [vmem:[%s0 + $0x14b0] sm:$0xff]
    %v693 = vld [vmem:[%s0 + $0x14b8] sm:$0xff]
    %v694 = vld [vmem:[%s0 + $0x14c0] sm:$0xff]
    %v695 = vld [vmem:[%s0 + $0x14c8] sm:$0xff]
    %v696 = vld [vmem:[%s0 + $0x14d0] sm:$0xff]
    %v697 = vld [vmem:[%s0 + $0x14d8] sm:$0xff]
    %v698 = vld [vmem:[%s0 + $0x14e0] sm:$0xff]
    %v699 = vld [vmem:[%s0 + $0x14e8] sm:$0xff]
    %v700 = vld [vmem:[%s0 + $0x14f0] sm:$0xff]
    %v701 = vld [vmem:[%s0 + $0x14f8] sm:$0xff]
    %v702 = vld [vmem:[%s0 + $0x1500] sm:$0xff]
    %v703 = vld [vmem:[%s0 + $0x1508] sm:$0xff]
    %v704 = vld [vmem:[%s0 + $0x1510] sm:$0xff]
    %v705 = vld [vmem:[%s0 + $0x1518] sm:$0xff]
    %v706 = vld [vmem:[%s0 + $0x1520] sm:$0xff]
    %v707 = vld [vmem:[%s0 + $0x1528] sm:$0xff]
    %v708 = vld [vmem:[%s0 + $0x1530] sm:$0xff]
    %v709 = vld [vmem:[%s0 + $0x1538] sm:$0xff]
    %v710 = vld [vmem:[%s0 + $0x1540] sm:$0xff]
    %v711 = vld [vmem:[%s0 + $0x1548] sm:$0xff]
    %v712 = vld [vmem:[%s0 + $0x1550] sm:$0xff]
    %v713 = vld [vmem:[%s0 + $0x1558] sm:$0xff]
    %v714 = vld [vmem:[%s0 + $0x1560] sm:$0xff]
    %v715 = vld [vmem:[%s0 + $0x1568] sm:$0xff]
    %v716 = vld [vmem:[%s0 + $0x1570] sm:$0xff]
    %v717 = vld [vmem:[%s0 + $0x1578] sm:$0xff]
    %v718 = vld [vmem:[%s0 + $0x1580] sm:$0xff]
    %v719 = vld [vmem:[%s0 + $0x1588] sm:$0xff]
    %v720 = vld [vmem:[%s0 + $0x1590] sm:$0xff]
    %v721 = vld [vmem:[%s0 + $0x1598] sm:$0xff]
    %v722 = vld [vmem:[%s0 + $0x15a0] sm:$0xff]
    %v723 = vld [vmem:[%s0 + $0x15a8] sm:$0xff]
    %v724 = vld [vmem:[%s0 + $0x15b0] sm:$0xff]
    %v725 = vld [vmem:[%s0 + $0x15b8] sm:$0xff]
    %v726 = vld [vmem:[%s0 + $0x15c0] sm:$0xff]
    %v727 = vld [vmem:[%s0 + $0x15c8] sm:$0xff]
    %v728 = vld [vmem:[%s0 + $0x15d0] sm:$0xff]
    %v729 = vld [vmem:[%s0 + $0x15d8] sm:$0xff]
    %v730 = vld [vmem:[%s0 + $0x15e0] sm:$0xff]
    %v731 = vld [vmem:[%s0 + $0x15e8] sm:$0xff]
    %v732 = vld [vmem:[%s0 + $0x15f0] sm:$0xff]
    %v733 = vld [vmem:[%s0 + $0x15f8] sm:$0xff]
    %v734 = vld [vmem:[%s0 + $0x1600] sm:$0xff]
    %v735 = vld [vmem:[%s0 + $0x1608] sm:$0xff]
    %v736 = vld [vmem:[%s0 + $0x1610] sm:$0xff]
    %v737 = vld [vmem:[%s0 + $0x1618] sm:$0xff]
    %v738 = vld [vmem:[%s0 + $0x1620] sm:$0xff]
    %v739 = vld [vmem:[%s0 + $0x1628] sm:$0xff]
    %v740 = vld [vmem:[%s0 + $0x1630] sm:$0xff]
    %v741 = vld [vmem:[%s0 + $0x1638] sm:$0xff]
    %v742 = vld [vmem:[%s0 + $0x1640] sm:$0xff]
    %v743 = vld [vmem:[%s0 + $0x1648] sm:$0xff]
    %v744 = vld [vmem:[%s0 + $0x1650] sm:$0xff]
    %v745 = vld [vmem:[%s0 + $0x1658] sm:$0xff]
    %v746 = vld [vmem:[%s0 + $0x1660] sm:$0xff]
    %v747 = vld [vmem:[%s0 + $0x1668] sm:$0xff]
    %v748 = vld [vmem:[%s0 + $0x1670] sm:$0xff]
    %v749 = vld [vmem:[%s0 + $0x1678] sm:$0xff]
    %v750 = vld [vmem:[%s0 + $0x1680] sm:$0xff]
    %v751 = vld [vmem:[%s0 + $0x1688] sm:$0xff]
    %v752 = vld [vmem:[%s0 + $0x1690] sm:$0xff]
    %v753 = vld [vmem:[%s0 + $0x1698] sm:$0xff]
    %v754 = vld [vmem:[%s0 + $0x16a0] sm:$0xff]
    %v755 = vld [vmem:[%s0 + $0x16a8] sm:$0xff]
    %v756 = vld [vmem:[%s0 + $0x16b0] sm:$0xff]
    %v757 = vld [vmem:[%s0 + $0x16b8] sm:$0xff]
    %v758 = vld [vmem:[%s0 + $0x16c0] sm:$0xff]
    %v759 = vld [vmem:[%s0 + $0x16c8] sm:$0xff]
    %v760 = vld [vmem:[%s0 + $0x16d0] sm:$0xff]
    %v761 = vld [vmem:[%s0 + $0x16d8] sm:$0xff]
    %v762 = vld [vmem:[%s0 + $0x16e0] sm:$0xff]
    %v763 = vld [vmem:[%s0 + $0x16e8] sm:$0xff]
    %v764 = vld [vmem:[%s0 + $0x16f0] sm:$0xff]
    %v765 = vld [vmem:[%s0 + $0x16f8] sm:$0xff]
    %v766 = vld [vmem:[%s0 + $0x1700] sm:$0xff]
    %v767 = vld [vmem:[%s0 + $0x1708] sm:$0xff]
    %v768 = vld [vmem:[%s0 + $0x1710] sm:$0xff]
    %v769 = vld [vmem:[%s0 + $0x1718] sm:$0xff]
    %v770 = vld [vmem:[%s0 + $0x1720] sm:$0xff]
    %v771 = vld [vmem:[%s0 + $0x1728] sm:$0xff]
    %v772 = vld [vmem:[%s0 + $0x1730] sm:$0xff]
    %v773 = vld [vmem:[%s0 + $0x1738] sm:$0xff]
    %v774 = vld [vmem:[%s0 + $0x1740] sm:$0xff]
    %v775 = vld [vmem:[%s0 + $0x1748] sm:$0xff]
    %v776 = vld [vmem:[%s0 + $0x1750] sm:$0xff]
    %v777 = vld [vmem:[%s0 + $0x1758] sm:$0xff]
    %v778 = vld [vmem:[%s0 + $0x1760] sm:$0xff]
    %v779 = vld [vmem:[%s0 + $0x1768] sm:$0xff]
    %v780 = vld [vmem:[%s0 + $0x1770] sm:$0xff]
    %v781 = vld [vmem:[%s0 + $0x1778] sm:$0xff]
    %v782 = vld [vmem:[%s0 + $0x1780] sm:$0xff]
    %v783 = vld [vmem:[%s0 + $0x1788] sm:$0xff]
    %v784 = vld [vmem:[%s0 + $0x1790] sm:$0xff]
    %v785 = vld [vmem:[%s0 + $0x1798] sm:$0xff]
    %v786 = vld [vmem:[%s0 + $0x17a0] sm:$0xff]
    %v787 = vld [vmem:[%s0 + $0x17a8] sm:$0xff]
    %v788 = vld [vmem:[%s0 + $0x17b0] sm:$0xff]
    %v789 = vld [vmem:[%s0 + $0x17b8] sm:$0xff]
    %v790 = vld [vmem:[%s0 + $0x17c0] sm:$0xff]
    %v791 = vld [vmem:[%s0 + $0x17c8] sm:$0xff]
    %v792 = vld [vmem:[%s0 + $0x17d0] sm:$0xff]
    %v793 = vld [vmem:[%s0 + $0x17d8] sm:$0xff]
    %v794 = vld [vmem:[%s0 + $0x17e0] sm:$0xff]
    %v795 = vld [vmem:[%s0 + $0x17e8] sm:$0xff]
    %v796 = vld [vmem:[%s0 + $0x17f0] sm:$0xff]
    %v797 = vld [vmem:[%s0 + $0x17f8] sm:$0xff]
    %v1566 = vcombine.low %v30, %v36
    %v1567 = vcombine.high %v30, %v36
    %v1568 = vcombine.low %v42, %v48
    %v1569 = vcombine.high %v42, %v48
    %v1571 = vunpack.c.l.s4 1983009808
    %v1572 = vunpack.c.0.s8 %v1571
    %v1573 = vlaneseq
    %v1574 = vshrl.u32 %v1573, 7
    %v1575 = vsub.s32 %v1572, %v1574
    %v1576 = vrot.slane %v1566, %v1575
    %v1578 = vunpack.c.l.s4 1983009808
    %v1579 = vunpack.c.0.s8 %v1578
    %v1580 = vlaneseq
    %v1581 = vshrl.u32 %v1580, 7
    %v1582 = vsub.s32 %v1579, %v1581
    %v1583 = vrot.slane %v1567, %v1582
    %v1585 = vunpack.c.l.s4 1983009808
    %v1586 = vunpack.c.0.s8 %v1585
    %v1587 = vlaneseq
    %v1588 = vshrl.u32 %v1587, 7
    %v1589 = vsub.s32 %v1586, %v1588
    %v1590 = vrot.slane %v1568, %v1589
    %v1592 = vunpack.c.l.s4 1983009808
    %v1593 = vunpack.c.0.s8 %v1592
    %v1594 = vlaneseq
    %v1595 = vshrl.u32 %v1594, 7
    %v1596 = vsub.s32 %v1593, %v1595
    %v1597 = vrot.slane %v1569, %v1596
    %v1598 = vcombine.low %v1576, %v1590
    %v1599 = vcombine.high %v1576, %v1590
    %v1600 = vcombine.low %v1583, %v1597
    %v1601 = vcombine.high %v1583, %v1597
    %v1602 = vcombine.low %v31, %v37
    %v1603 = vcombine.high %v31, %v37
    %v1604 = vcombine.low %v43, %v49
    %v1605 = vcombine.high %v43, %v49
    %v1607 = vunpack.c.l.s4 1983009808
    %v1608 = vunpack.c.0.s8 %v1607
    %v1609 = vlaneseq
    %v1610 = vshrl.u32 %v1609, 7
    %v1611 = vsub.s32 %v1608, %v1610
    %v1612 = vrot.slane %v1602, %v1611
    %v1614 = vunpack.c.l.s4 1983009808
    %v1615 = vunpack.c.0.s8 %v1614
    %v1616 = vlaneseq
    %v1617 = vshrl.u32 %v1616, 7
    %v1618 = vsub.s32 %v1615, %v1617
    %v1619 = vrot.slane %v1603, %v1618
    %v1621 = vunpack.c.l.s4 1983009808
    %v1622 = vunpack.c.0.s8 %v1621
    %v1623 = vlaneseq
    %v1624 = vshrl.u32 %v1623, 7
    %v1625 = vsub.s32 %v1622, %v1624
    %v1626 = vrot.slane %v1604, %v1625
    %v1628 = vunpack.c.l.s4 1983009808
    %v1629 = vunpack.c.0.s8 %v1628
    %v1630 = vlaneseq
    %v1631 = vshrl.u32 %v1630, 7
    %v1632 = vsub.s32 %v1629, %v1631
    %v1633 = vrot.slane %v1605, %v1632
    %v1634 = vcombine.low %v1612, %v1626
    %v1635 = vcombine.high %v1612, %v1626
    %v1636 = vcombine.low %v1619, %v1633
    %v1637 = vcombine.high %v1619, %v1633
    %v1638 = vcombine.low %v32, %v38
    %v1639 = vcombine.high %v32, %v38
    %v1640 = vcombine.low %v44, %v50
    %v1641 = vcombine.high %v44, %v50
    %v1643 = vunpack.c.l.s4 1983009808
    %v1644 = vunpack.c.0.s8 %v1643
    %v1645 = vlaneseq
    %v1646 = vshrl.u32 %v1645, 7
    %v1647 = vsub.s32 %v1644, %v1646
    %v1648 = vrot.slane %v1638, %v1647
    %v1650 = vunpack.c.l.s4 1983009808
    %v1651 = vunpack.c.0.s8 %v1650
    %v1652 = vlaneseq
    %v1653 = vshrl.u32 %v1652, 7
    %v1654 = vsub.s32 %v1651, %v1653
    %v1655 = vrot.slane %v1639, %v1654
    %v1657 = vunpack.c.l.s4 1983009808
    %v1658 = vunpack.c.0.s8 %v1657
    %v1659 = vlaneseq
    %v1660 = vshrl.u32 %v1659, 7
    %v1661 = vsub.s32 %v1658, %v1660
    %v1662 = vrot.slane %v1640, %v1661
    %v1664 = vunpack.c.l.s4 1983009808
    %v1665 = vunpack.c.0.s8 %v1664
    %v1666 = vlaneseq
    %v1667 = vshrl.u32 %v1666, 7
    %v1668 = vsub.s32 %v1665, %v1667
    %v1669 = vrot.slane %v1641, %v1668
    %v1670 = vcombine.low %v1648, %v1662
    %v1671 = vcombine.high %v1648, %v1662
    %v1672 = vcombine.low %v1655, %v1669
    %v1673 = vcombine.high %v1655, %v1669
    %v1674 = vcombine.low %v33, %v39
    %v1675 = vcombine.high %v33, %v39
    %v1676 = vcombine.low %v45, %v51
    %v1677 = vcombine.high %v45, %v51
    %v1679 = vunpack.c.l.s4 1983009808
    %v1680 = vunpack.c.0.s8 %v1679
    %v1681 = vlaneseq
    %v1682 = vshrl.u32 %v1681, 7
    %v1683 = vsub.s32 %v1680, %v1682
    %v1684 = vrot.slane %v1674, %v1683
    %v1686 = vunpack.c.l.s4 1983009808
    %v1687 = vunpack.c.0.s8 %v1686
    %v1688 = vlaneseq
    %v1689 = vshrl.u32 %v1688, 7
    %v1690 = vsub.s32 %v1687, %v1689
    %v1691 = vrot.slane %v1675, %v1690
    %v1693 = vunpack.c.l.s4 1983009808
    %v1694 = vunpack.c.0.s8 %v1693
    %v1695 = vlaneseq
    %v1696 = vshrl.u32 %v1695, 7
    %v1697 = vsub.s32 %v1694, %v1696
    %v1698 = vrot.slane %v1676, %v1697
    %v1700 = vunpack.c.l.s4 1983009808
    %v1701 = vunpack.c.0.s8 %v1700
    %v1702 = vlaneseq
    %v1703 = vshrl.u32 %v1702, 7
    %v1704 = vsub.s32 %v1701, %v1703
    %v1705 = vrot.slane %v1677, %v1704
    %v1706 = vcombine.low %v1684, %v1698
    %v1707 = vcombine.high %v1684, %v1698
    %v1708 = vcombine.low %v1691, %v1705
    %v1709 = vcombine.high %v1691, %v1705
    %v1710 = vcombine.low %v34, %v40
    %v1711 = vcombine.high %v34, %v40
    %v1712 = vcombine.low %v46, %v52
    %v1713 = vcombine.high %v46, %v52
    %v1715 = vunpack.c.l.s4 1983009808
    %v1716 = vunpack.c.0.s8 %v1715
    %v1717 = vlaneseq
    %v1718 = vshrl.u32 %v1717, 7
    %v1719 = vsub.s32 %v1716, %v1718
    %v1720 = vrot.slane %v1710, %v1719
    %v1722 = vunpack.c.l.s4 1983009808
    %v1723 = vunpack.c.0.s8 %v1722
    %v1724 = vlaneseq
    %v1725 = vshrl.u32 %v1724, 7
    %v1726 = vsub.s32 %v1723, %v1725
    %v1727 = vrot.slane %v1711, %v1726
    %v1729 = vunpack.c.l.s4 1983009808
    %v1730 = vunpack.c.0.s8 %v1729
    %v1731 = vlaneseq
    %v1732 = vshrl.u32 %v1731, 7
    %v1733 = vsub.s32 %v1730, %v1732
    %v1734 = vrot.slane %v1712, %v1733
    %v1736 = vunpack.c.l.s4 1983009808
    %v1737 = vunpack.c.0.s8 %v1736
    %v1738 = vlaneseq
    %v1739 = vshrl.u32 %v1738, 7
    %v1740 = vsub.s32 %v1737, %v1739
    %v1741 = vrot.slane %v1713, %v1740
    %v1742 = vcombine.low %v1720, %v1734
    %v1743 = vcombine.high %v1720, %v1734
    %v1744 = vcombine.low %v1727, %v1741
    %v1745 = vcombine.high %v1727, %v1741
    %v1746 = vcombine.low %v35, %v41
    %v1747 = vcombine.high %v35, %v41
    %v1748 = vcombine.low %v47, %v53
    %v1749 = vcombine.high %v47, %v53
    %v1751 = vunpack.c.l.s4 1983009808
    %v1752 = vunpack.c.0.s8 %v1751
    %v1753 = vlaneseq
    %v1754 = vshrl.u32 %v1753, 7
    %v1755 = vsub.s32 %v1752, %v1754
    %v1756 = vrot.slane %v1746, %v1755
    %v1758 = vunpack.c.l.s4 1983009808
    %v1759 = vunpack.c.0.s8 %v1758
    %v1760 = vlaneseq
    %v1761 = vshrl.u32 %v1760, 7
    %v1762 = vsub.s32 %v1759, %v1761
    %v1763 = vrot.slane %v1747, %v1762
    %v1765 = vunpack.c.l.s4 1983009808
    %v1766 = vunpack.c.0.s8 %v1765
    %v1767 = vlaneseq
    %v1768 = vshrl.u32 %v1767, 7
    %v1769 = vsub.s32 %v1766, %v1768
    %v1770 = vrot.slane %v1748, %v1769
    %v1772 = vunpack.c.l.s4 1983009808
    %v1773 = vunpack.c.0.s8 %v1772
    %v1774 = vlaneseq
    %v1775 = vshrl.u32 %v1774, 7
    %v1776 = vsub.s32 %v1773, %v1775
    %v1777 = vrot.slane %v1749, %v1776
    %v1778 = vcombine.low %v1756, %v1770
    %v1779 = vcombine.high %v1756, %v1770
    %v1780 = vcombine.low %v1763, %v1777
    %v1781 = vcombine.high %v1763, %v1777
    %v1782 = vcombine.low %v54, %v60
    %v1783 = vcombine.high %v54, %v60
    %v1784 = vcombine.low %v66, %v72
    %v1785 = vcombine.high %v66, %v72
    %v1787 = vunpack.c.l.s4 1983009808
    %v1788 = vunpack.c.0.s8 %v1787
    %v1789 = vlaneseq
    %v1790 = vshrl.u32 %v1789, 7
    %v1791 = vsub.s32 %v1788, %v1790
    %v1792 = vrot.slane %v1782, %v1791
    %v1794 = vunpack.c.l.s4 1983009808
    %v1795 = vunpack.c.0.s8 %v1794
    %v1796 = vlaneseq
    %v1797 = vshrl.u32 %v1796, 7
    %v1798 = vsub.s32 %v1795, %v1797
    %v1799 = vrot.slane %v1783, %v1798
    %v1801 = vunpack.c.l.s4 1983009808
    %v1802 = vunpack.c.0.s8 %v1801
    %v1803 = vlaneseq
    %v1804 = vshrl.u32 %v1803, 7
    %v1805 = vsub.s32 %v1802, %v1804
    %v1806 = vrot.slane %v1784, %v1805
    %v1808 = vunpack.c.l.s4 1983009808
    %v1809 = vunpack.c.0.s8 %v1808
    %v1810 = vlaneseq
    %v1811 = vshrl.u32 %v1810, 7
    %v1812 = vsub.s32 %v1809, %v1811
    %v1813 = vrot.slane %v1785, %v1812
    %v1814 = vcombine.low %v1792, %v1806
    %v1815 = vcombine.high %v1792, %v1806
    %v1816 = vcombine.low %v1799, %v1813
    %v1817 = vcombine.high %v1799, %v1813
    %v1818 = vcombine.low %v55, %v61
    %v1819 = vcombine.high %v55, %v61
    %v1820 = vcombine.low %v67, %v73
    %v1821 = vcombine.high %v67, %v73
    %v1823 = vunpack.c.l.s4 1983009808
    %v1824 = vunpack.c.0.s8 %v1823
    %v1825 = vlaneseq
    %v1826 = vshrl.u32 %v1825, 7
    %v1827 = vsub.s32 %v1824, %v1826
    %v1828 = vrot.slane %v1818, %v1827
    %v1830 = vunpack.c.l.s4 1983009808
    %v1831 = vunpack.c.0.s8 %v1830
    %v1832 = vlaneseq
    %v1833 = vshrl.u32 %v1832, 7
    %v1834 = vsub.s32 %v1831, %v1833
    %v1835 = vrot.slane %v1819, %v1834
    %v1837 = vunpack.c.l.s4 1983009808
    %v1838 = vunpack.c.0.s8 %v1837
    %v1839 = vlaneseq
    %v1840 = vshrl.u32 %v1839, 7
    %v1841 = vsub.s32 %v1838, %v1840
    %v1842 = vrot.slane %v1820, %v1841
    %v1844 = vunpack.c.l.s4 1983009808
    %v1845 = vunpack.c.0.s8 %v1844
    %v1846 = vlaneseq
    %v1847 = vshrl.u32 %v1846, 7
    %v1848 = vsub.s32 %v1845, %v1847
    %v1849 = vrot.slane %v1821, %v1848
    %v1850 = vcombine.low %v1828, %v1842
    %v1851 = vcombine.high %v1828, %v1842
    %v1852 = vcombine.low %v1835, %v1849
    %v1853 = vcombine.high %v1835, %v1849
    %v1854 = vcombine.low %v56, %v62
    %v1855 = vcombine.high %v56, %v62
    %v1856 = vcombine.low %v68, %v74
    %v1857 = vcombine.high %v68, %v74
    %v1859 = vunpack.c.l.s4 1983009808
    %v1860 = vunpack.c.0.s8 %v1859
    %v1861 = vlaneseq
    %v1862 = vshrl.u32 %v1861, 7
    %v1863 = vsub.s32 %v1860, %v1862
    %v1864 = vrot.slane %v1854, %v1863
    %v1866 = vunpack.c.l.s4 1983009808
    %v1867 = vunpack.c.0.s8 %v1866
    %v1868 = vlaneseq
    %v1869 = vshrl.u32 %v1868, 7
    %v1870 = vsub.s32 %v1867, %v1869
    %v1871 = vrot.slane %v1855, %v1870
    %v1873 = vunpack.c.l.s4 1983009808
    %v1874 = vunpack.c.0.s8 %v1873
    %v1875 = vlaneseq
    %v1876 = vshrl.u32 %v1875, 7
    %v1877 = vsub.s32 %v1874, %v1876
    %v1878 = vrot.slane %v1856, %v1877
    %v1880 = vunpack.c.l.s4 1983009808
    %v1881 = vunpack.c.0.s8 %v1880
    %v1882 = vlaneseq
    %v1883 = vshrl.u32 %v1882, 7
    %v1884 = vsub.s32 %v1881, %v1883
    %v1885 = vrot.slane %v1857, %v1884
    %v1886 = vcombine.low %v1864, %v1878
    %v1887 = vcombine.high %v1864, %v1878
    %v1888 = vcombine.low %v1871, %v1885
    %v1889 = vcombine.high %v1871, %v1885
    %v1890 = vcombine.low %v57, %v63
    %v1891 = vcombine.high %v57, %v63
    %v1892 = vcombine.low %v69, %v75
    %v1893 = vcombine.high %v69, %v75
    %v1895 = vunpack.c.l.s4 1983009808
    %v1896 = vunpack.c.0.s8 %v1895
    %v1897 = vlaneseq
    %v1898 = vshrl.u32 %v1897, 7
    %v1899 = vsub.s32 %v1896, %v1898
    %v1900 = vrot.slane %v1890, %v1899
    %v1902 = vunpack.c.l.s4 1983009808
    %v1903 = vunpack.c.0.s8 %v1902
    %v1904 = vlaneseq
    %v1905 = vshrl.u32 %v1904, 7
    %v1906 = vsub.s32 %v1903, %v1905
    %v1907 = vrot.slane %v1891, %v1906
    %v1909 = vunpack.c.l.s4 1983009808
    %v1910 = vunpack.c.0.s8 %v1909
    %v1911 = vlaneseq
    %v1912 = vshrl.u32 %v1911, 7
    %v1913 = vsub.s32 %v1910, %v1912
    %v1914 = vrot.slane %v1892, %v1913
    %v1916 = vunpack.c.l.s4 1983009808
    %v1917 = vunpack.c.0.s8 %v1916
    %v1918 = vlaneseq
    %v1919 = vshrl.u32 %v1918, 7
    %v1920 = vsub.s32 %v1917, %v1919
    %v1921 = vrot.slane %v1893, %v1920
    %v1922 = vcombine.low %v1900, %v1914
    %v1923 = vcombine.high %v1900, %v1914
    %v1924 = vcombine.low %v1907, %v1921
    %v1925 = vcombine.high %v1907, %v1921
    %v1926 = vcombine.low %v58, %v64
    %v1927 = vcombine.high %v58, %v64
    %v1928 = vcombine.low %v70, %v76
    %v1929 = vcombine.high %v70, %v76
    %v1931 = vunpack.c.l.s4 1983009808
    %v1932 = vunpack.c.0.s8 %v1931
    %v1933 = vlaneseq
    %v1934 = vshrl.u32 %v1933, 7
    %v1935 = vsub.s32 %v1932, %v1934
    %v1936 = vrot.slane %v1926, %v1935
    %v1938 = vunpack.c.l.s4 1983009808
    %v1939 = vunpack.c.0.s8 %v1938
    %v1940 = vlaneseq
    %v1941 = vshrl.u32 %v1940, 7
    %v1942 = vsub.s32 %v1939, %v1941
    %v1943 = vrot.slane %v1927, %v1942
    %v1945 = vunpack.c.l.s4 1983009808
    %v1946 = vunpack.c.0.s8 %v1945
    %v1947 = vlaneseq
    %v1948 = vshrl.u32 %v1947, 7
    %v1949 = vsub.s32 %v1946, %v1948
    %v1950 = vrot.slane %v1928, %v1949
    %v1952 = vunpack.c.l.s4 1983009808
    %v1953 = vunpack.c.0.s8 %v1952
    %v1954 = vlaneseq
    %v1955 = vshrl.u32 %v1954, 7
    %v1956 = vsub.s32 %v1953, %v1955
    %v1957 = vrot.slane %v1929, %v1956
    %v1958 = vcombine.low %v1936, %v1950
    %v1959 = vcombine.high %v1936, %v1950
    %v1960 = vcombine.low %v1943, %v1957
    %v1961 = vcombine.high %v1943, %v1957
    %v1962 = vcombine.low %v59, %v65
    %v1963 = vcombine.high %v59, %v65
    %v1964 = vcombine.low %v71, %v77
    %v1965 = vcombine.high %v71, %v77
    %v1967 = vunpack.c.l.s4 1983009808
    %v1968 = vunpack.c.0.s8 %v1967
    %v1969 = vlaneseq
    %v1970 = vshrl.u32 %v1969, 7
    %v1971 = vsub.s32 %v1968, %v1970
    %v1972 = vrot.slane %v1962, %v1971
    %v1974 = vunpack.c.l.s4 1983009808
    %v1975 = vunpack.c.0.s8 %v1974
    %v1976 = vlaneseq
    %v1977 = vshrl.u32 %v1976, 7
    %v1978 = vsub.s32 %v1975, %v1977
    %v1979 = vrot.slane %v1963, %v1978
    %v1981 = vunpack.c.l.s4 1983009808
    %v1982 = vunpack.c.0.s8 %v1981
    %v1983 = vlaneseq
    %v1984 = vshrl.u32 %v1983, 7
    %v1985 = vsub.s32 %v1982, %v1984
    %v1986 = vrot.slane %v1964, %v1985
    %v1988 = vunpack.c.l.s4 1983009808
    %v1989 = vunpack.c.0.s8 %v1988
    %v1990 = vlaneseq
    %v1991 = vshrl.u32 %v1990, 7
    %v1992 = vsub.s32 %v1989, %v1991
    %v1993 = vrot.slane %v1965, %v1992
    %v1994 = vcombine.low %v1972, %v1986
    %v1995 = vcombine.high %v1972, %v1986
    %v1996 = vcombine.low %v1979, %v1993
    %v1997 = vcombine.high %v1979, %v1993
    %v1998 = vcombine.low %v78, %v84
    %v1999 = vcombine.high %v78, %v84
    %v2000 = vcombine.low %v90, %v96
    %v2001 = vcombine.high %v90, %v96
    %v2003 = vunpack.c.l.s4 1983009808
    %v2004 = vunpack.c.0.s8 %v2003
    %v2005 = vlaneseq
    %v2006 = vshrl.u32 %v2005, 7
    %v2007 = vsub.s32 %v2004, %v2006
    %v2008 = vrot.slane %v1998, %v2007
    %v2010 = vunpack.c.l.s4 1983009808
    %v2011 = vunpack.c.0.s8 %v2010
    %v2012 = vlaneseq
    %v2013 = vshrl.u32 %v2012, 7
    %v2014 = vsub.s32 %v2011, %v2013
    %v2015 = vrot.slane %v1999, %v2014
    %v2017 = vunpack.c.l.s4 1983009808
    %v2018 = vunpack.c.0.s8 %v2017
    %v2019 = vlaneseq
    %v2020 = vshrl.u32 %v2019, 7
    %v2021 = vsub.s32 %v2018, %v2020
    %v2022 = vrot.slane %v2000, %v2021
    %v2024 = vunpack.c.l.s4 1983009808
    %v2025 = vunpack.c.0.s8 %v2024
    %v2026 = vlaneseq
    %v2027 = vshrl.u32 %v2026, 7
    %v2028 = vsub.s32 %v2025, %v2027
    %v2029 = vrot.slane %v2001, %v2028
    %v2030 = vcombine.low %v2008, %v2022
    %v2031 = vcombine.high %v2008, %v2022
    %v2032 = vcombine.low %v2015, %v2029
    %v2033 = vcombine.high %v2015, %v2029
    %v2034 = vcombine.low %v79, %v85
    %v2035 = vcombine.high %v79, %v85
    %v2036 = vcombine.low %v91, %v97
    %v2037 = vcombine.high %v91, %v97
    %v2039 = vunpack.c.l.s4 1983009808
    %v2040 = vunpack.c.0.s8 %v2039
    %v2041 = vlaneseq
    %v2042 = vshrl.u32 %v2041, 7
    %v2043 = vsub.s32 %v2040, %v2042
    %v2044 = vrot.slane %v2034, %v2043
    %v2046 = vunpack.c.l.s4 1983009808
    %v2047 = vunpack.c.0.s8 %v2046
    %v2048 = vlaneseq
    %v2049 = vshrl.u32 %v2048, 7
    %v2050 = vsub.s32 %v2047, %v2049
    %v2051 = vrot.slane %v2035, %v2050
    %v2053 = vunpack.c.l.s4 1983009808
    %v2054 = vunpack.c.0.s8 %v2053
    %v2055 = vlaneseq
    %v2056 = vshrl.u32 %v2055, 7
    %v2057 = vsub.s32 %v2054, %v2056
    %v2058 = vrot.slane %v2036, %v2057
    %v2060 = vunpack.c.l.s4 1983009808
    %v2061 = vunpack.c.0.s8 %v2060
    %v2062 = vlaneseq
    %v2063 = vshrl.u32 %v2062, 7
    %v2064 = vsub.s32 %v2061, %v2063
    %v2065 = vrot.slane %v2037, %v2064
    %v2066 = vcombine.low %v2044, %v2058
    %v2067 = vcombine.high %v2044, %v2058
    %v2068 = vcombine.low %v2051, %v2065
    %v2069 = vcombine.high %v2051, %v2065
    %v2070 = vcombine.low %v80, %v86
    %v2071 = vcombine.high %v80, %v86
    %v2072 = vcombine.low %v92, %v98
    %v2073 = vcombine.high %v92, %v98
    %v2075 = vunpack.c.l.s4 1983009808
    %v2076 = vunpack.c.0.s8 %v2075
    %v2077 = vlaneseq
    %v2078 = vshrl.u32 %v2077, 7
    %v2079 = vsub.s32 %v2076, %v2078
    %v2080 = vrot.slane %v2070, %v2079
    %v2082 = vunpack.c.l.s4 1983009808
    %v2083 = vunpack.c.0.s8 %v2082
    %v2084 = vlaneseq
    %v2085 = vshrl.u32 %v2084, 7
    %v2086 = vsub.s32 %v2083, %v2085
    %v2087 = vrot.slane %v2071, %v2086
    %v2089 = vunpack.c.l.s4 1983009808
    %v2090 = vunpack.c.0.s8 %v2089
    %v2091 = vlaneseq
    %v2092 = vshrl.u32 %v2091, 7
    %v2093 = vsub.s32 %v2090, %v2092
    %v2094 = vrot.slane %v2072, %v2093
    %v2096 = vunpack.c.l.s4 1983009808
    %v2097 = vunpack.c.0.s8 %v2096
    %v2098 = vlaneseq
    %v2099 = vshrl.u32 %v2098, 7
    %v2100 = vsub.s32 %v2097, %v2099
    %v2101 = vrot.slane %v2073, %v2100
    %v2102 = vcombine.low %v2080, %v2094
    %v2103 = vcombine.high %v2080, %v2094
    %v2104 = vcombine.low %v2087, %v2101
    %v2105 = vcombine.high %v2087, %v2101
    %v2106 = vcombine.low %v81, %v87
    %v2107 = vcombine.high %v81, %v87
    %v2108 = vcombine.low %v93, %v99
    %v2109 = vcombine.high %v93, %v99
    %v2111 = vunpack.c.l.s4 1983009808
    %v2112 = vunpack.c.0.s8 %v2111
    %v2113 = vlaneseq
    %v2114 = vshrl.u32 %v2113, 7
    %v2115 = vsub.s32 %v2112, %v2114
    %v2116 = vrot.slane %v2106, %v2115
    %v2118 = vunpack.c.l.s4 1983009808
    %v2119 = vunpack.c.0.s8 %v2118
    %v2120 = vlaneseq
    %v2121 = vshrl.u32 %v2120, 7
    %v2122 = vsub.s32 %v2119, %v2121
    %v2123 = vrot.slane %v2107, %v2122
    %v2125 = vunpack.c.l.s4 1983009808
    %v2126 = vunpack.c.0.s8 %v2125
    %v2127 = vlaneseq
    %v2128 = vshrl.u32 %v2127, 7
    %v2129 = vsub.s32 %v2126, %v2128
    %v2130 = vrot.slane %v2108, %v2129
    %v2132 = vunpack.c.l.s4 1983009808
    %v2133 = vunpack.c.0.s8 %v2132
    %v2134 = vlaneseq
    %v2135 = vshrl.u32 %v2134, 7
    %v2136 = vsub.s32 %v2133, %v2135
    %v2137 = vrot.slane %v2109, %v2136
    %v2138 = vcombine.low %v2116, %v2130
    %v2139 = vcombine.high %v2116, %v2130
    %v2140 = vcombine.low %v2123, %v2137
    %v2141 = vcombine.high %v2123, %v2137
    %v2142 = vcombine.low %v82, %v88
    %v2143 = vcombine.high %v82, %v88
    %v2144 = vcombine.low %v94, %v100
    %v2145 = vcombine.high %v94, %v100
    %v2147 = vunpack.c.l.s4 1983009808
    %v2148 = vunpack.c.0.s8 %v2147
    %v2149 = vlaneseq
    %v2150 = vshrl.u32 %v2149, 7
    %v2151 = vsub.s32 %v2148, %v2150
    %v2152 = vrot.slane %v2142, %v2151
    %v2154 = vunpack.c.l.s4 1983009808
    %v2155 = vunpack.c.0.s8 %v2154
    %v2156 = vlaneseq
    %v2157 = vshrl.u32 %v2156, 7
    %v2158 = vsub.s32 %v2155, %v2157
    %v2159 = vrot.slane %v2143, %v2158
    %v2161 = vunpack.c.l.s4 1983009808
    %v2162 = vunpack.c.0.s8 %v2161
    %v2163 = vlaneseq
    %v2164 = vshrl.u32 %v2163, 7
    %v2165 = vsub.s32 %v2162, %v2164
    %v2166 = vrot.slane %v2144, %v2165
    %v2168 = vunpack.c.l.s4 1983009808
    %v2169 = vunpack.c.0.s8 %v2168
    %v2170 = vlaneseq
    %v2171 = vshrl.u32 %v2170, 7
    %v2172 = vsub.s32 %v2169, %v2171
    %v2173 = vrot.slane %v2145, %v2172
    %v2174 = vcombine.low %v2152, %v2166
    %v2175 = vcombine.high %v2152, %v2166
    %v2176 = vcombine.low %v2159, %v2173
    %v2177 = vcombine.high %v2159, %v2173
    %v2178 = vcombine.low %v83, %v89
    %v2179 = vcombine.high %v83, %v89
    %v2180 = vcombine.low %v95, %v101
    %v2181 = vcombine.high %v95, %v101
    %v2183 = vunpack.c.l.s4 1983009808
    %v2184 = vunpack.c.0.s8 %v2183
    %v2185 = vlaneseq
    %v2186 = vshrl.u32 %v2185, 7
    %v2187 = vsub.s32 %v2184, %v2186
    %v2188 = vrot.slane %v2178, %v2187
    %v2190 = vunpack.c.l.s4 1983009808
    %v2191 = vunpack.c.0.s8 %v2190
    %v2192 = vlaneseq
    %v2193 = vshrl.u32 %v2192, 7
    %v2194 = vsub.s32 %v2191, %v2193
    %v2195 = vrot.slane %v2179, %v2194
    %v2197 = vunpack.c.l.s4 1983009808
    %v2198 = vunpack.c.0.s8 %v2197
    %v2199 = vlaneseq
    %v2200 = vshrl.u32 %v2199, 7
    %v2201 = vsub.s32 %v2198, %v2200
    %v2202 = vrot.slane %v2180, %v2201
    %v2204 = vunpack.c.l.s4 1983009808
    %v2205 = vunpack.c.0.s8 %v2204
    %v2206 = vlaneseq
    %v2207 = vshrl.u32 %v2206, 7
    %v2208 = vsub.s32 %v2205, %v2207
    %v2209 = vrot.slane %v2181, %v2208
    %v2210 = vcombine.low %v2188, %v2202
    %v2211 = vcombine.high %v2188, %v2202
    %v2212 = vcombine.low %v2195, %v2209
    %v2213 = vcombine.high %v2195, %v2209
    %v2214 = vcombine.low %v102, %v108
    %v2215 = vcombine.high %v102, %v108
    %v2216 = vcombine.low %v114, %v120
    %v2217 = vcombine.high %v114, %v120
    %v2219 = vunpack.c.l.s4 1983009808
    %v2220 = vunpack.c.0.s8 %v2219
    %v2221 = vlaneseq
    %v2222 = vshrl.u32 %v2221, 7
    %v2223 = vsub.s32 %v2220, %v2222
    %v2224 = vrot.slane %v2214, %v2223
    %v2226 = vunpack.c.l.s4 1983009808
    %v2227 = vunpack.c.0.s8 %v2226
    %v2228 = vlaneseq
    %v2229 = vshrl.u32 %v2228, 7
    %v2230 = vsub.s32 %v2227, %v2229
    %v2231 = vrot.slane %v2215, %v2230
    %v2233 = vunpack.c.l.s4 1983009808
    %v2234 = vunpack.c.0.s8 %v2233
    %v2235 = vlaneseq
    %v2236 = vshrl.u32 %v2235, 7
    %v2237 = vsub.s32 %v2234, %v2236
    %v2238 = vrot.slane %v2216, %v2237
    %v2240 = vunpack.c.l.s4 1983009808
    %v2241 = vunpack.c.0.s8 %v2240
    %v2242 = vlaneseq
    %v2243 = vshrl.u32 %v2242, 7
    %v2244 = vsub.s32 %v2241, %v2243
    %v2245 = vrot.slane %v2217, %v2244
    %v2246 = vcombine.low %v2224, %v2238
    %v2247 = vcombine.high %v2224, %v2238
    %v2248 = vcombine.low %v2231, %v2245
    %v2249 = vcombine.high %v2231, %v2245
    %v2250 = vcombine.low %v103, %v109
    %v2251 = vcombine.high %v103, %v109
    %v2252 = vcombine.low %v115, %v121
    %v2253 = vcombine.high %v115, %v121
    %v2255 = vunpack.c.l.s4 1983009808
    %v2256 = vunpack.c.0.s8 %v2255
    %v2257 = vlaneseq
    %v2258 = vshrl.u32 %v2257, 7
    %v2259 = vsub.s32 %v2256, %v2258
    %v2260 = vrot.slane %v2250, %v2259
    %v2262 = vunpack.c.l.s4 1983009808
    %v2263 = vunpack.c.0.s8 %v2262
    %v2264 = vlaneseq
    %v2265 = vshrl.u32 %v2264, 7
    %v2266 = vsub.s32 %v2263, %v2265
    %v2267 = vrot.slane %v2251, %v2266
    %v2269 = vunpack.c.l.s4 1983009808
    %v2270 = vunpack.c.0.s8 %v2269
    %v2271 = vlaneseq
    %v2272 = vshrl.u32 %v2271, 7
    %v2273 = vsub.s32 %v2270, %v2272
    %v2274 = vrot.slane %v2252, %v2273
    %v2276 = vunpack.c.l.s4 1983009808
    %v2277 = vunpack.c.0.s8 %v2276
    %v2278 = vlaneseq
    %v2279 = vshrl.u32 %v2278, 7
    %v2280 = vsub.s32 %v2277, %v2279
    %v2281 = vrot.slane %v2253, %v2280
    %v2282 = vcombine.low %v2260, %v2274
    %v2283 = vcombine.high %v2260, %v2274
    %v2284 = vcombine.low %v2267, %v2281
    %v2285 = vcombine.high %v2267, %v2281
    %v2286 = vcombine.low %v104, %v110
    %v2287 = vcombine.high %v104, %v110
    %v2288 = vcombine.low %v116, %v122
    %v2289 = vcombine.high %v116, %v122
    %v2291 = vunpack.c.l.s4 1983009808
    %v2292 = vunpack.c.0.s8 %v2291
    %v2293 = vlaneseq
    %v2294 = vshrl.u32 %v2293, 7
    %v2295 = vsub.s32 %v2292, %v2294
    %v2296 = vrot.slane %v2286, %v2295
    %v2298 = vunpack.c.l.s4 1983009808
    %v2299 = vunpack.c.0.s8 %v2298
    %v2300 = vlaneseq
    %v2301 = vshrl.u32 %v2300, 7
    %v2302 = vsub.s32 %v2299, %v2301
    %v2303 = vrot.slane %v2287, %v2302
    %v2305 = vunpack.c.l.s4 1983009808
    %v2306 = vunpack.c.0.s8 %v2305
    %v2307 = vlaneseq
    %v2308 = vshrl.u32 %v2307, 7
    %v2309 = vsub.s32 %v2306, %v2308
    %v2310 = vrot.slane %v2288, %v2309
    %v2312 = vunpack.c.l.s4 1983009808
    %v2313 = vunpack.c.0.s8 %v2312
    %v2314 = vlaneseq
    %v2315 = vshrl.u32 %v2314, 7
    %v2316 = vsub.s32 %v2313, %v2315
    %v2317 = vrot.slane %v2289, %v2316
    %v2318 = vcombine.low %v2296, %v2310
    %v2319 = vcombine.high %v2296, %v2310
    %v2320 = vcombine.low %v2303, %v2317
    %v2321 = vcombine.high %v2303, %v2317
    %v2322 = vcombine.low %v105, %v111
    %v2323 = vcombine.high %v105, %v111
    %v2324 = vcombine.low %v117, %v123
    %v2325 = vcombine.high %v117, %v123
    %v2327 = vunpack.c.l.s4 1983009808
    %v2328 = vunpack.c.0.s8 %v2327
    %v2329 = vlaneseq
    %v2330 = vshrl.u32 %v2329, 7
    %v2331 = vsub.s32 %v2328, %v2330
    %v2332 = vrot.slane %v2322, %v2331
    %v2334 = vunpack.c.l.s4 1983009808
    %v2335 = vunpack.c.0.s8 %v2334
    %v2336 = vlaneseq
    %v2337 = vshrl.u32 %v2336, 7
    %v2338 = vsub.s32 %v2335, %v2337
    %v2339 = vrot.slane %v2323, %v2338
    %v2341 = vunpack.c.l.s4 1983009808
    %v2342 = vunpack.c.0.s8 %v2341
    %v2343 = vlaneseq
    %v2344 = vshrl.u32 %v2343, 7
    %v2345 = vsub.s32 %v2342, %v2344
    %v2346 = vrot.slane %v2324, %v2345
    %v2348 = vunpack.c.l.s4 1983009808
    %v2349 = vunpack.c.0.s8 %v2348
    %v2350 = vlaneseq
    %v2351 = vshrl.u32 %v2350, 7
    %v2352 = vsub.s32 %v2349, %v2351
    %v2353 = vrot.slane %v2325, %v2352
    %v2354 = vcombine.low %v2332, %v2346
    %v2355 = vcombine.high %v2332, %v2346
    %v2356 = vcombine.low %v2339, %v2353
    %v2357 = vcombine.high %v2339, %v2353
    %v2358 = vcombine.low %v106, %v112
    %v2359 = vcombine.high %v106, %v112
    %v2360 = vcombine.low %v118, %v124
    %v2361 = vcombine.high %v118, %v124
    %v2363 = vunpack.c.l.s4 1983009808
    %v2364 = vunpack.c.0.s8 %v2363
    %v2365 = vlaneseq
    %v2366 = vshrl.u32 %v2365, 7
    %v2367 = vsub.s32 %v2364, %v2366
    %v2368 = vrot.slane %v2358, %v2367
    %v2370 = vunpack.c.l.s4 1983009808
    %v2371 = vunpack.c.0.s8 %v2370
    %v2372 = vlaneseq
    %v2373 = vshrl.u32 %v2372, 7
    %v2374 = vsub.s32 %v2371, %v2373
    %v2375 = vrot.slane %v2359, %v2374
    %v2377 = vunpack.c.l.s4 1983009808
    %v2378 = vunpack.c.0.s8 %v2377
    %v2379 = vlaneseq
    %v2380 = vshrl.u32 %v2379, 7
    %v2381 = vsub.s32 %v2378, %v2380
    %v2382 = vrot.slane %v2360, %v2381
    %v2384 = vunpack.c.l.s4 1983009808
    %v2385 = vunpack.c.0.s8 %v2384
    %v2386 = vlaneseq
    %v2387 = vshrl.u32 %v2386, 7
    %v2388 = vsub.s32 %v2385, %v2387
    %v2389 = vrot.slane %v2361, %v2388
    %v2390 = vcombine.low %v2368, %v2382
    %v2391 = vcombine.high %v2368, %v2382
    %v2392 = vcombine.low %v2375, %v2389
    %v2393 = vcombine.high %v2375, %v2389
    %v2394 = vcombine.low %v107, %v113
    %v2395 = vcombine.high %v107, %v113
    %v2396 = vcombine.low %v119, %v125
    %v2397 = vcombine.high %v119, %v125
    %v2399 = vunpack.c.l.s4 1983009808
    %v2400 = vunpack.c.0.s8 %v2399
    %v2401 = vlaneseq
    %v2402 = vshrl.u32 %v2401, 7
    %v2403 = vsub.s32 %v2400, %v2402
    %v2404 = vrot.slane %v2394, %v2403
    %v2406 = vunpack.c.l.s4 1983009808
    %v2407 = vunpack.c.0.s8 %v2406
    %v2408 = vlaneseq
    %v2409 = vshrl.u32 %v2408, 7
    %v2410 = vsub.s32 %v2407, %v2409
    %v2411 = vrot.slane %v2395, %v2410
    %v2413 = vunpack.c.l.s4 1983009808
    %v2414 = vunpack.c.0.s8 %v2413
    %v2415 = vlaneseq
    %v2416 = vshrl.u32 %v2415, 7
    %v2417 = vsub.s32 %v2414, %v2416
    %v2418 = vrot.slane %v2396, %v2417
    %v2420 = vunpack.c.l.s4 1983009808
    %v2421 = vunpack.c.0.s8 %v2420
    %v2422 = vlaneseq
    %v2423 = vshrl.u32 %v2422, 7
    %v2424 = vsub.s32 %v2421, %v2423
    %v2425 = vrot.slane %v2397, %v2424
    %v2426 = vcombine.low %v2404, %v2418
    %v2427 = vcombine.high %v2404, %v2418
    %v2428 = vcombine.low %v2411, %v2425
    %v2429 = vcombine.high %v2411, %v2425
    %v2430 = vcombine.low %v126, %v132
    %v2431 = vcombine.high %v126, %v132
    %v2432 = vcombine.low %v138, %v144
    %v2433 = vcombine.high %v138, %v144
    %v2435 = vunpack.c.l.s4 1983009808
    %v2436 = vunpack.c.0.s8 %v2435
    %v2437 = vlaneseq
    %v2438 = vshrl.u32 %v2437, 7
    %v2439 = vsub.s32 %v2436, %v2438
    %v2440 = vrot.slane %v2430, %v2439
    %v2442 = vunpack.c.l.s4 1983009808
    %v2443 = vunpack.c.0.s8 %v2442
    %v2444 = vlaneseq
    %v2445 = vshrl.u32 %v2444, 7
    %v2446 = vsub.s32 %v2443, %v2445
    %v2447 = vrot.slane %v2431, %v2446
    %v2449 = vunpack.c.l.s4 1983009808
    %v2450 = vunpack.c.0.s8 %v2449
    %v2451 = vlaneseq
    %v2452 = vshrl.u32 %v2451, 7
    %v2453 = vsub.s32 %v2450, %v2452
    %v2454 = vrot.slane %v2432, %v2453
    %v2456 = vunpack.c.l.s4 1983009808
    %v2457 = vunpack.c.0.s8 %v2456
    %v2458 = vlaneseq
    %v2459 = vshrl.u32 %v2458, 7
    %v2460 = vsub.s32 %v2457, %v2459
    %v2461 = vrot.slane %v2433, %v2460
    %v2462 = vcombine.low %v2440, %v2454
    %v2463 = vcombine.high %v2440, %v2454
    %v2464 = vcombine.low %v2447, %v2461
    %v2465 = vcombine.high %v2447, %v2461
    %v2466 = vcombine.low %v127, %v133
    %v2467 = vcombine.high %v127, %v133
    %v2468 = vcombine.low %v139, %v145
    %v2469 = vcombine.high %v139, %v145
    %v2471 = vunpack.c.l.s4 1983009808
    %v2472 = vunpack.c.0.s8 %v2471
    %v2473 = vlaneseq
    %v2474 = vshrl.u32 %v2473, 7
    %v2475 = vsub.s32 %v2472, %v2474
    %v2476 = vrot.slane %v2466, %v2475
    %v2478 = vunpack.c.l.s4 1983009808
    %v2479 = vunpack.c.0.s8 %v2478
    %v2480 = vlaneseq
    %v2481 = vshrl.u32 %v2480, 7
    %v2482 = vsub.s32 %v2479, %v2481
    %v2483 = vrot.slane %v2467, %v2482
    %v2485 = vunpack.c.l.s4 1983009808
    %v2486 = vunpack.c.0.s8 %v2485
    %v2487 = vlaneseq
    %v2488 = vshrl.u32 %v2487, 7
    %v2489 = vsub.s32 %v2486, %v2488
    %v2490 = vrot.slane %v2468, %v2489
    %v2492 = vunpack.c.l.s4 1983009808
    %v2493 = vunpack.c.0.s8 %v2492
    %v2494 = vlaneseq
    %v2495 = vshrl.u32 %v2494, 7
    %v2496 = vsub.s32 %v2493, %v2495
    %v2497 = vrot.slane %v2469, %v2496
    %v2498 = vcombine.low %v2476, %v2490
    %v2499 = vcombine.high %v2476, %v2490
    %v2500 = vcombine.low %v2483, %v2497
    %v2501 = vcombine.high %v2483, %v2497
    %v2502 = vcombine.low %v128, %v134
    %v2503 = vcombine.high %v128, %v134
    %v2504 = vcombine.low %v140, %v146
    %v2505 = vcombine.high %v140, %v146
    %v2507 = vunpack.c.l.s4 1983009808
    %v2508 = vunpack.c.0.s8 %v2507
    %v2509 = vlaneseq
    %v2510 = vshrl.u32 %v2509, 7
    %v2511 = vsub.s32 %v2508, %v2510
    %v2512 = vrot.slane %v2502, %v2511
    %v2514 = vunpack.c.l.s4 1983009808
    %v2515 = vunpack.c.0.s8 %v2514
    %v2516 = vlaneseq
    %v2517 = vshrl.u32 %v2516, 7
    %v2518 = vsub.s32 %v2515, %v2517
    %v2519 = vrot.slane %v2503, %v2518
    %v2521 = vunpack.c.l.s4 1983009808
    %v2522 = vunpack.c.0.s8 %v2521
    %v2523 = vlaneseq
    %v2524 = vshrl.u32 %v2523, 7
    %v2525 = vsub.s32 %v2522, %v2524
    %v2526 = vrot.slane %v2504, %v2525
    %v2528 = vunpack.c.l.s4 1983009808
    %v2529 = vunpack.c.0.s8 %v2528
    %v2530 = vlaneseq
    %v2531 = vshrl.u32 %v2530, 7
    %v2532 = vsub.s32 %v2529, %v2531
    %v2533 = vrot.slane %v2505, %v2532
    %v2534 = vcombine.low %v2512, %v2526
    %v2535 = vcombine.high %v2512, %v2526
    %v2536 = vcombine.low %v2519, %v2533
    %v2537 = vcombine.high %v2519, %v2533
    %v2538 = vcombine.low %v129, %v135
    %v2539 = vcombine.high %v129, %v135
    %v2540 = vcombine.low %v141, %v147
    %v2541 = vcombine.high %v141, %v147
    %v2543 = vunpack.c.l.s4 1983009808
    %v2544 = vunpack.c.0.s8 %v2543
    %v2545 = vlaneseq
    %v2546 = vshrl.u32 %v2545, 7
    %v2547 = vsub.s32 %v2544, %v2546
    %v2548 = vrot.slane %v2538, %v2547
    %v2550 = vunpack.c.l.s4 1983009808
    %v2551 = vunpack.c.0.s8 %v2550
    %v2552 = vlaneseq
    %v2553 = vshrl.u32 %v2552, 7
    %v2554 = vsub.s32 %v2551, %v2553
    %v2555 = vrot.slane %v2539, %v2554
    %v2557 = vunpack.c.l.s4 1983009808
    %v2558 = vunpack.c.0.s8 %v2557
    %v2559 = vlaneseq
    %v2560 = vshrl.u32 %v2559, 7
    %v2561 = vsub.s32 %v2558, %v2560
    %v2562 = vrot.slane %v2540, %v2561
    %v2564 = vunpack.c.l.s4 1983009808
    %v2565 = vunpack.c.0.s8 %v2564
    %v2566 = vlaneseq
    %v2567 = vshrl.u32 %v2566, 7
    %v2568 = vsub.s32 %v2565, %v2567
    %v2569 = vrot.slane %v2541, %v2568
    %v2570 = vcombine.low %v2548, %v2562
    %v2571 = vcombine.high %v2548, %v2562
    %v2572 = vcombine.low %v2555, %v2569
    %v2573 = vcombine.high %v2555, %v2569
    %v2574 = vcombine.low %v130, %v136
    %v2575 = vcombine.high %v130, %v136
    %v2576 = vcombine.low %v142, %v148
    %v2577 = vcombine.high %v142, %v148
    %v2579 = vunpack.c.l.s4 1983009808
    %v2580 = vunpack.c.0.s8 %v2579
    %v2581 = vlaneseq
    %v2582 = vshrl.u32 %v2581, 7
    %v2583 = vsub.s32 %v2580, %v2582
    %v2584 = vrot.slane %v2574, %v2583
    %v2586 = vunpack.c.l.s4 1983009808
    %v2587 = vunpack.c.0.s8 %v2586
    %v2588 = vlaneseq
    %v2589 = vshrl.u32 %v2588, 7
    %v2590 = vsub.s32 %v2587, %v2589
    %v2591 = vrot.slane %v2575, %v2590
    %v2593 = vunpack.c.l.s4 1983009808
    %v2594 = vunpack.c.0.s8 %v2593
    %v2595 = vlaneseq
    %v2596 = vshrl.u32 %v2595, 7
    %v2597 = vsub.s32 %v2594, %v2596
    %v2598 = vrot.slane %v2576, %v2597
    %v2600 = vunpack.c.l.s4 1983009808
    %v2601 = vunpack.c.0.s8 %v2600
    %v2602 = vlaneseq
    %v2603 = vshrl.u32 %v2602, 7
    %v2604 = vsub.s32 %v2601, %v2603
    %v2605 = vrot.slane %v2577, %v2604
    %v2606 = vcombine.low %v2584, %v2598
    %v2607 = vcombine.high %v2584, %v2598
    %v2608 = vcombine.low %v2591, %v2605
    %v2609 = vcombine.high %v2591, %v2605
    %v2610 = vcombine.low %v131, %v137
    %v2611 = vcombine.high %v131, %v137
    %v2612 = vcombine.low %v143, %v149
    %v2613 = vcombine.high %v143, %v149
    %v2615 = vunpack.c.l.s4 1983009808
    %v2616 = vunpack.c.0.s8 %v2615
    %v2617 = vlaneseq
    %v2618 = vshrl.u32 %v2617, 7
    %v2619 = vsub.s32 %v2616, %v2618
    %v2620 = vrot.slane %v2610, %v2619
    %v2622 = vunpack.c.l.s4 1983009808
    %v2623 = vunpack.c.0.s8 %v2622
    %v2624 = vlaneseq
    %v2625 = vshrl.u32 %v2624, 7
    %v2626 = vsub.s32 %v2623, %v2625
    %v2627 = vrot.slane %v2611, %v2626
    %v2629 = vunpack.c.l.s4 1983009808
    %v2630 = vunpack.c.0.s8 %v2629
    %v2631 = vlaneseq
    %v2632 = vshrl.u32 %v2631, 7
    %v2633 = vsub.s32 %v2630, %v2632
    %v2634 = vrot.slane %v2612, %v2633
    %v2636 = vunpack.c.l.s4 1983009808
    %v2637 = vunpack.c.0.s8 %v2636
    %v2638 = vlaneseq
    %v2639 = vshrl.u32 %v2638, 7
    %v2640 = vsub.s32 %v2637, %v2639
    %v2641 = vrot.slane %v2613, %v2640
    %v2642 = vcombine.low %v2620, %v2634
    %v2643 = vcombine.high %v2620, %v2634
    %v2644 = vcombine.low %v2627, %v2641
    %v2645 = vcombine.high %v2627, %v2641
    %v2646 = vcombine.low %v150, %v156
    %v2647 = vcombine.high %v150, %v156
    %v2648 = vcombine.low %v162, %v168
    %v2649 = vcombine.high %v162, %v168
    %v2651 = vunpack.c.l.s4 1983009808
    %v2652 = vunpack.c.0.s8 %v2651
    %v2653 = vlaneseq
    %v2654 = vshrl.u32 %v2653, 7
    %v2655 = vsub.s32 %v2652, %v2654
    %v2656 = vrot.slane %v2646, %v2655
    %v2658 = vunpack.c.l.s4 1983009808
    %v2659 = vunpack.c.0.s8 %v2658
    %v2660 = vlaneseq
    %v2661 = vshrl.u32 %v2660, 7
    %v2662 = vsub.s32 %v2659, %v2661
    %v2663 = vrot.slane %v2647, %v2662
    %v2665 = vunpack.c.l.s4 1983009808
    %v2666 = vunpack.c.0.s8 %v2665
    %v2667 = vlaneseq
    %v2668 = vshrl.u32 %v2667, 7
    %v2669 = vsub.s32 %v2666, %v2668
    %v2670 = vrot.slane %v2648, %v2669
    %v2672 = vunpack.c.l.s4 1983009808
    %v2673 = vunpack.c.0.s8 %v2672
    %v2674 = vlaneseq
    %v2675 = vshrl.u32 %v2674, 7
    %v2676 = vsub.s32 %v2673, %v2675
    %v2677 = vrot.slane %v2649, %v2676
    %v2678 = vcombine.low %v2656, %v2670
    %v2679 = vcombine.high %v2656, %v2670
    %v2680 = vcombine.low %v2663, %v2677
    %v2681 = vcombine.high %v2663, %v2677
    %v2682 = vcombine.low %v151, %v157
    %v2683 = vcombine.high %v151, %v157
    %v2684 = vcombine.low %v163, %v169
    %v2685 = vcombine.high %v163, %v169
    %v2687 = vunpack.c.l.s4 1983009808
    %v2688 = vunpack.c.0.s8 %v2687
    %v2689 = vlaneseq
    %v2690 = vshrl.u32 %v2689, 7
    %v2691 = vsub.s32 %v2688, %v2690
    %v2692 = vrot.slane %v2682, %v2691
    %v2694 = vunpack.c.l.s4 1983009808
    %v2695 = vunpack.c.0.s8 %v2694
    %v2696 = vlaneseq
    %v2697 = vshrl.u32 %v2696, 7
    %v2698 = vsub.s32 %v2695, %v2697
    %v2699 = vrot.slane %v2683, %v2698
    %v2701 = vunpack.c.l.s4 1983009808
    %v2702 = vunpack.c.0.s8 %v2701
    %v2703 = vlaneseq
    %v2704 = vshrl.u32 %v2703, 7
    %v2705 = vsub.s32 %v2702, %v2704
    %v2706 = vrot.slane %v2684, %v2705
    %v2708 = vunpack.c.l.s4 1983009808
    %v2709 = vunpack.c.0.s8 %v2708
    %v2710 = vlaneseq
    %v2711 = vshrl.u32 %v2710, 7
    %v2712 = vsub.s32 %v2709, %v2711
    %v2713 = vrot.slane %v2685, %v2712
    %v2714 = vcombine.low %v2692, %v2706
    %v2715 = vcombine.high %v2692, %v2706
    %v2716 = vcombine.low %v2699, %v2713
    %v2717 = vcombine.high %v2699, %v2713
    %v2718 = vcombine.low %v152, %v158
    %v2719 = vcombine.high %v152, %v158
    %v2720 = vcombine.low %v164, %v170
    %v2721 = vcombine.high %v164, %v170
    %v2723 = vunpack.c.l.s4 1983009808
    %v2724 = vunpack.c.0.s8 %v2723
    %v2725 = vlaneseq
    %v2726 = vshrl.u32 %v2725, 7
    %v2727 = vsub.s32 %v2724, %v2726
    %v2728 = vrot.slane %v2718, %v2727
    %v2730 = vunpack.c.l.s4 1983009808
    %v2731 = vunpack.c.0.s8 %v2730
    %v2732 = vlaneseq
    %v2733 = vshrl.u32 %v2732, 7
    %v2734 = vsub.s32 %v2731, %v2733
    %v2735 = vrot.slane %v2719, %v2734
    %v2737 = vunpack.c.l.s4 1983009808
    %v2738 = vunpack.c.0.s8 %v2737
    %v2739 = vlaneseq
    %v2740 = vshrl.u32 %v2739, 7
    %v2741 = vsub.s32 %v2738, %v2740
    %v2742 = vrot.slane %v2720, %v2741
    %v2744 = vunpack.c.l.s4 1983009808
    %v2745 = vunpack.c.0.s8 %v2744
    %v2746 = vlaneseq
    %v2747 = vshrl.u32 %v2746, 7
    %v2748 = vsub.s32 %v2745, %v2747
    %v2749 = vrot.slane %v2721, %v2748
    %v2750 = vcombine.low %v2728, %v2742
    %v2751 = vcombine.high %v2728, %v2742
    %v2752 = vcombine.low %v2735, %v2749
    %v2753 = vcombine.high %v2735, %v2749
    %v2754 = vcombine.low %v153, %v159
    %v2755 = vcombine.high %v153, %v159
    %v2756 = vcombine.low %v165, %v171
    %v2757 = vcombine.high %v165, %v171
    %v2759 = vunpack.c.l.s4 1983009808
    %v2760 = vunpack.c.0.s8 %v2759
    %v2761 = vlaneseq
    %v2762 = vshrl.u32 %v2761, 7
    %v2763 = vsub.s32 %v2760, %v2762
    %v2764 = vrot.slane %v2754, %v2763
    %v2766 = vunpack.c.l.s4 1983009808
    %v2767 = vunpack.c.0.s8 %v2766
    %v2768 = vlaneseq
    %v2769 = vshrl.u32 %v2768, 7
    %v2770 = vsub.s32 %v2767, %v2769
    %v2771 = vrot.slane %v2755, %v2770
    %v2773 = vunpack.c.l.s4 1983009808
    %v2774 = vunpack.c.0.s8 %v2773
    %v2775 = vlaneseq
    %v2776 = vshrl.u32 %v2775, 7
    %v2777 = vsub.s32 %v2774, %v2776
    %v2778 = vrot.slane %v2756, %v2777
    %v2780 = vunpack.c.l.s4 1983009808
    %v2781 = vunpack.c.0.s8 %v2780
    %v2782 = vlaneseq
    %v2783 = vshrl.u32 %v2782, 7
    %v2784 = vsub.s32 %v2781, %v2783
    %v2785 = vrot.slane %v2757, %v2784
    %v2786 = vcombine.low %v2764, %v2778
    %v2787 = vcombine.high %v2764, %v2778
    %v2788 = vcombine.low %v2771, %v2785
    %v2789 = vcombine.high %v2771, %v2785
    %v2790 = vcombine.low %v154, %v160
    %v2791 = vcombine.high %v154, %v160
    %v2792 = vcombine.low %v166, %v172
    %v2793 = vcombine.high %v166, %v172
    %v2795 = vunpack.c.l.s4 1983009808
    %v2796 = vunpack.c.0.s8 %v2795
    %v2797 = vlaneseq
    %v2798 = vshrl.u32 %v2797, 7
    %v2799 = vsub.s32 %v2796, %v2798
    %v2800 = vrot.slane %v2790, %v2799
    %v2802 = vunpack.c.l.s4 1983009808
    %v2803 = vunpack.c.0.s8 %v2802
    %v2804 = vlaneseq
    %v2805 = vshrl.u32 %v2804, 7
    %v2806 = vsub.s32 %v2803, %v2805
    %v2807 = vrot.slane %v2791, %v2806
    %v2809 = vunpack.c.l.s4 1983009808
    %v2810 = vunpack.c.0.s8 %v2809
    %v2811 = vlaneseq
    %v2812 = vshrl.u32 %v2811, 7
    %v2813 = vsub.s32 %v2810, %v2812
    %v2814 = vrot.slane %v2792, %v2813
    %v2816 = vunpack.c.l.s4 1983009808
    %v2817 = vunpack.c.0.s8 %v2816
    %v2818 = vlaneseq
    %v2819 = vshrl.u32 %v2818, 7
    %v2820 = vsub.s32 %v2817, %v2819
    %v2821 = vrot.slane %v2793, %v2820
    %v2822 = vcombine.low %v2800, %v2814
    %v2823 = vcombine.high %v2800, %v2814
    %v2824 = vcombine.low %v2807, %v2821
    %v2825 = vcombine.high %v2807, %v2821
    %v2826 = vcombine.low %v155, %v161
    %v2827 = vcombine.high %v155, %v161
    %v2828 = vcombine.low %v167, %v173
    %v2829 = vcombine.high %v167, %v173
    %v2831 = vunpack.c.l.s4 1983009808
    %v2832 = vunpack.c.0.s8 %v2831
    %v2833 = vlaneseq
    %v2834 = vshrl.u32 %v2833, 7
    %v2835 = vsub.s32 %v2832, %v2834
    %v2836 = vrot.slane %v2826, %v2835
    %v2838 = vunpack.c.l.s4 1983009808
    %v2839 = vunpack.c.0.s8 %v2838
    %v2840 = vlaneseq
    %v2841 = vshrl.u32 %v2840, 7
    %v2842 = vsub.s32 %v2839, %v2841
    %v2843 = vrot.slane %v2827, %v2842
    %v2845 = vunpack.c.l.s4 1983009808
    %v2846 = vunpack.c.0.s8 %v2845
    %v2847 = vlaneseq
    %v2848 = vshrl.u32 %v2847, 7
    %v2849 = vsub.s32 %v2846, %v2848
    %v2850 = vrot.slane %v2828, %v2849
    %v2852 = vunpack.c.l.s4 1983009808
    %v2853 = vunpack.c.0.s8 %v2852
    %v2854 = vlaneseq
    %v2855 = vshrl.u32 %v2854, 7
    %v2856 = vsub.s32 %v2853, %v2855
    %v2857 = vrot.slane %v2829, %v2856
    %v2858 = vcombine.low %v2836, %v2850
    %v2859 = vcombine.high %v2836, %v2850
    %v2860 = vcombine.low %v2843, %v2857
    %v2861 = vcombine.high %v2843, %v2857
    %v2862 = vcombine.low %v174, %v180
    %v2863 = vcombine.high %v174, %v180
    %v2864 = vcombine.low %v186, %v192
    %v2865 = vcombine.high %v186, %v192
    %v2867 = vunpack.c.l.s4 1983009808
    %v2868 = vunpack.c.0.s8 %v2867
    %v2869 = vlaneseq
    %v2870 = vshrl.u32 %v2869, 7
    %v2871 = vsub.s32 %v2868, %v2870
    %v2872 = vrot.slane %v2862, %v2871
    %v2874 = vunpack.c.l.s4 1983009808
    %v2875 = vunpack.c.0.s8 %v2874
    %v2876 = vlaneseq
    %v2877 = vshrl.u32 %v2876, 7
    %v2878 = vsub.s32 %v2875, %v2877
    %v2879 = vrot.slane %v2863, %v2878
    %v2881 = vunpack.c.l.s4 1983009808
    %v2882 = vunpack.c.0.s8 %v2881
    %v2883 = vlaneseq
    %v2884 = vshrl.u32 %v2883, 7
    %v2885 = vsub.s32 %v2882, %v2884
    %v2886 = vrot.slane %v2864, %v2885
    %v2888 = vunpack.c.l.s4 1983009808
    %v2889 = vunpack.c.0.s8 %v2888
    %v2890 = vlaneseq
    %v2891 = vshrl.u32 %v2890, 7
    %v2892 = vsub.s32 %v2889, %v2891
    %v2893 = vrot.slane %v2865, %v2892
    %v2894 = vcombine.low %v2872, %v2886
    %v2895 = vcombine.high %v2872, %v2886
    %v2896 = vcombine.low %v2879, %v2893
    %v2897 = vcombine.high %v2879, %v2893
    %v2898 = vcombine.low %v175, %v181
    %v2899 = vcombine.high %v175, %v181
    %v2900 = vcombine.low %v187, %v193
    %v2901 = vcombine.high %v187, %v193
    %v2903 = vunpack.c.l.s4 1983009808
    %v2904 = vunpack.c.0.s8 %v2903
    %v2905 = vlaneseq
    %v2906 = vshrl.u32 %v2905, 7
    %v2907 = vsub.s32 %v2904, %v2906
    %v2908 = vrot.slane %v2898, %v2907
    %v2910 = vunpack.c.l.s4 1983009808
    %v2911 = vunpack.c.0.s8 %v2910
    %v2912 = vlaneseq
    %v2913 = vshrl.u32 %v2912, 7
    %v2914 = vsub.s32 %v2911, %v2913
    %v2915 = vrot.slane %v2899, %v2914
    %v2917 = vunpack.c.l.s4 1983009808
    %v2918 = vunpack.c.0.s8 %v2917
    %v2919 = vlaneseq
    %v2920 = vshrl.u32 %v2919, 7
    %v2921 = vsub.s32 %v2918, %v2920
    %v2922 = vrot.slane %v2900, %v2921
    %v2924 = vunpack.c.l.s4 1983009808
    %v2925 = vunpack.c.0.s8 %v2924
    %v2926 = vlaneseq
    %v2927 = vshrl.u32 %v2926, 7
    %v2928 = vsub.s32 %v2925, %v2927
    %v2929 = vrot.slane %v2901, %v2928
    %v2930 = vcombine.low %v2908, %v2922
    %v2931 = vcombine.high %v2908, %v2922
    %v2932 = vcombine.low %v2915, %v2929
    %v2933 = vcombine.high %v2915, %v2929
    %v2934 = vcombine.low %v176, %v182
    %v2935 = vcombine.high %v176, %v182
    %v2936 = vcombine.low %v188, %v194
    %v2937 = vcombine.high %v188, %v194
    %v2939 = vunpack.c.l.s4 1983009808
    %v2940 = vunpack.c.0.s8 %v2939
    %v2941 = vlaneseq
    %v2942 = vshrl.u32 %v2941, 7
    %v2943 = vsub.s32 %v2940, %v2942
    %v2944 = vrot.slane %v2934, %v2943
    %v2946 = vunpack.c.l.s4 1983009808
    %v2947 = vunpack.c.0.s8 %v2946
    %v2948 = vlaneseq
    %v2949 = vshrl.u32 %v2948, 7
    %v2950 = vsub.s32 %v2947, %v2949
    %v2951 = vrot.slane %v2935, %v2950
    %v2953 = vunpack.c.l.s4 1983009808
    %v2954 = vunpack.c.0.s8 %v2953
    %v2955 = vlaneseq
    %v2956 = vshrl.u32 %v2955, 7
    %v2957 = vsub.s32 %v2954, %v2956
    %v2958 = vrot.slane %v2936, %v2957
    %v2960 = vunpack.c.l.s4 1983009808
    %v2961 = vunpack.c.0.s8 %v2960
    %v2962 = vlaneseq
    %v2963 = vshrl.u32 %v2962, 7
    %v2964 = vsub.s32 %v2961, %v2963
    %v2965 = vrot.slane %v2937, %v2964
    %v2966 = vcombine.low %v2944, %v2958
    %v2967 = vcombine.high %v2944, %v2958
    %v2968 = vcombine.low %v2951, %v2965
    %v2969 = vcombine.high %v2951, %v2965
    %v2970 = vcombine.low %v177, %v183
    %v2971 = vcombine.high %v177, %v183
    %v2972 = vcombine.low %v189, %v195
    %v2973 = vcombine.high %v189, %v195
    %v2975 = vunpack.c.l.s4 1983009808
    %v2976 = vunpack.c.0.s8 %v2975
    %v2977 = vlaneseq
    %v2978 = vshrl.u32 %v2977, 7
    %v2979 = vsub.s32 %v2976, %v2978
    %v2980 = vrot.slane %v2970, %v2979
    %v2982 = vunpack.c.l.s4 1983009808
    %v2983 = vunpack.c.0.s8 %v2982
    %v2984 = vlaneseq
    %v2985 = vshrl.u32 %v2984, 7
    %v2986 = vsub.s32 %v2983, %v2985
    %v2987 = vrot.slane %v2971, %v2986
    %v2989 = vunpack.c.l.s4 1983009808
    %v2990 = vunpack.c.0.s8 %v2989
    %v2991 = vlaneseq
    %v2992 = vshrl.u32 %v2991, 7
    %v2993 = vsub.s32 %v2990, %v2992
    %v2994 = vrot.slane %v2972, %v2993
    %v2996 = vunpack.c.l.s4 1983009808
    %v2997 = vunpack.c.0.s8 %v2996
    %v2998 = vlaneseq
    %v2999 = vshrl.u32 %v2998, 7
    %v3000 = vsub.s32 %v2997, %v2999
    %v3001 = vrot.slane %v2973, %v3000
    %v3002 = vcombine.low %v2980, %v2994
    %v3003 = vcombine.high %v2980, %v2994
    %v3004 = vcombine.low %v2987, %v3001
    %v3005 = vcombine.high %v2987, %v3001
    %v3006 = vcombine.low %v178, %v184
    %v3007 = vcombine.high %v178, %v184
    %v3008 = vcombine.low %v190, %v196
    %v3009 = vcombine.high %v190, %v196
    %v3011 = vunpack.c.l.s4 1983009808
    %v3012 = vunpack.c.0.s8 %v3011
    %v3013 = vlaneseq
    %v3014 = vshrl.u32 %v3013, 7
    %v3015 = vsub.s32 %v3012, %v3014
    %v3016 = vrot.slane %v3006, %v3015
    %v3018 = vunpack.c.l.s4 1983009808
    %v3019 = vunpack.c.0.s8 %v3018
    %v3020 = vlaneseq
    %v3021 = vshrl.u32 %v3020, 7
    %v3022 = vsub.s32 %v3019, %v3021
    %v3023 = vrot.slane %v3007, %v3022
    %v3025 = vunpack.c.l.s4 1983009808
    %v3026 = vunpack.c.0.s8 %v3025
    %v3027 = vlaneseq
    %v3028 = vshrl.u32 %v3027, 7
    %v3029 = vsub.s32 %v3026, %v3028
    %v3030 = vrot.slane %v3008, %v3029
    %v3032 = vunpack.c.l.s4 1983009808
    %v3033 = vunpack.c.0.s8 %v3032
    %v3034 = vlaneseq
    %v3035 = vshrl.u32 %v3034, 7
    %v3036 = vsub.s32 %v3033, %v3035
    %v3037 = vrot.slane %v3009, %v3036
    %v3038 = vcombine.low %v3016, %v3030
    %v3039 = vcombine.high %v3016, %v3030
    %v3040 = vcombine.low %v3023, %v3037
    %v3041 = vcombine.high %v3023, %v3037
    %v3042 = vcombine.low %v179, %v185
    %v3043 = vcombine.high %v179, %v185
    %v3044 = vcombine.low %v191, %v197
    %v3045 = vcombine.high %v191, %v197
    %v3047 = vunpack.c.l.s4 1983009808
    %v3048 = vunpack.c.0.s8 %v3047
    %v3049 = vlaneseq
    %v3050 = vshrl.u32 %v3049, 7
    %v3051 = vsub.s32 %v3048, %v3050
    %v3052 = vrot.slane %v3042, %v3051
    %v3054 = vunpack.c.l.s4 1983009808
    %v3055 = vunpack.c.0.s8 %v3054
    %v3056 = vlaneseq
    %v3057 = vshrl.u32 %v3056, 7
    %v3058 = vsub.s32 %v3055, %v3057
    %v3059 = vrot.slane %v3043, %v3058
    %v3061 = vunpack.c.l.s4 1983009808
    %v3062 = vunpack.c.0.s8 %v3061
    %v3063 = vlaneseq
    %v3064 = vshrl.u32 %v3063, 7
    %v3065 = vsub.s32 %v3062, %v3064
    %v3066 = vrot.slane %v3044, %v3065
    %v3068 = vunpack.c.l.s4 1983009808
    %v3069 = vunpack.c.0.s8 %v3068
    %v3070 = vlaneseq
    %v3071 = vshrl.u32 %v3070, 7
    %v3072 = vsub.s32 %v3069, %v3071
    %v3073 = vrot.slane %v3045, %v3072
    %v3074 = vcombine.low %v3052, %v3066
    %v3075 = vcombine.high %v3052, %v3066
    %v3076 = vcombine.low %v3059, %v3073
    %v3077 = vcombine.high %v3059, %v3073
    %v3078 = vcombine.low %v198, %v204
    %v3079 = vcombine.high %v198, %v204
    %v3080 = vcombine.low %v210, %v216
    %v3081 = vcombine.high %v210, %v216
    %v3083 = vunpack.c.l.s4 1983009808
    %v3084 = vunpack.c.0.s8 %v3083
    %v3085 = vlaneseq
    %v3086 = vshrl.u32 %v3085, 7
    %v3087 = vsub.s32 %v3084, %v3086
    %v3088 = vrot.slane %v3078, %v3087
    %v3090 = vunpack.c.l.s4 1983009808
    %v3091 = vunpack.c.0.s8 %v3090
    %v3092 = vlaneseq
    %v3093 = vshrl.u32 %v3092, 7
    %v3094 = vsub.s32 %v3091, %v3093
    %v3095 = vrot.slane %v3079, %v3094
    %v3097 = vunpack.c.l.s4 1983009808
    %v3098 = vunpack.c.0.s8 %v3097
    %v3099 = vlaneseq
    %v3100 = vshrl.u32 %v3099, 7
    %v3101 = vsub.s32 %v3098, %v3100
    %v3102 = vrot.slane %v3080, %v3101
    %v3104 = vunpack.c.l.s4 1983009808
    %v3105 = vunpack.c.0.s8 %v3104
    %v3106 = vlaneseq
    %v3107 = vshrl.u32 %v3106, 7
    %v3108 = vsub.s32 %v3105, %v3107
    %v3109 = vrot.slane %v3081, %v3108
    %v3110 = vcombine.low %v3088, %v3102
    %v3111 = vcombine.high %v3088, %v3102
    %v3112 = vcombine.low %v3095, %v3109
    %v3113 = vcombine.high %v3095, %v3109
    %v3114 = vcombine.low %v199, %v205
    %v3115 = vcombine.high %v199, %v205
    %v3116 = vcombine.low %v211, %v217
    %v3117 = vcombine.high %v211, %v217
    %v3119 = vunpack.c.l.s4 1983009808
    %v3120 = vunpack.c.0.s8 %v3119
    %v3121 = vlaneseq
    %v3122 = vshrl.u32 %v3121, 7
    %v3123 = vsub.s32 %v3120, %v3122
    %v3124 = vrot.slane %v3114, %v3123
    %v3126 = vunpack.c.l.s4 1983009808
    %v3127 = vunpack.c.0.s8 %v3126
    %v3128 = vlaneseq
    %v3129 = vshrl.u32 %v3128, 7
    %v3130 = vsub.s32 %v3127, %v3129
    %v3131 = vrot.slane %v3115, %v3130
    %v3133 = vunpack.c.l.s4 1983009808
    %v3134 = vunpack.c.0.s8 %v3133
    %v3135 = vlaneseq
    %v3136 = vshrl.u32 %v3135, 7
    %v3137 = vsub.s32 %v3134, %v3136
    %v3138 = vrot.slane %v3116, %v3137
    %v3140 = vunpack.c.l.s4 1983009808
    %v3141 = vunpack.c.0.s8 %v3140
    %v3142 = vlaneseq
    %v3143 = vshrl.u32 %v3142, 7
    %v3144 = vsub.s32 %v3141, %v3143
    %v3145 = vrot.slane %v3117, %v3144
    %v3146 = vcombine.low %v3124, %v3138
    %v3147 = vcombine.high %v3124, %v3138
    %v3148 = vcombine.low %v3131, %v3145
    %v3149 = vcombine.high %v3131, %v3145
    %v3150 = vcombine.low %v200, %v206
    %v3151 = vcombine.high %v200, %v206
    %v3152 = vcombine.low %v212, %v218
    %v3153 = vcombine.high %v212, %v218
    %v3155 = vunpack.c.l.s4 1983009808
    %v3156 = vunpack.c.0.s8 %v3155
    %v3157 = vlaneseq
    %v3158 = vshrl.u32 %v3157, 7
    %v3159 = vsub.s32 %v3156, %v3158
    %v3160 = vrot.slane %v3150, %v3159
    %v3162 = vunpack.c.l.s4 1983009808
    %v3163 = vunpack.c.0.s8 %v3162
    %v3164 = vlaneseq
    %v3165 = vshrl.u32 %v3164, 7
    %v3166 = vsub.s32 %v3163, %v3165
    %v3167 = vrot.slane %v3151, %v3166
    %v3169 = vunpack.c.l.s4 1983009808
    %v3170 = vunpack.c.0.s8 %v3169
    %v3171 = vlaneseq
    %v3172 = vshrl.u32 %v3171, 7
    %v3173 = vsub.s32 %v3170, %v3172
    %v3174 = vrot.slane %v3152, %v3173
    %v3176 = vunpack.c.l.s4 1983009808
    %v3177 = vunpack.c.0.s8 %v3176
    %v3178 = vlaneseq
    %v3179 = vshrl.u32 %v3178, 7
    %v3180 = vsub.s32 %v3177, %v3179
    %v3181 = vrot.slane %v3153, %v3180
    %v3182 = vcombine.low %v3160, %v3174
    %v3183 = vcombine.high %v3160, %v3174
    %v3184 = vcombine.low %v3167, %v3181
    %v3185 = vcombine.high %v3167, %v3181
    %v3186 = vcombine.low %v201, %v207
    %v3187 = vcombine.high %v201, %v207
    %v3188 = vcombine.low %v213, %v219
    %v3189 = vcombine.high %v213, %v219
    %v3191 = vunpack.c.l.s4 1983009808
    %v3192 = vunpack.c.0.s8 %v3191
    %v3193 = vlaneseq
    %v3194 = vshrl.u32 %v3193, 7
    %v3195 = vsub.s32 %v3192, %v3194
    %v3196 = vrot.slane %v3186, %v3195
    %v3198 = vunpack.c.l.s4 1983009808
    %v3199 = vunpack.c.0.s8 %v3198
    %v3200 = vlaneseq
    %v3201 = vshrl.u32 %v3200, 7
    %v3202 = vsub.s32 %v3199, %v3201
    %v3203 = vrot.slane %v3187, %v3202
    %v3205 = vunpack.c.l.s4 1983009808
    %v3206 = vunpack.c.0.s8 %v3205
    %v3207 = vlaneseq
    %v3208 = vshrl.u32 %v3207, 7
    %v3209 = vsub.s32 %v3206, %v3208
    %v3210 = vrot.slane %v3188, %v3209
    %v3212 = vunpack.c.l.s4 1983009808
    %v3213 = vunpack.c.0.s8 %v3212
    %v3214 = vlaneseq
    %v3215 = vshrl.u32 %v3214, 7
    %v3216 = vsub.s32 %v3213, %v3215
    %v3217 = vrot.slane %v3189, %v3216
    %v3218 = vcombine.low %v3196, %v3210
    %v3219 = vcombine.high %v3196, %v3210
    %v3220 = vcombine.low %v3203, %v3217
    %v3221 = vcombine.high %v3203, %v3217
    %v3222 = vcombine.low %v202, %v208
    %v3223 = vcombine.high %v202, %v208
    %v3224 = vcombine.low %v214, %v220
    %v3225 = vcombine.high %v214, %v220
    %v3227 = vunpack.c.l.s4 1983009808
    %v3228 = vunpack.c.0.s8 %v3227
    %v3229 = vlaneseq
    %v3230 = vshrl.u32 %v3229, 7
    %v3231 = vsub.s32 %v3228, %v3230
    %v3232 = vrot.slane %v3222, %v3231
    %v3234 = vunpack.c.l.s4 1983009808
    %v3235 = vunpack.c.0.s8 %v3234
    %v3236 = vlaneseq
    %v3237 = vshrl.u32 %v3236, 7
    %v3238 = vsub.s32 %v3235, %v3237
    %v3239 = vrot.slane %v3223, %v3238
    %v3241 = vunpack.c.l.s4 1983009808
    %v3242 = vunpack.c.0.s8 %v3241
    %v3243 = vlaneseq
    %v3244 = vshrl.u32 %v3243, 7
    %v3245 = vsub.s32 %v3242, %v3244
    %v3246 = vrot.slane %v3224, %v3245
    %v3248 = vunpack.c.l.s4 1983009808
    %v3249 = vunpack.c.0.s8 %v3248
    %v3250 = vlaneseq
    %v3251 = vshrl.u32 %v3250, 7
    %v3252 = vsub.s32 %v3249, %v3251
    %v3253 = vrot.slane %v3225, %v3252
    %v3254 = vcombine.low %v3232, %v3246
    %v3255 = vcombine.high %v3232, %v3246
    %v3256 = vcombine.low %v3239, %v3253
    %v3257 = vcombine.high %v3239, %v3253
    %v3258 = vcombine.low %v203, %v209
    %v3259 = vcombine.high %v203, %v209
    %v3260 = vcombine.low %v215, %v221
    %v3261 = vcombine.high %v215, %v221
    %v3263 = vunpack.c.l.s4 1983009808
    %v3264 = vunpack.c.0.s8 %v3263
    %v3265 = vlaneseq
    %v3266 = vshrl.u32 %v3265, 7
    %v3267 = vsub.s32 %v3264, %v3266
    %v3268 = vrot.slane %v3258, %v3267
    %v3270 = vunpack.c.l.s4 1983009808
    %v3271 = vunpack.c.0.s8 %v3270
    %v3272 = vlaneseq
    %v3273 = vshrl.u32 %v3272, 7
    %v3274 = vsub.s32 %v3271, %v3273
    %v3275 = vrot.slane %v3259, %v3274
    %v3277 = vunpack.c.l.s4 1983009808
    %v3278 = vunpack.c.0.s8 %v3277
    %v3279 = vlaneseq
    %v3280 = vshrl.u32 %v3279, 7
    %v3281 = vsub.s32 %v3278, %v3280
    %v3282 = vrot.slane %v3260, %v3281
    %v3284 = vunpack.c.l.s4 1983009808
    %v3285 = vunpack.c.0.s8 %v3284
    %v3286 = vlaneseq
    %v3287 = vshrl.u32 %v3286, 7
    %v3288 = vsub.s32 %v3285, %v3287
    %v3289 = vrot.slane %v3261, %v3288
    %v3290 = vcombine.low %v3268, %v3282
    %v3291 = vcombine.high %v3268, %v3282
    %v3292 = vcombine.low %v3275, %v3289
    %v3293 = vcombine.high %v3275, %v3289
    %v3294 = vcombine.low %v222, %v228
    %v3295 = vcombine.high %v222, %v228
    %v3296 = vcombine.low %v234, %v240
    %v3297 = vcombine.high %v234, %v240
    %v3299 = vunpack.c.l.s4 1983009808
    %v3300 = vunpack.c.0.s8 %v3299
    %v3301 = vlaneseq
    %v3302 = vshrl.u32 %v3301, 7
    %v3303 = vsub.s32 %v3300, %v3302
    %v3304 = vrot.slane %v3294, %v3303
    %v3306 = vunpack.c.l.s4 1983009808
    %v3307 = vunpack.c.0.s8 %v3306
    %v3308 = vlaneseq
    %v3309 = vshrl.u32 %v3308, 7
    %v3310 = vsub.s32 %v3307, %v3309
    %v3311 = vrot.slane %v3295, %v3310
    %v3313 = vunpack.c.l.s4 1983009808
    %v3314 = vunpack.c.0.s8 %v3313
    %v3315 = vlaneseq
    %v3316 = vshrl.u32 %v3315, 7
    %v3317 = vsub.s32 %v3314, %v3316
    %v3318 = vrot.slane %v3296, %v3317
    %v3320 = vunpack.c.l.s4 1983009808
    %v3321 = vunpack.c.0.s8 %v3320
    %v3322 = vlaneseq
    %v3323 = vshrl.u32 %v3322, 7
    %v3324 = vsub.s32 %v3321, %v3323
    %v3325 = vrot.slane %v3297, %v3324
    %v3326 = vcombine.low %v3304, %v3318
    %v3327 = vcombine.high %v3304, %v3318
    %v3328 = vcombine.low %v3311, %v3325
    %v3329 = vcombine.high %v3311, %v3325
    %v3330 = vcombine.low %v223, %v229
    %v3331 = vcombine.high %v223, %v229
    %v3332 = vcombine.low %v235, %v241
    %v3333 = vcombine.high %v235, %v241
    %v3335 = vunpack.c.l.s4 1983009808
    %v3336 = vunpack.c.0.s8 %v3335
    %v3337 = vlaneseq
    %v3338 = vshrl.u32 %v3337, 7
    %v3339 = vsub.s32 %v3336, %v3338
    %v3340 = vrot.slane %v3330, %v3339
    %v3342 = vunpack.c.l.s4 1983009808
    %v3343 = vunpack.c.0.s8 %v3342
    %v3344 = vlaneseq
    %v3345 = vshrl.u32 %v3344, 7
    %v3346 = vsub.s32 %v3343, %v3345
    %v3347 = vrot.slane %v3331, %v3346
    %v3349 = vunpack.c.l.s4 1983009808
    %v3350 = vunpack.c.0.s8 %v3349
    %v3351 = vlaneseq
    %v3352 = vshrl.u32 %v3351, 7
    %v3353 = vsub.s32 %v3350, %v3352
    %v3354 = vrot.slane %v3332, %v3353
    %v3356 = vunpack.c.l.s4 1983009808
    %v3357 = vunpack.c.0.s8 %v3356
    %v3358 = vlaneseq
    %v3359 = vshrl.u32 %v3358, 7
    %v3360 = vsub.s32 %v3357, %v3359
    %v3361 = vrot.slane %v3333, %v3360
    %v3362 = vcombine.low %v3340, %v3354
    %v3363 = vcombine.high %v3340, %v3354
    %v3364 = vcombine.low %v3347, %v3361
    %v3365 = vcombine.high %v3347, %v3361
    %v3366 = vcombine.low %v224, %v230
    %v3367 = vcombine.high %v224, %v230
    %v3368 = vcombine.low %v236, %v242
    %v3369 = vcombine.high %v236, %v242
    %v3371 = vunpack.c.l.s4 1983009808
    %v3372 = vunpack.c.0.s8 %v3371
    %v3373 = vlaneseq
    %v3374 = vshrl.u32 %v3373, 7
    %v3375 = vsub.s32 %v3372, %v3374
    %v3376 = vrot.slane %v3366, %v3375
    %v3378 = vunpack.c.l.s4 1983009808
    %v3379 = vunpack.c.0.s8 %v3378
    %v3380 = vlaneseq
    %v3381 = vshrl.u32 %v3380, 7
    %v3382 = vsub.s32 %v3379, %v3381
    %v3383 = vrot.slane %v3367, %v3382
    %v3385 = vunpack.c.l.s4 1983009808
    %v3386 = vunpack.c.0.s8 %v3385
    %v3387 = vlaneseq
    %v3388 = vshrl.u32 %v3387, 7
    %v3389 = vsub.s32 %v3386, %v3388
    %v3390 = vrot.slane %v3368, %v3389
    %v3392 = vunpack.c.l.s4 1983009808
    %v3393 = vunpack.c.0.s8 %v3392
    %v3394 = vlaneseq
    %v3395 = vshrl.u32 %v3394, 7
    %v3396 = vsub.s32 %v3393, %v3395
    %v3397 = vrot.slane %v3369, %v3396
    %v3398 = vcombine.low %v3376, %v3390
    %v3399 = vcombine.high %v3376, %v3390
    %v3400 = vcombine.low %v3383, %v3397
    %v3401 = vcombine.high %v3383, %v3397
    %v3402 = vcombine.low %v225, %v231
    %v3403 = vcombine.high %v225, %v231
    %v3404 = vcombine.low %v237, %v243
    %v3405 = vcombine.high %v237, %v243
    %v3407 = vunpack.c.l.s4 1983009808
    %v3408 = vunpack.c.0.s8 %v3407
    %v3409 = vlaneseq
    %v3410 = vshrl.u32 %v3409, 7
    %v3411 = vsub.s32 %v3408, %v3410
    %v3412 = vrot.slane %v3402, %v3411
    %v3414 = vunpack.c.l.s4 1983009808
    %v3415 = vunpack.c.0.s8 %v3414
    %v3416 = vlaneseq
    %v3417 = vshrl.u32 %v3416, 7
    %v3418 = vsub.s32 %v3415, %v3417
    %v3419 = vrot.slane %v3403, %v3418
    %v3421 = vunpack.c.l.s4 1983009808
    %v3422 = vunpack.c.0.s8 %v3421
    %v3423 = vlaneseq
    %v3424 = vshrl.u32 %v3423, 7
    %v3425 = vsub.s32 %v3422, %v3424
    %v3426 = vrot.slane %v3404, %v3425
    %v3428 = vunpack.c.l.s4 1983009808
    %v3429 = vunpack.c.0.s8 %v3428
    %v3430 = vlaneseq
    %v3431 = vshrl.u32 %v3430, 7
    %v3432 = vsub.s32 %v3429, %v3431
    %v3433 = vrot.slane %v3405, %v3432
    %v3434 = vcombine.low %v3412, %v3426
    %v3435 = vcombine.high %v3412, %v3426
    %v3436 = vcombine.low %v3419, %v3433
    %v3437 = vcombine.high %v3419, %v3433
    %v3438 = vcombine.low %v226, %v232
    %v3439 = vcombine.high %v226, %v232
    %v3440 = vcombine.low %v238, %v244
    %v3441 = vcombine.high %v238, %v244
    %v3443 = vunpack.c.l.s4 1983009808
    %v3444 = vunpack.c.0.s8 %v3443
    %v3445 = vlaneseq
    %v3446 = vshrl.u32 %v3445, 7
    %v3447 = vsub.s32 %v3444, %v3446
    %v3448 = vrot.slane %v3438, %v3447
    %v3450 = vunpack.c.l.s4 1983009808
    %v3451 = vunpack.c.0.s8 %v3450
    %v3452 = vlaneseq
    %v3453 = vshrl.u32 %v3452, 7
    %v3454 = vsub.s32 %v3451, %v3453
    %v3455 = vrot.slane %v3439, %v3454
    %v3457 = vunpack.c.l.s4 1983009808
    %v3458 = vunpack.c.0.s8 %v3457
    %v3459 = vlaneseq
    %v3460 = vshrl.u32 %v3459, 7
    %v3461 = vsub.s32 %v3458, %v3460
    %v3462 = vrot.slane %v3440, %v3461
    %v3464 = vunpack.c.l.s4 1983009808
    %v3465 = vunpack.c.0.s8 %v3464
    %v3466 = vlaneseq
    %v3467 = vshrl.u32 %v3466, 7
    %v3468 = vsub.s32 %v3465, %v3467
    %v3469 = vrot.slane %v3441, %v3468
    %v3470 = vcombine.low %v3448, %v3462
    %v3471 = vcombine.high %v3448, %v3462
    %v3472 = vcombine.low %v3455, %v3469
    %v3473 = vcombine.high %v3455, %v3469
    %v3474 = vcombine.low %v227, %v233
    %v3475 = vcombine.high %v227, %v233
    %v3476 = vcombine.low %v239, %v245
    %v3477 = vcombine.high %v239, %v245
    %v3479 = vunpack.c.l.s4 1983009808
    %v3480 = vunpack.c.0.s8 %v3479
    %v3481 = vlaneseq
    %v3482 = vshrl.u32 %v3481, 7
    %v3483 = vsub.s32 %v3480, %v3482
    %v3484 = vrot.slane %v3474, %v3483
    %v3486 = vunpack.c.l.s4 1983009808
    %v3487 = vunpack.c.0.s8 %v3486
    %v3488 = vlaneseq
    %v3489 = vshrl.u32 %v3488, 7
    %v3490 = vsub.s32 %v3487, %v3489
    %v3491 = vrot.slane %v3475, %v3490
    %v3493 = vunpack.c.l.s4 1983009808
    %v3494 = vunpack.c.0.s8 %v3493
    %v3495 = vlaneseq
    %v3496 = vshrl.u32 %v3495, 7
    %v3497 = vsub.s32 %v3494, %v3496
    %v3498 = vrot.slane %v3476, %v3497
    %v3500 = vunpack.c.l.s4 1983009808
    %v3501 = vunpack.c.0.s8 %v3500
    %v3502 = vlaneseq
    %v3503 = vshrl.u32 %v3502, 7
    %v3504 = vsub.s32 %v3501, %v3503
    %v3505 = vrot.slane %v3477, %v3504
    %v3506 = vcombine.low %v3484, %v3498
    %v3507 = vcombine.high %v3484, %v3498
    %v3508 = vcombine.low %v3491, %v3505
    %v3509 = vcombine.high %v3491, %v3505
    %v3510 = vcombine.low %v246, %v252
    %v3511 = vcombine.high %v246, %v252
    %v3512 = vcombine.low %v258, %v264
    %v3513 = vcombine.high %v258, %v264
    %v3515 = vunpack.c.l.s4 1983009808
    %v3516 = vunpack.c.0.s8 %v3515
    %v3517 = vlaneseq
    %v3518 = vshrl.u32 %v3517, 7
    %v3519 = vsub.s32 %v3516, %v3518
    %v3520 = vrot.slane %v3510, %v3519
    %v3522 = vunpack.c.l.s4 1983009808
    %v3523 = vunpack.c.0.s8 %v3522
    %v3524 = vlaneseq
    %v3525 = vshrl.u32 %v3524, 7
    %v3526 = vsub.s32 %v3523, %v3525
    %v3527 = vrot.slane %v3511, %v3526
    %v3529 = vunpack.c.l.s4 1983009808
    %v3530 = vunpack.c.0.s8 %v3529
    %v3531 = vlaneseq
    %v3532 = vshrl.u32 %v3531, 7
    %v3533 = vsub.s32 %v3530, %v3532
    %v3534 = vrot.slane %v3512, %v3533
    %v3536 = vunpack.c.l.s4 1983009808
    %v3537 = vunpack.c.0.s8 %v3536
    %v3538 = vlaneseq
    %v3539 = vshrl.u32 %v3538, 7
    %v3540 = vsub.s32 %v3537, %v3539
    %v3541 = vrot.slane %v3513, %v3540
    %v3542 = vcombine.low %v3520, %v3534
    %v3543 = vcombine.high %v3520, %v3534
    %v3544 = vcombine.low %v3527, %v3541
    %v3545 = vcombine.high %v3527, %v3541
    %v3546 = vcombine.low %v247, %v253
    %v3547 = vcombine.high %v247, %v253
    %v3548 = vcombine.low %v259, %v265
    %v3549 = vcombine.high %v259, %v265
    %v3551 = vunpack.c.l.s4 1983009808
    %v3552 = vunpack.c.0.s8 %v3551
    %v3553 = vlaneseq
    %v3554 = vshrl.u32 %v3553, 7
    %v3555 = vsub.s32 %v3552, %v3554
    %v3556 = vrot.slane %v3546, %v3555
    %v3558 = vunpack.c.l.s4 1983009808
    %v3559 = vunpack.c.0.s8 %v3558
    %v3560 = vlaneseq
    %v3561 = vshrl.u32 %v3560, 7
    %v3562 = vsub.s32 %v3559, %v3561
    %v3563 = vrot.slane %v3547, %v3562
    %v3565 = vunpack.c.l.s4 1983009808
    %v3566 = vunpack.c.0.s8 %v3565
    %v3567 = vlaneseq
    %v3568 = vshrl.u32 %v3567, 7
    %v3569 = vsub.s32 %v3566, %v3568
    %v3570 = vrot.slane %v3548, %v3569
    %v3572 = vunpack.c.l.s4 1983009808
    %v3573 = vunpack.c.0.s8 %v3572
    %v3574 = vlaneseq
    %v3575 = vshrl.u32 %v3574, 7
    %v3576 = vsub.s32 %v3573, %v3575
    %v3577 = vrot.slane %v3549, %v3576
    %v3578 = vcombine.low %v3556, %v3570
    %v3579 = vcombine.high %v3556, %v3570
    %v3580 = vcombine.low %v3563, %v3577
    %v3581 = vcombine.high %v3563, %v3577
    %v3582 = vcombine.low %v248, %v254
    %v3583 = vcombine.high %v248, %v254
    %v3584 = vcombine.low %v260, %v266
    %v3585 = vcombine.high %v260, %v266
    %v3587 = vunpack.c.l.s4 1983009808
    %v3588 = vunpack.c.0.s8 %v3587
    %v3589 = vlaneseq
    %v3590 = vshrl.u32 %v3589, 7
    %v3591 = vsub.s32 %v3588, %v3590
    %v3592 = vrot.slane %v3582, %v3591
    %v3594 = vunpack.c.l.s4 1983009808
    %v3595 = vunpack.c.0.s8 %v3594
    %v3596 = vlaneseq
    %v3597 = vshrl.u32 %v3596, 7
    %v3598 = vsub.s32 %v3595, %v3597
    %v3599 = vrot.slane %v3583, %v3598
    %v3601 = vunpack.c.l.s4 1983009808
    %v3602 = vunpack.c.0.s8 %v3601
    %v3603 = vlaneseq
    %v3604 = vshrl.u32 %v3603, 7
    %v3605 = vsub.s32 %v3602, %v3604
    %v3606 = vrot.slane %v3584, %v3605
    %v3608 = vunpack.c.l.s4 1983009808
    %v3609 = vunpack.c.0.s8 %v3608
    %v3610 = vlaneseq
    %v3611 = vshrl.u32 %v3610, 7
    %v3612 = vsub.s32 %v3609, %v3611
    %v3613 = vrot.slane %v3585, %v3612
    %v3614 = vcombine.low %v3592, %v3606
    %v3615 = vcombine.high %v3592, %v3606
    %v3616 = vcombine.low %v3599, %v3613
    %v3617 = vcombine.high %v3599, %v3613
    %v3618 = vcombine.low %v249, %v255
    %v3619 = vcombine.high %v249, %v255
    %v3620 = vcombine.low %v261, %v267
    %v3621 = vcombine.high %v261, %v267
    %v3623 = vunpack.c.l.s4 1983009808
    %v3624 = vunpack.c.0.s8 %v3623
    %v3625 = vlaneseq
    %v3626 = vshrl.u32 %v3625, 7
    %v3627 = vsub.s32 %v3624, %v3626
    %v3628 = vrot.slane %v3618, %v3627
    %v3630 = vunpack.c.l.s4 1983009808
    %v3631 = vunpack.c.0.s8 %v3630
    %v3632 = vlaneseq
    %v3633 = vshrl.u32 %v3632, 7
    %v3634 = vsub.s32 %v3631, %v3633
    %v3635 = vrot.slane %v3619, %v3634
    %v3637 = vunpack.c.l.s4 1983009808
    %v3638 = vunpack.c.0.s8 %v3637
    %v3639 = vlaneseq
    %v3640 = vshrl.u32 %v3639, 7
    %v3641 = vsub.s32 %v3638, %v3640
    %v3642 = vrot.slane %v3620, %v3641
    %v3644 = vunpack.c.l.s4 1983009808
    %v3645 = vunpack.c.0.s8 %v3644
    %v3646 = vlaneseq
    %v3647 = vshrl.u32 %v3646, 7
    %v3648 = vsub.s32 %v3645, %v3647
    %v3649 = vrot.slane %v3621, %v3648
    %v3650 = vcombine.low %v3628, %v3642
    %v3651 = vcombine.high %v3628, %v3642
    %v3652 = vcombine.low %v3635, %v3649
    %v3653 = vcombine.high %v3635, %v3649
    %v3654 = vcombine.low %v250, %v256
    %v3655 = vcombine.high %v250, %v256
    %v3656 = vcombine.low %v262, %v268
    %v3657 = vcombine.high %v262, %v268
    %v3659 = vunpack.c.l.s4 1983009808
    %v3660 = vunpack.c.0.s8 %v3659
    %v3661 = vlaneseq
    %v3662 = vshrl.u32 %v3661, 7
    %v3663 = vsub.s32 %v3660, %v3662
    %v3664 = vrot.slane %v3654, %v3663
    %v3666 = vunpack.c.l.s4 1983009808
    %v3667 = vunpack.c.0.s8 %v3666
    %v3668 = vlaneseq
    %v3669 = vshrl.u32 %v3668, 7
    %v3670 = vsub.s32 %v3667, %v3669
    %v3671 = vrot.slane %v3655, %v3670
    %v3673 = vunpack.c.l.s4 1983009808
    %v3674 = vunpack.c.0.s8 %v3673
    %v3675 = vlaneseq
    %v3676 = vshrl.u32 %v3675, 7
    %v3677 = vsub.s32 %v3674, %v3676
    %v3678 = vrot.slane %v3656, %v3677
    %v3680 = vunpack.c.l.s4 1983009808
    %v3681 = vunpack.c.0.s8 %v3680
    %v3682 = vlaneseq
    %v3683 = vshrl.u32 %v3682, 7
    %v3684 = vsub.s32 %v3681, %v3683
    %v3685 = vrot.slane %v3657, %v3684
    %v3686 = vcombine.low %v3664, %v3678
    %v3687 = vcombine.high %v3664, %v3678
    %v3688 = vcombine.low %v3671, %v3685
    %v3689 = vcombine.high %v3671, %v3685
    %v3690 = vcombine.low %v251, %v257
    %v3691 = vcombine.high %v251, %v257
    %v3692 = vcombine.low %v263, %v269
    %v3693 = vcombine.high %v263, %v269
    %v3695 = vunpack.c.l.s4 1983009808
    %v3696 = vunpack.c.0.s8 %v3695
    %v3697 = vlaneseq
    %v3698 = vshrl.u32 %v3697, 7
    %v3699 = vsub.s32 %v3696, %v3698
    %v3700 = vrot.slane %v3690, %v3699
    %v3702 = vunpack.c.l.s4 1983009808
    %v3703 = vunpack.c.0.s8 %v3702
    %v3704 = vlaneseq
    %v3705 = vshrl.u32 %v3704, 7
    %v3706 = vsub.s32 %v3703, %v3705
    %v3707 = vrot.slane %v3691, %v3706
    %v3709 = vunpack.c.l.s4 1983009808
    %v3710 = vunpack.c.0.s8 %v3709
    %v3711 = vlaneseq
    %v3712 = vshrl.u32 %v3711, 7
    %v3713 = vsub.s32 %v3710, %v3712
    %v3714 = vrot.slane %v3692, %v3713
    %v3716 = vunpack.c.l.s4 1983009808
    %v3717 = vunpack.c.0.s8 %v3716
    %v3718 = vlaneseq
    %v3719 = vshrl.u32 %v3718, 7
    %v3720 = vsub.s32 %v3717, %v3719
    %v3721 = vrot.slane %v3693, %v3720
    %v3722 = vcombine.low %v3700, %v3714
    %v3723 = vcombine.high %v3700, %v3714
    %v3724 = vcombine.low %v3707, %v3721
    %v3725 = vcombine.high %v3707, %v3721
    %v3726 = vcombine.low %v270, %v276
    %v3727 = vcombine.high %v270, %v276
    %v3728 = vcombine.low %v282, %v288
    %v3729 = vcombine.high %v282, %v288
    %v3731 = vunpack.c.l.s4 1983009808
    %v3732 = vunpack.c.0.s8 %v3731
    %v3733 = vlaneseq
    %v3734 = vshrl.u32 %v3733, 7
    %v3735 = vsub.s32 %v3732, %v3734
    %v3736 = vrot.slane %v3726, %v3735
    %v3738 = vunpack.c.l.s4 1983009808
    %v3739 = vunpack.c.0.s8 %v3738
    %v3740 = vlaneseq
    %v3741 = vshrl.u32 %v3740, 7
    %v3742 = vsub.s32 %v3739, %v3741
    %v3743 = vrot.slane %v3727, %v3742
    %v3745 = vunpack.c.l.s4 1983009808
    %v3746 = vunpack.c.0.s8 %v3745
    %v3747 = vlaneseq
    %v3748 = vshrl.u32 %v3747, 7
    %v3749 = vsub.s32 %v3746, %v3748
    %v3750 = vrot.slane %v3728, %v3749
    %v3752 = vunpack.c.l.s4 1983009808
    %v3753 = vunpack.c.0.s8 %v3752
    %v3754 = vlaneseq
    %v3755 = vshrl.u32 %v3754, 7
    %v3756 = vsub.s32 %v3753, %v3755
    %v3757 = vrot.slane %v3729, %v3756
    %v3758 = vcombine.low %v3736, %v3750
    %v3759 = vcombine.high %v3736, %v3750
    %v3760 = vcombine.low %v3743, %v3757
    %v3761 = vcombine.high %v3743, %v3757
    %v3762 = vcombine.low %v271, %v277
    %v3763 = vcombine.high %v271, %v277
    %v3764 = vcombine.low %v283, %v289
    %v3765 = vcombine.high %v283, %v289
    %v3767 = vunpack.c.l.s4 1983009808
    %v3768 = vunpack.c.0.s8 %v3767
    %v3769 = vlaneseq
    %v3770 = vshrl.u32 %v3769, 7
    %v3771 = vsub.s32 %v3768, %v3770
    %v3772 = vrot.slane %v3762, %v3771
    %v3774 = vunpack.c.l.s4 1983009808
    %v3775 = vunpack.c.0.s8 %v3774
    %v3776 = vlaneseq
    %v3777 = vshrl.u32 %v3776, 7
    %v3778 = vsub.s32 %v3775, %v3777
    %v3779 = vrot.slane %v3763, %v3778
    %v3781 = vunpack.c.l.s4 1983009808
    %v3782 = vunpack.c.0.s8 %v3781
    %v3783 = vlaneseq
    %v3784 = vshrl.u32 %v3783, 7
    %v3785 = vsub.s32 %v3782, %v3784
    %v3786 = vrot.slane %v3764, %v3785
    %v3788 = vunpack.c.l.s4 1983009808
    %v3789 = vunpack.c.0.s8 %v3788
    %v3790 = vlaneseq
    %v3791 = vshrl.u32 %v3790, 7
    %v3792 = vsub.s32 %v3789, %v3791
    %v3793 = vrot.slane %v3765, %v3792
    %v3794 = vcombine.low %v3772, %v3786
    %v3795 = vcombine.high %v3772, %v3786
    %v3796 = vcombine.low %v3779, %v3793
    %v3797 = vcombine.high %v3779, %v3793
    %v3798 = vcombine.low %v272, %v278
    %v3799 = vcombine.high %v272, %v278
    %v3800 = vcombine.low %v284, %v290
    %v3801 = vcombine.high %v284, %v290
    %v3803 = vunpack.c.l.s4 1983009808
    %v3804 = vunpack.c.0.s8 %v3803
    %v3805 = vlaneseq
    %v3806 = vshrl.u32 %v3805, 7
    %v3807 = vsub.s32 %v3804, %v3806
    %v3808 = vrot.slane %v3798, %v3807
    %v3810 = vunpack.c.l.s4 1983009808
    %v3811 = vunpack.c.0.s8 %v3810
    %v3812 = vlaneseq
    %v3813 = vshrl.u32 %v3812, 7
    %v3814 = vsub.s32 %v3811, %v3813
    %v3815 = vrot.slane %v3799, %v3814
    %v3817 = vunpack.c.l.s4 1983009808
    %v3818 = vunpack.c.0.s8 %v3817
    %v3819 = vlaneseq
    %v3820 = vshrl.u32 %v3819, 7
    %v3821 = vsub.s32 %v3818, %v3820
    %v3822 = vrot.slane %v3800, %v3821
    %v3824 = vunpack.c.l.s4 1983009808
    %v3825 = vunpack.c.0.s8 %v3824
    %v3826 = vlaneseq
    %v3827 = vshrl.u32 %v3826, 7
    %v3828 = vsub.s32 %v3825, %v3827
    %v3829 = vrot.slane %v3801, %v3828
    %v3830 = vcombine.low %v3808, %v3822
    %v3831 = vcombine.high %v3808, %v3822
    %v3832 = vcombine.low %v3815, %v3829
    %v3833 = vcombine.high %v3815, %v3829
    %v3834 = vcombine.low %v273, %v279
    %v3835 = vcombine.high %v273, %v279
    %v3836 = vcombine.low %v285, %v291
    %v3837 = vcombine.high %v285, %v291
    %v3839 = vunpack.c.l.s4 1983009808
    %v3840 = vunpack.c.0.s8 %v3839
    %v3841 = vlaneseq
    %v3842 = vshrl.u32 %v3841, 7
    %v3843 = vsub.s32 %v3840, %v3842
    %v3844 = vrot.slane %v3834, %v3843
    %v3846 = vunpack.c.l.s4 1983009808
    %v3847 = vunpack.c.0.s8 %v3846
    %v3848 = vlaneseq
    %v3849 = vshrl.u32 %v3848, 7
    %v3850 = vsub.s32 %v3847, %v3849
    %v3851 = vrot.slane %v3835, %v3850
    %v3853 = vunpack.c.l.s4 1983009808
    %v3854 = vunpack.c.0.s8 %v3853
    %v3855 = vlaneseq
    %v3856 = vshrl.u32 %v3855, 7
    %v3857 = vsub.s32 %v3854, %v3856
    %v3858 = vrot.slane %v3836, %v3857
    %v3860 = vunpack.c.l.s4 1983009808
    %v3861 = vunpack.c.0.s8 %v3860
    %v3862 = vlaneseq
    %v3863 = vshrl.u32 %v3862, 7
    %v3864 = vsub.s32 %v3861, %v3863
    %v3865 = vrot.slane %v3837, %v3864
    %v3866 = vcombine.low %v3844, %v3858
    %v3867 = vcombine.high %v3844, %v3858
    %v3868 = vcombine.low %v3851, %v3865
    %v3869 = vcombine.high %v3851, %v3865
    %v3870 = vcombine.low %v274, %v280
    %v3871 = vcombine.high %v274, %v280
    %v3872 = vcombine.low %v286, %v292
    %v3873 = vcombine.high %v286, %v292
    %v3875 = vunpack.c.l.s4 1983009808
    %v3876 = vunpack.c.0.s8 %v3875
    %v3877 = vlaneseq
    %v3878 = vshrl.u32 %v3877, 7
    %v3879 = vsub.s32 %v3876, %v3878
    %v3880 = vrot.slane %v3870, %v3879
    %v3882 = vunpack.c.l.s4 1983009808
    %v3883 = vunpack.c.0.s8 %v3882
    %v3884 = vlaneseq
    %v3885 = vshrl.u32 %v3884, 7
    %v3886 = vsub.s32 %v3883, %v3885
    %v3887 = vrot.slane %v3871, %v3886
    %v3889 = vunpack.c.l.s4 1983009808
    %v3890 = vunpack.c.0.s8 %v3889
    %v3891 = vlaneseq
    %v3892 = vshrl.u32 %v3891, 7
    %v3893 = vsub.s32 %v3890, %v3892
    %v3894 = vrot.slane %v3872, %v3893
    %v3896 = vunpack.c.l.s4 1983009808
    %v3897 = vunpack.c.0.s8 %v3896
    %v3898 = vlaneseq
    %v3899 = vshrl.u32 %v3898, 7
    %v3900 = vsub.s32 %v3897, %v3899
    %v3901 = vrot.slane %v3873, %v3900
    %v3902 = vcombine.low %v3880, %v3894
    %v3903 = vcombine.high %v3880, %v3894
    %v3904 = vcombine.low %v3887, %v3901
    %v3905 = vcombine.high %v3887, %v3901
    %v3906 = vcombine.low %v275, %v281
    %v3907 = vcombine.high %v275, %v281
    %v3908 = vcombine.low %v287, %v293
    %v3909 = vcombine.high %v287, %v293
    %v3911 = vunpack.c.l.s4 1983009808
    %v3912 = vunpack.c.0.s8 %v3911
    %v3913 = vlaneseq
    %v3914 = vshrl.u32 %v3913, 7
    %v3915 = vsub.s32 %v3912, %v3914
    %v3916 = vrot.slane %v3906, %v3915
    %v3918 = vunpack.c.l.s4 1983009808
    %v3919 = vunpack.c.0.s8 %v3918
    %v3920 = vlaneseq
    %v3921 = vshrl.u32 %v3920, 7
    %v3922 = vsub.s32 %v3919, %v3921
    %v3923 = vrot.slane %v3907, %v3922
    %v3925 = vunpack.c.l.s4 1983009808
    %v3926 = vunpack.c.0.s8 %v3925
    %v3927 = vlaneseq
    %v3928 = vshrl.u32 %v3927, 7
    %v3929 = vsub.s32 %v3926, %v3928
    %v3930 = vrot.slane %v3908, %v3929
    %v3932 = vunpack.c.l.s4 1983009808
    %v3933 = vunpack.c.0.s8 %v3932
    %v3934 = vlaneseq
    %v3935 = vshrl.u32 %v3934, 7
    %v3936 = vsub.s32 %v3933, %v3935
    %v3937 = vrot.slane %v3909, %v3936
    %v3938 = vcombine.low %v3916, %v3930
    %v3939 = vcombine.high %v3916, %v3930
    %v3940 = vcombine.low %v3923, %v3937
    %v3941 = vcombine.high %v3923, %v3937
    %v3942 = vcombine.low %v294, %v300
    %v3943 = vcombine.high %v294, %v300
    %v3944 = vcombine.low %v306, %v312
    %v3945 = vcombine.high %v306, %v312
    %v3947 = vunpack.c.l.s4 1983009808
    %v3948 = vunpack.c.0.s8 %v3947
    %v3949 = vlaneseq
    %v3950 = vshrl.u32 %v3949, 7
    %v3951 = vsub.s32 %v3948, %v3950
    %v3952 = vrot.slane %v3942, %v3951
    %v3954 = vunpack.c.l.s4 1983009808
    %v3955 = vunpack.c.0.s8 %v3954
    %v3956 = vlaneseq
    %v3957 = vshrl.u32 %v3956, 7
    %v3958 = vsub.s32 %v3955, %v3957
    %v3959 = vrot.slane %v3943, %v3958
    %v3961 = vunpack.c.l.s4 1983009808
    %v3962 = vunpack.c.0.s8 %v3961
    %v3963 = vlaneseq
    %v3964 = vshrl.u32 %v3963, 7
    %v3965 = vsub.s32 %v3962, %v3964
    %v3966 = vrot.slane %v3944, %v3965
    %v3968 = vunpack.c.l.s4 1983009808
    %v3969 = vunpack.c.0.s8 %v3968
    %v3970 = vlaneseq
    %v3971 = vshrl.u32 %v3970, 7
    %v3972 = vsub.s32 %v3969, %v3971
    %v3973 = vrot.slane %v3945, %v3972
    %v3974 = vcombine.low %v3952, %v3966
    %v3975 = vcombine.high %v3952, %v3966
    %v3976 = vcombine.low %v3959, %v3973
    %v3977 = vcombine.high %v3959, %v3973
    %v3978 = vcombine.low %v295, %v301
    %v3979 = vcombine.high %v295, %v301
    %v3980 = vcombine.low %v307, %v313
    %v3981 = vcombine.high %v307, %v313
    %v3983 = vunpack.c.l.s4 1983009808
    %v3984 = vunpack.c.0.s8 %v3983
    %v3985 = vlaneseq
    %v3986 = vshrl.u32 %v3985, 7
    %v3987 = vsub.s32 %v3984, %v3986
    %v3988 = vrot.slane %v3978, %v3987
    %v3990 = vunpack.c.l.s4 1983009808
    %v3991 = vunpack.c.0.s8 %v3990
    %v3992 = vlaneseq
    %v3993 = vshrl.u32 %v3992, 7
    %v3994 = vsub.s32 %v3991, %v3993
    %v3995 = vrot.slane %v3979, %v3994
    %v3997 = vunpack.c.l.s4 1983009808
    %v3998 = vunpack.c.0.s8 %v3997
    %v3999 = vlaneseq
    %v4000 = vshrl.u32 %v3999, 7
    %v4001 = vsub.s32 %v3998, %v4000
    %v4002 = vrot.slane %v3980, %v4001
    %v4004 = vunpack.c.l.s4 1983009808
    %v4005 = vunpack.c.0.s8 %v4004
    %v4006 = vlaneseq
    %v4007 = vshrl.u32 %v4006, 7
    %v4008 = vsub.s32 %v4005, %v4007
    %v4009 = vrot.slane %v3981, %v4008
    %v4010 = vcombine.low %v3988, %v4002
    %v4011 = vcombine.high %v3988, %v4002
    %v4012 = vcombine.low %v3995, %v4009
    %v4013 = vcombine.high %v3995, %v4009
    %v4014 = vcombine.low %v296, %v302
    %v4015 = vcombine.high %v296, %v302
    %v4016 = vcombine.low %v308, %v314
    %v4017 = vcombine.high %v308, %v314
    %v4019 = vunpack.c.l.s4 1983009808
    %v4020 = vunpack.c.0.s8 %v4019
    %v4021 = vlaneseq
    %v4022 = vshrl.u32 %v4021, 7
    %v4023 = vsub.s32 %v4020, %v4022
    %v4024 = vrot.slane %v4014, %v4023
    %v4026 = vunpack.c.l.s4 1983009808
    %v4027 = vunpack.c.0.s8 %v4026
    %v4028 = vlaneseq
    %v4029 = vshrl.u32 %v4028, 7
    %v4030 = vsub.s32 %v4027, %v4029
    %v4031 = vrot.slane %v4015, %v4030
    %v4033 = vunpack.c.l.s4 1983009808
    %v4034 = vunpack.c.0.s8 %v4033
    %v4035 = vlaneseq
    %v4036 = vshrl.u32 %v4035, 7
    %v4037 = vsub.s32 %v4034, %v4036
    %v4038 = vrot.slane %v4016, %v4037
    %v4040 = vunpack.c.l.s4 1983009808
    %v4041 = vunpack.c.0.s8 %v4040
    %v4042 = vlaneseq
    %v4043 = vshrl.u32 %v4042, 7
    %v4044 = vsub.s32 %v4041, %v4043
    %v4045 = vrot.slane %v4017, %v4044
    %v4046 = vcombine.low %v4024, %v4038
    %v4047 = vcombine.high %v4024, %v4038
    %v4048 = vcombine.low %v4031, %v4045
    %v4049 = vcombine.high %v4031, %v4045
    %v4050 = vcombine.low %v297, %v303
    %v4051 = vcombine.high %v297, %v303
    %v4052 = vcombine.low %v309, %v315
    %v4053 = vcombine.high %v309, %v315
    %v4055 = vunpack.c.l.s4 1983009808
    %v4056 = vunpack.c.0.s8 %v4055
    %v4057 = vlaneseq
    %v4058 = vshrl.u32 %v4057, 7
    %v4059 = vsub.s32 %v4056, %v4058
    %v4060 = vrot.slane %v4050, %v4059
    %v4062 = vunpack.c.l.s4 1983009808
    %v4063 = vunpack.c.0.s8 %v4062
    %v4064 = vlaneseq
    %v4065 = vshrl.u32 %v4064, 7
    %v4066 = vsub.s32 %v4063, %v4065
    %v4067 = vrot.slane %v4051, %v4066
    %v4069 = vunpack.c.l.s4 1983009808
    %v4070 = vunpack.c.0.s8 %v4069
    %v4071 = vlaneseq
    %v4072 = vshrl.u32 %v4071, 7
    %v4073 = vsub.s32 %v4070, %v4072
    %v4074 = vrot.slane %v4052, %v4073
    %v4076 = vunpack.c.l.s4 1983009808
    %v4077 = vunpack.c.0.s8 %v4076
    %v4078 = vlaneseq
    %v4079 = vshrl.u32 %v4078, 7
    %v4080 = vsub.s32 %v4077, %v4079
    %v4081 = vrot.slane %v4053, %v4080
    %v4082 = vcombine.low %v4060, %v4074
    %v4083 = vcombine.high %v4060, %v4074
    %v4084 = vcombine.low %v4067, %v4081
    %v4085 = vcombine.high %v4067, %v4081
    %v4086 = vcombine.low %v298, %v304
    %v4087 = vcombine.high %v298, %v304
    %v4088 = vcombine.low %v310, %v316
    %v4089 = vcombine.high %v310, %v316
    %v4091 = vunpack.c.l.s4 1983009808
    %v4092 = vunpack.c.0.s8 %v4091
    %v4093 = vlaneseq
    %v4094 = vshrl.u32 %v4093, 7
    %v4095 = vsub.s32 %v4092, %v4094
    %v4096 = vrot.slane %v4086, %v4095
    %v4098 = vunpack.c.l.s4 1983009808
    %v4099 = vunpack.c.0.s8 %v4098
    %v4100 = vlaneseq
    %v4101 = vshrl.u32 %v4100, 7
    %v4102 = vsub.s32 %v4099, %v4101
    %v4103 = vrot.slane %v4087, %v4102
    %v4105 = vunpack.c.l.s4 1983009808
    %v4106 = vunpack.c.0.s8 %v4105
    %v4107 = vlaneseq
    %v4108 = vshrl.u32 %v4107, 7
    %v4109 = vsub.s32 %v4106, %v4108
    %v4110 = vrot.slane %v4088, %v4109
    %v4112 = vunpack.c.l.s4 1983009808
    %v4113 = vunpack.c.0.s8 %v4112
    %v4114 = vlaneseq
    %v4115 = vshrl.u32 %v4114, 7
    %v4116 = vsub.s32 %v4113, %v4115
    %v4117 = vrot.slane %v4089, %v4116
    %v4118 = vcombine.low %v4096, %v4110
    %v4119 = vcombine.high %v4096, %v4110
    %v4120 = vcombine.low %v4103, %v4117
    %v4121 = vcombine.high %v4103, %v4117
    %v4122 = vcombine.low %v299, %v305
    %v4123 = vcombine.high %v299, %v305
    %v4124 = vcombine.low %v311, %v317
    %v4125 = vcombine.high %v311, %v317
    %v4127 = vunpack.c.l.s4 1983009808
    %v4128 = vunpack.c.0.s8 %v4127
    %v4129 = vlaneseq
    %v4130 = vshrl.u32 %v4129, 7
    %v4131 = vsub.s32 %v4128, %v4130
    %v4132 = vrot.slane %v4122, %v4131
    %v4134 = vunpack.c.l.s4 1983009808
    %v4135 = vunpack.c.0.s8 %v4134
    %v4136 = vlaneseq
    %v4137 = vshrl.u32 %v4136, 7
    %v4138 = vsub.s32 %v4135, %v4137
    %v4139 = vrot.slane %v4123, %v4138
    %v4141 = vunpack.c.l.s4 1983009808
    %v4142 = vunpack.c.0.s8 %v4141
    %v4143 = vlaneseq
    %v4144 = vshrl.u32 %v4143, 7
    %v4145 = vsub.s32 %v4142, %v4144
    %v4146 = vrot.slane %v4124, %v4145
    %v4148 = vunpack.c.l.s4 1983009808
    %v4149 = vunpack.c.0.s8 %v4148
    %v4150 = vlaneseq
    %v4151 = vshrl.u32 %v4150, 7
    %v4152 = vsub.s32 %v4149, %v4151
    %v4153 = vrot.slane %v4125, %v4152
    %v4154 = vcombine.low %v4132, %v4146
    %v4155 = vcombine.high %v4132, %v4146
    %v4156 = vcombine.low %v4139, %v4153
    %v4157 = vcombine.high %v4139, %v4153
    %v4158 = vcombine.low %v318, %v324
    %v4159 = vcombine.high %v318, %v324
    %v4160 = vcombine.low %v330, %v336
    %v4161 = vcombine.high %v330, %v336
    %v4163 = vunpack.c.l.s4 1983009808
    %v4164 = vunpack.c.0.s8 %v4163
    %v4165 = vlaneseq
    %v4166 = vshrl.u32 %v4165, 7
    %v4167 = vsub.s32 %v4164, %v4166
    %v4168 = vrot.slane %v4158, %v4167
    %v4170 = vunpack.c.l.s4 1983009808
    %v4171 = vunpack.c.0.s8 %v4170
    %v4172 = vlaneseq
    %v4173 = vshrl.u32 %v4172, 7
    %v4174 = vsub.s32 %v4171, %v4173
    %v4175 = vrot.slane %v4159, %v4174
    %v4177 = vunpack.c.l.s4 1983009808
    %v4178 = vunpack.c.0.s8 %v4177
    %v4179 = vlaneseq
    %v4180 = vshrl.u32 %v4179, 7
    %v4181 = vsub.s32 %v4178, %v4180
    %v4182 = vrot.slane %v4160, %v4181
    %v4184 = vunpack.c.l.s4 1983009808
    %v4185 = vunpack.c.0.s8 %v4184
    %v4186 = vlaneseq
    %v4187 = vshrl.u32 %v4186, 7
    %v4188 = vsub.s32 %v4185, %v4187
    %v4189 = vrot.slane %v4161, %v4188
    %v4190 = vcombine.low %v4168, %v4182
    %v4191 = vcombine.high %v4168, %v4182
    %v4192 = vcombine.low %v4175, %v4189
    %v4193 = vcombine.high %v4175, %v4189
    %v4194 = vcombine.low %v319, %v325
    %v4195 = vcombine.high %v319, %v325
    %v4196 = vcombine.low %v331, %v337
    %v4197 = vcombine.high %v331, %v337
    %v4199 = vunpack.c.l.s4 1983009808
    %v4200 = vunpack.c.0.s8 %v4199
    %v4201 = vlaneseq
    %v4202 = vshrl.u32 %v4201, 7
    %v4203 = vsub.s32 %v4200, %v4202
    %v4204 = vrot.slane %v4194, %v4203
    %v4206 = vunpack.c.l.s4 1983009808
    %v4207 = vunpack.c.0.s8 %v4206
    %v4208 = vlaneseq
    %v4209 = vshrl.u32 %v4208, 7
    %v4210 = vsub.s32 %v4207, %v4209
    %v4211 = vrot.slane %v4195, %v4210
    %v4213 = vunpack.c.l.s4 1983009808
    %v4214 = vunpack.c.0.s8 %v4213
    %v4215 = vlaneseq
    %v4216 = vshrl.u32 %v4215, 7
    %v4217 = vsub.s32 %v4214, %v4216
    %v4218 = vrot.slane %v4196, %v4217
    %v4220 = vunpack.c.l.s4 1983009808
    %v4221 = vunpack.c.0.s8 %v4220
    %v4222 = vlaneseq
    %v4223 = vshrl.u32 %v4222, 7
    %v4224 = vsub.s32 %v4221, %v4223
    %v4225 = vrot.slane %v4197, %v4224
    %v4226 = vcombine.low %v4204, %v4218
    %v4227 = vcombine.high %v4204, %v4218
    %v4228 = vcombine.low %v4211, %v4225
    %v4229 = vcombine.high %v4211, %v4225
    %v4230 = vcombine.low %v320, %v326
    %v4231 = vcombine.high %v320, %v326
    %v4232 = vcombine.low %v332, %v338
    %v4233 = vcombine.high %v332, %v338
    %v4235 = vunpack.c.l.s4 1983009808
    %v4236 = vunpack.c.0.s8 %v4235
    %v4237 = vlaneseq
    %v4238 = vshrl.u32 %v4237, 7
    %v4239 = vsub.s32 %v4236, %v4238
    %v4240 = vrot.slane %v4230, %v4239
    %v4242 = vunpack.c.l.s4 1983009808
    %v4243 = vunpack.c.0.s8 %v4242
    %v4244 = vlaneseq
    %v4245 = vshrl.u32 %v4244, 7
    %v4246 = vsub.s32 %v4243, %v4245
    %v4247 = vrot.slane %v4231, %v4246
    %v4249 = vunpack.c.l.s4 1983009808
    %v4250 = vunpack.c.0.s8 %v4249
    %v4251 = vlaneseq
    %v4252 = vshrl.u32 %v4251, 7
    %v4253 = vsub.s32 %v4250, %v4252
    %v4254 = vrot.slane %v4232, %v4253
    %v4256 = vunpack.c.l.s4 1983009808
    %v4257 = vunpack.c.0.s8 %v4256
    %v4258 = vlaneseq
    %v4259 = vshrl.u32 %v4258, 7
    %v4260 = vsub.s32 %v4257, %v4259
    %v4261 = vrot.slane %v4233, %v4260
    %v4262 = vcombine.low %v4240, %v4254
    %v4263 = vcombine.high %v4240, %v4254
    %v4264 = vcombine.low %v4247, %v4261
    %v4265 = vcombine.high %v4247, %v4261
    %v4266 = vcombine.low %v321, %v327
    %v4267 = vcombine.high %v321, %v327
    %v4268 = vcombine.low %v333, %v339
    %v4269 = vcombine.high %v333, %v339
    %v4271 = vunpack.c.l.s4 1983009808
    %v4272 = vunpack.c.0.s8 %v4271
    %v4273 = vlaneseq
    %v4274 = vshrl.u32 %v4273, 7
    %v4275 = vsub.s32 %v4272, %v4274
    %v4276 = vrot.slane %v4266, %v4275
    %v4278 = vunpack.c.l.s4 1983009808
    %v4279 = vunpack.c.0.s8 %v4278
    %v4280 = vlaneseq
    %v4281 = vshrl.u32 %v4280, 7
    %v4282 = vsub.s32 %v4279, %v4281
    %v4283 = vrot.slane %v4267, %v4282
    %v4285 = vunpack.c.l.s4 1983009808
    %v4286 = vunpack.c.0.s8 %v4285
    %v4287 = vlaneseq
    %v4288 = vshrl.u32 %v4287, 7
    %v4289 = vsub.s32 %v4286, %v4288
    %v4290 = vrot.slane %v4268, %v4289
    %v4292 = vunpack.c.l.s4 1983009808
    %v4293 = vunpack.c.0.s8 %v4292
    %v4294 = vlaneseq
    %v4295 = vshrl.u32 %v4294, 7
    %v4296 = vsub.s32 %v4293, %v4295
    %v4297 = vrot.slane %v4269, %v4296
    %v4298 = vcombine.low %v4276, %v4290
    %v4299 = vcombine.high %v4276, %v4290
    %v4300 = vcombine.low %v4283, %v4297
    %v4301 = vcombine.high %v4283, %v4297
    %v4302 = vcombine.low %v322, %v328
    %v4303 = vcombine.high %v322, %v328
    %v4304 = vcombine.low %v334, %v340
    %v4305 = vcombine.high %v334, %v340
    %v4307 = vunpack.c.l.s4 1983009808
    %v4308 = vunpack.c.0.s8 %v4307
    %v4309 = vlaneseq
    %v4310 = vshrl.u32 %v4309, 7
    %v4311 = vsub.s32 %v4308, %v4310
    %v4312 = vrot.slane %v4302, %v4311
    %v4314 = vunpack.c.l.s4 1983009808
    %v4315 = vunpack.c.0.s8 %v4314
    %v4316 = vlaneseq
    %v4317 = vshrl.u32 %v4316, 7
    %v4318 = vsub.s32 %v4315, %v4317
    %v4319 = vrot.slane %v4303, %v4318
    %v4321 = vunpack.c.l.s4 1983009808
    %v4322 = vunpack.c.0.s8 %v4321
    %v4323 = vlaneseq
    %v4324 = vshrl.u32 %v4323, 7
    %v4325 = vsub.s32 %v4322, %v4324
    %v4326 = vrot.slane %v4304, %v4325
    %v4328 = vunpack.c.l.s4 1983009808
    %v4329 = vunpack.c.0.s8 %v4328
    %v4330 = vlaneseq
    %v4331 = vshrl.u32 %v4330, 7
    %v4332 = vsub.s32 %v4329, %v4331
    %v4333 = vrot.slane %v4305, %v4332
    %v4334 = vcombine.low %v4312, %v4326
    %v4335 = vcombine.high %v4312, %v4326
    %v4336 = vcombine.low %v4319, %v4333
    %v4337 = vcombine.high %v4319, %v4333
    %v4338 = vcombine.low %v323, %v329
    %v4339 = vcombine.high %v323, %v329
    %v4340 = vcombine.low %v335, %v341
    %v4341 = vcombine.high %v335, %v341
    %v4343 = vunpack.c.l.s4 1983009808
    %v4344 = vunpack.c.0.s8 %v4343
    %v4345 = vlaneseq
    %v4346 = vshrl.u32 %v4345, 7
    %v4347 = vsub.s32 %v4344, %v4346
    %v4348 = vrot.slane %v4338, %v4347
    %v4350 = vunpack.c.l.s4 1983009808
    %v4351 = vunpack.c.0.s8 %v4350
    %v4352 = vlaneseq
    %v4353 = vshrl.u32 %v4352, 7
    %v4354 = vsub.s32 %v4351, %v4353
    %v4355 = vrot.slane %v4339, %v4354
    %v4357 = vunpack.c.l.s4 1983009808
    %v4358 = vunpack.c.0.s8 %v4357
    %v4359 = vlaneseq
    %v4360 = vshrl.u32 %v4359, 7
    %v4361 = vsub.s32 %v4358, %v4360
    %v4362 = vrot.slane %v4340, %v4361
    %v4364 = vunpack.c.l.s4 1983009808
    %v4365 = vunpack.c.0.s8 %v4364
    %v4366 = vlaneseq
    %v4367 = vshrl.u32 %v4366, 7
    %v4368 = vsub.s32 %v4365, %v4367
    %v4369 = vrot.slane %v4341, %v4368
    %v4370 = vcombine.low %v4348, %v4362
    %v4371 = vcombine.high %v4348, %v4362
    %v4372 = vcombine.low %v4355, %v4369
    %v4373 = vcombine.high %v4355, %v4369
    %v4374 = vcombine.low %v342, %v348
    %v4375 = vcombine.high %v342, %v348
    %v4376 = vcombine.low %v354, %v360
    %v4377 = vcombine.high %v354, %v360
    %v4379 = vunpack.c.l.s4 1983009808
    %v4380 = vunpack.c.0.s8 %v4379
    %v4381 = vlaneseq
    %v4382 = vshrl.u32 %v4381, 7
    %v4383 = vsub.s32 %v4380, %v4382
    %v4384 = vrot.slane %v4374, %v4383
    %v4386 = vunpack.c.l.s4 1983009808
    %v4387 = vunpack.c.0.s8 %v4386
    %v4388 = vlaneseq
    %v4389 = vshrl.u32 %v4388, 7
    %v4390 = vsub.s32 %v4387, %v4389
    %v4391 = vrot.slane %v4375, %v4390
    %v4393 = vunpack.c.l.s4 1983009808
    %v4394 = vunpack.c.0.s8 %v4393
    %v4395 = vlaneseq
    %v4396 = vshrl.u32 %v4395, 7
    %v4397 = vsub.s32 %v4394, %v4396
    %v4398 = vrot.slane %v4376, %v4397
    %v4400 = vunpack.c.l.s4 1983009808
    %v4401 = vunpack.c.0.s8 %v4400
    %v4402 = vlaneseq
    %v4403 = vshrl.u32 %v4402, 7
    %v4404 = vsub.s32 %v4401, %v4403
    %v4405 = vrot.slane %v4377, %v4404
    %v4406 = vcombine.low %v4384, %v4398
    %v4407 = vcombine.high %v4384, %v4398
    %v4408 = vcombine.low %v4391, %v4405
    %v4409 = vcombine.high %v4391, %v4405
    %v4410 = vcombine.low %v343, %v349
    %v4411 = vcombine.high %v343, %v349
    %v4412 = vcombine.low %v355, %v361
    %v4413 = vcombine.high %v355, %v361
    %v4415 = vunpack.c.l.s4 1983009808
    %v4416 = vunpack.c.0.s8 %v4415
    %v4417 = vlaneseq
    %v4418 = vshrl.u32 %v4417, 7
    %v4419 = vsub.s32 %v4416, %v4418
    %v4420 = vrot.slane %v4410, %v4419
    %v4422 = vunpack.c.l.s4 1983009808
    %v4423 = vunpack.c.0.s8 %v4422
    %v4424 = vlaneseq
    %v4425 = vshrl.u32 %v4424, 7
    %v4426 = vsub.s32 %v4423, %v4425
    %v4427 = vrot.slane %v4411, %v4426
    %v4429 = vunpack.c.l.s4 1983009808
    %v4430 = vunpack.c.0.s8 %v4429
    %v4431 = vlaneseq
    %v4432 = vshrl.u32 %v4431, 7
    %v4433 = vsub.s32 %v4430, %v4432
    %v4434 = vrot.slane %v4412, %v4433
    %v4436 = vunpack.c.l.s4 1983009808
    %v4437 = vunpack.c.0.s8 %v4436
    %v4438 = vlaneseq
    %v4439 = vshrl.u32 %v4438, 7
    %v4440 = vsub.s32 %v4437, %v4439
    %v4441 = vrot.slane %v4413, %v4440
    %v4442 = vcombine.low %v4420, %v4434
    %v4443 = vcombine.high %v4420, %v4434
    %v4444 = vcombine.low %v4427, %v4441
    %v4445 = vcombine.high %v4427, %v4441
    %v4446 = vcombine.low %v344, %v350
    %v4447 = vcombine.high %v344, %v350
    %v4448 = vcombine.low %v356, %v362
    %v4449 = vcombine.high %v356, %v362
    %v4451 = vunpack.c.l.s4 1983009808
    %v4452 = vunpack.c.0.s8 %v4451
    %v4453 = vlaneseq
    %v4454 = vshrl.u32 %v4453, 7
    %v4455 = vsub.s32 %v4452, %v4454
    %v4456 = vrot.slane %v4446, %v4455
    %v4458 = vunpack.c.l.s4 1983009808
    %v4459 = vunpack.c.0.s8 %v4458
    %v4460 = vlaneseq
    %v4461 = vshrl.u32 %v4460, 7
    %v4462 = vsub.s32 %v4459, %v4461
    %v4463 = vrot.slane %v4447, %v4462
    %v4465 = vunpack.c.l.s4 1983009808
    %v4466 = vunpack.c.0.s8 %v4465
    %v4467 = vlaneseq
    %v4468 = vshrl.u32 %v4467, 7
    %v4469 = vsub.s32 %v4466, %v4468
    %v4470 = vrot.slane %v4448, %v4469
    %v4472 = vunpack.c.l.s4 1983009808
    %v4473 = vunpack.c.0.s8 %v4472
    %v4474 = vlaneseq
    %v4475 = vshrl.u32 %v4474, 7
    %v4476 = vsub.s32 %v4473, %v4475
    %v4477 = vrot.slane %v4449, %v4476
    %v4478 = vcombine.low %v4456, %v4470
    %v4479 = vcombine.high %v4456, %v4470
    %v4480 = vcombine.low %v4463, %v4477
    %v4481 = vcombine.high %v4463, %v4477
    %v4482 = vcombine.low %v345, %v351
    %v4483 = vcombine.high %v345, %v351
    %v4484 = vcombine.low %v357, %v363
    %v4485 = vcombine.high %v357, %v363
    %v4487 = vunpack.c.l.s4 1983009808
    %v4488 = vunpack.c.0.s8 %v4487
    %v4489 = vlaneseq
    %v4490 = vshrl.u32 %v4489, 7
    %v4491 = vsub.s32 %v4488, %v4490
    %v4492 = vrot.slane %v4482, %v4491
    %v4494 = vunpack.c.l.s4 1983009808
    %v4495 = vunpack.c.0.s8 %v4494
    %v4496 = vlaneseq
    %v4497 = vshrl.u32 %v4496, 7
    %v4498 = vsub.s32 %v4495, %v4497
    %v4499 = vrot.slane %v4483, %v4498
    %v4501 = vunpack.c.l.s4 1983009808
    %v4502 = vunpack.c.0.s8 %v4501
    %v4503 = vlaneseq
    %v4504 = vshrl.u32 %v4503, 7
    %v4505 = vsub.s32 %v4502, %v4504
    %v4506 = vrot.slane %v4484, %v4505
    %v4508 = vunpack.c.l.s4 1983009808
    %v4509 = vunpack.c.0.s8 %v4508
    %v4510 = vlaneseq
    %v4511 = vshrl.u32 %v4510, 7
    %v4512 = vsub.s32 %v4509, %v4511
    %v4513 = vrot.slane %v4485, %v4512
    %v4514 = vcombine.low %v4492, %v4506
    %v4515 = vcombine.high %v4492, %v4506
    %v4516 = vcombine.low %v4499, %v4513
    %v4517 = vcombine.high %v4499, %v4513
    %v4518 = vcombine.low %v346, %v352
    %v4519 = vcombine.high %v346, %v352
    %v4520 = vcombine.low %v358, %v364
    %v4521 = vcombine.high %v358, %v364
    %v4523 = vunpack.c.l.s4 1983009808
    %v4524 = vunpack.c.0.s8 %v4523
    %v4525 = vlaneseq
    %v4526 = vshrl.u32 %v4525, 7
    %v4527 = vsub.s32 %v4524, %v4526
    %v4528 = vrot.slane %v4518, %v4527
    %v4530 = vunpack.c.l.s4 1983009808
    %v4531 = vunpack.c.0.s8 %v4530
    %v4532 = vlaneseq
    %v4533 = vshrl.u32 %v4532, 7
    %v4534 = vsub.s32 %v4531, %v4533
    %v4535 = vrot.slane %v4519, %v4534
    %v4537 = vunpack.c.l.s4 1983009808
    %v4538 = vunpack.c.0.s8 %v4537
    %v4539 = vlaneseq
    %v4540 = vshrl.u32 %v4539, 7
    %v4541 = vsub.s32 %v4538, %v4540
    %v4542 = vrot.slane %v4520, %v4541
    %v4544 = vunpack.c.l.s4 1983009808
    %v4545 = vunpack.c.0.s8 %v4544
    %v4546 = vlaneseq
    %v4547 = vshrl.u32 %v4546, 7
    %v4548 = vsub.s32 %v4545, %v4547
    %v4549 = vrot.slane %v4521, %v4548
    %v4550 = vcombine.low %v4528, %v4542
    %v4551 = vcombine.high %v4528, %v4542
    %v4552 = vcombine.low %v4535, %v4549
    %v4553 = vcombine.high %v4535, %v4549
    %v4554 = vcombine.low %v347, %v353
    %v4555 = vcombine.high %v347, %v353
    %v4556 = vcombine.low %v359, %v365
    %v4557 = vcombine.high %v359, %v365
    %v4559 = vunpack.c.l.s4 1983009808
    %v4560 = vunpack.c.0.s8 %v4559
    %v4561 = vlaneseq
    %v4562 = vshrl.u32 %v4561, 7
    %v4563 = vsub.s32 %v4560, %v4562
    %v4564 = vrot.slane %v4554, %v4563
    %v4566 = vunpack.c.l.s4 1983009808
    %v4567 = vunpack.c.0.s8 %v4566
    %v4568 = vlaneseq
    %v4569 = vshrl.u32 %v4568, 7
    %v4570 = vsub.s32 %v4567, %v4569
    %v4571 = vrot.slane %v4555, %v4570
    %v4573 = vunpack.c.l.s4 1983009808
    %v4574 = vunpack.c.0.s8 %v4573
    %v4575 = vlaneseq
    %v4576 = vshrl.u32 %v4575, 7
    %v4577 = vsub.s32 %v4574, %v4576
    %v4578 = vrot.slane %v4556, %v4577
    %v4580 = vunpack.c.l.s4 1983009808
    %v4581 = vunpack.c.0.s8 %v4580
    %v4582 = vlaneseq
    %v4583 = vshrl.u32 %v4582, 7
    %v4584 = vsub.s32 %v4581, %v4583
    %v4585 = vrot.slane %v4557, %v4584
    %v4586 = vcombine.low %v4564, %v4578
    %v4587 = vcombine.high %v4564, %v4578
    %v4588 = vcombine.low %v4571, %v4585
    %v4589 = vcombine.high %v4571, %v4585
    %v4590 = vcombine.low %v366, %v372
    %v4591 = vcombine.high %v366, %v372
    %v4592 = vcombine.low %v378, %v384
    %v4593 = vcombine.high %v378, %v384
    %v4595 = vunpack.c.l.s4 1983009808
    %v4596 = vunpack.c.0.s8 %v4595
    %v4597 = vlaneseq
    %v4598 = vshrl.u32 %v4597, 7
    %v4599 = vsub.s32 %v4596, %v4598
    %v4600 = vrot.slane %v4590, %v4599
    %v4602 = vunpack.c.l.s4 1983009808
    %v4603 = vunpack.c.0.s8 %v4602
    %v4604 = vlaneseq
    %v4605 = vshrl.u32 %v4604, 7
    %v4606 = vsub.s32 %v4603, %v4605
    %v4607 = vrot.slane %v4591, %v4606
    %v4609 = vunpack.c.l.s4 1983009808
    %v4610 = vunpack.c.0.s8 %v4609
    %v4611 = vlaneseq
    %v4612 = vshrl.u32 %v4611, 7
    %v4613 = vsub.s32 %v4610, %v4612
    %v4614 = vrot.slane %v4592, %v4613
    %v4616 = vunpack.c.l.s4 1983009808
    %v4617 = vunpack.c.0.s8 %v4616
    %v4618 = vlaneseq
    %v4619 = vshrl.u32 %v4618, 7
    %v4620 = vsub.s32 %v4617, %v4619
    %v4621 = vrot.slane %v4593, %v4620
    %v4622 = vcombine.low %v4600, %v4614
    %v4623 = vcombine.high %v4600, %v4614
    %v4624 = vcombine.low %v4607, %v4621
    %v4625 = vcombine.high %v4607, %v4621
    %v4626 = vcombine.low %v367, %v373
    %v4627 = vcombine.high %v367, %v373
    %v4628 = vcombine.low %v379, %v385
    %v4629 = vcombine.high %v379, %v385
    %v4631 = vunpack.c.l.s4 1983009808
    %v4632 = vunpack.c.0.s8 %v4631
    %v4633 = vlaneseq
    %v4634 = vshrl.u32 %v4633, 7
    %v4635 = vsub.s32 %v4632, %v4634
    %v4636 = vrot.slane %v4626, %v4635
    %v4638 = vunpack.c.l.s4 1983009808
    %v4639 = vunpack.c.0.s8 %v4638
    %v4640 = vlaneseq
    %v4641 = vshrl.u32 %v4640, 7
    %v4642 = vsub.s32 %v4639, %v4641
    %v4643 = vrot.slane %v4627, %v4642
    %v4645 = vunpack.c.l.s4 1983009808
    %v4646 = vunpack.c.0.s8 %v4645
    %v4647 = vlaneseq
    %v4648 = vshrl.u32 %v4647, 7
    %v4649 = vsub.s32 %v4646, %v4648
    %v4650 = vrot.slane %v4628, %v4649
    %v4652 = vunpack.c.l.s4 1983009808
    %v4653 = vunpack.c.0.s8 %v4652
    %v4654 = vlaneseq
    %v4655 = vshrl.u32 %v4654, 7
    %v4656 = vsub.s32 %v4653, %v4655
    %v4657 = vrot.slane %v4629, %v4656
    %v4658 = vcombine.low %v4636, %v4650
    %v4659 = vcombine.high %v4636, %v4650
    %v4660 = vcombine.low %v4643, %v4657
    %v4661 = vcombine.high %v4643, %v4657
    %v4662 = vcombine.low %v368, %v374
    %v4663 = vcombine.high %v368, %v374
    %v4664 = vcombine.low %v380, %v386
    %v4665 = vcombine.high %v380, %v386
    %v4667 = vunpack.c.l.s4 1983009808
    %v4668 = vunpack.c.0.s8 %v4667
    %v4669 = vlaneseq
    %v4670 = vshrl.u32 %v4669, 7
    %v4671 = vsub.s32 %v4668, %v4670
    %v4672 = vrot.slane %v4662, %v4671
    %v4674 = vunpack.c.l.s4 1983009808
    %v4675 = vunpack.c.0.s8 %v4674
    %v4676 = vlaneseq
    %v4677 = vshrl.u32 %v4676, 7
    %v4678 = vsub.s32 %v4675, %v4677
    %v4679 = vrot.slane %v4663, %v4678
    %v4681 = vunpack.c.l.s4 1983009808
    %v4682 = vunpack.c.0.s8 %v4681
    %v4683 = vlaneseq
    %v4684 = vshrl.u32 %v4683, 7
    %v4685 = vsub.s32 %v4682, %v4684
    %v4686 = vrot.slane %v4664, %v4685
    %v4688 = vunpack.c.l.s4 1983009808
    %v4689 = vunpack.c.0.s8 %v4688
    %v4690 = vlaneseq
    %v4691 = vshrl.u32 %v4690, 7
    %v4692 = vsub.s32 %v4689, %v4691
    %v4693 = vrot.slane %v4665, %v4692
    %v4694 = vcombine.low %v4672, %v4686
    %v4695 = vcombine.high %v4672, %v4686
    %v4696 = vcombine.low %v4679, %v4693
    %v4697 = vcombine.high %v4679, %v4693
    %v4698 = vcombine.low %v369, %v375
    %v4699 = vcombine.high %v369, %v375
    %v4700 = vcombine.low %v381, %v387
    %v4701 = vcombine.high %v381, %v387
    %v4703 = vunpack.c.l.s4 1983009808
    %v4704 = vunpack.c.0.s8 %v4703
    %v4705 = vlaneseq
    %v4706 = vshrl.u32 %v4705, 7
    %v4707 = vsub.s32 %v4704, %v4706
    %v4708 = vrot.slane %v4698, %v4707
    %v4710 = vunpack.c.l.s4 1983009808
    %v4711 = vunpack.c.0.s8 %v4710
    %v4712 = vlaneseq
    %v4713 = vshrl.u32 %v4712, 7
    %v4714 = vsub.s32 %v4711, %v4713
    %v4715 = vrot.slane %v4699, %v4714
    %v4717 = vunpack.c.l.s4 1983009808
    %v4718 = vunpack.c.0.s8 %v4717
    %v4719 = vlaneseq
    %v4720 = vshrl.u32 %v4719, 7
    %v4721 = vsub.s32 %v4718, %v4720
    %v4722 = vrot.slane %v4700, %v4721
    %v4724 = vunpack.c.l.s4 1983009808
    %v4725 = vunpack.c.0.s8 %v4724
    %v4726 = vlaneseq
    %v4727 = vshrl.u32 %v4726, 7
    %v4728 = vsub.s32 %v4725, %v4727
    %v4729 = vrot.slane %v4701, %v4728
    %v4730 = vcombine.low %v4708, %v4722
    %v4731 = vcombine.high %v4708, %v4722
    %v4732 = vcombine.low %v4715, %v4729
    %v4733 = vcombine.high %v4715, %v4729
    %v4734 = vcombine.low %v370, %v376
    %v4735 = vcombine.high %v370, %v376
    %v4736 = vcombine.low %v382, %v388
    %v4737 = vcombine.high %v382, %v388
    %v4739 = vunpack.c.l.s4 1983009808
    %v4740 = vunpack.c.0.s8 %v4739
    %v4741 = vlaneseq
    %v4742 = vshrl.u32 %v4741, 7
    %v4743 = vsub.s32 %v4740, %v4742
    %v4744 = vrot.slane %v4734, %v4743
    %v4746 = vunpack.c.l.s4 1983009808
    %v4747 = vunpack.c.0.s8 %v4746
    %v4748 = vlaneseq
    %v4749 = vshrl.u32 %v4748, 7
    %v4750 = vsub.s32 %v4747, %v4749
    %v4751 = vrot.slane %v4735, %v4750
    %v4753 = vunpack.c.l.s4 1983009808
    %v4754 = vunpack.c.0.s8 %v4753
    %v4755 = vlaneseq
    %v4756 = vshrl.u32 %v4755, 7
    %v4757 = vsub.s32 %v4754, %v4756
    %v4758 = vrot.slane %v4736, %v4757
    %v4760 = vunpack.c.l.s4 1983009808
    %v4761 = vunpack.c.0.s8 %v4760
    %v4762 = vlaneseq
    %v4763 = vshrl.u32 %v4762, 7
    %v4764 = vsub.s32 %v4761, %v4763
    %v4765 = vrot.slane %v4737, %v4764
    %v4766 = vcombine.low %v4744, %v4758
    %v4767 = vcombine.high %v4744, %v4758
    %v4768 = vcombine.low %v4751, %v4765
    %v4769 = vcombine.high %v4751, %v4765
    %v4770 = vcombine.low %v371, %v377
    %v4771 = vcombine.high %v371, %v377
    %v4772 = vcombine.low %v383, %v389
    %v4773 = vcombine.high %v383, %v389
    %v4775 = vunpack.c.l.s4 1983009808
    %v4776 = vunpack.c.0.s8 %v4775
    %v4777 = vlaneseq
    %v4778 = vshrl.u32 %v4777, 7
    %v4779 = vsub.s32 %v4776, %v4778
    %v4780 = vrot.slane %v4770, %v4779
    %v4782 = vunpack.c.l.s4 1983009808
    %v4783 = vunpack.c.0.s8 %v4782
    %v4784 = vlaneseq
    %v4785 = vshrl.u32 %v4784, 7
    %v4786 = vsub.s32 %v4783, %v4785
    %v4787 = vrot.slane %v4771, %v4786
    %v4789 = vunpack.c.l.s4 1983009808
    %v4790 = vunpack.c.0.s8 %v4789
    %v4791 = vlaneseq
    %v4792 = vshrl.u32 %v4791, 7
    %v4793 = vsub.s32 %v4790, %v4792
    %v4794 = vrot.slane %v4772, %v4793
    %v4796 = vunpack.c.l.s4 1983009808
    %v4797 = vunpack.c.0.s8 %v4796
    %v4798 = vlaneseq
    %v4799 = vshrl.u32 %v4798, 7
    %v4800 = vsub.s32 %v4797, %v4799
    %v4801 = vrot.slane %v4773, %v4800
    %v4802 = vcombine.low %v4780, %v4794
    %v4803 = vcombine.high %v4780, %v4794
    %v4804 = vcombine.low %v4787, %v4801
    %v4805 = vcombine.high %v4787, %v4801
    %v4806 = vcombine.low %v390, %v396
    %v4807 = vcombine.high %v390, %v396
    %v4808 = vcombine.low %v402, %v408
    %v4809 = vcombine.high %v402, %v408
    %v4811 = vunpack.c.l.s4 1983009808
    %v4812 = vunpack.c.0.s8 %v4811
    %v4813 = vlaneseq
    %v4814 = vshrl.u32 %v4813, 7
    %v4815 = vsub.s32 %v4812, %v4814
    %v4816 = vrot.slane %v4806, %v4815
    %v4818 = vunpack.c.l.s4 1983009808
    %v4819 = vunpack.c.0.s8 %v4818
    %v4820 = vlaneseq
    %v4821 = vshrl.u32 %v4820, 7
    %v4822 = vsub.s32 %v4819, %v4821
    %v4823 = vrot.slane %v4807, %v4822
    %v4825 = vunpack.c.l.s4 1983009808
    %v4826 = vunpack.c.0.s8 %v4825
    %v4827 = vlaneseq
    %v4828 = vshrl.u32 %v4827, 7
    %v4829 = vsub.s32 %v4826, %v4828
    %v4830 = vrot.slane %v4808, %v4829
    %v4832 = vunpack.c.l.s4 1983009808
    %v4833 = vunpack.c.0.s8 %v4832
    %v4834 = vlaneseq
    %v4835 = vshrl.u32 %v4834, 7
    %v4836 = vsub.s32 %v4833, %v4835
    %v4837 = vrot.slane %v4809, %v4836
    %v4838 = vcombine.low %v4816, %v4830
    %v4839 = vcombine.high %v4816, %v4830
    %v4840 = vcombine.low %v4823, %v4837
    %v4841 = vcombine.high %v4823, %v4837
    %v4842 = vcombine.low %v391, %v397
    %v4843 = vcombine.high %v391, %v397
    %v4844 = vcombine.low %v403, %v409
    %v4845 = vcombine.high %v403, %v409
    %v4847 = vunpack.c.l.s4 1983009808
    %v4848 = vunpack.c.0.s8 %v4847
    %v4849 = vlaneseq
    %v4850 = vshrl.u32 %v4849, 7
    %v4851 = vsub.s32 %v4848, %v4850
    %v4852 = vrot.slane %v4842, %v4851
    %v4854 = vunpack.c.l.s4 1983009808
    %v4855 = vunpack.c.0.s8 %v4854
    %v4856 = vlaneseq
    %v4857 = vshrl.u32 %v4856, 7
    %v4858 = vsub.s32 %v4855, %v4857
    %v4859 = vrot.slane %v4843, %v4858
    %v4861 = vunpack.c.l.s4 1983009808
    %v4862 = vunpack.c.0.s8 %v4861
    %v4863 = vlaneseq
    %v4864 = vshrl.u32 %v4863, 7
    %v4865 = vsub.s32 %v4862, %v4864
    %v4866 = vrot.slane %v4844, %v4865
    %v4868 = vunpack.c.l.s4 1983009808
    %v4869 = vunpack.c.0.s8 %v4868
    %v4870 = vlaneseq
    %v4871 = vshrl.u32 %v4870, 7
    %v4872 = vsub.s32 %v4869, %v4871
    %v4873 = vrot.slane %v4845, %v4872
    %v4874 = vcombine.low %v4852, %v4866
    %v4875 = vcombine.high %v4852, %v4866
    %v4876 = vcombine.low %v4859, %v4873
    %v4877 = vcombine.high %v4859, %v4873
    %v4878 = vcombine.low %v392, %v398
    %v4879 = vcombine.high %v392, %v398
    %v4880 = vcombine.low %v404, %v410
    %v4881 = vcombine.high %v404, %v410
    %v4883 = vunpack.c.l.s4 1983009808
    %v4884 = vunpack.c.0.s8 %v4883
    %v4885 = vlaneseq
    %v4886 = vshrl.u32 %v4885, 7
    %v4887 = vsub.s32 %v4884, %v4886
    %v4888 = vrot.slane %v4878, %v4887
    %v4890 = vunpack.c.l.s4 1983009808
    %v4891 = vunpack.c.0.s8 %v4890
    %v4892 = vlaneseq
    %v4893 = vshrl.u32 %v4892, 7
    %v4894 = vsub.s32 %v4891, %v4893
    %v4895 = vrot.slane %v4879, %v4894
    %v4897 = vunpack.c.l.s4 1983009808
    %v4898 = vunpack.c.0.s8 %v4897
    %v4899 = vlaneseq
    %v4900 = vshrl.u32 %v4899, 7
    %v4901 = vsub.s32 %v4898, %v4900
    %v4902 = vrot.slane %v4880, %v4901
    %v4904 = vunpack.c.l.s4 1983009808
    %v4905 = vunpack.c.0.s8 %v4904
    %v4906 = vlaneseq
    %v4907 = vshrl.u32 %v4906, 7
    %v4908 = vsub.s32 %v4905, %v4907
    %v4909 = vrot.slane %v4881, %v4908
    %v4910 = vcombine.low %v4888, %v4902
    %v4911 = vcombine.high %v4888, %v4902
    %v4912 = vcombine.low %v4895, %v4909
    %v4913 = vcombine.high %v4895, %v4909
    %v4914 = vcombine.low %v393, %v399
    %v4915 = vcombine.high %v393, %v399
    %v4916 = vcombine.low %v405, %v411
    %v4917 = vcombine.high %v405, %v411
    %v4919 = vunpack.c.l.s4 1983009808
    %v4920 = vunpack.c.0.s8 %v4919
    %v4921 = vlaneseq
    %v4922 = vshrl.u32 %v4921, 7
    %v4923 = vsub.s32 %v4920, %v4922
    %v4924 = vrot.slane %v4914, %v4923
    %v4926 = vunpack.c.l.s4 1983009808
    %v4927 = vunpack.c.0.s8 %v4926
    %v4928 = vlaneseq
    %v4929 = vshrl.u32 %v4928, 7
    %v4930 = vsub.s32 %v4927, %v4929
    %v4931 = vrot.slane %v4915, %v4930
    %v4933 = vunpack.c.l.s4 1983009808
    %v4934 = vunpack.c.0.s8 %v4933
    %v4935 = vlaneseq
    %v4936 = vshrl.u32 %v4935, 7
    %v4937 = vsub.s32 %v4934, %v4936
    %v4938 = vrot.slane %v4916, %v4937
    %v4940 = vunpack.c.l.s4 1983009808
    %v4941 = vunpack.c.0.s8 %v4940
    %v4942 = vlaneseq
    %v4943 = vshrl.u32 %v4942, 7
    %v4944 = vsub.s32 %v4941, %v4943
    %v4945 = vrot.slane %v4917, %v4944
    %v4946 = vcombine.low %v4924, %v4938
    %v4947 = vcombine.high %v4924, %v4938
    %v4948 = vcombine.low %v4931, %v4945
    %v4949 = vcombine.high %v4931, %v4945
    %v4950 = vcombine.low %v394, %v400
    %v4951 = vcombine.high %v394, %v400
    %v4952 = vcombine.low %v406, %v412
    %v4953 = vcombine.high %v406, %v412
    %v4955 = vunpack.c.l.s4 1983009808
    %v4956 = vunpack.c.0.s8 %v4955
    %v4957 = vlaneseq
    %v4958 = vshrl.u32 %v4957, 7
    %v4959 = vsub.s32 %v4956, %v4958
    %v4960 = vrot.slane %v4950, %v4959
    %v4962 = vunpack.c.l.s4 1983009808
    %v4963 = vunpack.c.0.s8 %v4962
    %v4964 = vlaneseq
    %v4965 = vshrl.u32 %v4964, 7
    %v4966 = vsub.s32 %v4963, %v4965
    %v4967 = vrot.slane %v4951, %v4966
    %v4969 = vunpack.c.l.s4 1983009808
    %v4970 = vunpack.c.0.s8 %v4969
    %v4971 = vlaneseq
    %v4972 = vshrl.u32 %v4971, 7
    %v4973 = vsub.s32 %v4970, %v4972
    %v4974 = vrot.slane %v4952, %v4973
    %v4976 = vunpack.c.l.s4 1983009808
    %v4977 = vunpack.c.0.s8 %v4976
    %v4978 = vlaneseq
    %v4979 = vshrl.u32 %v4978, 7
    %v4980 = vsub.s32 %v4977, %v4979
    %v4981 = vrot.slane %v4953, %v4980
    %v4982 = vcombine.low %v4960, %v4974
    %v4983 = vcombine.high %v4960, %v4974
    %v4984 = vcombine.low %v4967, %v4981
    %v4985 = vcombine.high %v4967, %v4981
    %v4986 = vcombine.low %v395, %v401
    %v4987 = vcombine.high %v395, %v401
    %v4988 = vcombine.low %v407, %v413
    %v4989 = vcombine.high %v407, %v413
    %v4991 = vunpack.c.l.s4 1983009808
    %v4992 = vunpack.c.0.s8 %v4991
    %v4993 = vlaneseq
    %v4994 = vshrl.u32 %v4993, 7
    %v4995 = vsub.s32 %v4992, %v4994
    %v4996 = vrot.slane %v4986, %v4995
    %v4998 = vunpack.c.l.s4 1983009808
    %v4999 = vunpack.c.0.s8 %v4998
    %v5000 = vlaneseq
    %v5001 = vshrl.u32 %v5000, 7
    %v5002 = vsub.s32 %v4999, %v5001
    %v5003 = vrot.slane %v4987, %v5002
    %v5005 = vunpack.c.l.s4 1983009808
    %v5006 = vunpack.c.0.s8 %v5005
    %v5007 = vlaneseq
    %v5008 = vshrl.u32 %v5007, 7
    %v5009 = vsub.s32 %v5006, %v5008
    %v5010 = vrot.slane %v4988, %v5009
    %v5012 = vunpack.c.l.s4 1983009808
    %v5013 = vunpack.c.0.s8 %v5012
    %v5014 = vlaneseq
    %v5015 = vshrl.u32 %v5014, 7
    %v5016 = vsub.s32 %v5013, %v5015
    %v5017 = vrot.slane %v4989, %v5016
    %v5018 = vcombine.low %v4996, %v5010
    %v5019 = vcombine.high %v4996, %v5010
    %v5020 = vcombine.low %v5003, %v5017
    %v5021 = vcombine.high %v5003, %v5017
    %v5022 = vcombine.low %v414, %v420
    %v5023 = vcombine.high %v414, %v420
    %v5024 = vcombine.low %v426, %v432
    %v5025 = vcombine.high %v426, %v432
    %v5027 = vunpack.c.l.s4 1983009808
    %v5028 = vunpack.c.0.s8 %v5027
    %v5029 = vlaneseq
    %v5030 = vshrl.u32 %v5029, 7
    %v5031 = vsub.s32 %v5028, %v5030
    %v5032 = vrot.slane %v5022, %v5031
    %v5034 = vunpack.c.l.s4 1983009808
    %v5035 = vunpack.c.0.s8 %v5034
    %v5036 = vlaneseq
    %v5037 = vshrl.u32 %v5036, 7
    %v5038 = vsub.s32 %v5035, %v5037
    %v5039 = vrot.slane %v5023, %v5038
    %v5041 = vunpack.c.l.s4 1983009808
    %v5042 = vunpack.c.0.s8 %v5041
    %v5043 = vlaneseq
    %v5044 = vshrl.u32 %v5043, 7
    %v5045 = vsub.s32 %v5042, %v5044
    %v5046 = vrot.slane %v5024, %v5045
    %v5048 = vunpack.c.l.s4 1983009808
    %v5049 = vunpack.c.0.s8 %v5048
    %v5050 = vlaneseq
    %v5051 = vshrl.u32 %v5050, 7
    %v5052 = vsub.s32 %v5049, %v5051
    %v5053 = vrot.slane %v5025, %v5052
    %v5054 = vcombine.low %v5032, %v5046
    %v5055 = vcombine.high %v5032, %v5046
    %v5056 = vcombine.low %v5039, %v5053
    %v5057 = vcombine.high %v5039, %v5053
    %v5058 = vcombine.low %v415, %v421
    %v5059 = vcombine.high %v415, %v421
    %v5060 = vcombine.low %v427, %v433
    %v5061 = vcombine.high %v427, %v433
    %v5063 = vunpack.c.l.s4 1983009808
    %v5064 = vunpack.c.0.s8 %v5063
    %v5065 = vlaneseq
    %v5066 = vshrl.u32 %v5065, 7
    %v5067 = vsub.s32 %v5064, %v5066
    %v5068 = vrot.slane %v5058, %v5067
    %v5070 = vunpack.c.l.s4 1983009808
    %v5071 = vunpack.c.0.s8 %v5070
    %v5072 = vlaneseq
    %v5073 = vshrl.u32 %v5072, 7
    %v5074 = vsub.s32 %v5071, %v5073
    %v5075 = vrot.slane %v5059, %v5074
    %v5077 = vunpack.c.l.s4 1983009808
    %v5078 = vunpack.c.0.s8 %v5077
    %v5079 = vlaneseq
    %v5080 = vshrl.u32 %v5079, 7
    %v5081 = vsub.s32 %v5078, %v5080
    %v5082 = vrot.slane %v5060, %v5081
    %v5084 = vunpack.c.l.s4 1983009808
    %v5085 = vunpack.c.0.s8 %v5084
    %v5086 = vlaneseq
    %v5087 = vshrl.u32 %v5086, 7
    %v5088 = vsub.s32 %v5085, %v5087
    %v5089 = vrot.slane %v5061, %v5088
    %v5090 = vcombine.low %v5068, %v5082
    %v5091 = vcombine.high %v5068, %v5082
    %v5092 = vcombine.low %v5075, %v5089
    %v5093 = vcombine.high %v5075, %v5089
    %v5094 = vcombine.low %v416, %v422
    %v5095 = vcombine.high %v416, %v422
    %v5096 = vcombine.low %v428, %v434
    %v5097 = vcombine.high %v428, %v434
    %v5099 = vunpack.c.l.s4 1983009808
    %v5100 = vunpack.c.0.s8 %v5099
    %v5101 = vlaneseq
    %v5102 = vshrl.u32 %v5101, 7
    %v5103 = vsub.s32 %v5100, %v5102
    %v5104 = vrot.slane %v5094, %v5103
    %v5106 = vunpack.c.l.s4 1983009808
    %v5107 = vunpack.c.0.s8 %v5106
    %v5108 = vlaneseq
    %v5109 = vshrl.u32 %v5108, 7
    %v5110 = vsub.s32 %v5107, %v5109
    %v5111 = vrot.slane %v5095, %v5110
    %v5113 = vunpack.c.l.s4 1983009808
    %v5114 = vunpack.c.0.s8 %v5113
    %v5115 = vlaneseq
    %v5116 = vshrl.u32 %v5115, 7
    %v5117 = vsub.s32 %v5114, %v5116
    %v5118 = vrot.slane %v5096, %v5117
    %v5120 = vunpack.c.l.s4 1983009808
    %v5121 = vunpack.c.0.s8 %v5120
    %v5122 = vlaneseq
    %v5123 = vshrl.u32 %v5122, 7
    %v5124 = vsub.s32 %v5121, %v5123
    %v5125 = vrot.slane %v5097, %v5124
    %v5126 = vcombine.low %v5104, %v5118
    %v5127 = vcombine.high %v5104, %v5118
    %v5128 = vcombine.low %v5111, %v5125
    %v5129 = vcombine.high %v5111, %v5125
    %v5130 = vcombine.low %v417, %v423
    %v5131 = vcombine.high %v417, %v423
    %v5132 = vcombine.low %v429, %v435
    %v5133 = vcombine.high %v429, %v435
    %v5135 = vunpack.c.l.s4 1983009808
    %v5136 = vunpack.c.0.s8 %v5135
    %v5137 = vlaneseq
    %v5138 = vshrl.u32 %v5137, 7
    %v5139 = vsub.s32 %v5136, %v5138
    %v5140 = vrot.slane %v5130, %v5139
    %v5142 = vunpack.c.l.s4 1983009808
    %v5143 = vunpack.c.0.s8 %v5142
    %v5144 = vlaneseq
    %v5145 = vshrl.u32 %v5144, 7
    %v5146 = vsub.s32 %v5143, %v5145
    %v5147 = vrot.slane %v5131, %v5146
    %v5149 = vunpack.c.l.s4 1983009808
    %v5150 = vunpack.c.0.s8 %v5149
    %v5151 = vlaneseq
    %v5152 = vshrl.u32 %v5151, 7
    %v5153 = vsub.s32 %v5150, %v5152
    %v5154 = vrot.slane %v5132, %v5153
    %v5156 = vunpack.c.l.s4 1983009808
    %v5157 = vunpack.c.0.s8 %v5156
    %v5158 = vlaneseq
    %v5159 = vshrl.u32 %v5158, 7
    %v5160 = vsub.s32 %v5157, %v5159
    %v5161 = vrot.slane %v5133, %v5160
    %v5162 = vcombine.low %v5140, %v5154
    %v5163 = vcombine.high %v5140, %v5154
    %v5164 = vcombine.low %v5147, %v5161
    %v5165 = vcombine.high %v5147, %v5161
    %v5166 = vcombine.low %v418, %v424
    %v5167 = vcombine.high %v418, %v424
    %v5168 = vcombine.low %v430, %v436
    %v5169 = vcombine.high %v430, %v436
    %v5171 = vunpack.c.l.s4 1983009808
    %v5172 = vunpack.c.0.s8 %v5171
    %v5173 = vlaneseq
    %v5174 = vshrl.u32 %v5173, 7
    %v5175 = vsub.s32 %v5172, %v5174
    %v5176 = vrot.slane %v5166, %v5175
    %v5178 = vunpack.c.l.s4 1983009808
    %v5179 = vunpack.c.0.s8 %v5178
    %v5180 = vlaneseq
    %v5181 = vshrl.u32 %v5180, 7
    %v5182 = vsub.s32 %v5179, %v5181
    %v5183 = vrot.slane %v5167, %v5182
    %v5185 = vunpack.c.l.s4 1983009808
    %v5186 = vunpack.c.0.s8 %v5185
    %v5187 = vlaneseq
    %v5188 = vshrl.u32 %v5187, 7
    %v5189 = vsub.s32 %v5186, %v5188
    %v5190 = vrot.slane %v5168, %v5189
    %v5192 = vunpack.c.l.s4 1983009808
    %v5193 = vunpack.c.0.s8 %v5192
    %v5194 = vlaneseq
    %v5195 = vshrl.u32 %v5194, 7
    %v5196 = vsub.s32 %v5193, %v5195
    %v5197 = vrot.slane %v5169, %v5196
    %v5198 = vcombine.low %v5176, %v5190
    %v5199 = vcombine.high %v5176, %v5190
    %v5200 = vcombine.low %v5183, %v5197
    %v5201 = vcombine.high %v5183, %v5197
    %v5202 = vcombine.low %v419, %v425
    %v5203 = vcombine.high %v419, %v425
    %v5204 = vcombine.low %v431, %v437
    %v5205 = vcombine.high %v431, %v437
    %v5207 = vunpack.c.l.s4 1983009808
    %v5208 = vunpack.c.0.s8 %v5207
    %v5209 = vlaneseq
    %v5210 = vshrl.u32 %v5209, 7
    %v5211 = vsub.s32 %v5208, %v5210
    %v5212 = vrot.slane %v5202, %v5211
    %v5214 = vunpack.c.l.s4 1983009808
    %v5215 = vunpack.c.0.s8 %v5214
    %v5216 = vlaneseq
    %v5217 = vshrl.u32 %v5216, 7
    %v5218 = vsub.s32 %v5215, %v5217
    %v5219 = vrot.slane %v5203, %v5218
    %v5221 = vunpack.c.l.s4 1983009808
    %v5222 = vunpack.c.0.s8 %v5221
    %v5223 = vlaneseq
    %v5224 = vshrl.u32 %v5223, 7
    %v5225 = vsub.s32 %v5222, %v5224
    %v5226 = vrot.slane %v5204, %v5225
    %v5228 = vunpack.c.l.s4 1983009808
    %v5229 = vunpack.c.0.s8 %v5228
    %v5230 = vlaneseq
    %v5231 = vshrl.u32 %v5230, 7
    %v5232 = vsub.s32 %v5229, %v5231
    %v5233 = vrot.slane %v5205, %v5232
    %v5234 = vcombine.low %v5212, %v5226
    %v5235 = vcombine.high %v5212, %v5226
    %v5236 = vcombine.low %v5219, %v5233
    %v5237 = vcombine.high %v5219, %v5233
    %v5238 = vcombine.low %v438, %v444
    %v5239 = vcombine.high %v438, %v444
    %v5240 = vcombine.low %v450, %v456
    %v5241 = vcombine.high %v450, %v456
    %v5243 = vunpack.c.l.s4 1983009808
    %v5244 = vunpack.c.0.s8 %v5243
    %v5245 = vlaneseq
    %v5246 = vshrl.u32 %v5245, 7
    %v5247 = vsub.s32 %v5244, %v5246
    %v5248 = vrot.slane %v5238, %v5247
    %v5250 = vunpack.c.l.s4 1983009808
    %v5251 = vunpack.c.0.s8 %v5250
    %v5252 = vlaneseq
    %v5253 = vshrl.u32 %v5252, 7
    %v5254 = vsub.s32 %v5251, %v5253
    %v5255 = vrot.slane %v5239, %v5254
    %v5257 = vunpack.c.l.s4 1983009808
    %v5258 = vunpack.c.0.s8 %v5257
    %v5259 = vlaneseq
    %v5260 = vshrl.u32 %v5259, 7
    %v5261 = vsub.s32 %v5258, %v5260
    %v5262 = vrot.slane %v5240, %v5261
    %v5264 = vunpack.c.l.s4 1983009808
    %v5265 = vunpack.c.0.s8 %v5264
    %v5266 = vlaneseq
    %v5267 = vshrl.u32 %v5266, 7
    %v5268 = vsub.s32 %v5265, %v5267
    %v5269 = vrot.slane %v5241, %v5268
    %v5270 = vcombine.low %v5248, %v5262
    %v5271 = vcombine.high %v5248, %v5262
    %v5272 = vcombine.low %v5255, %v5269
    %v5273 = vcombine.high %v5255, %v5269
    %v5274 = vcombine.low %v439, %v445
    %v5275 = vcombine.high %v439, %v445
    %v5276 = vcombine.low %v451, %v457
    %v5277 = vcombine.high %v451, %v457
    %v5279 = vunpack.c.l.s4 1983009808
    %v5280 = vunpack.c.0.s8 %v5279
    %v5281 = vlaneseq
    %v5282 = vshrl.u32 %v5281, 7
    %v5283 = vsub.s32 %v5280, %v5282
    %v5284 = vrot.slane %v5274, %v5283
    %v5286 = vunpack.c.l.s4 1983009808
    %v5287 = vunpack.c.0.s8 %v5286
    %v5288 = vlaneseq
    %v5289 = vshrl.u32 %v5288, 7
    %v5290 = vsub.s32 %v5287, %v5289
    %v5291 = vrot.slane %v5275, %v5290
    %v5293 = vunpack.c.l.s4 1983009808
    %v5294 = vunpack.c.0.s8 %v5293
    %v5295 = vlaneseq
    %v5296 = vshrl.u32 %v5295, 7
    %v5297 = vsub.s32 %v5294, %v5296
    %v5298 = vrot.slane %v5276, %v5297
    %v5300 = vunpack.c.l.s4 1983009808
    %v5301 = vunpack.c.0.s8 %v5300
    %v5302 = vlaneseq
    %v5303 = vshrl.u32 %v5302, 7
    %v5304 = vsub.s32 %v5301, %v5303
    %v5305 = vrot.slane %v5277, %v5304
    %v5306 = vcombine.low %v5284, %v5298
    %v5307 = vcombine.high %v5284, %v5298
    %v5308 = vcombine.low %v5291, %v5305
    %v5309 = vcombine.high %v5291, %v5305
    %v5310 = vcombine.low %v440, %v446
    %v5311 = vcombine.high %v440, %v446
    %v5312 = vcombine.low %v452, %v458
    %v5313 = vcombine.high %v452, %v458
    %v5315 = vunpack.c.l.s4 1983009808
    %v5316 = vunpack.c.0.s8 %v5315
    %v5317 = vlaneseq
    %v5318 = vshrl.u32 %v5317, 7
    %v5319 = vsub.s32 %v5316, %v5318
    %v5320 = vrot.slane %v5310, %v5319
    %v5322 = vunpack.c.l.s4 1983009808
    %v5323 = vunpack.c.0.s8 %v5322
    %v5324 = vlaneseq
    %v5325 = vshrl.u32 %v5324, 7
    %v5326 = vsub.s32 %v5323, %v5325
    %v5327 = vrot.slane %v5311, %v5326
    %v5329 = vunpack.c.l.s4 1983009808
    %v5330 = vunpack.c.0.s8 %v5329
    %v5331 = vlaneseq
    %v5332 = vshrl.u32 %v5331, 7
    %v5333 = vsub.s32 %v5330, %v5332
    %v5334 = vrot.slane %v5312, %v5333
    %v5336 = vunpack.c.l.s4 1983009808
    %v5337 = vunpack.c.0.s8 %v5336
    %v5338 = vlaneseq
    %v5339 = vshrl.u32 %v5338, 7
    %v5340 = vsub.s32 %v5337, %v5339
    %v5341 = vrot.slane %v5313, %v5340
    %v5342 = vcombine.low %v5320, %v5334
    %v5343 = vcombine.high %v5320, %v5334
    %v5344 = vcombine.low %v5327, %v5341
    %v5345 = vcombine.high %v5327, %v5341
    %v5346 = vcombine.low %v441, %v447
    %v5347 = vcombine.high %v441, %v447
    %v5348 = vcombine.low %v453, %v459
    %v5349 = vcombine.high %v453, %v459
    %v5351 = vunpack.c.l.s4 1983009808
    %v5352 = vunpack.c.0.s8 %v5351
    %v5353 = vlaneseq
    %v5354 = vshrl.u32 %v5353, 7
    %v5355 = vsub.s32 %v5352, %v5354
    %v5356 = vrot.slane %v5346, %v5355
    %v5358 = vunpack.c.l.s4 1983009808
    %v5359 = vunpack.c.0.s8 %v5358
    %v5360 = vlaneseq
    %v5361 = vshrl.u32 %v5360, 7
    %v5362 = vsub.s32 %v5359, %v5361
    %v5363 = vrot.slane %v5347, %v5362
    %v5365 = vunpack.c.l.s4 1983009808
    %v5366 = vunpack.c.0.s8 %v5365
    %v5367 = vlaneseq
    %v5368 = vshrl.u32 %v5367, 7
    %v5369 = vsub.s32 %v5366, %v5368
    %v5370 = vrot.slane %v5348, %v5369
    %v5372 = vunpack.c.l.s4 1983009808
    %v5373 = vunpack.c.0.s8 %v5372
    %v5374 = vlaneseq
    %v5375 = vshrl.u32 %v5374, 7
    %v5376 = vsub.s32 %v5373, %v5375
    %v5377 = vrot.slane %v5349, %v5376
    %v5378 = vcombine.low %v5356, %v5370
    %v5379 = vcombine.high %v5356, %v5370
    %v5380 = vcombine.low %v5363, %v5377
    %v5381 = vcombine.high %v5363, %v5377
    %v5382 = vcombine.low %v442, %v448
    %v5383 = vcombine.high %v442, %v448
    %v5384 = vcombine.low %v454, %v460
    %v5385 = vcombine.high %v454, %v460
    %v5387 = vunpack.c.l.s4 1983009808
    %v5388 = vunpack.c.0.s8 %v5387
    %v5389 = vlaneseq
    %v5390 = vshrl.u32 %v5389, 7
    %v5391 = vsub.s32 %v5388, %v5390
    %v5392 = vrot.slane %v5382, %v5391
    %v5394 = vunpack.c.l.s4 1983009808
    %v5395 = vunpack.c.0.s8 %v5394
    %v5396 = vlaneseq
    %v5397 = vshrl.u32 %v5396, 7
    %v5398 = vsub.s32 %v5395, %v5397
    %v5399 = vrot.slane %v5383, %v5398
    %v5401 = vunpack.c.l.s4 1983009808
    %v5402 = vunpack.c.0.s8 %v5401
    %v5403 = vlaneseq
    %v5404 = vshrl.u32 %v5403, 7
    %v5405 = vsub.s32 %v5402, %v5404
    %v5406 = vrot.slane %v5384, %v5405
    %v5408 = vunpack.c.l.s4 1983009808
    %v5409 = vunpack.c.0.s8 %v5408
    %v5410 = vlaneseq
    %v5411 = vshrl.u32 %v5410, 7
    %v5412 = vsub.s32 %v5409, %v5411
    %v5413 = vrot.slane %v5385, %v5412
    %v5414 = vcombine.low %v5392, %v5406
    %v5415 = vcombine.high %v5392, %v5406
    %v5416 = vcombine.low %v5399, %v5413
    %v5417 = vcombine.high %v5399, %v5413
    %v5418 = vcombine.low %v443, %v449
    %v5419 = vcombine.high %v443, %v449
    %v5420 = vcombine.low %v455, %v461
    %v5421 = vcombine.high %v455, %v461
    %v5423 = vunpack.c.l.s4 1983009808
    %v5424 = vunpack.c.0.s8 %v5423
    %v5425 = vlaneseq
    %v5426 = vshrl.u32 %v5425, 7
    %v5427 = vsub.s32 %v5424, %v5426
    %v5428 = vrot.slane %v5418, %v5427
    %v5430 = vunpack.c.l.s4 1983009808
    %v5431 = vunpack.c.0.s8 %v5430
    %v5432 = vlaneseq
    %v5433 = vshrl.u32 %v5432, 7
    %v5434 = vsub.s32 %v5431, %v5433
    %v5435 = vrot.slane %v5419, %v5434
    %v5437 = vunpack.c.l.s4 1983009808
    %v5438 = vunpack.c.0.s8 %v5437
    %v5439 = vlaneseq
    %v5440 = vshrl.u32 %v5439, 7
    %v5441 = vsub.s32 %v5438, %v5440
    %v5442 = vrot.slane %v5420, %v5441
    %v5444 = vunpack.c.l.s4 1983009808
    %v5445 = vunpack.c.0.s8 %v5444
    %v5446 = vlaneseq
    %v5447 = vshrl.u32 %v5446, 7
    %v5448 = vsub.s32 %v5445, %v5447
    %v5449 = vrot.slane %v5421, %v5448
    %v5450 = vcombine.low %v5428, %v5442
    %v5451 = vcombine.high %v5428, %v5442
    %v5452 = vcombine.low %v5435, %v5449
    %v5453 = vcombine.high %v5435, %v5449
    %v5454 = vcombine.low %v462, %v468
    %v5455 = vcombine.high %v462, %v468
    %v5456 = vcombine.low %v474, %v480
    %v5457 = vcombine.high %v474, %v480
    %v5459 = vunpack.c.l.s4 1983009808
    %v5460 = vunpack.c.0.s8 %v5459
    %v5461 = vlaneseq
    %v5462 = vshrl.u32 %v5461, 7
    %v5463 = vsub.s32 %v5460, %v5462
    %v5464 = vrot.slane %v5454, %v5463
    %v5466 = vunpack.c.l.s4 1983009808
    %v5467 = vunpack.c.0.s8 %v5466
    %v5468 = vlaneseq
    %v5469 = vshrl.u32 %v5468, 7
    %v5470 = vsub.s32 %v5467, %v5469
    %v5471 = vrot.slane %v5455, %v5470
    %v5473 = vunpack.c.l.s4 1983009808
    %v5474 = vunpack.c.0.s8 %v5473
    %v5475 = vlaneseq
    %v5476 = vshrl.u32 %v5475, 7
    %v5477 = vsub.s32 %v5474, %v5476
    %v5478 = vrot.slane %v5456, %v5477
    %v5480 = vunpack.c.l.s4 1983009808
    %v5481 = vunpack.c.0.s8 %v5480
    %v5482 = vlaneseq
    %v5483 = vshrl.u32 %v5482, 7
    %v5484 = vsub.s32 %v5481, %v5483
    %v5485 = vrot.slane %v5457, %v5484
    %v5486 = vcombine.low %v5464, %v5478
    %v5487 = vcombine.high %v5464, %v5478
    %v5488 = vcombine.low %v5471, %v5485
    %v5489 = vcombine.high %v5471, %v5485
    %v5490 = vcombine.low %v463, %v469
    %v5491 = vcombine.high %v463, %v469
    %v5492 = vcombine.low %v475, %v481
    %v5493 = vcombine.high %v475, %v481
    %v5495 = vunpack.c.l.s4 1983009808
    %v5496 = vunpack.c.0.s8 %v5495
    %v5497 = vlaneseq
    %v5498 = vshrl.u32 %v5497, 7
    %v5499 = vsub.s32 %v5496, %v5498
    %v5500 = vrot.slane %v5490, %v5499
    %v5502 = vunpack.c.l.s4 1983009808
    %v5503 = vunpack.c.0.s8 %v5502
    %v5504 = vlaneseq
    %v5505 = vshrl.u32 %v5504, 7
    %v5506 = vsub.s32 %v5503, %v5505
    %v5507 = vrot.slane %v5491, %v5506
    %v5509 = vunpack.c.l.s4 1983009808
    %v5510 = vunpack.c.0.s8 %v5509
    %v5511 = vlaneseq
    %v5512 = vshrl.u32 %v5511, 7
    %v5513 = vsub.s32 %v5510, %v5512
    %v5514 = vrot.slane %v5492, %v5513
    %v5516 = vunpack.c.l.s4 1983009808
    %v5517 = vunpack.c.0.s8 %v5516
    %v5518 = vlaneseq
    %v5519 = vshrl.u32 %v5518, 7
    %v5520 = vsub.s32 %v5517, %v5519
    %v5521 = vrot.slane %v5493, %v5520
    %v5522 = vcombine.low %v5500, %v5514
    %v5523 = vcombine.high %v5500, %v5514
    %v5524 = vcombine.low %v5507, %v5521
    %v5525 = vcombine.high %v5507, %v5521
    %v5526 = vcombine.low %v464, %v470
    %v5527 = vcombine.high %v464, %v470
    %v5528 = vcombine.low %v476, %v482
    %v5529 = vcombine.high %v476, %v482
    %v5531 = vunpack.c.l.s4 1983009808
    %v5532 = vunpack.c.0.s8 %v5531
    %v5533 = vlaneseq
    %v5534 = vshrl.u32 %v5533, 7
    %v5535 = vsub.s32 %v5532, %v5534
    %v5536 = vrot.slane %v5526, %v5535
    %v5538 = vunpack.c.l.s4 1983009808
    %v5539 = vunpack.c.0.s8 %v5538
    %v5540 = vlaneseq
    %v5541 = vshrl.u32 %v5540, 7
    %v5542 = vsub.s32 %v5539, %v5541
    %v5543 = vrot.slane %v5527, %v5542
    %v5545 = vunpack.c.l.s4 1983009808
    %v5546 = vunpack.c.0.s8 %v5545
    %v5547 = vlaneseq
    %v5548 = vshrl.u32 %v5547, 7
    %v5549 = vsub.s32 %v5546, %v5548
    %v5550 = vrot.slane %v5528, %v5549
    %v5552 = vunpack.c.l.s4 1983009808
    %v5553 = vunpack.c.0.s8 %v5552
    %v5554 = vlaneseq
    %v5555 = vshrl.u32 %v5554, 7
    %v5556 = vsub.s32 %v5553, %v5555
    %v5557 = vrot.slane %v5529, %v5556
    %v5558 = vcombine.low %v5536, %v5550
    %v5559 = vcombine.high %v5536, %v5550
    %v5560 = vcombine.low %v5543, %v5557
    %v5561 = vcombine.high %v5543, %v5557
    %v5562 = vcombine.low %v465, %v471
    %v5563 = vcombine.high %v465, %v471
    %v5564 = vcombine.low %v477, %v483
    %v5565 = vcombine.high %v477, %v483
    %v5567 = vunpack.c.l.s4 1983009808
    %v5568 = vunpack.c.0.s8 %v5567
    %v5569 = vlaneseq
    %v5570 = vshrl.u32 %v5569, 7
    %v5571 = vsub.s32 %v5568, %v5570
    %v5572 = vrot.slane %v5562, %v5571
    %v5574 = vunpack.c.l.s4 1983009808
    %v5575 = vunpack.c.0.s8 %v5574
    %v5576 = vlaneseq
    %v5577 = vshrl.u32 %v5576, 7
    %v5578 = vsub.s32 %v5575, %v5577
    %v5579 = vrot.slane %v5563, %v5578
    %v5581 = vunpack.c.l.s4 1983009808
    %v5582 = vunpack.c.0.s8 %v5581
    %v5583 = vlaneseq
    %v5584 = vshrl.u32 %v5583, 7
    %v5585 = vsub.s32 %v5582, %v5584
    %v5586 = vrot.slane %v5564, %v5585
    %v5588 = vunpack.c.l.s4 1983009808
    %v5589 = vunpack.c.0.s8 %v5588
    %v5590 = vlaneseq
    %v5591 = vshrl.u32 %v5590, 7
    %v5592 = vsub.s32 %v5589, %v5591
    %v5593 = vrot.slane %v5565, %v5592
    %v5594 = vcombine.low %v5572, %v5586
    %v5595 = vcombine.high %v5572, %v5586
    %v5596 = vcombine.low %v5579, %v5593
    %v5597 = vcombine.high %v5579, %v5593
    %v5598 = vcombine.low %v466, %v472
    %v5599 = vcombine.high %v466, %v472
    %v5600 = vcombine.low %v478, %v484
    %v5601 = vcombine.high %v478, %v484
    %v5603 = vunpack.c.l.s4 1983009808
    %v5604 = vunpack.c.0.s8 %v5603
    %v5605 = vlaneseq
    %v5606 = vshrl.u32 %v5605, 7
    %v5607 = vsub.s32 %v5604, %v5606
    %v5608 = vrot.slane %v5598, %v5607
    %v5610 = vunpack.c.l.s4 1983009808
    %v5611 = vunpack.c.0.s8 %v5610
    %v5612 = vlaneseq
    %v5613 = vshrl.u32 %v5612, 7
    %v5614 = vsub.s32 %v5611, %v5613
    %v5615 = vrot.slane %v5599, %v5614
    %v5617 = vunpack.c.l.s4 1983009808
    %v5618 = vunpack.c.0.s8 %v5617
    %v5619 = vlaneseq
    %v5620 = vshrl.u32 %v5619, 7
    %v5621 = vsub.s32 %v5618, %v5620
    %v5622 = vrot.slane %v5600, %v5621
    %v5624 = vunpack.c.l.s4 1983009808
    %v5625 = vunpack.c.0.s8 %v5624
    %v5626 = vlaneseq
    %v5627 = vshrl.u32 %v5626, 7
    %v5628 = vsub.s32 %v5625, %v5627
    %v5629 = vrot.slane %v5601, %v5628
    %v5630 = vcombine.low %v5608, %v5622
    %v5631 = vcombine.high %v5608, %v5622
    %v5632 = vcombine.low %v5615, %v5629
    %v5633 = vcombine.high %v5615, %v5629
    %v5634 = vcombine.low %v467, %v473
    %v5635 = vcombine.high %v467, %v473
    %v5636 = vcombine.low %v479, %v485
    %v5637 = vcombine.high %v479, %v485
    %v5639 = vunpack.c.l.s4 1983009808
    %v5640 = vunpack.c.0.s8 %v5639
    %v5641 = vlaneseq
    %v5642 = vshrl.u32 %v5641, 7
    %v5643 = vsub.s32 %v5640, %v5642
    %v5644 = vrot.slane %v5634, %v5643
    %v5646 = vunpack.c.l.s4 1983009808
    %v5647 = vunpack.c.0.s8 %v5646
    %v5648 = vlaneseq
    %v5649 = vshrl.u32 %v5648, 7
    %v5650 = vsub.s32 %v5647, %v5649
    %v5651 = vrot.slane %v5635, %v5650
    %v5653 = vunpack.c.l.s4 1983009808
    %v5654 = vunpack.c.0.s8 %v5653
    %v5655 = vlaneseq
    %v5656 = vshrl.u32 %v5655, 7
    %v5657 = vsub.s32 %v5654, %v5656
    %v5658 = vrot.slane %v5636, %v5657
    %v5660 = vunpack.c.l.s4 1983009808
    %v5661 = vunpack.c.0.s8 %v5660
    %v5662 = vlaneseq
    %v5663 = vshrl.u32 %v5662, 7
    %v5664 = vsub.s32 %v5661, %v5663
    %v5665 = vrot.slane %v5637, %v5664
    %v5666 = vcombine.low %v5644, %v5658
    %v5667 = vcombine.high %v5644, %v5658
    %v5668 = vcombine.low %v5651, %v5665
    %v5669 = vcombine.high %v5651, %v5665
    %v5670 = vcombine.low %v486, %v492
    %v5671 = vcombine.high %v486, %v492
    %v5672 = vcombine.low %v498, %v504
    %v5673 = vcombine.high %v498, %v504
    %v5675 = vunpack.c.l.s4 1983009808
    %v5676 = vunpack.c.0.s8 %v5675
    %v5677 = vlaneseq
    %v5678 = vshrl.u32 %v5677, 7
    %v5679 = vsub.s32 %v5676, %v5678
    %v5680 = vrot.slane %v5670, %v5679
    %v5682 = vunpack.c.l.s4 1983009808
    %v5683 = vunpack.c.0.s8 %v5682
    %v5684 = vlaneseq
    %v5685 = vshrl.u32 %v5684, 7
    %v5686 = vsub.s32 %v5683, %v5685
    %v5687 = vrot.slane %v5671, %v5686
    %v5689 = vunpack.c.l.s4 1983009808
    %v5690 = vunpack.c.0.s8 %v5689
    %v5691 = vlaneseq
    %v5692 = vshrl.u32 %v5691, 7
    %v5693 = vsub.s32 %v5690, %v5692
    %v5694 = vrot.slane %v5672, %v5693
    %v5696 = vunpack.c.l.s4 1983009808
    %v5697 = vunpack.c.0.s8 %v5696
    %v5698 = vlaneseq
    %v5699 = vshrl.u32 %v5698, 7
    %v5700 = vsub.s32 %v5697, %v5699
    %v5701 = vrot.slane %v5673, %v5700
    %v5702 = vcombine.low %v5680, %v5694
    %v5703 = vcombine.high %v5680, %v5694
    %v5704 = vcombine.low %v5687, %v5701
    %v5705 = vcombine.high %v5687, %v5701
    %v5706 = vcombine.low %v487, %v493
    %v5707 = vcombine.high %v487, %v493
    %v5708 = vcombine.low %v499, %v505
    %v5709 = vcombine.high %v499, %v505
    %v5711 = vunpack.c.l.s4 1983009808
    %v5712 = vunpack.c.0.s8 %v5711
    %v5713 = vlaneseq
    %v5714 = vshrl.u32 %v5713, 7
    %v5715 = vsub.s32 %v5712, %v5714
    %v5716 = vrot.slane %v5706, %v5715
    %v5718 = vunpack.c.l.s4 1983009808
    %v5719 = vunpack.c.0.s8 %v5718
    %v5720 = vlaneseq
    %v5721 = vshrl.u32 %v5720, 7
    %v5722 = vsub.s32 %v5719, %v5721
    %v5723 = vrot.slane %v5707, %v5722
    %v5725 = vunpack.c.l.s4 1983009808
    %v5726 = vunpack.c.0.s8 %v5725
    %v5727 = vlaneseq
    %v5728 = vshrl.u32 %v5727, 7
    %v5729 = vsub.s32 %v5726, %v5728
    %v5730 = vrot.slane %v5708, %v5729
    %v5732 = vunpack.c.l.s4 1983009808
    %v5733 = vunpack.c.0.s8 %v5732
    %v5734 = vlaneseq
    %v5735 = vshrl.u32 %v5734, 7
    %v5736 = vsub.s32 %v5733, %v5735
    %v5737 = vrot.slane %v5709, %v5736
    %v5738 = vcombine.low %v5716, %v5730
    %v5739 = vcombine.high %v5716, %v5730
    %v5740 = vcombine.low %v5723, %v5737
    %v5741 = vcombine.high %v5723, %v5737
    %v5742 = vcombine.low %v488, %v494
    %v5743 = vcombine.high %v488, %v494
    %v5744 = vcombine.low %v500, %v506
    %v5745 = vcombine.high %v500, %v506
    %v5747 = vunpack.c.l.s4 1983009808
    %v5748 = vunpack.c.0.s8 %v5747
    %v5749 = vlaneseq
    %v5750 = vshrl.u32 %v5749, 7
    %v5751 = vsub.s32 %v5748, %v5750
    %v5752 = vrot.slane %v5742, %v5751
    %v5754 = vunpack.c.l.s4 1983009808
    %v5755 = vunpack.c.0.s8 %v5754
    %v5756 = vlaneseq
    %v5757 = vshrl.u32 %v5756, 7
    %v5758 = vsub.s32 %v5755, %v5757
    %v5759 = vrot.slane %v5743, %v5758
    %v5761 = vunpack.c.l.s4 1983009808
    %v5762 = vunpack.c.0.s8 %v5761
    %v5763 = vlaneseq
    %v5764 = vshrl.u32 %v5763, 7
    %v5765 = vsub.s32 %v5762, %v5764
    %v5766 = vrot.slane %v5744, %v5765
    %v5768 = vunpack.c.l.s4 1983009808
    %v5769 = vunpack.c.0.s8 %v5768
    %v5770 = vlaneseq
    %v5771 = vshrl.u32 %v5770, 7
    %v5772 = vsub.s32 %v5769, %v5771
    %v5773 = vrot.slane %v5745, %v5772
    %v5774 = vcombine.low %v5752, %v5766
    %v5775 = vcombine.high %v5752, %v5766
    %v5776 = vcombine.low %v5759, %v5773
    %v5777 = vcombine.high %v5759, %v5773
    %v5778 = vcombine.low %v489, %v495
    %v5779 = vcombine.high %v489, %v495
    %v5780 = vcombine.low %v501, %v507
    %v5781 = vcombine.high %v501, %v507
    %v5783 = vunpack.c.l.s4 1983009808
    %v5784 = vunpack.c.0.s8 %v5783
    %v5785 = vlaneseq
    %v5786 = vshrl.u32 %v5785, 7
    %v5787 = vsub.s32 %v5784, %v5786
    %v5788 = vrot.slane %v5778, %v5787
    %v5790 = vunpack.c.l.s4 1983009808
    %v5791 = vunpack.c.0.s8 %v5790
    %v5792 = vlaneseq
    %v5793 = vshrl.u32 %v5792, 7
    %v5794 = vsub.s32 %v5791, %v5793
    %v5795 = vrot.slane %v5779, %v5794
    %v5797 = vunpack.c.l.s4 1983009808
    %v5798 = vunpack.c.0.s8 %v5797
    %v5799 = vlaneseq
    %v5800 = vshrl.u32 %v5799, 7
    %v5801 = vsub.s32 %v5798, %v5800
    %v5802 = vrot.slane %v5780, %v5801
    %v5804 = vunpack.c.l.s4 1983009808
    %v5805 = vunpack.c.0.s8 %v5804
    %v5806 = vlaneseq
    %v5807 = vshrl.u32 %v5806, 7
    %v5808 = vsub.s32 %v5805, %v5807
    %v5809 = vrot.slane %v5781, %v5808
    %v5810 = vcombine.low %v5788, %v5802
    %v5811 = vcombine.high %v5788, %v5802
    %v5812 = vcombine.low %v5795, %v5809
    %v5813 = vcombine.high %v5795, %v5809
    %v5814 = vcombine.low %v490, %v496
    %v5815 = vcombine.high %v490, %v496
    %v5816 = vcombine.low %v502, %v508
    %v5817 = vcombine.high %v502, %v508
    %v5819 = vunpack.c.l.s4 1983009808
    %v5820 = vunpack.c.0.s8 %v5819
    %v5821 = vlaneseq
    %v5822 = vshrl.u32 %v5821, 7
    %v5823 = vsub.s32 %v5820, %v5822
    %v5824 = vrot.slane %v5814, %v5823
    %v5826 = vunpack.c.l.s4 1983009808
    %v5827 = vunpack.c.0.s8 %v5826
    %v5828 = vlaneseq
    %v5829 = vshrl.u32 %v5828, 7
    %v5830 = vsub.s32 %v5827, %v5829
    %v5831 = vrot.slane %v5815, %v5830
    %v5833 = vunpack.c.l.s4 1983009808
    %v5834 = vunpack.c.0.s8 %v5833
    %v5835 = vlaneseq
    %v5836 = vshrl.u32 %v5835, 7
    %v5837 = vsub.s32 %v5834, %v5836
    %v5838 = vrot.slane %v5816, %v5837
    %v5840 = vunpack.c.l.s4 1983009808
    %v5841 = vunpack.c.0.s8 %v5840
    %v5842 = vlaneseq
    %v5843 = vshrl.u32 %v5842, 7
    %v5844 = vsub.s32 %v5841, %v5843
    %v5845 = vrot.slane %v5817, %v5844
    %v5846 = vcombine.low %v5824, %v5838
    %v5847 = vcombine.high %v5824, %v5838
    %v5848 = vcombine.low %v5831, %v5845
    %v5849 = vcombine.high %v5831, %v5845
    %v5850 = vcombine.low %v491, %v497
    %v5851 = vcombine.high %v491, %v497
    %v5852 = vcombine.low %v503, %v509
    %v5853 = vcombine.high %v503, %v509
    %v5855 = vunpack.c.l.s4 1983009808
    %v5856 = vunpack.c.0.s8 %v5855
    %v5857 = vlaneseq
    %v5858 = vshrl.u32 %v5857, 7
    %v5859 = vsub.s32 %v5856, %v5858
    %v5860 = vrot.slane %v5850, %v5859
    %v5862 = vunpack.c.l.s4 1983009808
    %v5863 = vunpack.c.0.s8 %v5862
    %v5864 = vlaneseq
    %v5865 = vshrl.u32 %v5864, 7
    %v5866 = vsub.s32 %v5863, %v5865
    %v5867 = vrot.slane %v5851, %v5866
    %v5869 = vunpack.c.l.s4 1983009808
    %v5870 = vunpack.c.0.s8 %v5869
    %v5871 = vlaneseq
    %v5872 = vshrl.u32 %v5871, 7
    %v5873 = vsub.s32 %v5870, %v5872
    %v5874 = vrot.slane %v5852, %v5873
    %v5876 = vunpack.c.l.s4 1983009808
    %v5877 = vunpack.c.0.s8 %v5876
    %v5878 = vlaneseq
    %v5879 = vshrl.u32 %v5878, 7
    %v5880 = vsub.s32 %v5877, %v5879
    %v5881 = vrot.slane %v5853, %v5880
    %v5882 = vcombine.low %v5860, %v5874
    %v5883 = vcombine.high %v5860, %v5874
    %v5884 = vcombine.low %v5867, %v5881
    %v5885 = vcombine.high %v5867, %v5881
    %v5886 = vcombine.low %v510, %v516
    %v5887 = vcombine.high %v510, %v516
    %v5888 = vcombine.low %v522, %v528
    %v5889 = vcombine.high %v522, %v528
    %v5891 = vunpack.c.l.s4 1983009808
    %v5892 = vunpack.c.0.s8 %v5891
    %v5893 = vlaneseq
    %v5894 = vshrl.u32 %v5893, 7
    %v5895 = vsub.s32 %v5892, %v5894
    %v5896 = vrot.slane %v5886, %v5895
    %v5898 = vunpack.c.l.s4 1983009808
    %v5899 = vunpack.c.0.s8 %v5898
    %v5900 = vlaneseq
    %v5901 = vshrl.u32 %v5900, 7
    %v5902 = vsub.s32 %v5899, %v5901
    %v5903 = vrot.slane %v5887, %v5902
    %v5905 = vunpack.c.l.s4 1983009808
    %v5906 = vunpack.c.0.s8 %v5905
    %v5907 = vlaneseq
    %v5908 = vshrl.u32 %v5907, 7
    %v5909 = vsub.s32 %v5906, %v5908
    %v5910 = vrot.slane %v5888, %v5909
    %v5912 = vunpack.c.l.s4 1983009808
    %v5913 = vunpack.c.0.s8 %v5912
    %v5914 = vlaneseq
    %v5915 = vshrl.u32 %v5914, 7
    %v5916 = vsub.s32 %v5913, %v5915
    %v5917 = vrot.slane %v5889, %v5916
    %v5918 = vcombine.low %v5896, %v5910
    %v5919 = vcombine.high %v5896, %v5910
    %v5920 = vcombine.low %v5903, %v5917
    %v5921 = vcombine.high %v5903, %v5917
    %v5922 = vcombine.low %v511, %v517
    %v5923 = vcombine.high %v511, %v517
    %v5924 = vcombine.low %v523, %v529
    %v5925 = vcombine.high %v523, %v529
    %v5927 = vunpack.c.l.s4 1983009808
    %v5928 = vunpack.c.0.s8 %v5927
    %v5929 = vlaneseq
    %v5930 = vshrl.u32 %v5929, 7
    %v5931 = vsub.s32 %v5928, %v5930
    %v5932 = vrot.slane %v5922, %v5931
    %v5934 = vunpack.c.l.s4 1983009808
    %v5935 = vunpack.c.0.s8 %v5934
    %v5936 = vlaneseq
    %v5937 = vshrl.u32 %v5936, 7
    %v5938 = vsub.s32 %v5935, %v5937
    %v5939 = vrot.slane %v5923, %v5938
    %v5941 = vunpack.c.l.s4 1983009808
    %v5942 = vunpack.c.0.s8 %v5941
    %v5943 = vlaneseq
    %v5944 = vshrl.u32 %v5943, 7
    %v5945 = vsub.s32 %v5942, %v5944
    %v5946 = vrot.slane %v5924, %v5945
    %v5948 = vunpack.c.l.s4 1983009808
    %v5949 = vunpack.c.0.s8 %v5948
    %v5950 = vlaneseq
    %v5951 = vshrl.u32 %v5950, 7
    %v5952 = vsub.s32 %v5949, %v5951
    %v5953 = vrot.slane %v5925, %v5952
    %v5954 = vcombine.low %v5932, %v5946
    %v5955 = vcombine.high %v5932, %v5946
    %v5956 = vcombine.low %v5939, %v5953
    %v5957 = vcombine.high %v5939, %v5953
    %v5958 = vcombine.low %v512, %v518
    %v5959 = vcombine.high %v512, %v518
    %v5960 = vcombine.low %v524, %v530
    %v5961 = vcombine.high %v524, %v530
    %v5963 = vunpack.c.l.s4 1983009808
    %v5964 = vunpack.c.0.s8 %v5963
    %v5965 = vlaneseq
    %v5966 = vshrl.u32 %v5965, 7
    %v5967 = vsub.s32 %v5964, %v5966
    %v5968 = vrot.slane %v5958, %v5967
    %v5970 = vunpack.c.l.s4 1983009808
    %v5971 = vunpack.c.0.s8 %v5970
    %v5972 = vlaneseq
    %v5973 = vshrl.u32 %v5972, 7
    %v5974 = vsub.s32 %v5971, %v5973
    %v5975 = vrot.slane %v5959, %v5974
    %v5977 = vunpack.c.l.s4 1983009808
    %v5978 = vunpack.c.0.s8 %v5977
    %v5979 = vlaneseq
    %v5980 = vshrl.u32 %v5979, 7
    %v5981 = vsub.s32 %v5978, %v5980
    %v5982 = vrot.slane %v5960, %v5981
    %v5984 = vunpack.c.l.s4 1983009808
    %v5985 = vunpack.c.0.s8 %v5984
    %v5986 = vlaneseq
    %v5987 = vshrl.u32 %v5986, 7
    %v5988 = vsub.s32 %v5985, %v5987
    %v5989 = vrot.slane %v5961, %v5988
    %v5990 = vcombine.low %v5968, %v5982
    %v5991 = vcombine.high %v5968, %v5982
    %v5992 = vcombine.low %v5975, %v5989
    %v5993 = vcombine.high %v5975, %v5989
    %v5994 = vcombine.low %v513, %v519
    %v5995 = vcombine.high %v513, %v519
    %v5996 = vcombine.low %v525, %v531
    %v5997 = vcombine.high %v525, %v531
    %v5999 = vunpack.c.l.s4 1983009808
    %v6000 = vunpack.c.0.s8 %v5999
    %v6001 = vlaneseq
    %v6002 = vshrl.u32 %v6001, 7
    %v6003 = vsub.s32 %v6000, %v6002
    %v6004 = vrot.slane %v5994, %v6003
    %v6006 = vunpack.c.l.s4 1983009808
    %v6007 = vunpack.c.0.s8 %v6006
    %v6008 = vlaneseq
    %v6009 = vshrl.u32 %v6008, 7
    %v6010 = vsub.s32 %v6007, %v6009
    %v6011 = vrot.slane %v5995, %v6010
    %v6013 = vunpack.c.l.s4 1983009808
    %v6014 = vunpack.c.0.s8 %v6013
    %v6015 = vlaneseq
    %v6016 = vshrl.u32 %v6015, 7
    %v6017 = vsub.s32 %v6014, %v6016
    %v6018 = vrot.slane %v5996, %v6017
    %v6020 = vunpack.c.l.s4 1983009808
    %v6021 = vunpack.c.0.s8 %v6020
    %v6022 = vlaneseq
    %v6023 = vshrl.u32 %v6022, 7
    %v6024 = vsub.s32 %v6021, %v6023
    %v6025 = vrot.slane %v5997, %v6024
    %v6026 = vcombine.low %v6004, %v6018
    %v6027 = vcombine.high %v6004, %v6018
    %v6028 = vcombine.low %v6011, %v6025
    %v6029 = vcombine.high %v6011, %v6025
    %v6030 = vcombine.low %v514, %v520
    %v6031 = vcombine.high %v514, %v520
    %v6032 = vcombine.low %v526, %v532
    %v6033 = vcombine.high %v526, %v532
    %v6035 = vunpack.c.l.s4 1983009808
    %v6036 = vunpack.c.0.s8 %v6035
    %v6037 = vlaneseq
    %v6038 = vshrl.u32 %v6037, 7
    %v6039 = vsub.s32 %v6036, %v6038
    %v6040 = vrot.slane %v6030, %v6039
    %v6042 = vunpack.c.l.s4 1983009808
    %v6043 = vunpack.c.0.s8 %v6042
    %v6044 = vlaneseq
    %v6045 = vshrl.u32 %v6044, 7
    %v6046 = vsub.s32 %v6043, %v6045
    %v6047 = vrot.slane %v6031, %v6046
    %v6049 = vunpack.c.l.s4 1983009808
    %v6050 = vunpack.c.0.s8 %v6049
    %v6051 = vlaneseq
    %v6052 = vshrl.u32 %v6051, 7
    %v6053 = vsub.s32 %v6050, %v6052
    %v6054 = vrot.slane %v6032, %v6053
    %v6056 = vunpack.c.l.s4 1983009808
    %v6057 = vunpack.c.0.s8 %v6056
    %v6058 = vlaneseq
    %v6059 = vshrl.u32 %v6058, 7
    %v6060 = vsub.s32 %v6057, %v6059
    %v6061 = vrot.slane %v6033, %v6060
    %v6062 = vcombine.low %v6040, %v6054
    %v6063 = vcombine.high %v6040, %v6054
    %v6064 = vcombine.low %v6047, %v6061
    %v6065 = vcombine.high %v6047, %v6061
    %v6066 = vcombine.low %v515, %v521
    %v6067 = vcombine.high %v515, %v521
    %v6068 = vcombine.low %v527, %v533
    %v6069 = vcombine.high %v527, %v533
    %v6071 = vunpack.c.l.s4 1983009808
    %v6072 = vunpack.c.0.s8 %v6071
    %v6073 = vlaneseq
    %v6074 = vshrl.u32 %v6073, 7
    %v6075 = vsub.s32 %v6072, %v6074
    %v6076 = vrot.slane %v6066, %v6075
    %v6078 = vunpack.c.l.s4 1983009808
    %v6079 = vunpack.c.0.s8 %v6078
    %v6080 = vlaneseq
    %v6081 = vshrl.u32 %v6080, 7
    %v6082 = vsub.s32 %v6079, %v6081
    %v6083 = vrot.slane %v6067, %v6082
    %v6085 = vunpack.c.l.s4 1983009808
    %v6086 = vunpack.c.0.s8 %v6085
    %v6087 = vlaneseq
    %v6088 = vshrl.u32 %v6087, 7
    %v6089 = vsub.s32 %v6086, %v6088
    %v6090 = vrot.slane %v6068, %v6089
    %v6092 = vunpack.c.l.s4 1983009808
    %v6093 = vunpack.c.0.s8 %v6092
    %v6094 = vlaneseq
    %v6095 = vshrl.u32 %v6094, 7
    %v6096 = vsub.s32 %v6093, %v6095
    %v6097 = vrot.slane %v6069, %v6096
    %v6098 = vcombine.low %v6076, %v6090
    %v6099 = vcombine.high %v6076, %v6090
    %v6100 = vcombine.low %v6083, %v6097
    %v6101 = vcombine.high %v6083, %v6097
    %v6102 = vcombine.low %v534, %v540
    %v6103 = vcombine.high %v534, %v540
    %v6104 = vcombine.low %v546, %v552
    %v6105 = vcombine.high %v546, %v552
    %v6107 = vunpack.c.l.s4 1983009808
    %v6108 = vunpack.c.0.s8 %v6107
    %v6109 = vlaneseq
    %v6110 = vshrl.u32 %v6109, 7
    %v6111 = vsub.s32 %v6108, %v6110
    %v6112 = vrot.slane %v6102, %v6111
    %v6114 = vunpack.c.l.s4 1983009808
    %v6115 = vunpack.c.0.s8 %v6114
    %v6116 = vlaneseq
    %v6117 = vshrl.u32 %v6116, 7
    %v6118 = vsub.s32 %v6115, %v6117
    %v6119 = vrot.slane %v6103, %v6118
    %v6121 = vunpack.c.l.s4 1983009808
    %v6122 = vunpack.c.0.s8 %v6121
    %v6123 = vlaneseq
    %v6124 = vshrl.u32 %v6123, 7
    %v6125 = vsub.s32 %v6122, %v6124
    %v6126 = vrot.slane %v6104, %v6125
    %v6128 = vunpack.c.l.s4 1983009808
    %v6129 = vunpack.c.0.s8 %v6128
    %v6130 = vlaneseq
    %v6131 = vshrl.u32 %v6130, 7
    %v6132 = vsub.s32 %v6129, %v6131
    %v6133 = vrot.slane %v6105, %v6132
    %v6134 = vcombine.low %v6112, %v6126
    %v6135 = vcombine.high %v6112, %v6126
    %v6136 = vcombine.low %v6119, %v6133
    %v6137 = vcombine.high %v6119, %v6133
    %v6138 = vcombine.low %v535, %v541
    %v6139 = vcombine.high %v535, %v541
    %v6140 = vcombine.low %v547, %v553
    %v6141 = vcombine.high %v547, %v553
    %v6143 = vunpack.c.l.s4 1983009808
    %v6144 = vunpack.c.0.s8 %v6143
    %v6145 = vlaneseq
    %v6146 = vshrl.u32 %v6145, 7
    %v6147 = vsub.s32 %v6144, %v6146
    %v6148 = vrot.slane %v6138, %v6147
    %v6150 = vunpack.c.l.s4 1983009808
    %v6151 = vunpack.c.0.s8 %v6150
    %v6152 = vlaneseq
    %v6153 = vshrl.u32 %v6152, 7
    %v6154 = vsub.s32 %v6151, %v6153
    %v6155 = vrot.slane %v6139, %v6154
    %v6157 = vunpack.c.l.s4 1983009808
    %v6158 = vunpack.c.0.s8 %v6157
    %v6159 = vlaneseq
    %v6160 = vshrl.u32 %v6159, 7
    %v6161 = vsub.s32 %v6158, %v6160
    %v6162 = vrot.slane %v6140, %v6161
    %v6164 = vunpack.c.l.s4 1983009808
    %v6165 = vunpack.c.0.s8 %v6164
    %v6166 = vlaneseq
    %v6167 = vshrl.u32 %v6166, 7
    %v6168 = vsub.s32 %v6165, %v6167
    %v6169 = vrot.slane %v6141, %v6168
    %v6170 = vcombine.low %v6148, %v6162
    %v6171 = vcombine.high %v6148, %v6162
    %v6172 = vcombine.low %v6155, %v6169
    %v6173 = vcombine.high %v6155, %v6169
    %v6174 = vcombine.low %v536, %v542
    %v6175 = vcombine.high %v536, %v542
    %v6176 = vcombine.low %v548, %v554
    %v6177 = vcombine.high %v548, %v554
    %v6179 = vunpack.c.l.s4 1983009808
    %v6180 = vunpack.c.0.s8 %v6179
    %v6181 = vlaneseq
    %v6182 = vshrl.u32 %v6181, 7
    %v6183 = vsub.s32 %v6180, %v6182
    %v6184 = vrot.slane %v6174, %v6183
    %v6186 = vunpack.c.l.s4 1983009808
    %v6187 = vunpack.c.0.s8 %v6186
    %v6188 = vlaneseq
    %v6189 = vshrl.u32 %v6188, 7
    %v6190 = vsub.s32 %v6187, %v6189
    %v6191 = vrot.slane %v6175, %v6190
    %v6193 = vunpack.c.l.s4 1983009808
    %v6194 = vunpack.c.0.s8 %v6193
    %v6195 = vlaneseq
    %v6196 = vshrl.u32 %v6195, 7
    %v6197 = vsub.s32 %v6194, %v6196
    %v6198 = vrot.slane %v6176, %v6197
    %v6200 = vunpack.c.l.s4 1983009808
    %v6201 = vunpack.c.0.s8 %v6200
    %v6202 = vlaneseq
    %v6203 = vshrl.u32 %v6202, 7
    %v6204 = vsub.s32 %v6201, %v6203
    %v6205 = vrot.slane %v6177, %v6204
    %v6206 = vcombine.low %v6184, %v6198
    %v6207 = vcombine.high %v6184, %v6198
    %v6208 = vcombine.low %v6191, %v6205
    %v6209 = vcombine.high %v6191, %v6205
    %v6210 = vcombine.low %v537, %v543
    %v6211 = vcombine.high %v537, %v543
    %v6212 = vcombine.low %v549, %v555
    %v6213 = vcombine.high %v549, %v555
    %v6215 = vunpack.c.l.s4 1983009808
    %v6216 = vunpack.c.0.s8 %v6215
    %v6217 = vlaneseq
    %v6218 = vshrl.u32 %v6217, 7
    %v6219 = vsub.s32 %v6216, %v6218
    %v6220 = vrot.slane %v6210, %v6219
    %v6222 = vunpack.c.l.s4 1983009808
    %v6223 = vunpack.c.0.s8 %v6222
    %v6224 = vlaneseq
    %v6225 = vshrl.u32 %v6224, 7
    %v6226 = vsub.s32 %v6223, %v6225
    %v6227 = vrot.slane %v6211, %v6226
    %v6229 = vunpack.c.l.s4 1983009808
    %v6230 = vunpack.c.0.s8 %v6229
    %v6231 = vlaneseq
    %v6232 = vshrl.u32 %v6231, 7
    %v6233 = vsub.s32 %v6230, %v6232
    %v6234 = vrot.slane %v6212, %v6233
    %v6236 = vunpack.c.l.s4 1983009808
    %v6237 = vunpack.c.0.s8 %v6236
    %v6238 = vlaneseq
    %v6239 = vshrl.u32 %v6238, 7
    %v6240 = vsub.s32 %v6237, %v6239
    %v6241 = vrot.slane %v6213, %v6240
    %v6242 = vcombine.low %v6220, %v6234
    %v6243 = vcombine.high %v6220, %v6234
    %v6244 = vcombine.low %v6227, %v6241
    %v6245 = vcombine.high %v6227, %v6241
    %v6246 = vcombine.low %v538, %v544
    %v6247 = vcombine.high %v538, %v544
    %v6248 = vcombine.low %v550, %v556
    %v6249 = vcombine.high %v550, %v556
    %v6251 = vunpack.c.l.s4 1983009808
    %v6252 = vunpack.c.0.s8 %v6251
    %v6253 = vlaneseq
    %v6254 = vshrl.u32 %v6253, 7
    %v6255 = vsub.s32 %v6252, %v6254
    %v6256 = vrot.slane %v6246, %v6255
    %v6258 = vunpack.c.l.s4 1983009808
    %v6259 = vunpack.c.0.s8 %v6258
    %v6260 = vlaneseq
    %v6261 = vshrl.u32 %v6260, 7
    %v6262 = vsub.s32 %v6259, %v6261
    %v6263 = vrot.slane %v6247, %v6262
    %v6265 = vunpack.c.l.s4 1983009808
    %v6266 = vunpack.c.0.s8 %v6265
    %v6267 = vlaneseq
    %v6268 = vshrl.u32 %v6267, 7
    %v6269 = vsub.s32 %v6266, %v6268
    %v6270 = vrot.slane %v6248, %v6269
    %v6272 = vunpack.c.l.s4 1983009808
    %v6273 = vunpack.c.0.s8 %v6272
    %v6274 = vlaneseq
    %v6275 = vshrl.u32 %v6274, 7
    %v6276 = vsub.s32 %v6273, %v6275
    %v6277 = vrot.slane %v6249, %v6276
    %v6278 = vcombine.low %v6256, %v6270
    %v6279 = vcombine.high %v6256, %v6270
    %v6280 = vcombine.low %v6263, %v6277
    %v6281 = vcombine.high %v6263, %v6277
    %v6282 = vcombine.low %v539, %v545
    %v6283 = vcombine.high %v539, %v545
    %v6284 = vcombine.low %v551, %v557
    %v6285 = vcombine.high %v551, %v557
    %v6287 = vunpack.c.l.s4 1983009808
    %v6288 = vunpack.c.0.s8 %v6287
    %v6289 = vlaneseq
    %v6290 = vshrl.u32 %v6289, 7
    %v6291 = vsub.s32 %v6288, %v6290
    %v6292 = vrot.slane %v6282, %v6291
    %v6294 = vunpack.c.l.s4 1983009808
    %v6295 = vunpack.c.0.s8 %v6294
    %v6296 = vlaneseq
    %v6297 = vshrl.u32 %v6296, 7
    %v6298 = vsub.s32 %v6295, %v6297
    %v6299 = vrot.slane %v6283, %v6298
    %v6301 = vunpack.c.l.s4 1983009808
    %v6302 = vunpack.c.0.s8 %v6301
    %v6303 = vlaneseq
    %v6304 = vshrl.u32 %v6303, 7
    %v6305 = vsub.s32 %v6302, %v6304
    %v6306 = vrot.slane %v6284, %v6305
    %v6308 = vunpack.c.l.s4 1983009808
    %v6309 = vunpack.c.0.s8 %v6308
    %v6310 = vlaneseq
    %v6311 = vshrl.u32 %v6310, 7
    %v6312 = vsub.s32 %v6309, %v6311
    %v6313 = vrot.slane %v6285, %v6312
    %v6314 = vcombine.low %v6292, %v6306
    %v6315 = vcombine.high %v6292, %v6306
    %v6316 = vcombine.low %v6299, %v6313
    %v6317 = vcombine.high %v6299, %v6313
    %v6318 = vcombine.low %v558, %v564
    %v6319 = vcombine.high %v558, %v564
    %v6320 = vcombine.low %v570, %v576
    %v6321 = vcombine.high %v570, %v576
    %v6323 = vunpack.c.l.s4 1983009808
    %v6324 = vunpack.c.0.s8 %v6323
    %v6325 = vlaneseq
    %v6326 = vshrl.u32 %v6325, 7
    %v6327 = vsub.s32 %v6324, %v6326
    %v6328 = vrot.slane %v6318, %v6327
    %v6330 = vunpack.c.l.s4 1983009808
    %v6331 = vunpack.c.0.s8 %v6330
    %v6332 = vlaneseq
    %v6333 = vshrl.u32 %v6332, 7
    %v6334 = vsub.s32 %v6331, %v6333
    %v6335 = vrot.slane %v6319, %v6334
    %v6337 = vunpack.c.l.s4 1983009808
    %v6338 = vunpack.c.0.s8 %v6337
    %v6339 = vlaneseq
    %v6340 = vshrl.u32 %v6339, 7
    %v6341 = vsub.s32 %v6338, %v6340
    %v6342 = vrot.slane %v6320, %v6341
    %v6344 = vunpack.c.l.s4 1983009808
    %v6345 = vunpack.c.0.s8 %v6344
    %v6346 = vlaneseq
    %v6347 = vshrl.u32 %v6346, 7
    %v6348 = vsub.s32 %v6345, %v6347
    %v6349 = vrot.slane %v6321, %v6348
    %v6350 = vcombine.low %v6328, %v6342
    %v6351 = vcombine.high %v6328, %v6342
    %v6352 = vcombine.low %v6335, %v6349
    %v6353 = vcombine.high %v6335, %v6349
    %v6354 = vcombine.low %v559, %v565
    %v6355 = vcombine.high %v559, %v565
    %v6356 = vcombine.low %v571, %v577
    %v6357 = vcombine.high %v571, %v577
    %v6359 = vunpack.c.l.s4 1983009808
    %v6360 = vunpack.c.0.s8 %v6359
    %v6361 = vlaneseq
    %v6362 = vshrl.u32 %v6361, 7
    %v6363 = vsub.s32 %v6360, %v6362
    %v6364 = vrot.slane %v6354, %v6363
    %v6366 = vunpack.c.l.s4 1983009808
    %v6367 = vunpack.c.0.s8 %v6366
    %v6368 = vlaneseq
    %v6369 = vshrl.u32 %v6368, 7
    %v6370 = vsub.s32 %v6367, %v6369
    %v6371 = vrot.slane %v6355, %v6370
    %v6373 = vunpack.c.l.s4 1983009808
    %v6374 = vunpack.c.0.s8 %v6373
    %v6375 = vlaneseq
    %v6376 = vshrl.u32 %v6375, 7
    %v6377 = vsub.s32 %v6374, %v6376
    %v6378 = vrot.slane %v6356, %v6377
    %v6380 = vunpack.c.l.s4 1983009808
    %v6381 = vunpack.c.0.s8 %v6380
    %v6382 = vlaneseq
    %v6383 = vshrl.u32 %v6382, 7
    %v6384 = vsub.s32 %v6381, %v6383
    %v6385 = vrot.slane %v6357, %v6384
    %v6386 = vcombine.low %v6364, %v6378
    %v6387 = vcombine.high %v6364, %v6378
    %v6388 = vcombine.low %v6371, %v6385
    %v6389 = vcombine.high %v6371, %v6385
    %v6390 = vcombine.low %v560, %v566
    %v6391 = vcombine.high %v560, %v566
    %v6392 = vcombine.low %v572, %v578
    %v6393 = vcombine.high %v572, %v578
    %v6395 = vunpack.c.l.s4 1983009808
    %v6396 = vunpack.c.0.s8 %v6395
    %v6397 = vlaneseq
    %v6398 = vshrl.u32 %v6397, 7
    %v6399 = vsub.s32 %v6396, %v6398
    %v6400 = vrot.slane %v6390, %v6399
    %v6402 = vunpack.c.l.s4 1983009808
    %v6403 = vunpack.c.0.s8 %v6402
    %v6404 = vlaneseq
    %v6405 = vshrl.u32 %v6404, 7
    %v6406 = vsub.s32 %v6403, %v6405
    %v6407 = vrot.slane %v6391, %v6406
    %v6409 = vunpack.c.l.s4 1983009808
    %v6410 = vunpack.c.0.s8 %v6409
    %v6411 = vlaneseq
    %v6412 = vshrl.u32 %v6411, 7
    %v6413 = vsub.s32 %v6410, %v6412
    %v6414 = vrot.slane %v6392, %v6413
    %v6416 = vunpack.c.l.s4 1983009808
    %v6417 = vunpack.c.0.s8 %v6416
    %v6418 = vlaneseq
    %v6419 = vshrl.u32 %v6418, 7
    %v6420 = vsub.s32 %v6417, %v6419
    %v6421 = vrot.slane %v6393, %v6420
    %v6422 = vcombine.low %v6400, %v6414
    %v6423 = vcombine.high %v6400, %v6414
    %v6424 = vcombine.low %v6407, %v6421
    %v6425 = vcombine.high %v6407, %v6421
    %v6426 = vcombine.low %v561, %v567
    %v6427 = vcombine.high %v561, %v567
    %v6428 = vcombine.low %v573, %v579
    %v6429 = vcombine.high %v573, %v579
    %v6431 = vunpack.c.l.s4 1983009808
    %v6432 = vunpack.c.0.s8 %v6431
    %v6433 = vlaneseq
    %v6434 = vshrl.u32 %v6433, 7
    %v6435 = vsub.s32 %v6432, %v6434
    %v6436 = vrot.slane %v6426, %v6435
    %v6438 = vunpack.c.l.s4 1983009808
    %v6439 = vunpack.c.0.s8 %v6438
    %v6440 = vlaneseq
    %v6441 = vshrl.u32 %v6440, 7
    %v6442 = vsub.s32 %v6439, %v6441
    %v6443 = vrot.slane %v6427, %v6442
    %v6445 = vunpack.c.l.s4 1983009808
    %v6446 = vunpack.c.0.s8 %v6445
    %v6447 = vlaneseq
    %v6448 = vshrl.u32 %v6447, 7
    %v6449 = vsub.s32 %v6446, %v6448
    %v6450 = vrot.slane %v6428, %v6449
    %v6452 = vunpack.c.l.s4 1983009808
    %v6453 = vunpack.c.0.s8 %v6452
    %v6454 = vlaneseq
    %v6455 = vshrl.u32 %v6454, 7
    %v6456 = vsub.s32 %v6453, %v6455
    %v6457 = vrot.slane %v6429, %v6456
    %v6458 = vcombine.low %v6436, %v6450
    %v6459 = vcombine.high %v6436, %v6450
    %v6460 = vcombine.low %v6443, %v6457
    %v6461 = vcombine.high %v6443, %v6457
    %v6462 = vcombine.low %v562, %v568
    %v6463 = vcombine.high %v562, %v568
    %v6464 = vcombine.low %v574, %v580
    %v6465 = vcombine.high %v574, %v580
    %v6467 = vunpack.c.l.s4 1983009808
    %v6468 = vunpack.c.0.s8 %v6467
    %v6469 = vlaneseq
    %v6470 = vshrl.u32 %v6469, 7
    %v6471 = vsub.s32 %v6468, %v6470
    %v6472 = vrot.slane %v6462, %v6471
    %v6474 = vunpack.c.l.s4 1983009808
    %v6475 = vunpack.c.0.s8 %v6474
    %v6476 = vlaneseq
    %v6477 = vshrl.u32 %v6476, 7
    %v6478 = vsub.s32 %v6475, %v6477
    %v6479 = vrot.slane %v6463, %v6478
    %v6481 = vunpack.c.l.s4 1983009808
    %v6482 = vunpack.c.0.s8 %v6481
    %v6483 = vlaneseq
    %v6484 = vshrl.u32 %v6483, 7
    %v6485 = vsub.s32 %v6482, %v6484
    %v6486 = vrot.slane %v6464, %v6485
    %v6488 = vunpack.c.l.s4 1983009808
    %v6489 = vunpack.c.0.s8 %v6488
    %v6490 = vlaneseq
    %v6491 = vshrl.u32 %v6490, 7
    %v6492 = vsub.s32 %v6489, %v6491
    %v6493 = vrot.slane %v6465, %v6492
    %v6494 = vcombine.low %v6472, %v6486
    %v6495 = vcombine.high %v6472, %v6486
    %v6496 = vcombine.low %v6479, %v6493
    %v6497 = vcombine.high %v6479, %v6493
    %v6498 = vcombine.low %v563, %v569
    %v6499 = vcombine.high %v563, %v569
    %v6500 = vcombine.low %v575, %v581
    %v6501 = vcombine.high %v575, %v581
    %v6503 = vunpack.c.l.s4 1983009808
    %v6504 = vunpack.c.0.s8 %v6503
    %v6505 = vlaneseq
    %v6506 = vshrl.u32 %v6505, 7
    %v6507 = vsub.s32 %v6504, %v6506
    %v6508 = vrot.slane %v6498, %v6507
    %v6510 = vunpack.c.l.s4 1983009808
    %v6511 = vunpack.c.0.s8 %v6510
    %v6512 = vlaneseq
    %v6513 = vshrl.u32 %v6512, 7
    %v6514 = vsub.s32 %v6511, %v6513
    %v6515 = vrot.slane %v6499, %v6514
    %v6517 = vunpack.c.l.s4 1983009808
    %v6518 = vunpack.c.0.s8 %v6517
    %v6519 = vlaneseq
    %v6520 = vshrl.u32 %v6519, 7
    %v6521 = vsub.s32 %v6518, %v6520
    %v6522 = vrot.slane %v6500, %v6521
    %v6524 = vunpack.c.l.s4 1983009808
    %v6525 = vunpack.c.0.s8 %v6524
    %v6526 = vlaneseq
    %v6527 = vshrl.u32 %v6526, 7
    %v6528 = vsub.s32 %v6525, %v6527
    %v6529 = vrot.slane %v6501, %v6528
    %v6530 = vcombine.low %v6508, %v6522
    %v6531 = vcombine.high %v6508, %v6522
    %v6532 = vcombine.low %v6515, %v6529
    %v6533 = vcombine.high %v6515, %v6529
    %v6534 = vcombine.low %v582, %v588
    %v6535 = vcombine.high %v582, %v588
    %v6536 = vcombine.low %v594, %v600
    %v6537 = vcombine.high %v594, %v600
    %v6539 = vunpack.c.l.s4 1983009808
    %v6540 = vunpack.c.0.s8 %v6539
    %v6541 = vlaneseq
    %v6542 = vshrl.u32 %v6541, 7
    %v6543 = vsub.s32 %v6540, %v6542
    %v6544 = vrot.slane %v6534, %v6543
    %v6546 = vunpack.c.l.s4 1983009808
    %v6547 = vunpack.c.0.s8 %v6546
    %v6548 = vlaneseq
    %v6549 = vshrl.u32 %v6548, 7
    %v6550 = vsub.s32 %v6547, %v6549
    %v6551 = vrot.slane %v6535, %v6550
    %v6553 = vunpack.c.l.s4 1983009808
    %v6554 = vunpack.c.0.s8 %v6553
    %v6555 = vlaneseq
    %v6556 = vshrl.u32 %v6555, 7
    %v6557 = vsub.s32 %v6554, %v6556
    %v6558 = vrot.slane %v6536, %v6557
    %v6560 = vunpack.c.l.s4 1983009808
    %v6561 = vunpack.c.0.s8 %v6560
    %v6562 = vlaneseq
    %v6563 = vshrl.u32 %v6562, 7
    %v6564 = vsub.s32 %v6561, %v6563
    %v6565 = vrot.slane %v6537, %v6564
    %v6566 = vcombine.low %v6544, %v6558
    %v6567 = vcombine.high %v6544, %v6558
    %v6568 = vcombine.low %v6551, %v6565
    %v6569 = vcombine.high %v6551, %v6565
    %v6570 = vcombine.low %v583, %v589
    %v6571 = vcombine.high %v583, %v589
    %v6572 = vcombine.low %v595, %v601
    %v6573 = vcombine.high %v595, %v601
    %v6575 = vunpack.c.l.s4 1983009808
    %v6576 = vunpack.c.0.s8 %v6575
    %v6577 = vlaneseq
    %v6578 = vshrl.u32 %v6577, 7
    %v6579 = vsub.s32 %v6576, %v6578
    %v6580 = vrot.slane %v6570, %v6579
    %v6582 = vunpack.c.l.s4 1983009808
    %v6583 = vunpack.c.0.s8 %v6582
    %v6584 = vlaneseq
    %v6585 = vshrl.u32 %v6584, 7
    %v6586 = vsub.s32 %v6583, %v6585
    %v6587 = vrot.slane %v6571, %v6586
    %v6589 = vunpack.c.l.s4 1983009808
    %v6590 = vunpack.c.0.s8 %v6589
    %v6591 = vlaneseq
    %v6592 = vshrl.u32 %v6591, 7
    %v6593 = vsub.s32 %v6590, %v6592
    %v6594 = vrot.slane %v6572, %v6593
    %v6596 = vunpack.c.l.s4 1983009808
    %v6597 = vunpack.c.0.s8 %v6596
    %v6598 = vlaneseq
    %v6599 = vshrl.u32 %v6598, 7
    %v6600 = vsub.s32 %v6597, %v6599
    %v6601 = vrot.slane %v6573, %v6600
    %v6602 = vcombine.low %v6580, %v6594
    %v6603 = vcombine.high %v6580, %v6594
    %v6604 = vcombine.low %v6587, %v6601
    %v6605 = vcombine.high %v6587, %v6601
    %v6606 = vcombine.low %v584, %v590
    %v6607 = vcombine.high %v584, %v590
    %v6608 = vcombine.low %v596, %v602
    %v6609 = vcombine.high %v596, %v602
    %v6611 = vunpack.c.l.s4 1983009808
    %v6612 = vunpack.c.0.s8 %v6611
    %v6613 = vlaneseq
    %v6614 = vshrl.u32 %v6613, 7
    %v6615 = vsub.s32 %v6612, %v6614
    %v6616 = vrot.slane %v6606, %v6615
    %v6618 = vunpack.c.l.s4 1983009808
    %v6619 = vunpack.c.0.s8 %v6618
    %v6620 = vlaneseq
    %v6621 = vshrl.u32 %v6620, 7
    %v6622 = vsub.s32 %v6619, %v6621
    %v6623 = vrot.slane %v6607, %v6622
    %v6625 = vunpack.c.l.s4 1983009808
    %v6626 = vunpack.c.0.s8 %v6625
    %v6627 = vlaneseq
    %v6628 = vshrl.u32 %v6627, 7
    %v6629 = vsub.s32 %v6626, %v6628
    %v6630 = vrot.slane %v6608, %v6629
    %v6632 = vunpack.c.l.s4 1983009808
    %v6633 = vunpack.c.0.s8 %v6632
    %v6634 = vlaneseq
    %v6635 = vshrl.u32 %v6634, 7
    %v6636 = vsub.s32 %v6633, %v6635
    %v6637 = vrot.slane %v6609, %v6636
    %v6638 = vcombine.low %v6616, %v6630
    %v6639 = vcombine.high %v6616, %v6630
    %v6640 = vcombine.low %v6623, %v6637
    %v6641 = vcombine.high %v6623, %v6637
    %v6642 = vcombine.low %v585, %v591
    %v6643 = vcombine.high %v585, %v591
    %v6644 = vcombine.low %v597, %v603
    %v6645 = vcombine.high %v597, %v603
    %v6647 = vunpack.c.l.s4 1983009808
    %v6648 = vunpack.c.0.s8 %v6647
    %v6649 = vlaneseq
    %v6650 = vshrl.u32 %v6649, 7
    %v6651 = vsub.s32 %v6648, %v6650
    %v6652 = vrot.slane %v6642, %v6651
    %v6654 = vunpack.c.l.s4 1983009808
    %v6655 = vunpack.c.0.s8 %v6654
    %v6656 = vlaneseq
    %v6657 = vshrl.u32 %v6656, 7
    %v6658 = vsub.s32 %v6655, %v6657
    %v6659 = vrot.slane %v6643, %v6658
    %v6661 = vunpack.c.l.s4 1983009808
    %v6662 = vunpack.c.0.s8 %v6661
    %v6663 = vlaneseq
    %v6664 = vshrl.u32 %v6663, 7
    %v6665 = vsub.s32 %v6662, %v6664
    %v6666 = vrot.slane %v6644, %v6665
    %v6668 = vunpack.c.l.s4 1983009808
    %v6669 = vunpack.c.0.s8 %v6668
    %v6670 = vlaneseq
    %v6671 = vshrl.u32 %v6670, 7
    %v6672 = vsub.s32 %v6669, %v6671
    %v6673 = vrot.slane %v6645, %v6672
    %v6674 = vcombine.low %v6652, %v6666
    %v6675 = vcombine.high %v6652, %v6666
    %v6676 = vcombine.low %v6659, %v6673
    %v6677 = vcombine.high %v6659, %v6673
    %v6678 = vcombine.low %v586, %v592
    %v6679 = vcombine.high %v586, %v592
    %v6680 = vcombine.low %v598, %v604
    %v6681 = vcombine.high %v598, %v604
    %v6683 = vunpack.c.l.s4 1983009808
    %v6684 = vunpack.c.0.s8 %v6683
    %v6685 = vlaneseq
    %v6686 = vshrl.u32 %v6685, 7
    %v6687 = vsub.s32 %v6684, %v6686
    %v6688 = vrot.slane %v6678, %v6687
    %v6690 = vunpack.c.l.s4 1983009808
    %v6691 = vunpack.c.0.s8 %v6690
    %v6692 = vlaneseq
    %v6693 = vshrl.u32 %v6692, 7
    %v6694 = vsub.s32 %v6691, %v6693
    %v6695 = vrot.slane %v6679, %v6694
    %v6697 = vunpack.c.l.s4 1983009808
    %v6698 = vunpack.c.0.s8 %v6697
    %v6699 = vlaneseq
    %v6700 = vshrl.u32 %v6699, 7
    %v6701 = vsub.s32 %v6698, %v6700
    %v6702 = vrot.slane %v6680, %v6701
    %v6704 = vunpack.c.l.s4 1983009808
    %v6705 = vunpack.c.0.s8 %v6704
    %v6706 = vlaneseq
    %v6707 = vshrl.u32 %v6706, 7
    %v6708 = vsub.s32 %v6705, %v6707
    %v6709 = vrot.slane %v6681, %v6708
    %v6710 = vcombine.low %v6688, %v6702
    %v6711 = vcombine.high %v6688, %v6702
    %v6712 = vcombine.low %v6695, %v6709
    %v6713 = vcombine.high %v6695, %v6709
    %v6714 = vcombine.low %v587, %v593
    %v6715 = vcombine.high %v587, %v593
    %v6716 = vcombine.low %v599, %v605
    %v6717 = vcombine.high %v599, %v605
    %v6719 = vunpack.c.l.s4 1983009808
    %v6720 = vunpack.c.0.s8 %v6719
    %v6721 = vlaneseq
    %v6722 = vshrl.u32 %v6721, 7
    %v6723 = vsub.s32 %v6720, %v6722
    %v6724 = vrot.slane %v6714, %v6723
    %v6726 = vunpack.c.l.s4 1983009808
    %v6727 = vunpack.c.0.s8 %v6726
    %v6728 = vlaneseq
    %v6729 = vshrl.u32 %v6728, 7
    %v6730 = vsub.s32 %v6727, %v6729
    %v6731 = vrot.slane %v6715, %v6730
    %v6733 = vunpack.c.l.s4 1983009808
    %v6734 = vunpack.c.0.s8 %v6733
    %v6735 = vlaneseq
    %v6736 = vshrl.u32 %v6735, 7
    %v6737 = vsub.s32 %v6734, %v6736
    %v6738 = vrot.slane %v6716, %v6737
    %v6740 = vunpack.c.l.s4 1983009808
    %v6741 = vunpack.c.0.s8 %v6740
    %v6742 = vlaneseq
    %v6743 = vshrl.u32 %v6742, 7
    %v6744 = vsub.s32 %v6741, %v6743
    %v6745 = vrot.slane %v6717, %v6744
    %v6746 = vcombine.low %v6724, %v6738
    %v6747 = vcombine.high %v6724, %v6738
    %v6748 = vcombine.low %v6731, %v6745
    %v6749 = vcombine.high %v6731, %v6745
    %v6750 = vcombine.low %v606, %v612
    %v6751 = vcombine.high %v606, %v612
    %v6752 = vcombine.low %v618, %v624
    %v6753 = vcombine.high %v618, %v624
    %v6755 = vunpack.c.l.s4 1983009808
    %v6756 = vunpack.c.0.s8 %v6755
    %v6757 = vlaneseq
    %v6758 = vshrl.u32 %v6757, 7
    %v6759 = vsub.s32 %v6756, %v6758
    %v6760 = vrot.slane %v6750, %v6759
    %v6762 = vunpack.c.l.s4 1983009808
    %v6763 = vunpack.c.0.s8 %v6762
    %v6764 = vlaneseq
    %v6765 = vshrl.u32 %v6764, 7
    %v6766 = vsub.s32 %v6763, %v6765
    %v6767 = vrot.slane %v6751, %v6766
    %v6769 = vunpack.c.l.s4 1983009808
    %v6770 = vunpack.c.0.s8 %v6769
    %v6771 = vlaneseq
    %v6772 = vshrl.u32 %v6771, 7
    %v6773 = vsub.s32 %v6770, %v6772
    %v6774 = vrot.slane %v6752, %v6773
    %v6776 = vunpack.c.l.s4 1983009808
    %v6777 = vunpack.c.0.s8 %v6776
    %v6778 = vlaneseq
    %v6779 = vshrl.u32 %v6778, 7
    %v6780 = vsub.s32 %v6777, %v6779
    %v6781 = vrot.slane %v6753, %v6780
    %v6782 = vcombine.low %v6760, %v6774
    %v6783 = vcombine.high %v6760, %v6774
    %v6784 = vcombine.low %v6767, %v6781
    %v6785 = vcombine.high %v6767, %v6781
    %v6786 = vcombine.low %v607, %v613
    %v6787 = vcombine.high %v607, %v613
    %v6788 = vcombine.low %v619, %v625
    %v6789 = vcombine.high %v619, %v625
    %v6791 = vunpack.c.l.s4 1983009808
    %v6792 = vunpack.c.0.s8 %v6791
    %v6793 = vlaneseq
    %v6794 = vshrl.u32 %v6793, 7
    %v6795 = vsub.s32 %v6792, %v6794
    %v6796 = vrot.slane %v6786, %v6795
    %v6798 = vunpack.c.l.s4 1983009808
    %v6799 = vunpack.c.0.s8 %v6798
    %v6800 = vlaneseq
    %v6801 = vshrl.u32 %v6800, 7
    %v6802 = vsub.s32 %v6799, %v6801
    %v6803 = vrot.slane %v6787, %v6802
    %v6805 = vunpack.c.l.s4 1983009808
    %v6806 = vunpack.c.0.s8 %v6805
    %v6807 = vlaneseq
    %v6808 = vshrl.u32 %v6807, 7
    %v6809 = vsub.s32 %v6806, %v6808
    %v6810 = vrot.slane %v6788, %v6809
    %v6812 = vunpack.c.l.s4 1983009808
    %v6813 = vunpack.c.0.s8 %v6812
    %v6814 = vlaneseq
    %v6815 = vshrl.u32 %v6814, 7
    %v6816 = vsub.s32 %v6813, %v6815
    %v6817 = vrot.slane %v6789, %v6816
    %v6818 = vcombine.low %v6796, %v6810
    %v6819 = vcombine.high %v6796, %v6810
    %v6820 = vcombine.low %v6803, %v6817
    %v6821 = vcombine.high %v6803, %v6817
    %v6822 = vcombine.low %v608, %v614
    %v6823 = vcombine.high %v608, %v614
    %v6824 = vcombine.low %v620, %v626
    %v6825 = vcombine.high %v620, %v626
    %v6827 = vunpack.c.l.s4 1983009808
    %v6828 = vunpack.c.0.s8 %v6827
    %v6829 = vlaneseq
    %v6830 = vshrl.u32 %v6829, 7
    %v6831 = vsub.s32 %v6828, %v6830
    %v6832 = vrot.slane %v6822, %v6831
    %v6834 = vunpack.c.l.s4 1983009808
    %v6835 = vunpack.c.0.s8 %v6834
    %v6836 = vlaneseq
    %v6837 = vshrl.u32 %v6836, 7
    %v6838 = vsub.s32 %v6835, %v6837
    %v6839 = vrot.slane %v6823, %v6838
    %v6841 = vunpack.c.l.s4 1983009808
    %v6842 = vunpack.c.0.s8 %v6841
    %v6843 = vlaneseq
    %v6844 = vshrl.u32 %v6843, 7
    %v6845 = vsub.s32 %v6842, %v6844
    %v6846 = vrot.slane %v6824, %v6845
    %v6848 = vunpack.c.l.s4 1983009808
    %v6849 = vunpack.c.0.s8 %v6848
    %v6850 = vlaneseq
    %v6851 = vshrl.u32 %v6850, 7
    %v6852 = vsub.s32 %v6849, %v6851
    %v6853 = vrot.slane %v6825, %v6852
    %v6854 = vcombine.low %v6832, %v6846
    %v6855 = vcombine.high %v6832, %v6846
    %v6856 = vcombine.low %v6839, %v6853
    %v6857 = vcombine.high %v6839, %v6853
    %v6858 = vcombine.low %v609, %v615
    %v6859 = vcombine.high %v609, %v615
    %v6860 = vcombine.low %v621, %v627
    %v6861 = vcombine.high %v621, %v627
    %v6863 = vunpack.c.l.s4 1983009808
    %v6864 = vunpack.c.0.s8 %v6863
    %v6865 = vlaneseq
    %v6866 = vshrl.u32 %v6865, 7
    %v6867 = vsub.s32 %v6864, %v6866
    %v6868 = vrot.slane %v6858, %v6867
    %v6870 = vunpack.c.l.s4 1983009808
    %v6871 = vunpack.c.0.s8 %v6870
    %v6872 = vlaneseq
    %v6873 = vshrl.u32 %v6872, 7
    %v6874 = vsub.s32 %v6871, %v6873
    %v6875 = vrot.slane %v6859, %v6874
    %v6877 = vunpack.c.l.s4 1983009808
    %v6878 = vunpack.c.0.s8 %v6877
    %v6879 = vlaneseq
    %v6880 = vshrl.u32 %v6879, 7
    %v6881 = vsub.s32 %v6878, %v6880
    %v6882 = vrot.slane %v6860, %v6881
    %v6884 = vunpack.c.l.s4 1983009808
    %v6885 = vunpack.c.0.s8 %v6884
    %v6886 = vlaneseq
    %v6887 = vshrl.u32 %v6886, 7
    %v6888 = vsub.s32 %v6885, %v6887
    %v6889 = vrot.slane %v6861, %v6888
    %v6890 = vcombine.low %v6868, %v6882
    %v6891 = vcombine.high %v6868, %v6882
    %v6892 = vcombine.low %v6875, %v6889
    %v6893 = vcombine.high %v6875, %v6889
    %v6894 = vcombine.low %v610, %v616
    %v6895 = vcombine.high %v610, %v616
    %v6896 = vcombine.low %v622, %v628
    %v6897 = vcombine.high %v622, %v628
    %v6899 = vunpack.c.l.s4 1983009808
    %v6900 = vunpack.c.0.s8 %v6899
    %v6901 = vlaneseq
    %v6902 = vshrl.u32 %v6901, 7
    %v6903 = vsub.s32 %v6900, %v6902
    %v6904 = vrot.slane %v6894, %v6903
    %v6906 = vunpack.c.l.s4 1983009808
    %v6907 = vunpack.c.0.s8 %v6906
    %v6908 = vlaneseq
    %v6909 = vshrl.u32 %v6908, 7
    %v6910 = vsub.s32 %v6907, %v6909
    %v6911 = vrot.slane %v6895, %v6910
    %v6913 = vunpack.c.l.s4 1983009808
    %v6914 = vunpack.c.0.s8 %v6913
    %v6915 = vlaneseq
    %v6916 = vshrl.u32 %v6915, 7
    %v6917 = vsub.s32 %v6914, %v6916
    %v6918 = vrot.slane %v6896, %v6917
    %v6920 = vunpack.c.l.s4 1983009808
    %v6921 = vunpack.c.0.s8 %v6920
    %v6922 = vlaneseq
    %v6923 = vshrl.u32 %v6922, 7
    %v6924 = vsub.s32 %v6921, %v6923
    %v6925 = vrot.slane %v6897, %v6924
    %v6926 = vcombine.low %v6904, %v6918
    %v6927 = vcombine.high %v6904, %v6918
    %v6928 = vcombine.low %v6911, %v6925
    %v6929 = vcombine.high %v6911, %v6925
    %v6930 = vcombine.low %v611, %v617
    %v6931 = vcombine.high %v611, %v617
    %v6932 = vcombine.low %v623, %v629
    %v6933 = vcombine.high %v623, %v629
    %v6935 = vunpack.c.l.s4 1983009808
    %v6936 = vunpack.c.0.s8 %v6935
    %v6937 = vlaneseq
    %v6938 = vshrl.u32 %v6937, 7
    %v6939 = vsub.s32 %v6936, %v6938
    %v6940 = vrot.slane %v6930, %v6939
    %v6942 = vunpack.c.l.s4 1983009808
    %v6943 = vunpack.c.0.s8 %v6942
    %v6944 = vlaneseq
    %v6945 = vshrl.u32 %v6944, 7
    %v6946 = vsub.s32 %v6943, %v6945
    %v6947 = vrot.slane %v6931, %v6946
    %v6949 = vunpack.c.l.s4 1983009808
    %v6950 = vunpack.c.0.s8 %v6949
    %v6951 = vlaneseq
    %v6952 = vshrl.u32 %v6951, 7
    %v6953 = vsub.s32 %v6950, %v6952
    %v6954 = vrot.slane %v6932, %v6953
    %v6956 = vunpack.c.l.s4 1983009808
    %v6957 = vunpack.c.0.s8 %v6956
    %v6958 = vlaneseq
    %v6959 = vshrl.u32 %v6958, 7
    %v6960 = vsub.s32 %v6957, %v6959
    %v6961 = vrot.slane %v6933, %v6960
    %v6962 = vcombine.low %v6940, %v6954
    %v6963 = vcombine.high %v6940, %v6954
    %v6964 = vcombine.low %v6947, %v6961
    %v6965 = vcombine.high %v6947, %v6961
    %v6966 = vcombine.low %v630, %v636
    %v6967 = vcombine.high %v630, %v636
    %v6968 = vcombine.low %v642, %v648
    %v6969 = vcombine.high %v642, %v648
    %v6971 = vunpack.c.l.s4 1983009808
    %v6972 = vunpack.c.0.s8 %v6971
    %v6973 = vlaneseq
    %v6974 = vshrl.u32 %v6973, 7
    %v6975 = vsub.s32 %v6972, %v6974
    %v6976 = vrot.slane %v6966, %v6975
    %v6978 = vunpack.c.l.s4 1983009808
    %v6979 = vunpack.c.0.s8 %v6978
    %v6980 = vlaneseq
    %v6981 = vshrl.u32 %v6980, 7
    %v6982 = vsub.s32 %v6979, %v6981
    %v6983 = vrot.slane %v6967, %v6982
    %v6985 = vunpack.c.l.s4 1983009808
    %v6986 = vunpack.c.0.s8 %v6985
    %v6987 = vlaneseq
    %v6988 = vshrl.u32 %v6987, 7
    %v6989 = vsub.s32 %v6986, %v6988
    %v6990 = vrot.slane %v6968, %v6989
    %v6992 = vunpack.c.l.s4 1983009808
    %v6993 = vunpack.c.0.s8 %v6992
    %v6994 = vlaneseq
    %v6995 = vshrl.u32 %v6994, 7
    %v6996 = vsub.s32 %v6993, %v6995
    %v6997 = vrot.slane %v6969, %v6996
    %v6998 = vcombine.low %v6976, %v6990
    %v6999 = vcombine.high %v6976, %v6990
    %v7000 = vcombine.low %v6983, %v6997
    %v7001 = vcombine.high %v6983, %v6997
    %v7002 = vcombine.low %v631, %v637
    %v7003 = vcombine.high %v631, %v637
    %v7004 = vcombine.low %v643, %v649
    %v7005 = vcombine.high %v643, %v649
    %v7007 = vunpack.c.l.s4 1983009808
    %v7008 = vunpack.c.0.s8 %v7007
    %v7009 = vlaneseq
    %v7010 = vshrl.u32 %v7009, 7
    %v7011 = vsub.s32 %v7008, %v7010
    %v7012 = vrot.slane %v7002, %v7011
    %v7014 = vunpack.c.l.s4 1983009808
    %v7015 = vunpack.c.0.s8 %v7014
    %v7016 = vlaneseq
    %v7017 = vshrl.u32 %v7016, 7
    %v7018 = vsub.s32 %v7015, %v7017
    %v7019 = vrot.slane %v7003, %v7018
    %v7021 = vunpack.c.l.s4 1983009808
    %v7022 = vunpack.c.0.s8 %v7021
    %v7023 = vlaneseq
    %v7024 = vshrl.u32 %v7023, 7
    %v7025 = vsub.s32 %v7022, %v7024
    %v7026 = vrot.slane %v7004, %v7025
    %v7028 = vunpack.c.l.s4 1983009808
    %v7029 = vunpack.c.0.s8 %v7028
    %v7030 = vlaneseq
    %v7031 = vshrl.u32 %v7030, 7
    %v7032 = vsub.s32 %v7029, %v7031
    %v7033 = vrot.slane %v7005, %v7032
    %v7034 = vcombine.low %v7012, %v7026
    %v7035 = vcombine.high %v7012, %v7026
    %v7036 = vcombine.low %v7019, %v7033
    %v7037 = vcombine.high %v7019, %v7033
    %v7038 = vcombine.low %v632, %v638
    %v7039 = vcombine.high %v632, %v638
    %v7040 = vcombine.low %v644, %v650
    %v7041 = vcombine.high %v644, %v650
    %v7043 = vunpack.c.l.s4 1983009808
    %v7044 = vunpack.c.0.s8 %v7043
    %v7045 = vlaneseq
    %v7046 = vshrl.u32 %v7045, 7
    %v7047 = vsub.s32 %v7044, %v7046
    %v7048 = vrot.slane %v7038, %v7047
    %v7050 = vunpack.c.l.s4 1983009808
    %v7051 = vunpack.c.0.s8 %v7050
    %v7052 = vlaneseq
    %v7053 = vshrl.u32 %v7052, 7
    %v7054 = vsub.s32 %v7051, %v7053
    %v7055 = vrot.slane %v7039, %v7054
    %v7057 = vunpack.c.l.s4 1983009808
    %v7058 = vunpack.c.0.s8 %v7057
    %v7059 = vlaneseq
    %v7060 = vshrl.u32 %v7059, 7
    %v7061 = vsub.s32 %v7058, %v7060
    %v7062 = vrot.slane %v7040, %v7061
    %v7064 = vunpack.c.l.s4 1983009808
    %v7065 = vunpack.c.0.s8 %v7064
    %v7066 = vlaneseq
    %v7067 = vshrl.u32 %v7066, 7
    %v7068 = vsub.s32 %v7065, %v7067
    %v7069 = vrot.slane %v7041, %v7068
    %v7070 = vcombine.low %v7048, %v7062
    %v7071 = vcombine.high %v7048, %v7062
    %v7072 = vcombine.low %v7055, %v7069
    %v7073 = vcombine.high %v7055, %v7069
    %v7074 = vcombine.low %v633, %v639
    %v7075 = vcombine.high %v633, %v639
    %v7076 = vcombine.low %v645, %v651
    %v7077 = vcombine.high %v645, %v651
    %v7079 = vunpack.c.l.s4 1983009808
    %v7080 = vunpack.c.0.s8 %v7079
    %v7081 = vlaneseq
    %v7082 = vshrl.u32 %v7081, 7
    %v7083 = vsub.s32 %v7080, %v7082
    %v7084 = vrot.slane %v7074, %v7083
    %v7086 = vunpack.c.l.s4 1983009808
    %v7087 = vunpack.c.0.s8 %v7086
    %v7088 = vlaneseq
    %v7089 = vshrl.u32 %v7088, 7
    %v7090 = vsub.s32 %v7087, %v7089
    %v7091 = vrot.slane %v7075, %v7090
    %v7093 = vunpack.c.l.s4 1983009808
    %v7094 = vunpack.c.0.s8 %v7093
    %v7095 = vlaneseq
    %v7096 = vshrl.u32 %v7095, 7
    %v7097 = vsub.s32 %v7094, %v7096
    %v7098 = vrot.slane %v7076, %v7097
    %v7100 = vunpack.c.l.s4 1983009808
    %v7101 = vunpack.c.0.s8 %v7100
    %v7102 = vlaneseq
    %v7103 = vshrl.u32 %v7102, 7
    %v7104 = vsub.s32 %v7101, %v7103
    %v7105 = vrot.slane %v7077, %v7104
    %v7106 = vcombine.low %v7084, %v7098
    %v7107 = vcombine.high %v7084, %v7098
    %v7108 = vcombine.low %v7091, %v7105
    %v7109 = vcombine.high %v7091, %v7105
    %v7110 = vcombine.low %v634, %v640
    %v7111 = vcombine.high %v634, %v640
    %v7112 = vcombine.low %v646, %v652
    %v7113 = vcombine.high %v646, %v652
    %v7115 = vunpack.c.l.s4 1983009808
    %v7116 = vunpack.c.0.s8 %v7115
    %v7117 = vlaneseq
    %v7118 = vshrl.u32 %v7117, 7
    %v7119 = vsub.s32 %v7116, %v7118
    %v7120 = vrot.slane %v7110, %v7119
    %v7122 = vunpack.c.l.s4 1983009808
    %v7123 = vunpack.c.0.s8 %v7122
    %v7124 = vlaneseq
    %v7125 = vshrl.u32 %v7124, 7
    %v7126 = vsub.s32 %v7123, %v7125
    %v7127 = vrot.slane %v7111, %v7126
    %v7129 = vunpack.c.l.s4 1983009808
    %v7130 = vunpack.c.0.s8 %v7129
    %v7131 = vlaneseq
    %v7132 = vshrl.u32 %v7131, 7
    %v7133 = vsub.s32 %v7130, %v7132
    %v7134 = vrot.slane %v7112, %v7133
    %v7136 = vunpack.c.l.s4 1983009808
    %v7137 = vunpack.c.0.s8 %v7136
    %v7138 = vlaneseq
    %v7139 = vshrl.u32 %v7138, 7
    %v7140 = vsub.s32 %v7137, %v7139
    %v7141 = vrot.slane %v7113, %v7140
    %v7142 = vcombine.low %v7120, %v7134
    %v7143 = vcombine.high %v7120, %v7134
    %v7144 = vcombine.low %v7127, %v7141
    %v7145 = vcombine.high %v7127, %v7141
    %v7146 = vcombine.low %v635, %v641
    %v7147 = vcombine.high %v635, %v641
    %v7148 = vcombine.low %v647, %v653
    %v7149 = vcombine.high %v647, %v653
    %v7151 = vunpack.c.l.s4 1983009808
    %v7152 = vunpack.c.0.s8 %v7151
    %v7153 = vlaneseq
    %v7154 = vshrl.u32 %v7153, 7
    %v7155 = vsub.s32 %v7152, %v7154
    %v7156 = vrot.slane %v7146, %v7155
    %v7158 = vunpack.c.l.s4 1983009808
    %v7159 = vunpack.c.0.s8 %v7158
    %v7160 = vlaneseq
    %v7161 = vshrl.u32 %v7160, 7
    %v7162 = vsub.s32 %v7159, %v7161
    %v7163 = vrot.slane %v7147, %v7162
    %v7165 = vunpack.c.l.s4 1983009808
    %v7166 = vunpack.c.0.s8 %v7165
    %v7167 = vlaneseq
    %v7168 = vshrl.u32 %v7167, 7
    %v7169 = vsub.s32 %v7166, %v7168
    %v7170 = vrot.slane %v7148, %v7169
    %v7172 = vunpack.c.l.s4 1983009808
    %v7173 = vunpack.c.0.s8 %v7172
    %v7174 = vlaneseq
    %v7175 = vshrl.u32 %v7174, 7
    %v7176 = vsub.s32 %v7173, %v7175
    %v7177 = vrot.slane %v7149, %v7176
    %v7178 = vcombine.low %v7156, %v7170
    %v7179 = vcombine.high %v7156, %v7170
    %v7180 = vcombine.low %v7163, %v7177
    %v7181 = vcombine.high %v7163, %v7177
    %v7182 = vcombine.low %v654, %v660
    %v7183 = vcombine.high %v654, %v660
    %v7184 = vcombine.low %v666, %v672
    %v7185 = vcombine.high %v666, %v672
    %v7187 = vunpack.c.l.s4 1983009808
    %v7188 = vunpack.c.0.s8 %v7187
    %v7189 = vlaneseq
    %v7190 = vshrl.u32 %v7189, 7
    %v7191 = vsub.s32 %v7188, %v7190
    %v7192 = vrot.slane %v7182, %v7191
    %v7194 = vunpack.c.l.s4 1983009808
    %v7195 = vunpack.c.0.s8 %v7194
    %v7196 = vlaneseq
    %v7197 = vshrl.u32 %v7196, 7
    %v7198 = vsub.s32 %v7195, %v7197
    %v7199 = vrot.slane %v7183, %v7198
    %v7201 = vunpack.c.l.s4 1983009808
    %v7202 = vunpack.c.0.s8 %v7201
    %v7203 = vlaneseq
    %v7204 = vshrl.u32 %v7203, 7
    %v7205 = vsub.s32 %v7202, %v7204
    %v7206 = vrot.slane %v7184, %v7205
    %v7208 = vunpack.c.l.s4 1983009808
    %v7209 = vunpack.c.0.s8 %v7208
    %v7210 = vlaneseq
    %v7211 = vshrl.u32 %v7210, 7
    %v7212 = vsub.s32 %v7209, %v7211
    %v7213 = vrot.slane %v7185, %v7212
    %v7214 = vcombine.low %v7192, %v7206
    %v7215 = vcombine.high %v7192, %v7206
    %v7216 = vcombine.low %v7199, %v7213
    %v7217 = vcombine.high %v7199, %v7213
    %v7218 = vcombine.low %v655, %v661
    %v7219 = vcombine.high %v655, %v661
    %v7220 = vcombine.low %v667, %v673
    %v7221 = vcombine.high %v667, %v673
    %v7223 = vunpack.c.l.s4 1983009808
    %v7224 = vunpack.c.0.s8 %v7223
    %v7225 = vlaneseq
    %v7226 = vshrl.u32 %v7225, 7
    %v7227 = vsub.s32 %v7224, %v7226
    %v7228 = vrot.slane %v7218, %v7227
    %v7230 = vunpack.c.l.s4 1983009808
    %v7231 = vunpack.c.0.s8 %v7230
    %v7232 = vlaneseq
    %v7233 = vshrl.u32 %v7232, 7
    %v7234 = vsub.s32 %v7231, %v7233
    %v7235 = vrot.slane %v7219, %v7234
    %v7237 = vunpack.c.l.s4 1983009808
    %v7238 = vunpack.c.0.s8 %v7237
    %v7239 = vlaneseq
    %v7240 = vshrl.u32 %v7239, 7
    %v7241 = vsub.s32 %v7238, %v7240
    %v7242 = vrot.slane %v7220, %v7241
    %v7244 = vunpack.c.l.s4 1983009808
    %v7245 = vunpack.c.0.s8 %v7244
    %v7246 = vlaneseq
    %v7247 = vshrl.u32 %v7246, 7
    %v7248 = vsub.s32 %v7245, %v7247
    %v7249 = vrot.slane %v7221, %v7248
    %v7250 = vcombine.low %v7228, %v7242
    %v7251 = vcombine.high %v7228, %v7242
    %v7252 = vcombine.low %v7235, %v7249
    %v7253 = vcombine.high %v7235, %v7249
    %v7254 = vcombine.low %v656, %v662
    %v7255 = vcombine.high %v656, %v662
    %v7256 = vcombine.low %v668, %v674
    %v7257 = vcombine.high %v668, %v674
    %v7259 = vunpack.c.l.s4 1983009808
    %v7260 = vunpack.c.0.s8 %v7259
    %v7261 = vlaneseq
    %v7262 = vshrl.u32 %v7261, 7
    %v7263 = vsub.s32 %v7260, %v7262
    %v7264 = vrot.slane %v7254, %v7263
    %v7266 = vunpack.c.l.s4 1983009808
    %v7267 = vunpack.c.0.s8 %v7266
    %v7268 = vlaneseq
    %v7269 = vshrl.u32 %v7268, 7
    %v7270 = vsub.s32 %v7267, %v7269
    %v7271 = vrot.slane %v7255, %v7270
    %v7273 = vunpack.c.l.s4 1983009808
    %v7274 = vunpack.c.0.s8 %v7273
    %v7275 = vlaneseq
    %v7276 = vshrl.u32 %v7275, 7
    %v7277 = vsub.s32 %v7274, %v7276
    %v7278 = vrot.slane %v7256, %v7277
    %v7280 = vunpack.c.l.s4 1983009808
    %v7281 = vunpack.c.0.s8 %v7280
    %v7282 = vlaneseq
    %v7283 = vshrl.u32 %v7282, 7
    %v7284 = vsub.s32 %v7281, %v7283
    %v7285 = vrot.slane %v7257, %v7284
    %v7286 = vcombine.low %v7264, %v7278
    %v7287 = vcombine.high %v7264, %v7278
    %v7288 = vcombine.low %v7271, %v7285
    %v7289 = vcombine.high %v7271, %v7285
    %v7290 = vcombine.low %v657, %v663
    %v7291 = vcombine.high %v657, %v663
    %v7292 = vcombine.low %v669, %v675
    %v7293 = vcombine.high %v669, %v675
    %v7295 = vunpack.c.l.s4 1983009808
    %v7296 = vunpack.c.0.s8 %v7295
    %v7297 = vlaneseq
    %v7298 = vshrl.u32 %v7297, 7
    %v7299 = vsub.s32 %v7296, %v7298
    %v7300 = vrot.slane %v7290, %v7299
    %v7302 = vunpack.c.l.s4 1983009808
    %v7303 = vunpack.c.0.s8 %v7302
    %v7304 = vlaneseq
    %v7305 = vshrl.u32 %v7304, 7
    %v7306 = vsub.s32 %v7303, %v7305
    %v7307 = vrot.slane %v7291, %v7306
    %v7309 = vunpack.c.l.s4 1983009808
    %v7310 = vunpack.c.0.s8 %v7309
    %v7311 = vlaneseq
    %v7312 = vshrl.u32 %v7311, 7
    %v7313 = vsub.s32 %v7310, %v7312
    %v7314 = vrot.slane %v7292, %v7313
    %v7316 = vunpack.c.l.s4 1983009808
    %v7317 = vunpack.c.0.s8 %v7316
    %v7318 = vlaneseq
    %v7319 = vshrl.u32 %v7318, 7
    %v7320 = vsub.s32 %v7317, %v7319
    %v7321 = vrot.slane %v7293, %v7320
    %v7322 = vcombine.low %v7300, %v7314
    %v7323 = vcombine.high %v7300, %v7314
    %v7324 = vcombine.low %v7307, %v7321
    %v7325 = vcombine.high %v7307, %v7321
    %v7326 = vcombine.low %v658, %v664
    %v7327 = vcombine.high %v658, %v664
    %v7328 = vcombine.low %v670, %v676
    %v7329 = vcombine.high %v670, %v676
    %v7331 = vunpack.c.l.s4 1983009808
    %v7332 = vunpack.c.0.s8 %v7331
    %v7333 = vlaneseq
    %v7334 = vshrl.u32 %v7333, 7
    %v7335 = vsub.s32 %v7332, %v7334
    %v7336 = vrot.slane %v7326, %v7335
    %v7338 = vunpack.c.l.s4 1983009808
    %v7339 = vunpack.c.0.s8 %v7338
    %v7340 = vlaneseq
    %v7341 = vshrl.u32 %v7340, 7
    %v7342 = vsub.s32 %v7339, %v7341
    %v7343 = vrot.slane %v7327, %v7342
    %v7345 = vunpack.c.l.s4 1983009808
    %v7346 = vunpack.c.0.s8 %v7345
    %v7347 = vlaneseq
    %v7348 = vshrl.u32 %v7347, 7
    %v7349 = vsub.s32 %v7346, %v7348
    %v7350 = vrot.slane %v7328, %v7349
    %v7352 = vunpack.c.l.s4 1983009808
    %v7353 = vunpack.c.0.s8 %v7352
    %v7354 = vlaneseq
    %v7355 = vshrl.u32 %v7354, 7
    %v7356 = vsub.s32 %v7353, %v7355
    %v7357 = vrot.slane %v7329, %v7356
    %v7358 = vcombine.low %v7336, %v7350
    %v7359 = vcombine.high %v7336, %v7350
    %v7360 = vcombine.low %v7343, %v7357
    %v7361 = vcombine.high %v7343, %v7357
    %v7362 = vcombine.low %v659, %v665
    %v7363 = vcombine.high %v659, %v665
    %v7364 = vcombine.low %v671, %v677
    %v7365 = vcombine.high %v671, %v677
    %v7367 = vunpack.c.l.s4 1983009808
    %v7368 = vunpack.c.0.s8 %v7367
    %v7369 = vlaneseq
    %v7370 = vshrl.u32 %v7369, 7
    %v7371 = vsub.s32 %v7368, %v7370
    %v7372 = vrot.slane %v7362, %v7371
    %v7374 = vunpack.c.l.s4 1983009808
    %v7375 = vunpack.c.0.s8 %v7374
    %v7376 = vlaneseq
    %v7377 = vshrl.u32 %v7376, 7
    %v7378 = vsub.s32 %v7375, %v7377
    %v7379 = vrot.slane %v7363, %v7378
    %v7381 = vunpack.c.l.s4 1983009808
    %v7382 = vunpack.c.0.s8 %v7381
    %v7383 = vlaneseq
    %v7384 = vshrl.u32 %v7383, 7
    %v7385 = vsub.s32 %v7382, %v7384
    %v7386 = vrot.slane %v7364, %v7385
    %v7388 = vunpack.c.l.s4 1983009808
    %v7389 = vunpack.c.0.s8 %v7388
    %v7390 = vlaneseq
    %v7391 = vshrl.u32 %v7390, 7
    %v7392 = vsub.s32 %v7389, %v7391
    %v7393 = vrot.slane %v7365, %v7392
    %v7394 = vcombine.low %v7372, %v7386
    %v7395 = vcombine.high %v7372, %v7386
    %v7396 = vcombine.low %v7379, %v7393
    %v7397 = vcombine.high %v7379, %v7393
    %v7398 = vcombine.low %v678, %v684
    %v7399 = vcombine.high %v678, %v684
    %v7400 = vcombine.low %v690, %v696
    %v7401 = vcombine.high %v690, %v696
    %v7403 = vunpack.c.l.s4 1983009808
    %v7404 = vunpack.c.0.s8 %v7403
    %v7405 = vlaneseq
    %v7406 = vshrl.u32 %v7405, 7
    %v7407 = vsub.s32 %v7404, %v7406
    %v7408 = vrot.slane %v7398, %v7407
    %v7410 = vunpack.c.l.s4 1983009808
    %v7411 = vunpack.c.0.s8 %v7410
    %v7412 = vlaneseq
    %v7413 = vshrl.u32 %v7412, 7
    %v7414 = vsub.s32 %v7411, %v7413
    %v7415 = vrot.slane %v7399, %v7414
    %v7417 = vunpack.c.l.s4 1983009808
    %v7418 = vunpack.c.0.s8 %v7417
    %v7419 = vlaneseq
    %v7420 = vshrl.u32 %v7419, 7
    %v7421 = vsub.s32 %v7418, %v7420
    %v7422 = vrot.slane %v7400, %v7421
    %v7424 = vunpack.c.l.s4 1983009808
    %v7425 = vunpack.c.0.s8 %v7424
    %v7426 = vlaneseq
    %v7427 = vshrl.u32 %v7426, 7
    %v7428 = vsub.s32 %v7425, %v7427
    %v7429 = vrot.slane %v7401, %v7428
    %v7430 = vcombine.low %v7408, %v7422
    %v7431 = vcombine.high %v7408, %v7422
    %v7432 = vcombine.low %v7415, %v7429
    %v7433 = vcombine.high %v7415, %v7429
    %v7434 = vcombine.low %v679, %v685
    %v7435 = vcombine.high %v679, %v685
    %v7436 = vcombine.low %v691, %v697
    %v7437 = vcombine.high %v691, %v697
    %v7439 = vunpack.c.l.s4 1983009808
    %v7440 = vunpack.c.0.s8 %v7439
    %v7441 = vlaneseq
    %v7442 = vshrl.u32 %v7441, 7
    %v7443 = vsub.s32 %v7440, %v7442
    %v7444 = vrot.slane %v7434, %v7443
    %v7446 = vunpack.c.l.s4 1983009808
    %v7447 = vunpack.c.0.s8 %v7446
    %v7448 = vlaneseq
    %v7449 = vshrl.u32 %v7448, 7
    %v7450 = vsub.s32 %v7447, %v7449
    %v7451 = vrot.slane %v7435, %v7450
    %v7453 = vunpack.c.l.s4 1983009808
    %v7454 = vunpack.c.0.s8 %v7453
    %v7455 = vlaneseq
    %v7456 = vshrl.u32 %v7455, 7
    %v7457 = vsub.s32 %v7454, %v7456
    %v7458 = vrot.slane %v7436, %v7457
    %v7460 = vunpack.c.l.s4 1983009808
    %v7461 = vunpack.c.0.s8 %v7460
    %v7462 = vlaneseq
    %v7463 = vshrl.u32 %v7462, 7
    %v7464 = vsub.s32 %v7461, %v7463
    %v7465 = vrot.slane %v7437, %v7464
    %v7466 = vcombine.low %v7444, %v7458
    %v7467 = vcombine.high %v7444, %v7458
    %v7468 = vcombine.low %v7451, %v7465
    %v7469 = vcombine.high %v7451, %v7465
    %v7470 = vcombine.low %v680, %v686
    %v7471 = vcombine.high %v680, %v686
    %v7472 = vcombine.low %v692, %v698
    %v7473 = vcombine.high %v692, %v698
    %v7475 = vunpack.c.l.s4 1983009808
    %v7476 = vunpack.c.0.s8 %v7475
    %v7477 = vlaneseq
    %v7478 = vshrl.u32 %v7477, 7
    %v7479 = vsub.s32 %v7476, %v7478
    %v7480 = vrot.slane %v7470, %v7479
    %v7482 = vunpack.c.l.s4 1983009808
    %v7483 = vunpack.c.0.s8 %v7482
    %v7484 = vlaneseq
    %v7485 = vshrl.u32 %v7484, 7
    %v7486 = vsub.s32 %v7483, %v7485
    %v7487 = vrot.slane %v7471, %v7486
    %v7489 = vunpack.c.l.s4 1983009808
    %v7490 = vunpack.c.0.s8 %v7489
    %v7491 = vlaneseq
    %v7492 = vshrl.u32 %v7491, 7
    %v7493 = vsub.s32 %v7490, %v7492
    %v7494 = vrot.slane %v7472, %v7493
    %v7496 = vunpack.c.l.s4 1983009808
    %v7497 = vunpack.c.0.s8 %v7496
    %v7498 = vlaneseq
    %v7499 = vshrl.u32 %v7498, 7
    %v7500 = vsub.s32 %v7497, %v7499
    %v7501 = vrot.slane %v7473, %v7500
    %v7502 = vcombine.low %v7480, %v7494
    %v7503 = vcombine.high %v7480, %v7494
    %v7504 = vcombine.low %v7487, %v7501
    %v7505 = vcombine.high %v7487, %v7501
    %v7506 = vcombine.low %v681, %v687
    %v7507 = vcombine.high %v681, %v687
    %v7508 = vcombine.low %v693, %v699
    %v7509 = vcombine.high %v693, %v699
    %v7511 = vunpack.c.l.s4 1983009808
    %v7512 = vunpack.c.0.s8 %v7511
    %v7513 = vlaneseq
    %v7514 = vshrl.u32 %v7513, 7
    %v7515 = vsub.s32 %v7512, %v7514
    %v7516 = vrot.slane %v7506, %v7515
    %v7518 = vunpack.c.l.s4 1983009808
    %v7519 = vunpack.c.0.s8 %v7518
    %v7520 = vlaneseq
    %v7521 = vshrl.u32 %v7520, 7
    %v7522 = vsub.s32 %v7519, %v7521
    %v7523 = vrot.slane %v7507, %v7522
    %v7525 = vunpack.c.l.s4 1983009808
    %v7526 = vunpack.c.0.s8 %v7525
    %v7527 = vlaneseq
    %v7528 = vshrl.u32 %v7527, 7
    %v7529 = vsub.s32 %v7526, %v7528
    %v7530 = vrot.slane %v7508, %v7529
    %v7532 = vunpack.c.l.s4 1983009808
    %v7533 = vunpack.c.0.s8 %v7532
    %v7534 = vlaneseq
    %v7535 = vshrl.u32 %v7534, 7
    %v7536 = vsub.s32 %v7533, %v7535
    %v7537 = vrot.slane %v7509, %v7536
    %v7538 = vcombine.low %v7516, %v7530
    %v7539 = vcombine.high %v7516, %v7530
    %v7540 = vcombine.low %v7523, %v7537
    %v7541 = vcombine.high %v7523, %v7537
    %v7542 = vcombine.low %v682, %v688
    %v7543 = vcombine.high %v682, %v688
    %v7544 = vcombine.low %v694, %v700
    %v7545 = vcombine.high %v694, %v700
    %v7547 = vunpack.c.l.s4 1983009808
    %v7548 = vunpack.c.0.s8 %v7547
    %v7549 = vlaneseq
    %v7550 = vshrl.u32 %v7549, 7
    %v7551 = vsub.s32 %v7548, %v7550
    %v7552 = vrot.slane %v7542, %v7551
    %v7554 = vunpack.c.l.s4 1983009808
    %v7555 = vunpack.c.0.s8 %v7554
    %v7556 = vlaneseq
    %v7557 = vshrl.u32 %v7556, 7
    %v7558 = vsub.s32 %v7555, %v7557
    %v7559 = vrot.slane %v7543, %v7558
    %v7561 = vunpack.c.l.s4 1983009808
    %v7562 = vunpack.c.0.s8 %v7561
    %v7563 = vlaneseq
    %v7564 = vshrl.u32 %v7563, 7
    %v7565 = vsub.s32 %v7562, %v7564
    %v7566 = vrot.slane %v7544, %v7565
    %v7568 = vunpack.c.l.s4 1983009808
    %v7569 = vunpack.c.0.s8 %v7568
    %v7570 = vlaneseq
    %v7571 = vshrl.u32 %v7570, 7
    %v7572 = vsub.s32 %v7569, %v7571
    %v7573 = vrot.slane %v7545, %v7572
    %v7574 = vcombine.low %v7552, %v7566
    %v7575 = vcombine.high %v7552, %v7566
    %v7576 = vcombine.low %v7559, %v7573
    %v7577 = vcombine.high %v7559, %v7573
    %v7578 = vcombine.low %v683, %v689
    %v7579 = vcombine.high %v683, %v689
    %v7580 = vcombine.low %v695, %v701
    %v7581 = vcombine.high %v695, %v701
    %v7583 = vunpack.c.l.s4 1983009808
    %v7584 = vunpack.c.0.s8 %v7583
    %v7585 = vlaneseq
    %v7586 = vshrl.u32 %v7585, 7
    %v7587 = vsub.s32 %v7584, %v7586
    %v7588 = vrot.slane %v7578, %v7587
    %v7590 = vunpack.c.l.s4 1983009808
    %v7591 = vunpack.c.0.s8 %v7590
    %v7592 = vlaneseq
    %v7593 = vshrl.u32 %v7592, 7
    %v7594 = vsub.s32 %v7591, %v7593
    %v7595 = vrot.slane %v7579, %v7594
    %v7597 = vunpack.c.l.s4 1983009808
    %v7598 = vunpack.c.0.s8 %v7597
    %v7599 = vlaneseq
    %v7600 = vshrl.u32 %v7599, 7
    %v7601 = vsub.s32 %v7598, %v7600
    %v7602 = vrot.slane %v7580, %v7601
    %v7604 = vunpack.c.l.s4 1983009808
    %v7605 = vunpack.c.0.s8 %v7604
    %v7606 = vlaneseq
    %v7607 = vshrl.u32 %v7606, 7
    %v7608 = vsub.s32 %v7605, %v7607
    %v7609 = vrot.slane %v7581, %v7608
    %v7610 = vcombine.low %v7588, %v7602
    %v7611 = vcombine.high %v7588, %v7602
    %v7612 = vcombine.low %v7595, %v7609
    %v7613 = vcombine.high %v7595, %v7609
    %v7614 = vcombine.low %v702, %v708
    %v7615 = vcombine.high %v702, %v708
    %v7616 = vcombine.low %v714, %v720
    %v7617 = vcombine.high %v714, %v720
    %v7619 = vunpack.c.l.s4 1983009808
    %v7620 = vunpack.c.0.s8 %v7619
    %v7621 = vlaneseq
    %v7622 = vshrl.u32 %v7621, 7
    %v7623 = vsub.s32 %v7620, %v7622
    %v7624 = vrot.slane %v7614, %v7623
    %v7626 = vunpack.c.l.s4 1983009808
    %v7627 = vunpack.c.0.s8 %v7626
    %v7628 = vlaneseq
    %v7629 = vshrl.u32 %v7628, 7
    %v7630 = vsub.s32 %v7627, %v7629
    %v7631 = vrot.slane %v7615, %v7630
    %v7633 = vunpack.c.l.s4 1983009808
    %v7634 = vunpack.c.0.s8 %v7633
    %v7635 = vlaneseq
    %v7636 = vshrl.u32 %v7635, 7
    %v7637 = vsub.s32 %v7634, %v7636
    %v7638 = vrot.slane %v7616, %v7637
    %v7640 = vunpack.c.l.s4 1983009808
    %v7641 = vunpack.c.0.s8 %v7640
    %v7642 = vlaneseq
    %v7643 = vshrl.u32 %v7642, 7
    %v7644 = vsub.s32 %v7641, %v7643
    %v7645 = vrot.slane %v7617, %v7644
    %v7646 = vcombine.low %v7624, %v7638
    %v7647 = vcombine.high %v7624, %v7638
    %v7648 = vcombine.low %v7631, %v7645
    %v7649 = vcombine.high %v7631, %v7645
    %v7650 = vcombine.low %v703, %v709
    %v7651 = vcombine.high %v703, %v709
    %v7652 = vcombine.low %v715, %v721
    %v7653 = vcombine.high %v715, %v721
    %v7655 = vunpack.c.l.s4 1983009808
    %v7656 = vunpack.c.0.s8 %v7655
    %v7657 = vlaneseq
    %v7658 = vshrl.u32 %v7657, 7
    %v7659 = vsub.s32 %v7656, %v7658
    %v7660 = vrot.slane %v7650, %v7659
    %v7662 = vunpack.c.l.s4 1983009808
    %v7663 = vunpack.c.0.s8 %v7662
    %v7664 = vlaneseq
    %v7665 = vshrl.u32 %v7664, 7
    %v7666 = vsub.s32 %v7663, %v7665
    %v7667 = vrot.slane %v7651, %v7666
    %v7669 = vunpack.c.l.s4 1983009808
    %v7670 = vunpack.c.0.s8 %v7669
    %v7671 = vlaneseq
    %v7672 = vshrl.u32 %v7671, 7
    %v7673 = vsub.s32 %v7670, %v7672
    %v7674 = vrot.slane %v7652, %v7673
    %v7676 = vunpack.c.l.s4 1983009808
    %v7677 = vunpack.c.0.s8 %v7676
    %v7678 = vlaneseq
    %v7679 = vshrl.u32 %v7678, 7
    %v7680 = vsub.s32 %v7677, %v7679
    %v7681 = vrot.slane %v7653, %v7680
    %v7682 = vcombine.low %v7660, %v7674
    %v7683 = vcombine.high %v7660, %v7674
    %v7684 = vcombine.low %v7667, %v7681
    %v7685 = vcombine.high %v7667, %v7681
    %v7686 = vcombine.low %v704, %v710
    %v7687 = vcombine.high %v704, %v710
    %v7688 = vcombine.low %v716, %v722
    %v7689 = vcombine.high %v716, %v722
    %v7691 = vunpack.c.l.s4 1983009808
    %v7692 = vunpack.c.0.s8 %v7691
    %v7693 = vlaneseq
    %v7694 = vshrl.u32 %v7693, 7
    %v7695 = vsub.s32 %v7692, %v7694
    %v7696 = vrot.slane %v7686, %v7695
    %v7698 = vunpack.c.l.s4 1983009808
    %v7699 = vunpack.c.0.s8 %v7698
    %v7700 = vlaneseq
    %v7701 = vshrl.u32 %v7700, 7
    %v7702 = vsub.s32 %v7699, %v7701
    %v7703 = vrot.slane %v7687, %v7702
    %v7705 = vunpack.c.l.s4 1983009808
    %v7706 = vunpack.c.0.s8 %v7705
    %v7707 = vlaneseq
    %v7708 = vshrl.u32 %v7707, 7
    %v7709 = vsub.s32 %v7706, %v7708
    %v7710 = vrot.slane %v7688, %v7709
    %v7712 = vunpack.c.l.s4 1983009808
    %v7713 = vunpack.c.0.s8 %v7712
    %v7714 = vlaneseq
    %v7715 = vshrl.u32 %v7714, 7
    %v7716 = vsub.s32 %v7713, %v7715
    %v7717 = vrot.slane %v7689, %v7716
    %v7718 = vcombine.low %v7696, %v7710
    %v7719 = vcombine.high %v7696, %v7710
    %v7720 = vcombine.low %v7703, %v7717
    %v7721 = vcombine.high %v7703, %v7717
    %v7722 = vcombine.low %v705, %v711
    %v7723 = vcombine.high %v705, %v711
    %v7724 = vcombine.low %v717, %v723
    %v7725 = vcombine.high %v717, %v723
    %v7727 = vunpack.c.l.s4 1983009808
    %v7728 = vunpack.c.0.s8 %v7727
    %v7729 = vlaneseq
    %v7730 = vshrl.u32 %v7729, 7
    %v7731 = vsub.s32 %v7728, %v7730
    %v7732 = vrot.slane %v7722, %v7731
    %v7734 = vunpack.c.l.s4 1983009808
    %v7735 = vunpack.c.0.s8 %v7734
    %v7736 = vlaneseq
    %v7737 = vshrl.u32 %v7736, 7
    %v7738 = vsub.s32 %v7735, %v7737
    %v7739 = vrot.slane %v7723, %v7738
    %v7741 = vunpack.c.l.s4 1983009808
    %v7742 = vunpack.c.0.s8 %v7741
    %v7743 = vlaneseq
    %v7744 = vshrl.u32 %v7743, 7
    %v7745 = vsub.s32 %v7742, %v7744
    %v7746 = vrot.slane %v7724, %v7745
    %v7748 = vunpack.c.l.s4 1983009808
    %v7749 = vunpack.c.0.s8 %v7748
    %v7750 = vlaneseq
    %v7751 = vshrl.u32 %v7750, 7
    %v7752 = vsub.s32 %v7749, %v7751
    %v7753 = vrot.slane %v7725, %v7752
    %v7754 = vcombine.low %v7732, %v7746
    %v7755 = vcombine.high %v7732, %v7746
    %v7756 = vcombine.low %v7739, %v7753
    %v7757 = vcombine.high %v7739, %v7753
    %v7758 = vcombine.low %v706, %v712
    %v7759 = vcombine.high %v706, %v712
    %v7760 = vcombine.low %v718, %v724
    %v7761 = vcombine.high %v718, %v724
    %v7763 = vunpack.c.l.s4 1983009808
    %v7764 = vunpack.c.0.s8 %v7763
    %v7765 = vlaneseq
    %v7766 = vshrl.u32 %v7765, 7
    %v7767 = vsub.s32 %v7764, %v7766
    %v7768 = vrot.slane %v7758, %v7767
    %v7770 = vunpack.c.l.s4 1983009808
    %v7771 = vunpack.c.0.s8 %v7770
    %v7772 = vlaneseq
    %v7773 = vshrl.u32 %v7772, 7
    %v7774 = vsub.s32 %v7771, %v7773
    %v7775 = vrot.slane %v7759, %v7774
    %v7777 = vunpack.c.l.s4 1983009808
    %v7778 = vunpack.c.0.s8 %v7777
    %v7779 = vlaneseq
    %v7780 = vshrl.u32 %v7779, 7
    %v7781 = vsub.s32 %v7778, %v7780
    %v7782 = vrot.slane %v7760, %v7781
    %v7784 = vunpack.c.l.s4 1983009808
    %v7785 = vunpack.c.0.s8 %v7784
    %v7786 = vlaneseq
    %v7787 = vshrl.u32 %v7786, 7
    %v7788 = vsub.s32 %v7785, %v7787
    %v7789 = vrot.slane %v7761, %v7788
    %v7790 = vcombine.low %v7768, %v7782
    %v7791 = vcombine.high %v7768, %v7782
    %v7792 = vcombine.low %v7775, %v7789
    %v7793 = vcombine.high %v7775, %v7789
    %v7794 = vcombine.low %v707, %v713
    %v7795 = vcombine.high %v707, %v713
    %v7796 = vcombine.low %v719, %v725
    %v7797 = vcombine.high %v719, %v725
    %v7799 = vunpack.c.l.s4 1983009808
    %v7800 = vunpack.c.0.s8 %v7799
    %v7801 = vlaneseq
    %v7802 = vshrl.u32 %v7801, 7
    %v7803 = vsub.s32 %v7800, %v7802
    %v7804 = vrot.slane %v7794, %v7803
    %v7806 = vunpack.c.l.s4 1983009808
    %v7807 = vunpack.c.0.s8 %v7806
    %v7808 = vlaneseq
    %v7809 = vshrl.u32 %v7808, 7
    %v7810 = vsub.s32 %v7807, %v7809
    %v7811 = vrot.slane %v7795, %v7810
    %v7813 = vunpack.c.l.s4 1983009808
    %v7814 = vunpack.c.0.s8 %v7813
    %v7815 = vlaneseq
    %v7816 = vshrl.u32 %v7815, 7
    %v7817 = vsub.s32 %v7814, %v7816
    %v7818 = vrot.slane %v7796, %v7817
    %v7820 = vunpack.c.l.s4 1983009808
    %v7821 = vunpack.c.0.s8 %v7820
    %v7822 = vlaneseq
    %v7823 = vshrl.u32 %v7822, 7
    %v7824 = vsub.s32 %v7821, %v7823
    %v7825 = vrot.slane %v7797, %v7824
    %v7826 = vcombine.low %v7804, %v7818
    %v7827 = vcombine.high %v7804, %v7818
    %v7828 = vcombine.low %v7811, %v7825
    %v7829 = vcombine.high %v7811, %v7825
    %v7830 = vcombine.low %v726, %v732
    %v7831 = vcombine.high %v726, %v732
    %v7832 = vcombine.low %v738, %v744
    %v7833 = vcombine.high %v738, %v744
    %v7835 = vunpack.c.l.s4 1983009808
    %v7836 = vunpack.c.0.s8 %v7835
    %v7837 = vlaneseq
    %v7838 = vshrl.u32 %v7837, 7
    %v7839 = vsub.s32 %v7836, %v7838
    %v7840 = vrot.slane %v7830, %v7839
    %v7842 = vunpack.c.l.s4 1983009808
    %v7843 = vunpack.c.0.s8 %v7842
    %v7844 = vlaneseq
    %v7845 = vshrl.u32 %v7844, 7
    %v7846 = vsub.s32 %v7843, %v7845
    %v7847 = vrot.slane %v7831, %v7846
    %v7849 = vunpack.c.l.s4 1983009808
    %v7850 = vunpack.c.0.s8 %v7849
    %v7851 = vlaneseq
    %v7852 = vshrl.u32 %v7851, 7
    %v7853 = vsub.s32 %v7850, %v7852
    %v7854 = vrot.slane %v7832, %v7853
    %v7856 = vunpack.c.l.s4 1983009808
    %v7857 = vunpack.c.0.s8 %v7856
    %v7858 = vlaneseq
    %v7859 = vshrl.u32 %v7858, 7
    %v7860 = vsub.s32 %v7857, %v7859
    %v7861 = vrot.slane %v7833, %v7860
    %v7862 = vcombine.low %v7840, %v7854
    %v7863 = vcombine.high %v7840, %v7854
    %v7864 = vcombine.low %v7847, %v7861
    %v7865 = vcombine.high %v7847, %v7861
    %v7866 = vcombine.low %v727, %v733
    %v7867 = vcombine.high %v727, %v733
    %v7868 = vcombine.low %v739, %v745
    %v7869 = vcombine.high %v739, %v745
    %v7871 = vunpack.c.l.s4 1983009808
    %v7872 = vunpack.c.0.s8 %v7871
    %v7873 = vlaneseq
    %v7874 = vshrl.u32 %v7873, 7
    %v7875 = vsub.s32 %v7872, %v7874
    %v7876 = vrot.slane %v7866, %v7875
    %v7878 = vunpack.c.l.s4 1983009808
    %v7879 = vunpack.c.0.s8 %v7878
    %v7880 = vlaneseq
    %v7881 = vshrl.u32 %v7880, 7
    %v7882 = vsub.s32 %v7879, %v7881
    %v7883 = vrot.slane %v7867, %v7882
    %v7885 = vunpack.c.l.s4 1983009808
    %v7886 = vunpack.c.0.s8 %v7885
    %v7887 = vlaneseq
    %v7888 = vshrl.u32 %v7887, 7
    %v7889 = vsub.s32 %v7886, %v7888
    %v7890 = vrot.slane %v7868, %v7889
    %v7892 = vunpack.c.l.s4 1983009808
    %v7893 = vunpack.c.0.s8 %v7892
    %v7894 = vlaneseq
    %v7895 = vshrl.u32 %v7894, 7
    %v7896 = vsub.s32 %v7893, %v7895
    %v7897 = vrot.slane %v7869, %v7896
    %v7898 = vcombine.low %v7876, %v7890
    %v7899 = vcombine.high %v7876, %v7890
    %v7900 = vcombine.low %v7883, %v7897
    %v7901 = vcombine.high %v7883, %v7897
    %v7902 = vcombine.low %v728, %v734
    %v7903 = vcombine.high %v728, %v734
    %v7904 = vcombine.low %v740, %v746
    %v7905 = vcombine.high %v740, %v746
    %v7907 = vunpack.c.l.s4 1983009808
    %v7908 = vunpack.c.0.s8 %v7907
    %v7909 = vlaneseq
    %v7910 = vshrl.u32 %v7909, 7
    %v7911 = vsub.s32 %v7908, %v7910
    %v7912 = vrot.slane %v7902, %v7911
    %v7914 = vunpack.c.l.s4 1983009808
    %v7915 = vunpack.c.0.s8 %v7914
    %v7916 = vlaneseq
    %v7917 = vshrl.u32 %v7916, 7
    %v7918 = vsub.s32 %v7915, %v7917
    %v7919 = vrot.slane %v7903, %v7918
    %v7921 = vunpack.c.l.s4 1983009808
    %v7922 = vunpack.c.0.s8 %v7921
    %v7923 = vlaneseq
    %v7924 = vshrl.u32 %v7923, 7
    %v7925 = vsub.s32 %v7922, %v7924
    %v7926 = vrot.slane %v7904, %v7925
    %v7928 = vunpack.c.l.s4 1983009808
    %v7929 = vunpack.c.0.s8 %v7928
    %v7930 = vlaneseq
    %v7931 = vshrl.u32 %v7930, 7
    %v7932 = vsub.s32 %v7929, %v7931
    %v7933 = vrot.slane %v7905, %v7932
    %v7934 = vcombine.low %v7912, %v7926
    %v7935 = vcombine.high %v7912, %v7926
    %v7936 = vcombine.low %v7919, %v7933
    %v7937 = vcombine.high %v7919, %v7933
    %v7938 = vcombine.low %v729, %v735
    %v7939 = vcombine.high %v729, %v735
    %v7940 = vcombine.low %v741, %v747
    %v7941 = vcombine.high %v741, %v747
    %v7943 = vunpack.c.l.s4 1983009808
    %v7944 = vunpack.c.0.s8 %v7943
    %v7945 = vlaneseq
    %v7946 = vshrl.u32 %v7945, 7
    %v7947 = vsub.s32 %v7944, %v7946
    %v7948 = vrot.slane %v7938, %v7947
    %v7950 = vunpack.c.l.s4 1983009808
    %v7951 = vunpack.c.0.s8 %v7950
    %v7952 = vlaneseq
    %v7953 = vshrl.u32 %v7952, 7
    %v7954 = vsub.s32 %v7951, %v7953
    %v7955 = vrot.slane %v7939, %v7954
    %v7957 = vunpack.c.l.s4 1983009808
    %v7958 = vunpack.c.0.s8 %v7957
    %v7959 = vlaneseq
    %v7960 = vshrl.u32 %v7959, 7
    %v7961 = vsub.s32 %v7958, %v7960
    %v7962 = vrot.slane %v7940, %v7961
    %v7964 = vunpack.c.l.s4 1983009808
    %v7965 = vunpack.c.0.s8 %v7964
    %v7966 = vlaneseq
    %v7967 = vshrl.u32 %v7966, 7
    %v7968 = vsub.s32 %v7965, %v7967
    %v7969 = vrot.slane %v7941, %v7968
    %v7970 = vcombine.low %v7948, %v7962
    %v7971 = vcombine.high %v7948, %v7962
    %v7972 = vcombine.low %v7955, %v7969
    %v7973 = vcombine.high %v7955, %v7969
    %v7974 = vcombine.low %v730, %v736
    %v7975 = vcombine.high %v730, %v736
    %v7976 = vcombine.low %v742, %v748
    %v7977 = vcombine.high %v742, %v748
    %v7979 = vunpack.c.l.s4 1983009808
    %v7980 = vunpack.c.0.s8 %v7979
    %v7981 = vlaneseq
    %v7982 = vshrl.u32 %v7981, 7
    %v7983 = vsub.s32 %v7980, %v7982
    %v7984 = vrot.slane %v7974, %v7983
    %v7986 = vunpack.c.l.s4 1983009808
    %v7987 = vunpack.c.0.s8 %v7986
    %v7988 = vlaneseq
    %v7989 = vshrl.u32 %v7988, 7
    %v7990 = vsub.s32 %v7987, %v7989
    %v7991 = vrot.slane %v7975, %v7990
    %v7993 = vunpack.c.l.s4 1983009808
    %v7994 = vunpack.c.0.s8 %v7993
    %v7995 = vlaneseq
    %v7996 = vshrl.u32 %v7995, 7
    %v7997 = vsub.s32 %v7994, %v7996
    %v7998 = vrot.slane %v7976, %v7997
    %v8000 = vunpack.c.l.s4 1983009808
    %v8001 = vunpack.c.0.s8 %v8000
    %v8002 = vlaneseq
    %v8003 = vshrl.u32 %v8002, 7
    %v8004 = vsub.s32 %v8001, %v8003
    %v8005 = vrot.slane %v7977, %v8004
    %v8006 = vcombine.low %v7984, %v7998
    %v8007 = vcombine.high %v7984, %v7998
    %v8008 = vcombine.low %v7991, %v8005
    %v8009 = vcombine.high %v7991, %v8005
    %v8010 = vcombine.low %v731, %v737
    %v8011 = vcombine.high %v731, %v737
    %v8012 = vcombine.low %v743, %v749
    %v8013 = vcombine.high %v743, %v749
    %v8015 = vunpack.c.l.s4 1983009808
    %v8016 = vunpack.c.0.s8 %v8015
    %v8017 = vlaneseq
    %v8018 = vshrl.u32 %v8017, 7
    %v8019 = vsub.s32 %v8016, %v8018
    %v8020 = vrot.slane %v8010, %v8019
    %v8022 = vunpack.c.l.s4 1983009808
    %v8023 = vunpack.c.0.s8 %v8022
    %v8024 = vlaneseq
    %v8025 = vshrl.u32 %v8024, 7
    %v8026 = vsub.s32 %v8023, %v8025
    %v8027 = vrot.slane %v8011, %v8026
    %v8029 = vunpack.c.l.s4 1983009808
    %v8030 = vunpack.c.0.s8 %v8029
    %v8031 = vlaneseq
    %v8032 = vshrl.u32 %v8031, 7
    %v8033 = vsub.s32 %v8030, %v8032
    %v8034 = vrot.slane %v8012, %v8033
    %v8036 = vunpack.c.l.s4 1983009808
    %v8037 = vunpack.c.0.s8 %v8036
    %v8038 = vlaneseq
    %v8039 = vshrl.u32 %v8038, 7
    %v8040 = vsub.s32 %v8037, %v8039
    %v8041 = vrot.slane %v8013, %v8040
    %v8042 = vcombine.low %v8020, %v8034
    %v8043 = vcombine.high %v8020, %v8034
    %v8044 = vcombine.low %v8027, %v8041
    %v8045 = vcombine.high %v8027, %v8041
    %v8046 = vcombine.low %v750, %v756
    %v8047 = vcombine.high %v750, %v756
    %v8048 = vcombine.low %v762, %v768
    %v8049 = vcombine.high %v762, %v768
    %v8051 = vunpack.c.l.s4 1983009808
    %v8052 = vunpack.c.0.s8 %v8051
    %v8053 = vlaneseq
    %v8054 = vshrl.u32 %v8053, 7
    %v8055 = vsub.s32 %v8052, %v8054
    %v8056 = vrot.slane %v8046, %v8055
    %v8058 = vunpack.c.l.s4 1983009808
    %v8059 = vunpack.c.0.s8 %v8058
    %v8060 = vlaneseq
    %v8061 = vshrl.u32 %v8060, 7
    %v8062 = vsub.s32 %v8059, %v8061
    %v8063 = vrot.slane %v8047, %v8062
    %v8065 = vunpack.c.l.s4 1983009808
    %v8066 = vunpack.c.0.s8 %v8065
    %v8067 = vlaneseq
    %v8068 = vshrl.u32 %v8067, 7
    %v8069 = vsub.s32 %v8066, %v8068
    %v8070 = vrot.slane %v8048, %v8069
    %v8072 = vunpack.c.l.s4 1983009808
    %v8073 = vunpack.c.0.s8 %v8072
    %v8074 = vlaneseq
    %v8075 = vshrl.u32 %v8074, 7
    %v8076 = vsub.s32 %v8073, %v8075
    %v8077 = vrot.slane %v8049, %v8076
    %v8078 = vcombine.low %v8056, %v8070
    %v8079 = vcombine.high %v8056, %v8070
    %v8080 = vcombine.low %v8063, %v8077
    %v8081 = vcombine.high %v8063, %v8077
    %v8082 = vcombine.low %v751, %v757
    %v8083 = vcombine.high %v751, %v757
    %v8084 = vcombine.low %v763, %v769
    %v8085 = vcombine.high %v763, %v769
    %v8087 = vunpack.c.l.s4 1983009808
    %v8088 = vunpack.c.0.s8 %v8087
    %v8089 = vlaneseq
    %v8090 = vshrl.u32 %v8089, 7
    %v8091 = vsub.s32 %v8088, %v8090
    %v8092 = vrot.slane %v8082, %v8091
    %v8094 = vunpack.c.l.s4 1983009808
    %v8095 = vunpack.c.0.s8 %v8094
    %v8096 = vlaneseq
    %v8097 = vshrl.u32 %v8096, 7
    %v8098 = vsub.s32 %v8095, %v8097
    %v8099 = vrot.slane %v8083, %v8098
    %v8101 = vunpack.c.l.s4 1983009808
    %v8102 = vunpack.c.0.s8 %v8101
    %v8103 = vlaneseq
    %v8104 = vshrl.u32 %v8103, 7
    %v8105 = vsub.s32 %v8102, %v8104
    %v8106 = vrot.slane %v8084, %v8105
    %v8108 = vunpack.c.l.s4 1983009808
    %v8109 = vunpack.c.0.s8 %v8108
    %v8110 = vlaneseq
    %v8111 = vshrl.u32 %v8110, 7
    %v8112 = vsub.s32 %v8109, %v8111
    %v8113 = vrot.slane %v8085, %v8112
    %v8114 = vcombine.low %v8092, %v8106
    %v8115 = vcombine.high %v8092, %v8106
    %v8116 = vcombine.low %v8099, %v8113
    %v8117 = vcombine.high %v8099, %v8113
    %v8118 = vcombine.low %v752, %v758
    %v8119 = vcombine.high %v752, %v758
    %v8120 = vcombine.low %v764, %v770
    %v8121 = vcombine.high %v764, %v770
    %v8123 = vunpack.c.l.s4 1983009808
    %v8124 = vunpack.c.0.s8 %v8123
    %v8125 = vlaneseq
    %v8126 = vshrl.u32 %v8125, 7
    %v8127 = vsub.s32 %v8124, %v8126
    %v8128 = vrot.slane %v8118, %v8127
    %v8130 = vunpack.c.l.s4 1983009808
    %v8131 = vunpack.c.0.s8 %v8130
    %v8132 = vlaneseq
    %v8133 = vshrl.u32 %v8132, 7
    %v8134 = vsub.s32 %v8131, %v8133
    %v8135 = vrot.slane %v8119, %v8134
    %v8137 = vunpack.c.l.s4 1983009808
    %v8138 = vunpack.c.0.s8 %v8137
    %v8139 = vlaneseq
    %v8140 = vshrl.u32 %v8139, 7
    %v8141 = vsub.s32 %v8138, %v8140
    %v8142 = vrot.slane %v8120, %v8141
    %v8144 = vunpack.c.l.s4 1983009808
    %v8145 = vunpack.c.0.s8 %v8144
    %v8146 = vlaneseq
    %v8147 = vshrl.u32 %v8146, 7
    %v8148 = vsub.s32 %v8145, %v8147
    %v8149 = vrot.slane %v8121, %v8148
    %v8150 = vcombine.low %v8128, %v8142
    %v8151 = vcombine.high %v8128, %v8142
    %v8152 = vcombine.low %v8135, %v8149
    %v8153 = vcombine.high %v8135, %v8149
    %v8154 = vcombine.low %v753, %v759
    %v8155 = vcombine.high %v753, %v759
    %v8156 = vcombine.low %v765, %v771
    %v8157 = vcombine.high %v765, %v771
    %v8159 = vunpack.c.l.s4 1983009808
    %v8160 = vunpack.c.0.s8 %v8159
    %v8161 = vlaneseq
    %v8162 = vshrl.u32 %v8161, 7
    %v8163 = vsub.s32 %v8160, %v8162
    %v8164 = vrot.slane %v8154, %v8163
    %v8166 = vunpack.c.l.s4 1983009808
    %v8167 = vunpack.c.0.s8 %v8166
    %v8168 = vlaneseq
    %v8169 = vshrl.u32 %v8168, 7
    %v8170 = vsub.s32 %v8167, %v8169
    %v8171 = vrot.slane %v8155, %v8170
    %v8173 = vunpack.c.l.s4 1983009808
    %v8174 = vunpack.c.0.s8 %v8173
    %v8175 = vlaneseq
    %v8176 = vshrl.u32 %v8175, 7
    %v8177 = vsub.s32 %v8174, %v8176
    %v8178 = vrot.slane %v8156, %v8177
    %v8180 = vunpack.c.l.s4 1983009808
    %v8181 = vunpack.c.0.s8 %v8180
    %v8182 = vlaneseq
    %v8183 = vshrl.u32 %v8182, 7
    %v8184 = vsub.s32 %v8181, %v8183
    %v8185 = vrot.slane %v8157, %v8184
    %v8186 = vcombine.low %v8164, %v8178
    %v8187 = vcombine.high %v8164, %v8178
    %v8188 = vcombine.low %v8171, %v8185
    %v8189 = vcombine.high %v8171, %v8185
    %v8190 = vcombine.low %v754, %v760
    %v8191 = vcombine.high %v754, %v760
    %v8192 = vcombine.low %v766, %v772
    %v8193 = vcombine.high %v766, %v772
    %v8195 = vunpack.c.l.s4 1983009808
    %v8196 = vunpack.c.0.s8 %v8195
    %v8197 = vlaneseq
    %v8198 = vshrl.u32 %v8197, 7
    %v8199 = vsub.s32 %v8196, %v8198
    %v8200 = vrot.slane %v8190, %v8199
    %v8202 = vunpack.c.l.s4 1983009808
    %v8203 = vunpack.c.0.s8 %v8202
    %v8204 = vlaneseq
    %v8205 = vshrl.u32 %v8204, 7
    %v8206 = vsub.s32 %v8203, %v8205
    %v8207 = vrot.slane %v8191, %v8206
    %v8209 = vunpack.c.l.s4 1983009808
    %v8210 = vunpack.c.0.s8 %v8209
    %v8211 = vlaneseq
    %v8212 = vshrl.u32 %v8211, 7
    %v8213 = vsub.s32 %v8210, %v8212
    %v8214 = vrot.slane %v8192, %v8213
    %v8216 = vunpack.c.l.s4 1983009808
    %v8217 = vunpack.c.0.s8 %v8216
    %v8218 = vlaneseq
    %v8219 = vshrl.u32 %v8218, 7
    %v8220 = vsub.s32 %v8217, %v8219
    %v8221 = vrot.slane %v8193, %v8220
    %v8222 = vcombine.low %v8200, %v8214
    %v8223 = vcombine.high %v8200, %v8214
    %v8224 = vcombine.low %v8207, %v8221
    %v8225 = vcombine.high %v8207, %v8221
    %v8226 = vcombine.low %v755, %v761
    %v8227 = vcombine.high %v755, %v761
    %v8228 = vcombine.low %v767, %v773
    %v8229 = vcombine.high %v767, %v773
    %v8231 = vunpack.c.l.s4 1983009808
    %v8232 = vunpack.c.0.s8 %v8231
    %v8233 = vlaneseq
    %v8234 = vshrl.u32 %v8233, 7
    %v8235 = vsub.s32 %v8232, %v8234
    %v8236 = vrot.slane %v8226, %v8235
    %v8238 = vunpack.c.l.s4 1983009808
    %v8239 = vunpack.c.0.s8 %v8238
    %v8240 = vlaneseq
    %v8241 = vshrl.u32 %v8240, 7
    %v8242 = vsub.s32 %v8239, %v8241
    %v8243 = vrot.slane %v8227, %v8242
    %v8245 = vunpack.c.l.s4 1983009808
    %v8246 = vunpack.c.0.s8 %v8245
    %v8247 = vlaneseq
    %v8248 = vshrl.u32 %v8247, 7
    %v8249 = vsub.s32 %v8246, %v8248
    %v8250 = vrot.slane %v8228, %v8249
    %v8252 = vunpack.c.l.s4 1983009808
    %v8253 = vunpack.c.0.s8 %v8252
    %v8254 = vlaneseq
    %v8255 = vshrl.u32 %v8254, 7
    %v8256 = vsub.s32 %v8253, %v8255
    %v8257 = vrot.slane %v8229, %v8256
    %v8258 = vcombine.low %v8236, %v8250
    %v8259 = vcombine.high %v8236, %v8250
    %v8260 = vcombine.low %v8243, %v8257
    %v8261 = vcombine.high %v8243, %v8257
    %v8262 = vcombine.low %v774, %v780
    %v8263 = vcombine.high %v774, %v780
    %v8264 = vcombine.low %v786, %v792
    %v8265 = vcombine.high %v786, %v792
    %v8267 = vunpack.c.l.s4 1983009808
    %v8268 = vunpack.c.0.s8 %v8267
    %v8269 = vlaneseq
    %v8270 = vshrl.u32 %v8269, 7
    %v8271 = vsub.s32 %v8268, %v8270
    %v8272 = vrot.slane %v8262, %v8271
    %v8274 = vunpack.c.l.s4 1983009808
    %v8275 = vunpack.c.0.s8 %v8274
    %v8276 = vlaneseq
    %v8277 = vshrl.u32 %v8276, 7
    %v8278 = vsub.s32 %v8275, %v8277
    %v8279 = vrot.slane %v8263, %v8278
    %v8281 = vunpack.c.l.s4 1983009808
    %v8282 = vunpack.c.0.s8 %v8281
    %v8283 = vlaneseq
    %v8284 = vshrl.u32 %v8283, 7
    %v8285 = vsub.s32 %v8282, %v8284
    %v8286 = vrot.slane %v8264, %v8285
    %v8288 = vunpack.c.l.s4 1983009808
    %v8289 = vunpack.c.0.s8 %v8288
    %v8290 = vlaneseq
    %v8291 = vshrl.u32 %v8290, 7
    %v8292 = vsub.s32 %v8289, %v8291
    %v8293 = vrot.slane %v8265, %v8292
    %v8294 = vcombine.low %v8272, %v8286
    %v8295 = vcombine.high %v8272, %v8286
    %v8296 = vcombine.low %v8279, %v8293
    %v8297 = vcombine.high %v8279, %v8293
    %v8298 = vcombine.low %v775, %v781
    %v8299 = vcombine.high %v775, %v781
    %v8300 = vcombine.low %v787, %v793
    %v8301 = vcombine.high %v787, %v793
    %v8303 = vunpack.c.l.s4 1983009808
    %v8304 = vunpack.c.0.s8 %v8303
    %v8305 = vlaneseq
    %v8306 = vshrl.u32 %v8305, 7
    %v8307 = vsub.s32 %v8304, %v8306
    %v8308 = vrot.slane %v8298, %v8307
    %v8310 = vunpack.c.l.s4 1983009808
    %v8311 = vunpack.c.0.s8 %v8310
    %v8312 = vlaneseq
    %v8313 = vshrl.u32 %v8312, 7
    %v8314 = vsub.s32 %v8311, %v8313
    %v8315 = vrot.slane %v8299, %v8314
    %v8317 = vunpack.c.l.s4 1983009808
    %v8318 = vunpack.c.0.s8 %v8317
    %v8319 = vlaneseq
    %v8320 = vshrl.u32 %v8319, 7
    %v8321 = vsub.s32 %v8318, %v8320
    %v8322 = vrot.slane %v8300, %v8321
    %v8324 = vunpack.c.l.s4 1983009808
    %v8325 = vunpack.c.0.s8 %v8324
    %v8326 = vlaneseq
    %v8327 = vshrl.u32 %v8326, 7
    %v8328 = vsub.s32 %v8325, %v8327
    %v8329 = vrot.slane %v8301, %v8328
    %v8330 = vcombine.low %v8308, %v8322
    %v8331 = vcombine.high %v8308, %v8322
    %v8332 = vcombine.low %v8315, %v8329
    %v8333 = vcombine.high %v8315, %v8329
    %v8334 = vcombine.low %v776, %v782
    %v8335 = vcombine.high %v776, %v782
    %v8336 = vcombine.low %v788, %v794
    %v8337 = vcombine.high %v788, %v794
    %v8339 = vunpack.c.l.s4 1983009808
    %v8340 = vunpack.c.0.s8 %v8339
    %v8341 = vlaneseq
    %v8342 = vshrl.u32 %v8341, 7
    %v8343 = vsub.s32 %v8340, %v8342
    %v8344 = vrot.slane %v8334, %v8343
    %v8346 = vunpack.c.l.s4 1983009808
    %v8347 = vunpack.c.0.s8 %v8346
    %v8348 = vlaneseq
    %v8349 = vshrl.u32 %v8348, 7
    %v8350 = vsub.s32 %v8347, %v8349
    %v8351 = vrot.slane %v8335, %v8350
    %v8353 = vunpack.c.l.s4 1983009808
    %v8354 = vunpack.c.0.s8 %v8353
    %v8355 = vlaneseq
    %v8356 = vshrl.u32 %v8355, 7
    %v8357 = vsub.s32 %v8354, %v8356
    %v8358 = vrot.slane %v8336, %v8357
    %v8360 = vunpack.c.l.s4 1983009808
    %v8361 = vunpack.c.0.s8 %v8360
    %v8362 = vlaneseq
    %v8363 = vshrl.u32 %v8362, 7
    %v8364 = vsub.s32 %v8361, %v8363
    %v8365 = vrot.slane %v8337, %v8364
    %v8366 = vcombine.low %v8344, %v8358
    %v8367 = vcombine.high %v8344, %v8358
    %v8368 = vcombine.low %v8351, %v8365
    %v8369 = vcombine.high %v8351, %v8365
    %v8370 = vcombine.low %v777, %v783
    %v8371 = vcombine.high %v777, %v783
    %v8372 = vcombine.low %v789, %v795
    %v8373 = vcombine.high %v789, %v795
    %v8375 = vunpack.c.l.s4 1983009808
    %v8376 = vunpack.c.0.s8 %v8375
    %v8377 = vlaneseq
    %v8378 = vshrl.u32 %v8377, 7
    %v8379 = vsub.s32 %v8376, %v8378
    %v8380 = vrot.slane %v8370, %v8379
    %v8382 = vunpack.c.l.s4 1983009808
    %v8383 = vunpack.c.0.s8 %v8382
    %v8384 = vlaneseq
    %v8385 = vshrl.u32 %v8384, 7
    %v8386 = vsub.s32 %v8383, %v8385
    %v8387 = vrot.slane %v8371, %v8386
    %v8389 = vunpack.c.l.s4 1983009808
    %v8390 = vunpack.c.0.s8 %v8389
    %v8391 = vlaneseq
    %v8392 = vshrl.u32 %v8391, 7
    %v8393 = vsub.s32 %v8390, %v8392
    %v8394 = vrot.slane %v8372, %v8393
    %v8396 = vunpack.c.l.s4 1983009808
    %v8397 = vunpack.c.0.s8 %v8396
    %v8398 = vlaneseq
    %v8399 = vshrl.u32 %v8398, 7
    %v8400 = vsub.s32 %v8397, %v8399
    %v8401 = vrot.slane %v8373, %v8400
    %v8402 = vcombine.low %v8380, %v8394
    %v8403 = vcombine.high %v8380, %v8394
    %v8404 = vcombine.low %v8387, %v8401
    %v8405 = vcombine.high %v8387, %v8401
    %v8406 = vcombine.low %v778, %v784
    %v8407 = vcombine.high %v778, %v784
    %v8408 = vcombine.low %v790, %v796
    %v8409 = vcombine.high %v790, %v796
    %v8411 = vunpack.c.l.s4 1983009808
    %v8412 = vunpack.c.0.s8 %v8411
    %v8413 = vlaneseq
    %v8414 = vshrl.u32 %v8413, 7
    %v8415 = vsub.s32 %v8412, %v8414
    %v8416 = vrot.slane %v8406, %v8415
    %v8418 = vunpack.c.l.s4 1983009808
    %v8419 = vunpack.c.0.s8 %v8418
    %v8420 = vlaneseq
    %v8421 = vshrl.u32 %v8420, 7
    %v8422 = vsub.s32 %v8419, %v8421
    %v8423 = vrot.slane %v8407, %v8422
    %v8425 = vunpack.c.l.s4 1983009808
    %v8426 = vunpack.c.0.s8 %v8425
    %v8427 = vlaneseq
    %v8428 = vshrl.u32 %v8427, 7
    %v8429 = vsub.s32 %v8426, %v8428
    %v8430 = vrot.slane %v8408, %v8429
    %v8432 = vunpack.c.l.s4 1983009808
    %v8433 = vunpack.c.0.s8 %v8432
    %v8434 = vlaneseq
    %v8435 = vshrl.u32 %v8434, 7
    %v8436 = vsub.s32 %v8433, %v8435
    %v8437 = vrot.slane %v8409, %v8436
    %v8438 = vcombine.low %v8416, %v8430
    %v8439 = vcombine.high %v8416, %v8430
    %v8440 = vcombine.low %v8423, %v8437
    %v8441 = vcombine.high %v8423, %v8437
    %v8442 = vcombine.low %v779, %v785
    %v8443 = vcombine.high %v779, %v785
    %v8444 = vcombine.low %v791, %v797
    %v8445 = vcombine.high %v791, %v797
    %v8447 = vunpack.c.l.s4 1983009808
    %v8448 = vunpack.c.0.s8 %v8447
    %v8449 = vlaneseq
    %v8450 = vshrl.u32 %v8449, 7
    %v8451 = vsub.s32 %v8448, %v8450
    %v8452 = vrot.slane %v8442, %v8451
    %v8454 = vunpack.c.l.s4 1983009808
    %v8455 = vunpack.c.0.s8 %v8454
    %v8456 = vlaneseq
    %v8457 = vshrl.u32 %v8456, 7
    %v8458 = vsub.s32 %v8455, %v8457
    %v8459 = vrot.slane %v8443, %v8458
    %v8461 = vunpack.c.l.s4 1983009808
    %v8462 = vunpack.c.0.s8 %v8461
    %v8463 = vlaneseq
    %v8464 = vshrl.u32 %v8463, 7
    %v8465 = vsub.s32 %v8462, %v8464
    %v8466 = vrot.slane %v8444, %v8465
    %v8468 = vunpack.c.l.s4 1983009808
    %v8469 = vunpack.c.0.s8 %v8468
    %v8470 = vlaneseq
    %v8471 = vshrl.u32 %v8470, 7
    %v8472 = vsub.s32 %v8469, %v8471
    %v8473 = vrot.slane %v8445, %v8472
    %v8474 = vcombine.low %v8452, %v8466
    %v8475 = vcombine.high %v8452, %v8466
    %v8476 = vcombine.low %v8459, %v8473
    %v8477 = vcombine.high %v8459, %v8473
    %v9246 = vpack.c.bf16 %v1814, %v1598
    %v9247 = vpack.c.bf16 %v1815, %v1599
    %v9248 = vpack.c.bf16 %v1816, %v1600
    %v9249 = vpack.c.bf16 %v1817, %v1601
    %v9250 = vpack.c.bf16 %v1850, %v1634
    %v9251 = vpack.c.bf16 %v1851, %v1635
    %v9252 = vpack.c.bf16 %v1852, %v1636
    %v9253 = vpack.c.bf16 %v1853, %v1637
    %v9254 = vpack.c.bf16 %v1886, %v1670
    %v9255 = vpack.c.bf16 %v1887, %v1671
    %v9256 = vpack.c.bf16 %v1888, %v1672
    %v9257 = vpack.c.bf16 %v1889, %v1673
    %v9258 = vpack.c.bf16 %v1922, %v1706
    %v9259 = vpack.c.bf16 %v1923, %v1707
    %v9260 = vpack.c.bf16 %v1924, %v1708
    %v9261 = vpack.c.bf16 %v1925, %v1709
    %v9262 = vpack.c.bf16 %v1958, %v1742
    %v9263 = vpack.c.bf16 %v1959, %v1743
    %v9264 = vpack.c.bf16 %v1960, %v1744
    %v9265 = vpack.c.bf16 %v1961, %v1745
    %v9266 = vpack.c.bf16 %v1994, %v1778
    %v9267 = vpack.c.bf16 %v1995, %v1779
    %v9268 = vpack.c.bf16 %v1996, %v1780
    %v9269 = vpack.c.bf16 %v1997, %v1781
    %v9270 = vpack.c.bf16 %v2246, %v2030
    %v9271 = vpack.c.bf16 %v2247, %v2031
    %v9272 = vpack.c.bf16 %v2248, %v2032
    %v9273 = vpack.c.bf16 %v2249, %v2033
    %v9274 = vpack.c.bf16 %v2282, %v2066
    %v9275 = vpack.c.bf16 %v2283, %v2067
    %v9276 = vpack.c.bf16 %v2284, %v2068
    %v9277 = vpack.c.bf16 %v2285, %v2069
    %v9278 = vpack.c.bf16 %v2318, %v2102
    %v9279 = vpack.c.bf16 %v2319, %v2103
    %v9280 = vpack.c.bf16 %v2320, %v2104
    %v9281 = vpack.c.bf16 %v2321, %v2105
    %v9282 = vpack.c.bf16 %v2354, %v2138
    %v9283 = vpack.c.bf16 %v2355, %v2139
    %v9284 = vpack.c.bf16 %v2356, %v2140
    %v9285 = vpack.c.bf16 %v2357, %v2141
    %v9286 = vpack.c.bf16 %v2390, %v2174
    %v9287 = vpack.c.bf16 %v2391, %v2175
    %v9288 = vpack.c.bf16 %v2392, %v2176
    %v9289 = vpack.c.bf16 %v2393, %v2177
    %v9290 = vpack.c.bf16 %v2426, %v2210
    %v9291 = vpack.c.bf16 %v2427, %v2211
    %v9292 = vpack.c.bf16 %v2428, %v2212
    %v9293 = vpack.c.bf16 %v2429, %v2213
    %v9294 = vpack.c.bf16 %v2678, %v2462
    %v9295 = vpack.c.bf16 %v2679, %v2463
    %v9296 = vpack.c.bf16 %v2680, %v2464
    %v9297 = vpack.c.bf16 %v2681, %v2465
    %v9298 = vpack.c.bf16 %v2714, %v2498
    %v9299 = vpack.c.bf16 %v2715, %v2499
    %v9300 = vpack.c.bf16 %v2716, %v2500
    %v9301 = vpack.c.bf16 %v2717, %v2501
    %v9302 = vpack.c.bf16 %v2750, %v2534
    %v9303 = vpack.c.bf16 %v2751, %v2535
    %v9304 = vpack.c.bf16 %v2752, %v2536
    %v9305 = vpack.c.bf16 %v2753, %v2537
    %v9306 = vpack.c.bf16 %v2786, %v2570
    %v9307 = vpack.c.bf16 %v2787, %v2571
    %v9308 = vpack.c.bf16 %v2788, %v2572
    %v9309 = vpack.c.bf16 %v2789, %v2573
    %v9310 = vpack.c.bf16 %v2822, %v2606
    %v9311 = vpack.c.bf16 %v2823, %v2607
    %v9312 = vpack.c.bf16 %v2824, %v2608
    %v9313 = vpack.c.bf16 %v2825, %v2609
    %v9314 = vpack.c.bf16 %v2858, %v2642
    %v9315 = vpack.c.bf16 %v2859, %v2643
    %v9316 = vpack.c.bf16 %v2860, %v2644
    %v9317 = vpack.c.bf16 %v2861, %v2645
    %v9318 = vpack.c.bf16 %v3110, %v2894
    %v9319 = vpack.c.bf16 %v3111, %v2895
    %v9320 = vpack.c.bf16 %v3112, %v2896
    %v9321 = vpack.c.bf16 %v3113, %v2897
    %v9322 = vpack.c.bf16 %v3146, %v2930
    %v9323 = vpack.c.bf16 %v3147, %v2931
    %v9324 = vpack.c.bf16 %v3148, %v2932
    %v9325 = vpack.c.bf16 %v3149, %v2933
    %v9326 = vpack.c.bf16 %v3182, %v2966
    %v9327 = vpack.c.bf16 %v3183, %v2967
    %v9328 = vpack.c.bf16 %v3184, %v2968
    %v9329 = vpack.c.bf16 %v3185, %v2969
    %v9330 = vpack.c.bf16 %v3218, %v3002
    %v9331 = vpack.c.bf16 %v3219, %v3003
    %v9332 = vpack.c.bf16 %v3220, %v3004
    %v9333 = vpack.c.bf16 %v3221, %v3005
    %v9334 = vpack.c.bf16 %v3254, %v3038
    %v9335 = vpack.c.bf16 %v3255, %v3039
    %v9336 = vpack.c.bf16 %v3256, %v3040
    %v9337 = vpack.c.bf16 %v3257, %v3041
    %v9338 = vpack.c.bf16 %v3290, %v3074
    %v9339 = vpack.c.bf16 %v3291, %v3075
    %v9340 = vpack.c.bf16 %v3292, %v3076
    %v9341 = vpack.c.bf16 %v3293, %v3077
    %v9342 = vpack.c.bf16 %v3542, %v3326
    %v9343 = vpack.c.bf16 %v3543, %v3327
    %v9344 = vpack.c.bf16 %v3544, %v3328
    %v9345 = vpack.c.bf16 %v3545, %v3329
    %v9346 = vpack.c.bf16 %v3578, %v3362
    %v9347 = vpack.c.bf16 %v3579, %v3363
    %v9348 = vpack.c.bf16 %v3580, %v3364
    %v9349 = vpack.c.bf16 %v3581, %v3365
    %v9350 = vpack.c.bf16 %v3614, %v3398
    %v9351 = vpack.c.bf16 %v3615, %v3399
    %v9352 = vpack.c.bf16 %v3616, %v3400
    %v9353 = vpack.c.bf16 %v3617, %v3401
    %v9354 = vpack.c.bf16 %v3650, %v3434
    %v9355 = vpack.c.bf16 %v3651, %v3435
    %v9356 = vpack.c.bf16 %v3652, %v3436
    %v9357 = vpack.c.bf16 %v3653, %v3437
    %v9358 = vpack.c.bf16 %v3686, %v3470
    %v9359 = vpack.c.bf16 %v3687, %v3471
    %v9360 = vpack.c.bf16 %v3688, %v3472
    %v9361 = vpack.c.bf16 %v3689, %v3473
    %v9362 = vpack.c.bf16 %v3722, %v3506
    %v9363 = vpack.c.bf16 %v3723, %v3507
    %v9364 = vpack.c.bf16 %v3724, %v3508
    %v9365 = vpack.c.bf16 %v3725, %v3509
    %v9366 = vpack.c.bf16 %v3974, %v3758
    %v9367 = vpack.c.bf16 %v3975, %v3759
    %v9368 = vpack.c.bf16 %v3976, %v3760
    %v9369 = vpack.c.bf16 %v3977, %v3761
    %v9370 = vpack.c.bf16 %v4010, %v3794
    %v9371 = vpack.c.bf16 %v4011, %v3795
    %v9372 = vpack.c.bf16 %v4012, %v3796
    %v9373 = vpack.c.bf16 %v4013, %v3797
    %v9374 = vpack.c.bf16 %v4046, %v3830
    %v9375 = vpack.c.bf16 %v4047, %v3831
    %v9376 = vpack.c.bf16 %v4048, %v3832
    %v9377 = vpack.c.bf16 %v4049, %v3833
    %v9378 = vpack.c.bf16 %v4082, %v3866
    %v9379 = vpack.c.bf16 %v4083, %v3867
    %v9380 = vpack.c.bf16 %v4084, %v3868
    %v9381 = vpack.c.bf16 %v4085, %v3869
    %v9382 = vpack.c.bf16 %v4118, %v3902
    %v9383 = vpack.c.bf16 %v4119, %v3903
    %v9384 = vpack.c.bf16 %v4120, %v3904
    %v9385 = vpack.c.bf16 %v4121, %v3905
    %v9386 = vpack.c.bf16 %v4154, %v3938
    %v9387 = vpack.c.bf16 %v4155, %v3939
    %v9388 = vpack.c.bf16 %v4156, %v3940
    %v9389 = vpack.c.bf16 %v4157, %v3941
    %v9390 = vpack.c.bf16 %v4406, %v4190
    %v9391 = vpack.c.bf16 %v4407, %v4191
    %v9392 = vpack.c.bf16 %v4408, %v4192
    %v9393 = vpack.c.bf16 %v4409, %v4193
    %v9394 = vpack.c.bf16 %v4442, %v4226
    %v9395 = vpack.c.bf16 %v4443, %v4227
    %v9396 = vpack.c.bf16 %v4444, %v4228
    %v9397 = vpack.c.bf16 %v4445, %v4229
    %v9398 = vpack.c.bf16 %v4478, %v4262
    %v9399 = vpack.c.bf16 %v4479, %v4263
    %v9400 = vpack.c.bf16 %v4480, %v4264
    %v9401 = vpack.c.bf16 %v4481, %v4265
    %v9402 = vpack.c.bf16 %v4514, %v4298
    %v9403 = vpack.c.bf16 %v4515, %v4299
    %v9404 = vpack.c.bf16 %v4516, %v4300
    %v9405 = vpack.c.bf16 %v4517, %v4301
    %v9406 = vpack.c.bf16 %v4550, %v4334
    %v9407 = vpack.c.bf16 %v4551, %v4335
    %v9408 = vpack.c.bf16 %v4552, %v4336
    %v9409 = vpack.c.bf16 %v4553, %v4337
    %v9410 = vpack.c.bf16 %v4586, %v4370
    %v9411 = vpack.c.bf16 %v4587, %v4371
    %v9412 = vpack.c.bf16 %v4588, %v4372
    %v9413 = vpack.c.bf16 %v4589, %v4373
    %v9414 = vpack.c.bf16 %v4838, %v4622
    %v9415 = vpack.c.bf16 %v4839, %v4623
    %v9416 = vpack.c.bf16 %v4840, %v4624
    %v9417 = vpack.c.bf16 %v4841, %v4625
    %v9418 = vpack.c.bf16 %v4874, %v4658
    %v9419 = vpack.c.bf16 %v4875, %v4659
    %v9420 = vpack.c.bf16 %v4876, %v4660
    %v9421 = vpack.c.bf16 %v4877, %v4661
    %v9422 = vpack.c.bf16 %v4910, %v4694
    %v9423 = vpack.c.bf16 %v4911, %v4695
    %v9424 = vpack.c.bf16 %v4912, %v4696
    %v9425 = vpack.c.bf16 %v4913, %v4697
    %v9426 = vpack.c.bf16 %v4946, %v4730
    %v9427 = vpack.c.bf16 %v4947, %v4731
    %v9428 = vpack.c.bf16 %v4948, %v4732
    %v9429 = vpack.c.bf16 %v4949, %v4733
    %v9430 = vpack.c.bf16 %v4982, %v4766
    %v9431 = vpack.c.bf16 %v4983, %v4767
    %v9432 = vpack.c.bf16 %v4984, %v4768
    %v9433 = vpack.c.bf16 %v4985, %v4769
    %v9434 = vpack.c.bf16 %v5018, %v4802
    %v9435 = vpack.c.bf16 %v5019, %v4803
    %v9436 = vpack.c.bf16 %v5020, %v4804
    %v9437 = vpack.c.bf16 %v5021, %v4805
    %v9438 = vpack.c.bf16 %v5270, %v5054
    %v9439 = vpack.c.bf16 %v5271, %v5055
    %v9440 = vpack.c.bf16 %v5272, %v5056
    %v9441 = vpack.c.bf16 %v5273, %v5057
    %v9442 = vpack.c.bf16 %v5306, %v5090
    %v9443 = vpack.c.bf16 %v5307, %v5091
    %v9444 = vpack.c.bf16 %v5308, %v5092
    %v9445 = vpack.c.bf16 %v5309, %v5093
    %v9446 = vpack.c.bf16 %v5342, %v5126
    %v9447 = vpack.c.bf16 %v5343, %v5127
    %v9448 = vpack.c.bf16 %v5344, %v5128
    %v9449 = vpack.c.bf16 %v5345, %v5129
    %v9450 = vpack.c.bf16 %v5378, %v5162
    %v9451 = vpack.c.bf16 %v5379, %v5163
    %v9452 = vpack.c.bf16 %v5380, %v5164
    %v9453 = vpack.c.bf16 %v5381, %v5165
    %v9454 = vpack.c.bf16 %v5414, %v5198
    %v9455 = vpack.c.bf16 %v5415, %v5199
    %v9456 = vpack.c.bf16 %v5416, %v5200
    %v9457 = vpack.c.bf16 %v5417, %v5201
    %v9458 = vpack.c.bf16 %v5450, %v5234
    %v9459 = vpack.c.bf16 %v5451, %v5235
    %v9460 = vpack.c.bf16 %v5452, %v5236
    %v9461 = vpack.c.bf16 %v5453, %v5237
    %v9462 = vpack.c.bf16 %v5702, %v5486
    %v9463 = vpack.c.bf16 %v5703, %v5487
    %v9464 = vpack.c.bf16 %v5704, %v5488
    %v9465 = vpack.c.bf16 %v5705, %v5489
    %v9466 = vpack.c.bf16 %v5738, %v5522
    %v9467 = vpack.c.bf16 %v5739, %v5523
    %v9468 = vpack.c.bf16 %v5740, %v5524
    %v9469 = vpack.c.bf16 %v5741, %v5525
    %v9470 = vpack.c.bf16 %v5774, %v5558
    %v9471 = vpack.c.bf16 %v5775, %v5559
    %v9472 = vpack.c.bf16 %v5776, %v5560
    %v9473 = vpack.c.bf16 %v5777, %v5561
    %v9474 = vpack.c.bf16 %v5810, %v5594
    %v9475 = vpack.c.bf16 %v5811, %v5595
    %v9476 = vpack.c.bf16 %v5812, %v5596
    %v9477 = vpack.c.bf16 %v5813, %v5597
    %v9478 = vpack.c.bf16 %v5846, %v5630
    %v9479 = vpack.c.bf16 %v5847, %v5631
    %v9480 = vpack.c.bf16 %v5848, %v5632
    %v9481 = vpack.c.bf16 %v5849, %v5633
    %v9482 = vpack.c.bf16 %v5882, %v5666
    %v9483 = vpack.c.bf16 %v5883, %v5667
    %v9484 = vpack.c.bf16 %v5884, %v5668
    %v9485 = vpack.c.bf16 %v5885, %v5669
    %v9486 = vpack.c.bf16 %v6134, %v5918
    %v9487 = vpack.c.bf16 %v6135, %v5919
    %v9488 = vpack.c.bf16 %v6136, %v5920
    %v9489 = vpack.c.bf16 %v6137, %v5921
    %v9490 = vpack.c.bf16 %v6170, %v5954
    %v9491 = vpack.c.bf16 %v6171, %v5955
    %v9492 = vpack.c.bf16 %v6172, %v5956
    %v9493 = vpack.c.bf16 %v6173, %v5957
    %v9494 = vpack.c.bf16 %v6206, %v5990
    %v9495 = vpack.c.bf16 %v6207, %v5991
    %v9496 = vpack.c.bf16 %v6208, %v5992
    %v9497 = vpack.c.bf16 %v6209, %v5993
    %v9498 = vpack.c.bf16 %v6242, %v6026
    %v9499 = vpack.c.bf16 %v6243, %v6027
    %v9500 = vpack.c.bf16 %v6244, %v6028
    %v9501 = vpack.c.bf16 %v6245, %v6029
    %v9502 = vpack.c.bf16 %v6278, %v6062
    %v9503 = vpack.c.bf16 %v6279, %v6063
    %v9504 = vpack.c.bf16 %v6280, %v6064
    %v9505 = vpack.c.bf16 %v6281, %v6065
    %v9506 = vpack.c.bf16 %v6314, %v6098
    %v9507 = vpack.c.bf16 %v6315, %v6099
    %v9508 = vpack.c.bf16 %v6316, %v6100
    %v9509 = vpack.c.bf16 %v6317, %v6101
    %v9510 = vpack.c.bf16 %v6566, %v6350
    %v9511 = vpack.c.bf16 %v6567, %v6351
    %v9512 = vpack.c.bf16 %v6568, %v6352
    %v9513 = vpack.c.bf16 %v6569, %v6353
    %v9514 = vpack.c.bf16 %v6602, %v6386
    %v9515 = vpack.c.bf16 %v6603, %v6387
    %v9516 = vpack.c.bf16 %v6604, %v6388
    %v9517 = vpack.c.bf16 %v6605, %v6389
    %v9518 = vpack.c.bf16 %v6638, %v6422
    %v9519 = vpack.c.bf16 %v6639, %v6423
    %v9520 = vpack.c.bf16 %v6640, %v6424
    %v9521 = vpack.c.bf16 %v6641, %v6425
    %v9522 = vpack.c.bf16 %v6674, %v6458
    %v9523 = vpack.c.bf16 %v6675, %v6459
    %v9524 = vpack.c.bf16 %v6676, %v6460
    %v9525 = vpack.c.bf16 %v6677, %v6461
    %v9526 = vpack.c.bf16 %v6710, %v6494
    %v9527 = vpack.c.bf16 %v6711, %v6495
    %v9528 = vpack.c.bf16 %v6712, %v6496
    %v9529 = vpack.c.bf16 %v6713, %v6497
    %v9530 = vpack.c.bf16 %v6746, %v6530
    %v9531 = vpack.c.bf16 %v6747, %v6531
    %v9532 = vpack.c.bf16 %v6748, %v6532
    %v9533 = vpack.c.bf16 %v6749, %v6533
    %v9534 = vpack.c.bf16 %v6998, %v6782
    %v9535 = vpack.c.bf16 %v6999, %v6783
    %v9536 = vpack.c.bf16 %v7000, %v6784
    %v9537 = vpack.c.bf16 %v7001, %v6785
    %v9538 = vpack.c.bf16 %v7034, %v6818
    %v9539 = vpack.c.bf16 %v7035, %v6819
    %v9540 = vpack.c.bf16 %v7036, %v6820
    %v9541 = vpack.c.bf16 %v7037, %v6821
    %v9542 = vpack.c.bf16 %v7070, %v6854
    %v9543 = vpack.c.bf16 %v7071, %v6855
    %v9544 = vpack.c.bf16 %v7072, %v6856
    %v9545 = vpack.c.bf16 %v7073, %v6857
    %v9546 = vpack.c.bf16 %v7106, %v6890
    %v9547 = vpack.c.bf16 %v7107, %v6891
    %v9548 = vpack.c.bf16 %v7108, %v6892
    %v9549 = vpack.c.bf16 %v7109, %v6893
    %v9550 = vpack.c.bf16 %v7142, %v6926
    %v9551 = vpack.c.bf16 %v7143, %v6927
    %v9552 = vpack.c.bf16 %v7144, %v6928
    %v9553 = vpack.c.bf16 %v7145, %v6929
    %v9554 = vpack.c.bf16 %v7178, %v6962
    %v9555 = vpack.c.bf16 %v7179, %v6963
    %v9556 = vpack.c.bf16 %v7180, %v6964
    %v9557 = vpack.c.bf16 %v7181, %v6965
    %v9558 = vpack.c.bf16 %v7430, %v7214
    %v9559 = vpack.c.bf16 %v7431, %v7215
    %v9560 = vpack.c.bf16 %v7432, %v7216
    %v9561 = vpack.c.bf16 %v7433, %v7217
    %v9562 = vpack.c.bf16 %v7466, %v7250
    %v9563 = vpack.c.bf16 %v7467, %v7251
    %v9564 = vpack.c.bf16 %v7468, %v7252
    %v9565 = vpack.c.bf16 %v7469, %v7253
    %v9566 = vpack.c.bf16 %v7502, %v7286
    %v9567 = vpack.c.bf16 %v7503, %v7287
    %v9568 = vpack.c.bf16 %v7504, %v7288
    %v9569 = vpack.c.bf16 %v7505, %v7289
    %v9570 = vpack.c.bf16 %v7538, %v7322
    %v9571 = vpack.c.bf16 %v7539, %v7323
    %v9572 = vpack.c.bf16 %v7540, %v7324
    %v9573 = vpack.c.bf16 %v7541, %v7325
    %v9574 = vpack.c.bf16 %v7574, %v7358
    %v9575 = vpack.c.bf16 %v7575, %v7359
    %v9576 = vpack.c.bf16 %v7576, %v7360
    %v9577 = vpack.c.bf16 %v7577, %v7361
    %v9578 = vpack.c.bf16 %v7610, %v7394
    %v9579 = vpack.c.bf16 %v7611, %v7395
    %v9580 = vpack.c.bf16 %v7612, %v7396
    %v9581 = vpack.c.bf16 %v7613, %v7397
    %v9582 = vpack.c.bf16 %v7862, %v7646
    %v9583 = vpack.c.bf16 %v7863, %v7647
    %v9584 = vpack.c.bf16 %v7864, %v7648
    %v9585 = vpack.c.bf16 %v7865, %v7649
    %v9586 = vpack.c.bf16 %v7898, %v7682
    %v9587 = vpack.c.bf16 %v7899, %v7683
    %v9588 = vpack.c.bf16 %v7900, %v7684
    %v9589 = vpack.c.bf16 %v7901, %v7685
    %v9590 = vpack.c.bf16 %v7934, %v7718
    %v9591 = vpack.c.bf16 %v7935, %v7719
    %v9592 = vpack.c.bf16 %v7936, %v7720
    %v9593 = vpack.c.bf16 %v7937, %v7721
    %v9594 = vpack.c.bf16 %v7970, %v7754
    %v9595 = vpack.c.bf16 %v7971, %v7755
    %v9596 = vpack.c.bf16 %v7972, %v7756
    %v9597 = vpack.c.bf16 %v7973, %v7757
    %v9598 = vpack.c.bf16 %v8006, %v7790
    %v9599 = vpack.c.bf16 %v8007, %v7791
    %v9600 = vpack.c.bf16 %v8008, %v7792
    %v9601 = vpack.c.bf16 %v8009, %v7793
    %v9602 = vpack.c.bf16 %v8042, %v7826
    %v9603 = vpack.c.bf16 %v8043, %v7827
    %v9604 = vpack.c.bf16 %v8044, %v7828
    %v9605 = vpack.c.bf16 %v8045, %v7829
    %v9606 = vpack.c.bf16 %v8294, %v8078
    %v9607 = vpack.c.bf16 %v8295, %v8079
    %v9608 = vpack.c.bf16 %v8296, %v8080
    %v9609 = vpack.c.bf16 %v8297, %v8081
    %v9610 = vpack.c.bf16 %v8330, %v8114
    %v9611 = vpack.c.bf16 %v8331, %v8115
    %v9612 = vpack.c.bf16 %v8332, %v8116
    %v9613 = vpack.c.bf16 %v8333, %v8117
    %v9614 = vpack.c.bf16 %v8366, %v8150
    %v9615 = vpack.c.bf16 %v8367, %v8151
    %v9616 = vpack.c.bf16 %v8368, %v8152
    %v9617 = vpack.c.bf16 %v8369, %v8153
    %v9618 = vpack.c.bf16 %v8402, %v8186
    %v9619 = vpack.c.bf16 %v8403, %v8187
    %v9620 = vpack.c.bf16 %v8404, %v8188
    %v9621 = vpack.c.bf16 %v8405, %v8189
    %v9622 = vpack.c.bf16 %v8438, %v8222
    %v9623 = vpack.c.bf16 %v8439, %v8223
    %v9624 = vpack.c.bf16 %v8440, %v8224
    %v9625 = vpack.c.bf16 %v8441, %v8225
    %v9626 = vpack.c.bf16 %v8474, %v8258
    %v9627 = vpack.c.bf16 %v8475, %v8259
    %v9628 = vpack.c.bf16 %v8476, %v8260
    %v9629 = vpack.c.bf16 %v8477, %v8261
    %v9630 = vld [vmem:[#allocation2] sm:$0xf]
    %v9631 = vld [vmem:[#allocation2 + $0x4] sm:$0xf]
    %v9632 = vld [vmem:[#allocation2 + $0x8] sm:$0xf]
    %v9633 = vld [vmem:[#allocation2 + $0xc] sm:$0xf]
    %v9634 = vld [vmem:[#allocation2 + $0x10] sm:$0xf]
    %v9635 = vld [vmem:[#allocation2 + $0x14] sm:$0xf]
    %v9636 = vld [vmem:[#allocation2 + $0x18] sm:$0xf]
    %v9637 = vld [vmem:[#allocation2 + $0x1c] sm:$0xf]
    %v9638 = vld [vmem:[#allocation2 + $0x20] sm:$0xf]
    %v9639 = vld [vmem:[#allocation2 + $0x24] sm:$0xf]
    %v9640 = vld [vmem:[#allocation2 + $0x28] sm:$0xf]
    %v9641 = vld [vmem:[#allocation2 + $0x2c] sm:$0xf]
    %v9642 = vld [vmem:[#allocation2 + $0x30] sm:$0xf]
    %v9643 = vld [vmem:[#allocation2 + $0x34] sm:$0xf]
    %v9644 = vld [vmem:[#allocation2 + $0x38] sm:$0xf]
    %v9645 = vld [vmem:[#allocation2 + $0x3c] sm:$0xf]
    %v9646 = vld [vmem:[#allocation2 + $0x40] sm:$0xf]
    %v9647 = vld [vmem:[#allocation2 + $0x44] sm:$0xf]
    %v9648 = vld [vmem:[#allocation2 + $0x48] sm:$0xf]
    %v9649 = vld [vmem:[#allocation2 + $0x4c] sm:$0xf]
    %v9650 = vld [vmem:[#allocation2 + $0x50] sm:$0xf]
    %v9651 = vld [vmem:[#allocation2 + $0x54] sm:$0xf]
    %v9652 = vld [vmem:[#allocation2 + $0x58] sm:$0xf]
    %v9653 = vld [vmem:[#allocation2 + $0x5c] sm:$0xf]
    %v9654 = vld [vmem:[#allocation2 + $0x60] sm:$0xf]
    %v9655 = vld [vmem:[#allocation2 + $0x64] sm:$0xf]
    %v9656 = vld [vmem:[#allocation2 + $0x68] sm:$0xf]
    %v9657 = vld [vmem:[#allocation2 + $0x6c] sm:$0xf]
    %v9658 = vld [vmem:[#allocation2 + $0x70] sm:$0xf]
    %v9659 = vld [vmem:[#allocation2 + $0x74] sm:$0xf]
    %v9660 = vld [vmem:[#allocation2 + $0x78] sm:$0xf]
    %v9661 = vld [vmem:[#allocation2 + $0x7c] sm:$0xf]
    %v9662 = vld [vmem:[#allocation2 + $0x80] sm:$0xf]
    %v9663 = vld [vmem:[#allocation2 + $0x84] sm:$0xf]
    %v9664 = vld [vmem:[#allocation2 + $0x88] sm:$0xf]
    %v9665 = vld [vmem:[#allocation2 + $0x8c] sm:$0xf]
    %v9666 = vld [vmem:[#allocation2 + $0x90] sm:$0xf]
    %v9667 = vld [vmem:[#allocation2 + $0x94] sm:$0xf]
    %v9668 = vld [vmem:[#allocation2 + $0x98] sm:$0xf]
    %v9669 = vld [vmem:[#allocation2 + $0x9c] sm:$0xf]
    %v9670 = vld [vmem:[#allocation2 + $0xa0] sm:$0xf]
    %v9671 = vld [vmem:[#allocation2 + $0xa4] sm:$0xf]
    %v9672 = vld [vmem:[#allocation2 + $0xa8] sm:$0xf]
    %v9673 = vld [vmem:[#allocation2 + $0xac] sm:$0xf]
    %v9674 = vld [vmem:[#allocation2 + $0xb0] sm:$0xf]
    %v9675 = vld [vmem:[#allocation2 + $0xb4] sm:$0xf]
    %v9676 = vld [vmem:[#allocation2 + $0xb8] sm:$0xf]
    %v9677 = vld [vmem:[#allocation2 + $0xbc] sm:$0xf]
    %v9678 = vld [vmem:[#allocation2 + $0xc0] sm:$0xf]
    %v9679 = vld [vmem:[#allocation2 + $0xc4] sm:$0xf]
    %v9680 = vld [vmem:[#allocation2 + $0xc8] sm:$0xf]
    %v9681 = vld [vmem:[#allocation2 + $0xcc] sm:$0xf]
    %v9682 = vld [vmem:[#allocation2 + $0xd0] sm:$0xf]
    %v9683 = vld [vmem:[#allocation2 + $0xd4] sm:$0xf]
    %v9684 = vld [vmem:[#allocation2 + $0xd8] sm:$0xf]
    %v9685 = vld [vmem:[#allocation2 + $0xdc] sm:$0xf]
    %v9686 = vld [vmem:[#allocation2 + $0xe0] sm:$0xf]
    %v9687 = vld [vmem:[#allocation2 + $0xe4] sm:$0xf]
    %v9688 = vld [vmem:[#allocation2 + $0xe8] sm:$0xf]
    %v9689 = vld [vmem:[#allocation2 + $0xec] sm:$0xf]
    %v9690 = vld [vmem:[#allocation2 + $0xf0] sm:$0xf]
    %v9691 = vld [vmem:[#allocation2 + $0xf4] sm:$0xf]
    %v9692 = vld [vmem:[#allocation2 + $0xf8] sm:$0xf]
    %v9693 = vld [vmem:[#allocation2 + $0xfc] sm:$0xf]
    %v9694 = vld [vmem:[#allocation2 + $0x100] sm:$0xf]
    %v9695 = vld [vmem:[#allocation2 + $0x104] sm:$0xf]
    %v9696 = vld [vmem:[#allocation2 + $0x108] sm:$0xf]
    %v9697 = vld [vmem:[#allocation2 + $0x10c] sm:$0xf]
    %v9698 = vld [vmem:[#allocation2 + $0x110] sm:$0xf]
    %v9699 = vld [vmem:[#allocation2 + $0x114] sm:$0xf]
    %v9700 = vld [vmem:[#allocation2 + $0x118] sm:$0xf]
    %v9701 = vld [vmem:[#allocation2 + $0x11c] sm:$0xf]
    %v9702 = vld [vmem:[#allocation2 + $0x120] sm:$0xf]
    %v9703 = vld [vmem:[#allocation2 + $0x124] sm:$0xf]
    %v9704 = vld [vmem:[#allocation2 + $0x128] sm:$0xf]
    %v9705 = vld [vmem:[#allocation2 + $0x12c] sm:$0xf]
    %v9706 = vld [vmem:[#allocation2 + $0x130] sm:$0xf]
    %v9707 = vld [vmem:[#allocation2 + $0x134] sm:$0xf]
    %v9708 = vld [vmem:[#allocation2 + $0x138] sm:$0xf]
    %v9709 = vld [vmem:[#allocation2 + $0x13c] sm:$0xf]
    %v9710 = vld [vmem:[#allocation2 + $0x140] sm:$0xf]
    %v9711 = vld [vmem:[#allocation2 + $0x144] sm:$0xf]
    %v9712 = vld [vmem:[#allocation2 + $0x148] sm:$0xf]
    %v9713 = vld [vmem:[#allocation2 + $0x14c] sm:$0xf]
    %v9714 = vld [vmem:[#allocation2 + $0x150] sm:$0xf]
    %v9715 = vld [vmem:[#allocation2 + $0x154] sm:$0xf]
    %v9716 = vld [vmem:[#allocation2 + $0x158] sm:$0xf]
    %v9717 = vld [vmem:[#allocation2 + $0x15c] sm:$0xf]
    %v9718 = vld [vmem:[#allocation2 + $0x160] sm:$0xf]
    %v9719 = vld [vmem:[#allocation2 + $0x164] sm:$0xf]
    %v9720 = vld [vmem:[#allocation2 + $0x168] sm:$0xf]
    %v9721 = vld [vmem:[#allocation2 + $0x16c] sm:$0xf]
    %v9722 = vld [vmem:[#allocation2 + $0x170] sm:$0xf]
    %v9723 = vld [vmem:[#allocation2 + $0x174] sm:$0xf]
    %v9724 = vld [vmem:[#allocation2 + $0x178] sm:$0xf]
    %v9725 = vld [vmem:[#allocation2 + $0x17c] sm:$0xf]
    %v9726 = vld [vmem:[#allocation2 + $0x180] sm:$0xf]
    %v9727 = vld [vmem:[#allocation2 + $0x184] sm:$0xf]
    %v9728 = vld [vmem:[#allocation2 + $0x188] sm:$0xf]
    %v9729 = vld [vmem:[#allocation2 + $0x18c] sm:$0xf]
    %v9730 = vld [vmem:[#allocation2 + $0x190] sm:$0xf]
    %v9731 = vld [vmem:[#allocation2 + $0x194] sm:$0xf]
    %v9732 = vld [vmem:[#allocation2 + $0x198] sm:$0xf]
    %v9733 = vld [vmem:[#allocation2 + $0x19c] sm:$0xf]
    %v9734 = vld [vmem:[#allocation2 + $0x1a0] sm:$0xf]
    %v9735 = vld [vmem:[#allocation2 + $0x1a4] sm:$0xf]
    %v9736 = vld [vmem:[#allocation2 + $0x1a8] sm:$0xf]
    %v9737 = vld [vmem:[#allocation2 + $0x1ac] sm:$0xf]
    %v9738 = vld [vmem:[#allocation2 + $0x1b0] sm:$0xf]
    %v9739 = vld [vmem:[#allocation2 + $0x1b4] sm:$0xf]
    %v9740 = vld [vmem:[#allocation2 + $0x1b8] sm:$0xf]
    %v9741 = vld [vmem:[#allocation2 + $0x1bc] sm:$0xf]
    %v9742 = vld [vmem:[#allocation2 + $0x1c0] sm:$0xf]
    %v9743 = vld [vmem:[#allocation2 + $0x1c4] sm:$0xf]
    %v9744 = vld [vmem:[#allocation2 + $0x1c8] sm:$0xf]
    %v9745 = vld [vmem:[#allocation2 + $0x1cc] sm:$0xf]
    %v9746 = vld [vmem:[#allocation2 + $0x1d0] sm:$0xf]
    %v9747 = vld [vmem:[#allocation2 + $0x1d4] sm:$0xf]
    %v9748 = vld [vmem:[#allocation2 + $0x1d8] sm:$0xf]
    %v9749 = vld [vmem:[#allocation2 + $0x1dc] sm:$0xf]
    %v9750 = vld [vmem:[#allocation2 + $0x1e0] sm:$0xf]
    %v9751 = vld [vmem:[#allocation2 + $0x1e4] sm:$0xf]
    %v9752 = vld [vmem:[#allocation2 + $0x1e8] sm:$0xf]
    %v9753 = vld [vmem:[#allocation2 + $0x1ec] sm:$0xf]
    %v9754 = vld [vmem:[#allocation2 + $0x1f0] sm:$0xf]
    %v9755 = vld [vmem:[#allocation2 + $0x1f4] sm:$0xf]
    %v9756 = vld [vmem:[#allocation2 + $0x1f8] sm:$0xf]
    %v9757 = vld [vmem:[#allocation2 + $0x1fc] sm:$0xf]
    %v9758 = vld [vmem:[#allocation2 + $0x200] sm:$0xf]
    %v9759 = vld [vmem:[#allocation2 + $0x204] sm:$0xf]
    %v9760 = vld [vmem:[#allocation2 + $0x208] sm:$0xf]
    %v9761 = vld [vmem:[#allocation2 + $0x20c] sm:$0xf]
    %v9762 = vld [vmem:[#allocation2 + $0x210] sm:$0xf]
    %v9763 = vld [vmem:[#allocation2 + $0x214] sm:$0xf]
    %v9764 = vld [vmem:[#allocation2 + $0x218] sm:$0xf]
    %v9765 = vld [vmem:[#allocation2 + $0x21c] sm:$0xf]
    %v9766 = vld [vmem:[#allocation2 + $0x220] sm:$0xf]
    %v9767 = vld [vmem:[#allocation2 + $0x224] sm:$0xf]
    %v9768 = vld [vmem:[#allocation2 + $0x228] sm:$0xf]
    %v9769 = vld [vmem:[#allocation2 + $0x22c] sm:$0xf]
    %v9770 = vld [vmem:[#allocation2 + $0x230] sm:$0xf]
    %v9771 = vld [vmem:[#allocation2 + $0x234] sm:$0xf]
    %v9772 = vld [vmem:[#allocation2 + $0x238] sm:$0xf]
    %v9773 = vld [vmem:[#allocation2 + $0x23c] sm:$0xf]
    %v9774 = vld [vmem:[#allocation2 + $0x240] sm:$0xf]
    %v9775 = vld [vmem:[#allocation2 + $0x244] sm:$0xf]
    %v9776 = vld [vmem:[#allocation2 + $0x248] sm:$0xf]
    %v9777 = vld [vmem:[#allocation2 + $0x24c] sm:$0xf]
    %v9778 = vld [vmem:[#allocation2 + $0x250] sm:$0xf]
    %v9779 = vld [vmem:[#allocation2 + $0x254] sm:$0xf]
    %v9780 = vld [vmem:[#allocation2 + $0x258] sm:$0xf]
    %v9781 = vld [vmem:[#allocation2 + $0x25c] sm:$0xf]
    %v9782 = vld [vmem:[#allocation2 + $0x260] sm:$0xf]
    %v9783 = vld [vmem:[#allocation2 + $0x264] sm:$0xf]
    %v9784 = vld [vmem:[#allocation2 + $0x268] sm:$0xf]
    %v9785 = vld [vmem:[#allocation2 + $0x26c] sm:$0xf]
    %v9786 = vld [vmem:[#allocation2 + $0x270] sm:$0xf]
    %v9787 = vld [vmem:[#allocation2 + $0x274] sm:$0xf]
    %v9788 = vld [vmem:[#allocation2 + $0x278] sm:$0xf]
    %v9789 = vld [vmem:[#allocation2 + $0x27c] sm:$0xf]
    %v9790 = vld [vmem:[#allocation2 + $0x280] sm:$0xf]
    %v9791 = vld [vmem:[#allocation2 + $0x284] sm:$0xf]
    %v9792 = vld [vmem:[#allocation2 + $0x288] sm:$0xf]
    %v9793 = vld [vmem:[#allocation2 + $0x28c] sm:$0xf]
    %v9794 = vld [vmem:[#allocation2 + $0x290] sm:$0xf]
    %v9795 = vld [vmem:[#allocation2 + $0x294] sm:$0xf]
    %v9796 = vld [vmem:[#allocation2 + $0x298] sm:$0xf]
    %v9797 = vld [vmem:[#allocation2 + $0x29c] sm:$0xf]
    %v9798 = vld [vmem:[#allocation2 + $0x2a0] sm:$0xf]
    %v9799 = vld [vmem:[#allocation2 + $0x2a4] sm:$0xf]
    %v9800 = vld [vmem:[#allocation2 + $0x2a8] sm:$0xf]
    %v9801 = vld [vmem:[#allocation2 + $0x2ac] sm:$0xf]
    %v9802 = vld [vmem:[#allocation2 + $0x2b0] sm:$0xf]
    %v9803 = vld [vmem:[#allocation2 + $0x2b4] sm:$0xf]
    %v9804 = vld [vmem:[#allocation2 + $0x2b8] sm:$0xf]
    %v9805 = vld [vmem:[#allocation2 + $0x2bc] sm:$0xf]
    %v9806 = vld [vmem:[#allocation2 + $0x2c0] sm:$0xf]
    %v9807 = vld [vmem:[#allocation2 + $0x2c4] sm:$0xf]
    %v9808 = vld [vmem:[#allocation2 + $0x2c8] sm:$0xf]
    %v9809 = vld [vmem:[#allocation2 + $0x2cc] sm:$0xf]
    %v9810 = vld [vmem:[#allocation2 + $0x2d0] sm:$0xf]
    %v9811 = vld [vmem:[#allocation2 + $0x2d4] sm:$0xf]
    %v9812 = vld [vmem:[#allocation2 + $0x2d8] sm:$0xf]
    %v9813 = vld [vmem:[#allocation2 + $0x2dc] sm:$0xf]
    %v9814 = vld [vmem:[#allocation2 + $0x2e0] sm:$0xf]
    %v9815 = vld [vmem:[#allocation2 + $0x2e4] sm:$0xf]
    %v9816 = vld [vmem:[#allocation2 + $0x2e8] sm:$0xf]
    %v9817 = vld [vmem:[#allocation2 + $0x2ec] sm:$0xf]
    %v9818 = vld [vmem:[#allocation2 + $0x2f0] sm:$0xf]
    %v9819 = vld [vmem:[#allocation2 + $0x2f4] sm:$0xf]
    %v9820 = vld [vmem:[#allocation2 + $0x2f8] sm:$0xf]
    %v9821 = vld [vmem:[#allocation2 + $0x2fc] sm:$0xf]
    %v9822 = vld [vmem:[#allocation2 + $0x300] sm:$0xf]
    %v9823 = vld [vmem:[#allocation2 + $0x304] sm:$0xf]
    %v9824 = vld [vmem:[#allocation2 + $0x308] sm:$0xf]
    %v9825 = vld [vmem:[#allocation2 + $0x30c] sm:$0xf]
    %v9826 = vld [vmem:[#allocation2 + $0x310] sm:$0xf]
    %v9827 = vld [vmem:[#allocation2 + $0x314] sm:$0xf]
    %v9828 = vld [vmem:[#allocation2 + $0x318] sm:$0xf]
    %v9829 = vld [vmem:[#allocation2 + $0x31c] sm:$0xf]
    %v9830 = vld [vmem:[#allocation2 + $0x320] sm:$0xf]
    %v9831 = vld [vmem:[#allocation2 + $0x324] sm:$0xf]
    %v9832 = vld [vmem:[#allocation2 + $0x328] sm:$0xf]
    %v9833 = vld [vmem:[#allocation2 + $0x32c] sm:$0xf]
    %v9834 = vld [vmem:[#allocation2 + $0x330] sm:$0xf]
    %v9835 = vld [vmem:[#allocation2 + $0x334] sm:$0xf]
    %v9836 = vld [vmem:[#allocation2 + $0x338] sm:$0xf]
    %v9837 = vld [vmem:[#allocation2 + $0x33c] sm:$0xf]
    %v9838 = vld [vmem:[#allocation2 + $0x340] sm:$0xf]
    %v9839 = vld [vmem:[#allocation2 + $0x344] sm:$0xf]
    %v9840 = vld [vmem:[#allocation2 + $0x348] sm:$0xf]
    %v9841 = vld [vmem:[#allocation2 + $0x34c] sm:$0xf]
    %v9842 = vld [vmem:[#allocation2 + $0x350] sm:$0xf]
    %v9843 = vld [vmem:[#allocation2 + $0x354] sm:$0xf]
    %v9844 = vld [vmem:[#allocation2 + $0x358] sm:$0xf]
    %v9845 = vld [vmem:[#allocation2 + $0x35c] sm:$0xf]
    %v9846 = vld [vmem:[#allocation2 + $0x360] sm:$0xf]
    %v9847 = vld [vmem:[#allocation2 + $0x364] sm:$0xf]
    %v9848 = vld [vmem:[#allocation2 + $0x368] sm:$0xf]
    %v9849 = vld [vmem:[#allocation2 + $0x36c] sm:$0xf]
    %v9850 = vld [vmem:[#allocation2 + $0x370] sm:$0xf]
    %v9851 = vld [vmem:[#allocation2 + $0x374] sm:$0xf]
    %v9852 = vld [vmem:[#allocation2 + $0x378] sm:$0xf]
    %v9853 = vld [vmem:[#allocation2 + $0x37c] sm:$0xf]
    %v9854 = vld [vmem:[#allocation2 + $0x380] sm:$0xf]
    %v9855 = vld [vmem:[#allocation2 + $0x384] sm:$0xf]
    %v9856 = vld [vmem:[#allocation2 + $0x388] sm:$0xf]
    %v9857 = vld [vmem:[#allocation2 + $0x38c] sm:$0xf]
    %v9858 = vld [vmem:[#allocation2 + $0x390] sm:$0xf]
    %v9859 = vld [vmem:[#allocation2 + $0x394] sm:$0xf]
    %v9860 = vld [vmem:[#allocation2 + $0x398] sm:$0xf]
    %v9861 = vld [vmem:[#allocation2 + $0x39c] sm:$0xf]
    %v9862 = vld [vmem:[#allocation2 + $0x3a0] sm:$0xf]
    %v9863 = vld [vmem:[#allocation2 + $0x3a4] sm:$0xf]
    %v9864 = vld [vmem:[#allocation2 + $0x3a8] sm:$0xf]
    %v9865 = vld [vmem:[#allocation2 + $0x3ac] sm:$0xf]
    %v9866 = vld [vmem:[#allocation2 + $0x3b0] sm:$0xf]
    %v9867 = vld [vmem:[#allocation2 + $0x3b4] sm:$0xf]
    %v9868 = vld [vmem:[#allocation2 + $0x3b8] sm:$0xf]
    %v9869 = vld [vmem:[#allocation2 + $0x3bc] sm:$0xf]
    %v9870 = vld [vmem:[#allocation2 + $0x3c0] sm:$0xf]
    %v9871 = vld [vmem:[#allocation2 + $0x3c4] sm:$0xf]
    %v9872 = vld [vmem:[#allocation2 + $0x3c8] sm:$0xf]
    %v9873 = vld [vmem:[#allocation2 + $0x3cc] sm:$0xf]
    %v9874 = vld [vmem:[#allocation2 + $0x3d0] sm:$0xf]
    %v9875 = vld [vmem:[#allocation2 + $0x3d4] sm:$0xf]
    %v9876 = vld [vmem:[#allocation2 + $0x3d8] sm:$0xf]
    %v9877 = vld [vmem:[#allocation2 + $0x3dc] sm:$0xf]
    %v9878 = vld [vmem:[#allocation2 + $0x3e0] sm:$0xf]
    %v9879 = vld [vmem:[#allocation2 + $0x3e4] sm:$0xf]
    %v9880 = vld [vmem:[#allocation2 + $0x3e8] sm:$0xf]
    %v9881 = vld [vmem:[#allocation2 + $0x3ec] sm:$0xf]
    %v9882 = vld [vmem:[#allocation2 + $0x3f0] sm:$0xf]
    %v9883 = vld [vmem:[#allocation2 + $0x3f4] sm:$0xf]
    %v9884 = vld [vmem:[#allocation2 + $0x3f8] sm:$0xf]
    %v9885 = vld [vmem:[#allocation2 + $0x3fc] sm:$0xf]
    %v9886 = vld [vmem:[#allocation2 + $0x400] sm:$0xf]
    %v9887 = vld [vmem:[#allocation2 + $0x404] sm:$0xf]
    %v9888 = vld [vmem:[#allocation2 + $0x408] sm:$0xf]
    %v9889 = vld [vmem:[#allocation2 + $0x40c] sm:$0xf]
    %v9890 = vld [vmem:[#allocation2 + $0x410] sm:$0xf]
    %v9891 = vld [vmem:[#allocation2 + $0x414] sm:$0xf]
    %v9892 = vld [vmem:[#allocation2 + $0x418] sm:$0xf]
    %v9893 = vld [vmem:[#allocation2 + $0x41c] sm:$0xf]
    %v9894 = vld [vmem:[#allocation2 + $0x420] sm:$0xf]
    %v9895 = vld [vmem:[#allocation2 + $0x424] sm:$0xf]
    %v9896 = vld [vmem:[#allocation2 + $0x428] sm:$0xf]
    %v9897 = vld [vmem:[#allocation2 + $0x42c] sm:$0xf]
    %v9898 = vld [vmem:[#allocation2 + $0x430] sm:$0xf]
    %v9899 = vld [vmem:[#allocation2 + $0x434] sm:$0xf]
    %v9900 = vld [vmem:[#allocation2 + $0x438] sm:$0xf]
    %v9901 = vld [vmem:[#allocation2 + $0x43c] sm:$0xf]
    %v9902 = vld [vmem:[#allocation2 + $0x440] sm:$0xf]
    %v9903 = vld [vmem:[#allocation2 + $0x444] sm:$0xf]
    %v9904 = vld [vmem:[#allocation2 + $0x448] sm:$0xf]
    %v9905 = vld [vmem:[#allocation2 + $0x44c] sm:$0xf]
    %v9906 = vld [vmem:[#allocation2 + $0x450] sm:$0xf]
    %v9907 = vld [vmem:[#allocation2 + $0x454] sm:$0xf]
    %v9908 = vld [vmem:[#allocation2 + $0x458] sm:$0xf]
    %v9909 = vld [vmem:[#allocation2 + $0x45c] sm:$0xf]
    %v9910 = vld [vmem:[#allocation2 + $0x460] sm:$0xf]
    %v9911 = vld [vmem:[#allocation2 + $0x464] sm:$0xf]
    %v9912 = vld [vmem:[#allocation2 + $0x468] sm:$0xf]
    %v9913 = vld [vmem:[#allocation2 + $0x46c] sm:$0xf]
    %v9914 = vld [vmem:[#allocation2 + $0x470] sm:$0xf]
    %v9915 = vld [vmem:[#allocation2 + $0x474] sm:$0xf]
    %v9916 = vld [vmem:[#allocation2 + $0x478] sm:$0xf]
    %v9917 = vld [vmem:[#allocation2 + $0x47c] sm:$0xf]
    %v9918 = vld [vmem:[#allocation2 + $0x480] sm:$0xf]
    %v9919 = vld [vmem:[#allocation2 + $0x484] sm:$0xf]
    %v9920 = vld [vmem:[#allocation2 + $0x488] sm:$0xf]
    %v9921 = vld [vmem:[#allocation2 + $0x48c] sm:$0xf]
    %v9922 = vld [vmem:[#allocation2 + $0x490] sm:$0xf]
    %v9923 = vld [vmem:[#allocation2 + $0x494] sm:$0xf]
    %v9924 = vld [vmem:[#allocation2 + $0x498] sm:$0xf]
    %v9925 = vld [vmem:[#allocation2 + $0x49c] sm:$0xf]
    %v9926 = vld [vmem:[#allocation2 + $0x4a0] sm:$0xf]
    %v9927 = vld [vmem:[#allocation2 + $0x4a4] sm:$0xf]
    %v9928 = vld [vmem:[#allocation2 + $0x4a8] sm:$0xf]
    %v9929 = vld [vmem:[#allocation2 + $0x4ac] sm:$0xf]
    %v9930 = vld [vmem:[#allocation2 + $0x4b0] sm:$0xf]
    %v9931 = vld [vmem:[#allocation2 + $0x4b4] sm:$0xf]
    %v9932 = vld [vmem:[#allocation2 + $0x4b8] sm:$0xf]
    %v9933 = vld [vmem:[#allocation2 + $0x4bc] sm:$0xf]
    %v9934 = vld [vmem:[#allocation2 + $0x4c0] sm:$0xf]
    %v9935 = vld [vmem:[#allocation2 + $0x4c4] sm:$0xf]
    %v9936 = vld [vmem:[#allocation2 + $0x4c8] sm:$0xf]
    %v9937 = vld [vmem:[#allocation2 + $0x4cc] sm:$0xf]
    %v9938 = vld [vmem:[#allocation2 + $0x4d0] sm:$0xf]
    %v9939 = vld [vmem:[#allocation2 + $0x4d4] sm:$0xf]
    %v9940 = vld [vmem:[#allocation2 + $0x4d8] sm:$0xf]
    %v9941 = vld [vmem:[#allocation2 + $0x4dc] sm:$0xf]
    %v9942 = vld [vmem:[#allocation2 + $0x4e0] sm:$0xf]
    %v9943 = vld [vmem:[#allocation2 + $0x4e4] sm:$0xf]
    %v9944 = vld [vmem:[#allocation2 + $0x4e8] sm:$0xf]
    %v9945 = vld [vmem:[#allocation2 + $0x4ec] sm:$0xf]
    %v9946 = vld [vmem:[#allocation2 + $0x4f0] sm:$0xf]
    %v9947 = vld [vmem:[#allocation2 + $0x4f4] sm:$0xf]
    %v9948 = vld [vmem:[#allocation2 + $0x4f8] sm:$0xf]
    %v9949 = vld [vmem:[#allocation2 + $0x4fc] sm:$0xf]
    %v9950 = vld [vmem:[#allocation2 + $0x500] sm:$0xf]
    %v9951 = vld [vmem:[#allocation2 + $0x504] sm:$0xf]
    %v9952 = vld [vmem:[#allocation2 + $0x508] sm:$0xf]
    %v9953 = vld [vmem:[#allocation2 + $0x50c] sm:$0xf]
    %v9954 = vld [vmem:[#allocation2 + $0x510] sm:$0xf]
    %v9955 = vld [vmem:[#allocation2 + $0x514] sm:$0xf]
    %v9956 = vld [vmem:[#allocation2 + $0x518] sm:$0xf]
    %v9957 = vld [vmem:[#allocation2 + $0x51c] sm:$0xf]
    %v9958 = vld [vmem:[#allocation2 + $0x520] sm:$0xf]
    %v9959 = vld [vmem:[#allocation2 + $0x524] sm:$0xf]
    %v9960 = vld [vmem:[#allocation2 + $0x528] sm:$0xf]
    %v9961 = vld [vmem:[#allocation2 + $0x52c] sm:$0xf]
    %v9962 = vld [vmem:[#allocation2 + $0x530] sm:$0xf]
    %v9963 = vld [vmem:[#allocation2 + $0x534] sm:$0xf]
    %v9964 = vld [vmem:[#allocation2 + $0x538] sm:$0xf]
    %v9965 = vld [vmem:[#allocation2 + $0x53c] sm:$0xf]
    %v9966 = vld [vmem:[#allocation2 + $0x540] sm:$0xf]
    %v9967 = vld [vmem:[#allocation2 + $0x544] sm:$0xf]
    %v9968 = vld [vmem:[#allocation2 + $0x548] sm:$0xf]
    %v9969 = vld [vmem:[#allocation2 + $0x54c] sm:$0xf]
    %v9970 = vld [vmem:[#allocation2 + $0x550] sm:$0xf]
    %v9971 = vld [vmem:[#allocation2 + $0x554] sm:$0xf]
    %v9972 = vld [vmem:[#allocation2 + $0x558] sm:$0xf]
    %v9973 = vld [vmem:[#allocation2 + $0x55c] sm:$0xf]
    %v9974 = vld [vmem:[#allocation2 + $0x560] sm:$0xf]
    %v9975 = vld [vmem:[#allocation2 + $0x564] sm:$0xf]
    %v9976 = vld [vmem:[#allocation2 + $0x568] sm:$0xf]
    %v9977 = vld [vmem:[#allocation2 + $0x56c] sm:$0xf]
    %v9978 = vld [vmem:[#allocation2 + $0x570] sm:$0xf]
    %v9979 = vld [vmem:[#allocation2 + $0x574] sm:$0xf]
    %v9980 = vld [vmem:[#allocation2 + $0x578] sm:$0xf]
    %v9981 = vld [vmem:[#allocation2 + $0x57c] sm:$0xf]
    %v9982 = vld [vmem:[#allocation2 + $0x580] sm:$0xf]
    %v9983 = vld [vmem:[#allocation2 + $0x584] sm:$0xf]
    %v9984 = vld [vmem:[#allocation2 + $0x588] sm:$0xf]
    %v9985 = vld [vmem:[#allocation2 + $0x58c] sm:$0xf]
    %v9986 = vld [vmem:[#allocation2 + $0x590] sm:$0xf]
    %v9987 = vld [vmem:[#allocation2 + $0x594] sm:$0xf]
    %v9988 = vld [vmem:[#allocation2 + $0x598] sm:$0xf]
    %v9989 = vld [vmem:[#allocation2 + $0x59c] sm:$0xf]
    %v9990 = vld [vmem:[#allocation2 + $0x5a0] sm:$0xf]
    %v9991 = vld [vmem:[#allocation2 + $0x5a4] sm:$0xf]
    %v9992 = vld [vmem:[#allocation2 + $0x5a8] sm:$0xf]
    %v9993 = vld [vmem:[#allocation2 + $0x5ac] sm:$0xf]
    %v9994 = vld [vmem:[#allocation2 + $0x5b0] sm:$0xf]
    %v9995 = vld [vmem:[#allocation2 + $0x5b4] sm:$0xf]
    %v9996 = vld [vmem:[#allocation2 + $0x5b8] sm:$0xf]
    %v9997 = vld [vmem:[#allocation2 + $0x5bc] sm:$0xf]
    %v9998 = vld [vmem:[#allocation2 + $0x5c0] sm:$0xf]
    %v9999 = vld [vmem:[#allocation2 + $0x5c4] sm:$0xf]
    %v10000 = vld [vmem:[#allocation2 + $0x5c8] sm:$0xf]
    %v10001 = vld [vmem:[#allocation2 + $0x5cc] sm:$0xf]
    %v10002 = vld [vmem:[#allocation2 + $0x5d0] sm:$0xf]
    %v10003 = vld [vmem:[#allocation2 + $0x5d4] sm:$0xf]
    %v10004 = vld [vmem:[#allocation2 + $0x5d8] sm:$0xf]
    %v10005 = vld [vmem:[#allocation2 + $0x5dc] sm:$0xf]
    %v10006 = vld [vmem:[#allocation2 + $0x5e0] sm:$0xf]
    %v10007 = vld [vmem:[#allocation2 + $0x5e4] sm:$0xf]
    %v10008 = vld [vmem:[#allocation2 + $0x5e8] sm:$0xf]
    %v10009 = vld [vmem:[#allocation2 + $0x5ec] sm:$0xf]
    %v10010 = vld [vmem:[#allocation2 + $0x5f0] sm:$0xf]
    %v10011 = vld [vmem:[#allocation2 + $0x5f4] sm:$0xf]
    %v10012 = vld [vmem:[#allocation2 + $0x5f8] sm:$0xf]
    %v10013 = vld [vmem:[#allocation2 + $0x5fc] sm:$0xf]
    %v10014 = vld [vmem:[%s2] sm:$0x1]
    %v10016 = vlaneseq
    %v10017 = vshrl.u32 %v10016, 7
    %v10018 = vsub.s32 0, %v10017
    %v10019 = vrot.slane %v10014, %v10018
    %v10405 = vunpack.c.l.b16 %v9630
    %v10406 = vunpack.c.l.b16 %v9631
    %v10407 = vunpack.c.l.b16 %v9632
    %v10408 = vunpack.c.l.b16 %v9633
    %v10409 = vunpack.c.l.b16 %v9634
    %v10410 = vunpack.c.l.b16 %v9635
    %v10411 = vunpack.c.l.b16 %v9636
    %v10412 = vunpack.c.l.b16 %v9637
    %v10413 = vunpack.c.l.b16 %v9638
    %v10414 = vunpack.c.l.b16 %v9639
    %v10415 = vunpack.c.l.b16 %v9640
    %v10416 = vunpack.c.l.b16 %v9641
    %v10417 = vunpack.c.l.b16 %v9642
    %v10418 = vunpack.c.l.b16 %v9643
    %v10419 = vunpack.c.l.b16 %v9644
    %v10420 = vunpack.c.l.b16 %v9645
    %v10421 = vunpack.c.l.b16 %v9646
    %v10422 = vunpack.c.l.b16 %v9647
    %v10423 = vunpack.c.l.b16 %v9648
    %v10424 = vunpack.c.l.b16 %v9649
    %v10425 = vunpack.c.l.b16 %v9650
    %v10426 = vunpack.c.l.b16 %v9651
    %v10427 = vunpack.c.l.b16 %v9652
    %v10428 = vunpack.c.l.b16 %v9653
    %v10429 = vunpack.c.l.b16 %v9654
    %v10430 = vunpack.c.l.b16 %v9655
    %v10431 = vunpack.c.l.b16 %v9656
    %v10432 = vunpack.c.l.b16 %v9657
    %v10433 = vunpack.c.l.b16 %v9658
    %v10434 = vunpack.c.l.b16 %v9659
    %v10435 = vunpack.c.l.b16 %v9660
    %v10436 = vunpack.c.l.b16 %v9661
    %v10437 = vunpack.c.l.b16 %v9662
    %v10438 = vunpack.c.l.b16 %v9663
    %v10439 = vunpack.c.l.b16 %v9664
    %v10440 = vunpack.c.l.b16 %v9665
    %v10441 = vunpack.c.l.b16 %v9666
    %v10442 = vunpack.c.l.b16 %v9667
    %v10443 = vunpack.c.l.b16 %v9668
    %v10444 = vunpack.c.l.b16 %v9669
    %v10445 = vunpack.c.l.b16 %v9670
    %v10446 = vunpack.c.l.b16 %v9671
    %v10447 = vunpack.c.l.b16 %v9672
    %v10448 = vunpack.c.l.b16 %v9673
    %v10449 = vunpack.c.l.b16 %v9674
    %v10450 = vunpack.c.l.b16 %v9675
    %v10451 = vunpack.c.l.b16 %v9676
    %v10452 = vunpack.c.l.b16 %v9677
    %v10453 = vunpack.c.l.b16 %v9678
    %v10454 = vunpack.c.l.b16 %v9679
    %v10455 = vunpack.c.l.b16 %v9680
    %v10456 = vunpack.c.l.b16 %v9681
    %v10457 = vunpack.c.l.b16 %v9682
    %v10458 = vunpack.c.l.b16 %v9683
    %v10459 = vunpack.c.l.b16 %v9684
    %v10460 = vunpack.c.l.b16 %v9685
    %v10461 = vunpack.c.l.b16 %v9686
    %v10462 = vunpack.c.l.b16 %v9687
    %v10463 = vunpack.c.l.b16 %v9688
    %v10464 = vunpack.c.l.b16 %v9689
    %v10465 = vunpack.c.l.b16 %v9690
    %v10466 = vunpack.c.l.b16 %v9691
    %v10467 = vunpack.c.l.b16 %v9692
    %v10468 = vunpack.c.l.b16 %v9693
    %v10469 = vunpack.c.l.b16 %v9694
    %v10470 = vunpack.c.l.b16 %v9695
    %v10471 = vunpack.c.l.b16 %v9696
    %v10472 = vunpack.c.l.b16 %v9697
    %v10473 = vunpack.c.l.b16 %v9698
    %v10474 = vunpack.c.l.b16 %v9699
    %v10475 = vunpack.c.l.b16 %v9700
    %v10476 = vunpack.c.l.b16 %v9701
    %v10477 = vunpack.c.l.b16 %v9702
    %v10478 = vunpack.c.l.b16 %v9703
    %v10479 = vunpack.c.l.b16 %v9704
    %v10480 = vunpack.c.l.b16 %v9705
    %v10481 = vunpack.c.l.b16 %v9706
    %v10482 = vunpack.c.l.b16 %v9707
    %v10483 = vunpack.c.l.b16 %v9708
    %v10484 = vunpack.c.l.b16 %v9709
    %v10485 = vunpack.c.l.b16 %v9710
    %v10486 = vunpack.c.l.b16 %v9711
    %v10487 = vunpack.c.l.b16 %v9712
    %v10488 = vunpack.c.l.b16 %v9713
    %v10489 = vunpack.c.l.b16 %v9714
    %v10490 = vunpack.c.l.b16 %v9715
    %v10491 = vunpack.c.l.b16 %v9716
    %v10492 = vunpack.c.l.b16 %v9717
    %v10493 = vunpack.c.l.b16 %v9718
    %v10494 = vunpack.c.l.b16 %v9719
    %v10495 = vunpack.c.l.b16 %v9720
    %v10496 = vunpack.c.l.b16 %v9721
    %v10497 = vunpack.c.l.b16 %v9722
    %v10498 = vunpack.c.l.b16 %v9723
    %v10499 = vunpack.c.l.b16 %v9724
    %v10500 = vunpack.c.l.b16 %v9725
    %v10501 = vunpack.c.l.b16 %v9726
    %v10502 = vunpack.c.l.b16 %v9727
    %v10503 = vunpack.c.l.b16 %v9728
    %v10504 = vunpack.c.l.b16 %v9729
    %v10505 = vunpack.c.l.b16 %v9730
    %v10506 = vunpack.c.l.b16 %v9731
    %v10507 = vunpack.c.l.b16 %v9732
    %v10508 = vunpack.c.l.b16 %v9733
    %v10509 = vunpack.c.l.b16 %v9734
    %v10510 = vunpack.c.l.b16 %v9735
    %v10511 = vunpack.c.l.b16 %v9736
    %v10512 = vunpack.c.l.b16 %v9737
    %v10513 = vunpack.c.l.b16 %v9738
    %v10514 = vunpack.c.l.b16 %v9739
    %v10515 = vunpack.c.l.b16 %v9740
    %v10516 = vunpack.c.l.b16 %v9741
    %v10517 = vunpack.c.l.b16 %v9742
    %v10518 = vunpack.c.l.b16 %v9743
    %v10519 = vunpack.c.l.b16 %v9744
    %v10520 = vunpack.c.l.b16 %v9745
    %v10521 = vunpack.c.l.b16 %v9746
    %v10522 = vunpack.c.l.b16 %v9747
    %v10523 = vunpack.c.l.b16 %v9748
    %v10524 = vunpack.c.l.b16 %v9749
    %v10525 = vunpack.c.l.b16 %v9750
    %v10526 = vunpack.c.l.b16 %v9751
    %v10527 = vunpack.c.l.b16 %v9752
    %v10528 = vunpack.c.l.b16 %v9753
    %v10529 = vunpack.c.l.b16 %v9754
    %v10530 = vunpack.c.l.b16 %v9755
    %v10531 = vunpack.c.l.b16 %v9756
    %v10532 = vunpack.c.l.b16 %v9757
    %v10533 = vunpack.c.l.b16 %v9758
    %v10534 = vunpack.c.l.b16 %v9759
    %v10535 = vunpack.c.l.b16 %v9760
    %v10536 = vunpack.c.l.b16 %v9761
    %v10537 = vunpack.c.l.b16 %v9762
    %v10538 = vunpack.c.l.b16 %v9763
    %v10539 = vunpack.c.l.b16 %v9764
    %v10540 = vunpack.c.l.b16 %v9765
    %v10541 = vunpack.c.l.b16 %v9766
    %v10542 = vunpack.c.l.b16 %v9767
    %v10543 = vunpack.c.l.b16 %v9768
    %v10544 = vunpack.c.l.b16 %v9769
    %v10545 = vunpack.c.l.b16 %v9770
    %v10546 = vunpack.c.l.b16 %v9771
    %v10547 = vunpack.c.l.b16 %v9772
    %v10548 = vunpack.c.l.b16 %v9773
    %v10549 = vunpack.c.l.b16 %v9774
    %v10550 = vunpack.c.l.b16 %v9775
    %v10551 = vunpack.c.l.b16 %v9776
    %v10552 = vunpack.c.l.b16 %v9777
    %v10553 = vunpack.c.l.b16 %v9778
    %v10554 = vunpack.c.l.b16 %v9779
    %v10555 = vunpack.c.l.b16 %v9780
    %v10556 = vunpack.c.l.b16 %v9781
    %v10557 = vunpack.c.l.b16 %v9782
    %v10558 = vunpack.c.l.b16 %v9783
    %v10559 = vunpack.c.l.b16 %v9784
    %v10560 = vunpack.c.l.b16 %v9785
    %v10561 = vunpack.c.l.b16 %v9786
    %v10562 = vunpack.c.l.b16 %v9787
    %v10563 = vunpack.c.l.b16 %v9788
    %v10564 = vunpack.c.l.b16 %v9789
    %v10565 = vunpack.c.l.b16 %v9790
    %v10566 = vunpack.c.l.b16 %v9791
    %v10567 = vunpack.c.l.b16 %v9792
    %v10568 = vunpack.c.l.b16 %v9793
    %v10569 = vunpack.c.l.b16 %v9794
    %v10570 = vunpack.c.l.b16 %v9795
    %v10571 = vunpack.c.l.b16 %v9796
    %v10572 = vunpack.c.l.b16 %v9797
    %v10573 = vunpack.c.l.b16 %v9798
    %v10574 = vunpack.c.l.b16 %v9799
    %v10575 = vunpack.c.l.b16 %v9800
    %v10576 = vunpack.c.l.b16 %v9801
    %v10577 = vunpack.c.l.b16 %v9802
    %v10578 = vunpack.c.l.b16 %v9803
    %v10579 = vunpack.c.l.b16 %v9804
    %v10580 = vunpack.c.l.b16 %v9805
    %v10581 = vunpack.c.l.b16 %v9806
    %v10582 = vunpack.c.l.b16 %v9807
    %v10583 = vunpack.c.l.b16 %v9808
    %v10584 = vunpack.c.l.b16 %v9809
    %v10585 = vunpack.c.l.b16 %v9810
    %v10586 = vunpack.c.l.b16 %v9811
    %v10587 = vunpack.c.l.b16 %v9812
    %v10588 = vunpack.c.l.b16 %v9813
    %v10589 = vunpack.c.l.b16 %v9814
    %v10590 = vunpack.c.l.b16 %v9815
    %v10591 = vunpack.c.l.b16 %v9816
    %v10592 = vunpack.c.l.b16 %v9817
    %v10593 = vunpack.c.l.b16 %v9818
    %v10594 = vunpack.c.l.b16 %v9819
    %v10595 = vunpack.c.l.b16 %v9820
    %v10596 = vunpack.c.l.b16 %v9821
    %v10597 = vunpack.c.l.b16 %v9822
    %v10598 = vunpack.c.l.b16 %v9823
    %v10599 = vunpack.c.l.b16 %v9824
    %v10600 = vunpack.c.l.b16 %v9825
    %v10601 = vunpack.c.l.b16 %v9826
    %v10602 = vunpack.c.l.b16 %v9827
    %v10603 = vunpack.c.l.b16 %v9828
    %v10604 = vunpack.c.l.b16 %v9829
    %v10605 = vunpack.c.l.b16 %v9830
    %v10606 = vunpack.c.l.b16 %v9831
    %v10607 = vunpack.c.l.b16 %v9832
    %v10608 = vunpack.c.l.b16 %v9833
    %v10609 = vunpack.c.l.b16 %v9834
    %v10610 = vunpack.c.l.b16 %v9835
    %v10611 = vunpack.c.l.b16 %v9836
    %v10612 = vunpack.c.l.b16 %v9837
    %v10613 = vunpack.c.l.b16 %v9838
    %v10614 = vunpack.c.l.b16 %v9839
    %v10615 = vunpack.c.l.b16 %v9840
    %v10616 = vunpack.c.l.b16 %v9841
    %v10617 = vunpack.c.l.b16 %v9842
    %v10618 = vunpack.c.l.b16 %v9843
    %v10619 = vunpack.c.l.b16 %v9844
    %v10620 = vunpack.c.l.b16 %v9845
    %v10621 = vunpack.c.l.b16 %v9846
    %v10622 = vunpack.c.l.b16 %v9847
    %v10623 = vunpack.c.l.b16 %v9848
    %v10624 = vunpack.c.l.b16 %v9849
    %v10625 = vunpack.c.l.b16 %v9850
    %v10626 = vunpack.c.l.b16 %v9851
    %v10627 = vunpack.c.l.b16 %v9852
    %v10628 = vunpack.c.l.b16 %v9853
    %v10629 = vunpack.c.l.b16 %v9854
    %v10630 = vunpack.c.l.b16 %v9855
    %v10631 = vunpack.c.l.b16 %v9856
    %v10632 = vunpack.c.l.b16 %v9857
    %v10633 = vunpack.c.l.b16 %v9858
    %v10634 = vunpack.c.l.b16 %v9859
    %v10635 = vunpack.c.l.b16 %v9860
    %v10636 = vunpack.c.l.b16 %v9861
    %v10637 = vunpack.c.l.b16 %v9862
    %v10638 = vunpack.c.l.b16 %v9863
    %v10639 = vunpack.c.l.b16 %v9864
    %v10640 = vunpack.c.l.b16 %v9865
    %v10641 = vunpack.c.l.b16 %v9866
    %v10642 = vunpack.c.l.b16 %v9867
    %v10643 = vunpack.c.l.b16 %v9868
    %v10644 = vunpack.c.l.b16 %v9869
    %v10645 = vunpack.c.l.b16 %v9870
    %v10646 = vunpack.c.l.b16 %v9871
    %v10647 = vunpack.c.l.b16 %v9872
    %v10648 = vunpack.c.l.b16 %v9873
    %v10649 = vunpack.c.l.b16 %v9874
    %v10650 = vunpack.c.l.b16 %v9875
    %v10651 = vunpack.c.l.b16 %v9876
    %v10652 = vunpack.c.l.b16 %v9877
    %v10653 = vunpack.c.l.b16 %v9878
    %v10654 = vunpack.c.l.b16 %v9879
    %v10655 = vunpack.c.l.b16 %v9880
    %v10656 = vunpack.c.l.b16 %v9881
    %v10657 = vunpack.c.l.b16 %v9882
    %v10658 = vunpack.c.l.b16 %v9883
    %v10659 = vunpack.c.l.b16 %v9884
    %v10660 = vunpack.c.l.b16 %v9885
    %v10661 = vunpack.c.l.b16 %v9886
    %v10662 = vunpack.c.l.b16 %v9887
    %v10663 = vunpack.c.l.b16 %v9888
    %v10664 = vunpack.c.l.b16 %v9889
    %v10665 = vunpack.c.l.b16 %v9890
    %v10666 = vunpack.c.l.b16 %v9891
    %v10667 = vunpack.c.l.b16 %v9892
    %v10668 = vunpack.c.l.b16 %v9893
    %v10669 = vunpack.c.l.b16 %v9894
    %v10670 = vunpack.c.l.b16 %v9895
    %v10671 = vunpack.c.l.b16 %v9896
    %v10672 = vunpack.c.l.b16 %v9897
    %v10673 = vunpack.c.l.b16 %v9898
    %v10674 = vunpack.c.l.b16 %v9899
    %v10675 = vunpack.c.l.b16 %v9900
    %v10676 = vunpack.c.l.b16 %v9901
    %v10677 = vunpack.c.l.b16 %v9902
    %v10678 = vunpack.c.l.b16 %v9903
    %v10679 = vunpack.c.l.b16 %v9904
    %v10680 = vunpack.c.l.b16 %v9905
    %v10681 = vunpack.c.l.b16 %v9906
    %v10682 = vunpack.c.l.b16 %v9907
    %v10683 = vunpack.c.l.b16 %v9908
    %v10684 = vunpack.c.l.b16 %v9909
    %v10685 = vunpack.c.l.b16 %v9910
    %v10686 = vunpack.c.l.b16 %v9911
    %v10687 = vunpack.c.l.b16 %v9912
    %v10688 = vunpack.c.l.b16 %v9913
    %v10689 = vunpack.c.l.b16 %v9914
    %v10690 = vunpack.c.l.b16 %v9915
    %v10691 = vunpack.c.l.b16 %v9916
    %v10692 = vunpack.c.l.b16 %v9917
    %v10693 = vunpack.c.l.b16 %v9918
    %v10694 = vunpack.c.l.b16 %v9919
    %v10695 = vunpack.c.l.b16 %v9920
    %v10696 = vunpack.c.l.b16 %v9921
    %v10697 = vunpack.c.l.b16 %v9922
    %v10698 = vunpack.c.l.b16 %v9923
    %v10699 = vunpack.c.l.b16 %v9924
    %v10700 = vunpack.c.l.b16 %v9925
    %v10701 = vunpack.c.l.b16 %v9926
    %v10702 = vunpack.c.l.b16 %v9927
    %v10703 = vunpack.c.l.b16 %v9928
    %v10704 = vunpack.c.l.b16 %v9929
    %v10705 = vunpack.c.l.b16 %v9930
    %v10706 = vunpack.c.l.b16 %v9931
    %v10707 = vunpack.c.l.b16 %v9932
    %v10708 = vunpack.c.l.b16 %v9933
    %v10709 = vunpack.c.l.b16 %v9934
    %v10710 = vunpack.c.l.b16 %v9935
    %v10711 = vunpack.c.l.b16 %v9936
    %v10712 = vunpack.c.l.b16 %v9937
    %v10713 = vunpack.c.l.b16 %v9938
    %v10714 = vunpack.c.l.b16 %v9939
    %v10715 = vunpack.c.l.b16 %v9940
    %v10716 = vunpack.c.l.b16 %v9941
    %v10717 = vunpack.c.l.b16 %v9942
    %v10718 = vunpack.c.l.b16 %v9943
    %v10719 = vunpack.c.l.b16 %v9944
    %v10720 = vunpack.c.l.b16 %v9945
    %v10721 = vunpack.c.l.b16 %v9946
    %v10722 = vunpack.c.l.b16 %v9947
    %v10723 = vunpack.c.l.b16 %v9948
    %v10724 = vunpack.c.l.b16 %v9949
    %v10725 = vunpack.c.l.b16 %v9950
    %v10726 = vunpack.c.l.b16 %v9951
    %v10727 = vunpack.c.l.b16 %v9952
    %v10728 = vunpack.c.l.b16 %v9953
    %v10729 = vunpack.c.l.b16 %v9954
    %v10730 = vunpack.c.l.b16 %v9955
    %v10731 = vunpack.c.l.b16 %v9956
    %v10732 = vunpack.c.l.b16 %v9957
    %v10733 = vunpack.c.l.b16 %v9958
    %v10734 = vunpack.c.l.b16 %v9959
    %v10735 = vunpack.c.l.b16 %v9960
    %v10736 = vunpack.c.l.b16 %v9961
    %v10737 = vunpack.c.l.b16 %v9962
    %v10738 = vunpack.c.l.b16 %v9963
    %v10739 = vunpack.c.l.b16 %v9964
    %v10740 = vunpack.c.l.b16 %v9965
    %v10741 = vunpack.c.l.b16 %v9966
    %v10742 = vunpack.c.l.b16 %v9967
    %v10743 = vunpack.c.l.b16 %v9968
    %v10744 = vunpack.c.l.b16 %v9969
    %v10745 = vunpack.c.l.b16 %v9970
    %v10746 = vunpack.c.l.b16 %v9971
    %v10747 = vunpack.c.l.b16 %v9972
    %v10748 = vunpack.c.l.b16 %v9973
    %v10749 = vunpack.c.l.b16 %v9974
    %v10750 = vunpack.c.l.b16 %v9975
    %v10751 = vunpack.c.l.b16 %v9976
    %v10752 = vunpack.c.l.b16 %v9977
    %v10753 = vunpack.c.l.b16 %v9978
    %v10754 = vunpack.c.l.b16 %v9979
    %v10755 = vunpack.c.l.b16 %v9980
    %v10756 = vunpack.c.l.b16 %v9981
    %v10757 = vunpack.c.l.b16 %v9982
    %v10758 = vunpack.c.l.b16 %v9983
    %v10759 = vunpack.c.l.b16 %v9984
    %v10760 = vunpack.c.l.b16 %v9985
    %v10761 = vunpack.c.l.b16 %v9986
    %v10762 = vunpack.c.l.b16 %v9987
    %v10763 = vunpack.c.l.b16 %v9988
    %v10764 = vunpack.c.l.b16 %v9989
    %v10765 = vunpack.c.l.b16 %v9990
    %v10766 = vunpack.c.l.b16 %v9991
    %v10767 = vunpack.c.l.b16 %v9992
    %v10768 = vunpack.c.l.b16 %v9993
    %v10769 = vunpack.c.l.b16 %v9994
    %v10770 = vunpack.c.l.b16 %v9995
    %v10771 = vunpack.c.l.b16 %v9996
    %v10772 = vunpack.c.l.b16 %v9997
    %v10773 = vunpack.c.l.b16 %v9998
    %v10774 = vunpack.c.l.b16 %v9999
    %v10775 = vunpack.c.l.b16 %v10000
    %v10776 = vunpack.c.l.b16 %v10001
    %v10777 = vunpack.c.l.b16 %v10002
    %v10778 = vunpack.c.l.b16 %v10003
    %v10779 = vunpack.c.l.b16 %v10004
    %v10780 = vunpack.c.l.b16 %v10005
    %v10781 = vunpack.c.l.b16 %v10006
    %v10782 = vunpack.c.l.b16 %v10007
    %v10783 = vunpack.c.l.b16 %v10008
    %v10784 = vunpack.c.l.b16 %v10009
    %v10785 = vunpack.c.l.b16 %v10010
    %v10786 = vunpack.c.l.b16 %v10011
    %v10787 = vunpack.c.l.b16 %v10012
    %v10788 = vunpack.c.l.b16 %v10013
    %v10789 = vpack.c.b16 %v10406, %v10405
    %v10790 = vpack.c.b16 %v10408, %v10407
    %v10791 = vpack.c.b16 %v10410, %v10409
    %v10792 = vpack.c.b16 %v10412, %v10411
    %v10793 = vpack.c.b16 %v10414, %v10413
    %v10794 = vpack.c.b16 %v10416, %v10415
    %v10795 = vpack.c.b16 %v10418, %v10417
    %v10796 = vpack.c.b16 %v10420, %v10419
    %v10797 = vpack.c.b16 %v10422, %v10421
    %v10798 = vpack.c.b16 %v10424, %v10423
    %v10799 = vpack.c.b16 %v10426, %v10425
    %v10800 = vpack.c.b16 %v10428, %v10427
    %v10801 = vpack.c.b16 %v10430, %v10429
    %v10802 = vpack.c.b16 %v10432, %v10431
    %v10803 = vpack.c.b16 %v10434, %v10433
    %v10804 = vpack.c.b16 %v10436, %v10435
    %v10805 = vpack.c.b16 %v10438, %v10437
    %v10806 = vpack.c.b16 %v10440, %v10439
    %v10807 = vpack.c.b16 %v10442, %v10441
    %v10808 = vpack.c.b16 %v10444, %v10443
    %v10809 = vpack.c.b16 %v10446, %v10445
    %v10810 = vpack.c.b16 %v10448, %v10447
    %v10811 = vpack.c.b16 %v10450, %v10449
    %v10812 = vpack.c.b16 %v10452, %v10451
    %v10813 = vpack.c.b16 %v10454, %v10453
    %v10814 = vpack.c.b16 %v10456, %v10455
    %v10815 = vpack.c.b16 %v10458, %v10457
    %v10816 = vpack.c.b16 %v10460, %v10459
    %v10817 = vpack.c.b16 %v10462, %v10461
    %v10818 = vpack.c.b16 %v10464, %v10463
    %v10819 = vpack.c.b16 %v10466, %v10465
    %v10820 = vpack.c.b16 %v10468, %v10467
    %v10821 = vpack.c.b16 %v10470, %v10469
    %v10822 = vpack.c.b16 %v10472, %v10471
    %v10823 = vpack.c.b16 %v10474, %v10473
    %v10824 = vpack.c.b16 %v10476, %v10475
    %v10825 = vpack.c.b16 %v10478, %v10477
    %v10826 = vpack.c.b16 %v10480, %v10479
    %v10827 = vpack.c.b16 %v10482, %v10481
    %v10828 = vpack.c.b16 %v10484, %v10483
    %v10829 = vpack.c.b16 %v10486, %v10485
    %v10830 = vpack.c.b16 %v10488, %v10487
    %v10831 = vpack.c.b16 %v10490, %v10489
    %v10832 = vpack.c.b16 %v10492, %v10491
    %v10833 = vpack.c.b16 %v10494, %v10493
    %v10834 = vpack.c.b16 %v10496, %v10495
    %v10835 = vpack.c.b16 %v10498, %v10497
    %v10836 = vpack.c.b16 %v10500, %v10499
    %v10837 = vpack.c.b16 %v10502, %v10501
    %v10838 = vpack.c.b16 %v10504, %v10503
    %v10839 = vpack.c.b16 %v10506, %v10505
    %v10840 = vpack.c.b16 %v10508, %v10507
    %v10841 = vpack.c.b16 %v10510, %v10509
    %v10842 = vpack.c.b16 %v10512, %v10511
    %v10843 = vpack.c.b16 %v10514, %v10513
    %v10844 = vpack.c.b16 %v10516, %v10515
    %v10845 = vpack.c.b16 %v10518, %v10517
    %v10846 = vpack.c.b16 %v10520, %v10519
    %v10847 = vpack.c.b16 %v10522, %v10521
    %v10848 = vpack.c.b16 %v10524, %v10523
    %v10849 = vpack.c.b16 %v10526, %v10525
    %v10850 = vpack.c.b16 %v10528, %v10527
    %v10851 = vpack.c.b16 %v10530, %v10529
    %v10852 = vpack.c.b16 %v10532, %v10531
    %v10853 = vpack.c.b16 %v10534, %v10533
    %v10854 = vpack.c.b16 %v10536, %v10535
    %v10855 = vpack.c.b16 %v10538, %v10537
    %v10856 = vpack.c.b16 %v10540, %v10539
    %v10857 = vpack.c.b16 %v10542, %v10541
    %v10858 = vpack.c.b16 %v10544, %v10543
    %v10859 = vpack.c.b16 %v10546, %v10545
    %v10860 = vpack.c.b16 %v10548, %v10547
    %v10861 = vpack.c.b16 %v10550, %v10549
    %v10862 = vpack.c.b16 %v10552, %v10551
    %v10863 = vpack.c.b16 %v10554, %v10553
    %v10864 = vpack.c.b16 %v10556, %v10555
    %v10865 = vpack.c.b16 %v10558, %v10557
    %v10866 = vpack.c.b16 %v10560, %v10559
    %v10867 = vpack.c.b16 %v10562, %v10561
    %v10868 = vpack.c.b16 %v10564, %v10563
    %v10869 = vpack.c.b16 %v10566, %v10565
    %v10870 = vpack.c.b16 %v10568, %v10567
    %v10871 = vpack.c.b16 %v10570, %v10569
    %v10872 = vpack.c.b16 %v10572, %v10571
    %v10873 = vpack.c.b16 %v10574, %v10573
    %v10874 = vpack.c.b16 %v10576, %v10575
    %v10875 = vpack.c.b16 %v10578, %v10577
    %v10876 = vpack.c.b16 %v10580, %v10579
    %v10877 = vpack.c.b16 %v10582, %v10581
    %v10878 = vpack.c.b16 %v10584, %v10583
    %v10879 = vpack.c.b16 %v10586, %v10585
    %v10880 = vpack.c.b16 %v10588, %v10587
    %v10881 = vpack.c.b16 %v10590, %v10589
    %v10882 = vpack.c.b16 %v10592, %v10591
    %v10883 = vpack.c.b16 %v10594, %v10593
    %v10884 = vpack.c.b16 %v10596, %v10595
    %v10885 = vpack.c.b16 %v10598, %v10597
    %v10886 = vpack.c.b16 %v10600, %v10599
    %v10887 = vpack.c.b16 %v10602, %v10601
    %v10888 = vpack.c.b16 %v10604, %v10603
    %v10889 = vpack.c.b16 %v10606, %v10605
    %v10890 = vpack.c.b16 %v10608, %v10607
    %v10891 = vpack.c.b16 %v10610, %v10609
    %v10892 = vpack.c.b16 %v10612, %v10611
    %v10893 = vpack.c.b16 %v10614, %v10613
    %v10894 = vpack.c.b16 %v10616, %v10615
    %v10895 = vpack.c.b16 %v10618, %v10617
    %v10896 = vpack.c.b16 %v10620, %v10619
    %v10897 = vpack.c.b16 %v10622, %v10621
    %v10898 = vpack.c.b16 %v10624, %v10623
    %v10899 = vpack.c.b16 %v10626, %v10625
    %v10900 = vpack.c.b16 %v10628, %v10627
    %v10901 = vpack.c.b16 %v10630, %v10629
    %v10902 = vpack.c.b16 %v10632, %v10631
    %v10903 = vpack.c.b16 %v10634, %v10633
    %v10904 = vpack.c.b16 %v10636, %v10635
    %v10905 = vpack.c.b16 %v10638, %v10637
    %v10906 = vpack.c.b16 %v10640, %v10639
    %v10907 = vpack.c.b16 %v10642, %v10641
    %v10908 = vpack.c.b16 %v10644, %v10643
    %v10909 = vpack.c.b16 %v10646, %v10645
    %v10910 = vpack.c.b16 %v10648, %v10647
    %v10911 = vpack.c.b16 %v10650, %v10649
    %v10912 = vpack.c.b16 %v10652, %v10651
    %v10913 = vpack.c.b16 %v10654, %v10653
    %v10914 = vpack.c.b16 %v10656, %v10655
    %v10915 = vpack.c.b16 %v10658, %v10657
    %v10916 = vpack.c.b16 %v10660, %v10659
    %v10917 = vpack.c.b16 %v10662, %v10661
    %v10918 = vpack.c.b16 %v10664, %v10663
    %v10919 = vpack.c.b16 %v10666, %v10665
    %v10920 = vpack.c.b16 %v10668, %v10667
    %v10921 = vpack.c.b16 %v10670, %v10669
    %v10922 = vpack.c.b16 %v10672, %v10671
    %v10923 = vpack.c.b16 %v10674, %v10673
    %v10924 = vpack.c.b16 %v10676, %v10675
    %v10925 = vpack.c.b16 %v10678, %v10677
    %v10926 = vpack.c.b16 %v10680, %v10679
    %v10927 = vpack.c.b16 %v10682, %v10681
    %v10928 = vpack.c.b16 %v10684, %v10683
    %v10929 = vpack.c.b16 %v10686, %v10685
    %v10930 = vpack.c.b16 %v10688, %v10687
    %v10931 = vpack.c.b16 %v10690, %v10689
    %v10932 = vpack.c.b16 %v10692, %v10691
    %v10933 = vpack.c.b16 %v10694, %v10693
    %v10934 = vpack.c.b16 %v10696, %v10695
    %v10935 = vpack.c.b16 %v10698, %v10697
    %v10936 = vpack.c.b16 %v10700, %v10699
    %v10937 = vpack.c.b16 %v10702, %v10701
    %v10938 = vpack.c.b16 %v10704, %v10703
    %v10939 = vpack.c.b16 %v10706, %v10705
    %v10940 = vpack.c.b16 %v10708, %v10707
    %v10941 = vpack.c.b16 %v10710, %v10709
    %v10942 = vpack.c.b16 %v10712, %v10711
    %v10943 = vpack.c.b16 %v10714, %v10713
    %v10944 = vpack.c.b16 %v10716, %v10715
    %v10945 = vpack.c.b16 %v10718, %v10717
    %v10946 = vpack.c.b16 %v10720, %v10719
    %v10947 = vpack.c.b16 %v10722, %v10721
    %v10948 = vpack.c.b16 %v10724, %v10723
    %v10949 = vpack.c.b16 %v10726, %v10725
    %v10950 = vpack.c.b16 %v10728, %v10727
    %v10951 = vpack.c.b16 %v10730, %v10729
    %v10952 = vpack.c.b16 %v10732, %v10731
    %v10953 = vpack.c.b16 %v10734, %v10733
    %v10954 = vpack.c.b16 %v10736, %v10735
    %v10955 = vpack.c.b16 %v10738, %v10737
    %v10956 = vpack.c.b16 %v10740, %v10739
    %v10957 = vpack.c.b16 %v10742, %v10741
    %v10958 = vpack.c.b16 %v10744, %v10743
    %v10959 = vpack.c.b16 %v10746, %v10745
    %v10960 = vpack.c.b16 %v10748, %v10747
    %v10961 = vpack.c.b16 %v10750, %v10749
    %v10962 = vpack.c.b16 %v10752, %v10751
    %v10963 = vpack.c.b16 %v10754, %v10753
    %v10964 = vpack.c.b16 %v10756, %v10755
    %v10965 = vpack.c.b16 %v10758, %v10757
    %v10966 = vpack.c.b16 %v10760, %v10759
    %v10967 = vpack.c.b16 %v10762, %v10761
    %v10968 = vpack.c.b16 %v10764, %v10763
    %v10969 = vpack.c.b16 %v10766, %v10765
    %v10970 = vpack.c.b16 %v10768, %v10767
    %v10971 = vpack.c.b16 %v10770, %v10769
    %v10972 = vpack.c.b16 %v10772, %v10771
    %v10973 = vpack.c.b16 %v10774, %v10773
    %v10974 = vpack.c.b16 %v10776, %v10775
    %v10975 = vpack.c.b16 %v10778, %v10777
    %v10976 = vpack.c.b16 %v10780, %v10779
    %v10977 = vpack.c.b16 %v10782, %v10781
    %v10978 = vpack.c.b16 %v10784, %v10783
    %v10979 = vpack.c.b16 %v10786, %v10785
    %v10980 = vpack.c.b16 %v10788, %v10787
    %11173 = vmatprep.subr.bf16.mxu0 0
    %11174 = vmatpush1.bf16.msra.mxu0 %v10796
    %11175 = vmatprep.subr.bf16.mxu0 0
    %11176 = vmatpush1.bf16.msra.mxu0 %v10795
    %11177 = vmatprep.subr.bf16.mxu0 0
    %11178 = vmatpush1.bf16.msra.mxu0 %v10794
    %11179 = vmatprep.subr.bf16.mxu0 0
    %11180 = vmatpush1.bf16.msra.mxu0 %v10793
    %11181 = vmatprep.subr.bf16.mxu0 0
    %11182 = vmatpush1.bf16.msra.mxu0 %v10792
    %11183 = vmatprep.subr.bf16.mxu0 0
    %11184 = vmatpush1.bf16.msra.mxu0 %v10791
    %11185 = vmatprep.subr.bf16.mxu0 0
    %11186 = vmatpush1.bf16.msra.mxu0 %v10790
    %11187 = vmatprep.subr.bf16.mxu0 0
    %11188 = vmatpush1.bf16.msra.mxu0 %v10789
    %11189 = vmatprep.subr.bf16.mxu0 0
    %11190 = vmatpush2.bf16.msra.mxu0 %v10804
    %11191 = vmatprep.subr.bf16.mxu0 0
    %11192 = vmatpush2.bf16.msra.mxu0 %v10803
    %11193 = vmatprep.subr.bf16.mxu0 0
    %11194 = vmatpush2.bf16.msra.mxu0 %v10802
    %11195 = vmatprep.subr.bf16.mxu0 0
    %11196 = vmatpush2.bf16.msra.mxu0 %v10801
    %11197 = vmatprep.subr.bf16.mxu0 0
    %11198 = vmatpush2.bf16.msra.mxu0 %v10800
    %11199 = vmatprep.subr.bf16.mxu0 0
    %11200 = vmatpush2.bf16.msra.mxu0 %v10799
    %11201 = vmatprep.subr.bf16.mxu0 0
    %11202 = vmatpush2.bf16.msra.mxu0 %v10798
    %11203 = vmatprep.subr.bf16.mxu0 0
    %11204 = vmatpush2.bf16.msra.mxu0 %v10797
    %11205 = vmatprep.mubr.bf16.mxu0 %v9247
    %11206 = vmatmul.mubr.bf16.gmra.mxu0 %v9246
    %v11207 = vpop.f32.mrf.mxu0
    %v11208 = vadd.f32 %v10019, %v11207
    %v11209 = vpop.f32.mrf.mxu0
    %v11210 = vpop.f32.mrf.mxu0
    %v11211 = vadd.f32 %v10019, %v11210
    %v11212 = vpop.f32.mrf.mxu0
    %11213 = vmatprep.mubr.bf16.mxu0 %v9271
    %11214 = vmatmul.mubr.bf16.gmra.mxu0 %v9270
    %v11215 = vpop.f32.mrf.mxu0
    %v11216 = vadd.f32 %v10019, %v11215
    %v11217 = vpop.f32.mrf.mxu0
    %v11218 = vpop.f32.mrf.mxu0
    %v11219 = vadd.f32 %v10019, %v11218
    %v11220 = vpop.f32.mrf.mxu0
    %11221 = vmatprep.mubr.bf16.mxu0 %v9295
    %11222 = vmatmul.mubr.bf16.gmra.mxu0 %v9294
    %v11223 = vpop.f32.mrf.mxu0
    %v11224 = vadd.f32 %v10019, %v11223
    %v11225 = vpop.f32.mrf.mxu0
    %v11226 = vpop.f32.mrf.mxu0
    %v11227 = vadd.f32 %v10019, %v11226
    %v11228 = vpop.f32.mrf.mxu0
    %11229 = vmatprep.mubr.bf16.mxu0 %v9319
    %11230 = vmatmul.mubr.bf16.gmra.mxu0 %v9318
    %v11231 = vpop.f32.mrf.mxu0
    %v11232 = vadd.f32 %v10019, %v11231
    %v11233 = vpop.f32.mrf.mxu0
    %v11234 = vpop.f32.mrf.mxu0
    %v11235 = vadd.f32 %v10019, %v11234
    %v11236 = vpop.f32.mrf.mxu0
    %11237 = vmatprep.mubr.bf16.mxu0 %v9343
    %11238 = vmatmul.mubr.bf16.gmra.mxu0 %v9342
    %v11239 = vpop.f32.mrf.mxu0
    %v11240 = vadd.f32 %v10019, %v11239
    %v11241 = vpop.f32.mrf.mxu0
    %v11242 = vpop.f32.mrf.mxu0
    %v11243 = vadd.f32 %v10019, %v11242
    %v11244 = vpop.f32.mrf.mxu0
    %11245 = vmatprep.mubr.bf16.mxu0 %v9367
    %11246 = vmatmul.mubr.bf16.gmra.mxu0 %v9366
    %v11247 = vpop.f32.mrf.mxu0
    %v11248 = vadd.f32 %v10019, %v11247
    %v11249 = vpop.f32.mrf.mxu0
    %v11250 = vpop.f32.mrf.mxu0
    %v11251 = vadd.f32 %v10019, %v11250
    %v11252 = vpop.f32.mrf.mxu0
    %11253 = vmatprep.mubr.bf16.mxu0 %v9391
    %11254 = vmatmul.mubr.bf16.gmra.mxu0 %v9390
    %v11255 = vpop.f32.mrf.mxu0
    %v11256 = vadd.f32 %v10019, %v11255
    %v11257 = vpop.f32.mrf.mxu0
    %v11258 = vpop.f32.mrf.mxu0
    %v11259 = vadd.f32 %v10019, %v11258
    %v11260 = vpop.f32.mrf.mxu0
    %11261 = vmatprep.mubr.bf16.mxu0 %v9415
    %11262 = vmatmul.mubr.bf16.gmra.mxu0 %v9414
    %v11263 = vpop.f32.mrf.mxu0
    %v11264 = vadd.f32 %v10019, %v11263
    %v11265 = vpop.f32.mrf.mxu0
    %v11266 = vpop.f32.mrf.mxu0
    %v11267 = vadd.f32 %v10019, %v11266
    %v11268 = vpop.f32.mrf.mxu0
    %11269 = vmatprep.mubr.bf16.mxu0 %v9439
    %11270 = vmatmul.mubr.bf16.gmra.mxu0 %v9438
    %v11271 = vpop.f32.mrf.mxu0
    %v11272 = vadd.f32 %v10019, %v11271
    %v11273 = vpop.f32.mrf.mxu0
    %v11274 = vpop.f32.mrf.mxu0
    %v11275 = vadd.f32 %v10019, %v11274
    %v11276 = vpop.f32.mrf.mxu0
    %11277 = vmatprep.mubr.bf16.mxu0 %v9463
    %11278 = vmatmul.mubr.bf16.gmra.mxu0 %v9462
    %v11279 = vpop.f32.mrf.mxu0
    %v11280 = vadd.f32 %v10019, %v11279
    %v11281 = vpop.f32.mrf.mxu0
    %v11282 = vpop.f32.mrf.mxu0
    %v11283 = vadd.f32 %v10019, %v11282
    %v11284 = vpop.f32.mrf.mxu0
    %11285 = vmatprep.mubr.bf16.mxu0 %v9487
    %11286 = vmatmul.mubr.bf16.gmra.mxu0 %v9486
    %v11287 = vpop.f32.mrf.mxu0
    %v11288 = vadd.f32 %v10019, %v11287
    %v11289 = vpop.f32.mrf.mxu0
    %v11290 = vpop.f32.mrf.mxu0
    %v11291 = vadd.f32 %v10019, %v11290
    %v11292 = vpop.f32.mrf.mxu0
    %11293 = vmatprep.mubr.bf16.mxu0 %v9511
    %11294 = vmatmul.mubr.bf16.gmra.mxu0 %v9510
    %v11295 = vpop.f32.mrf.mxu0
    %v11296 = vadd.f32 %v10019, %v11295
    %v11297 = vpop.f32.mrf.mxu0
    %v11298 = vpop.f32.mrf.mxu0
    %v11299 = vadd.f32 %v10019, %v11298
    %v11300 = vpop.f32.mrf.mxu0
    %11301 = vmatprep.mubr.bf16.mxu0 %v9535
    %11302 = vmatmul.mubr.bf16.gmra.mxu0 %v9534
    %v11303 = vpop.f32.mrf.mxu0
    %v11304 = vadd.f32 %v10019, %v11303
    %v11305 = vpop.f32.mrf.mxu0
    %v11306 = vpop.f32.mrf.mxu0
    %v11307 = vadd.f32 %v10019, %v11306
    %v11308 = vpop.f32.mrf.mxu0
    %11309 = vmatprep.mubr.bf16.mxu0 %v9559
    %11310 = vmatmul.mubr.bf16.gmra.mxu0 %v9558
    %v11311 = vpop.f32.mrf.mxu0
    %v11312 = vadd.f32 %v10019, %v11311
    %v11313 = vpop.f32.mrf.mxu0
    %v11314 = vpop.f32.mrf.mxu0
    %v11315 = vadd.f32 %v10019, %v11314
    %v11316 = vpop.f32.mrf.mxu0
    %11317 = vmatprep.mubr.bf16.mxu0 %v9583
    %11318 = vmatmul.mubr.bf16.gmra.mxu0 %v9582
    %v11319 = vpop.f32.mrf.mxu0
    %v11320 = vadd.f32 %v10019, %v11319
    %v11321 = vpop.f32.mrf.mxu0
    %v11322 = vpop.f32.mrf.mxu0
    %v11323 = vadd.f32 %v10019, %v11322
    %v11324 = vpop.f32.mrf.mxu0
    %11325 = vmatprep.mubr.bf16.mxu0 %v9607
    %11326 = vmatmul.mubr.bf16.gmra.mxu0 %v9606
    %v11327 = vpop.f32.mrf.mxu0
    %v11328 = vadd.f32 %v10019, %v11327
    %v11329 = vpop.f32.mrf.mxu0
    %v11330 = vpop.f32.mrf.mxu0
    %v11331 = vadd.f32 %v10019, %v11330
    %v11332 = vpop.f32.mrf.mxu0
    %11333 = vdwg.mxu0
    %11334 = vmatprep.subr.bf16.mxu0 0
    %11335 = vmatpush1.bf16.msra.mxu0 %v10812
    %11336 = vmatprep.subr.bf16.mxu0 0
    %11337 = vmatpush1.bf16.msra.mxu0 %v10811
    %11338 = vmatprep.subr.bf16.mxu0 0
    %11339 = vmatpush1.bf16.msra.mxu0 %v10810
    %11340 = vmatprep.subr.bf16.mxu0 0
    %11341 = vmatpush1.bf16.msra.mxu0 %v10809
    %11342 = vmatprep.subr.bf16.mxu0 0
    %11343 = vmatpush1.bf16.msra.mxu0 %v10808
    %11344 = vmatprep.subr.bf16.mxu0 0
    %11345 = vmatpush1.bf16.msra.mxu0 %v10807
    %11346 = vmatprep.subr.bf16.mxu0 0
    %11347 = vmatpush1.bf16.msra.mxu0 %v10806
    %11348 = vmatprep.subr.bf16.mxu0 0
    %11349 = vmatpush1.bf16.msra.mxu0 %v10805
    %11350 = vmatprep.subr.bf16.mxu0 0
    %11351 = vmatpush2.bf16.msra.mxu0 %v10820
    %11352 = vmatprep.subr.bf16.mxu0 0
    %11353 = vmatpush2.bf16.msra.mxu0 %v10819
    %11354 = vmatprep.subr.bf16.mxu0 0
    %11355 = vmatpush2.bf16.msra.mxu0 %v10818
    %11356 = vmatprep.subr.bf16.mxu0 0
    %11357 = vmatpush2.bf16.msra.mxu0 %v10817
    %11358 = vmatprep.subr.bf16.mxu0 0
    %11359 = vmatpush2.bf16.msra.mxu0 %v10816
    %11360 = vmatprep.subr.bf16.mxu0 0
    %11361 = vmatpush2.bf16.msra.mxu0 %v10815
    %11362 = vmatprep.subr.bf16.mxu0 0
    %11363 = vmatpush2.bf16.msra.mxu0 %v10814
    %11364 = vmatprep.subr.bf16.mxu0 0
    %11365 = vmatpush2.bf16.msra.mxu0 %v10813
    %11366 = vmatprep.mubr.bf16.mxu0 %v9249
    %11367 = vmatmul.mubr.bf16.gmra.mxu0 %v9248
    %v11368 = vpop.f32.mrf.mxu0
    %v11369 = vadd.f32 %v11208, %v11368
    %v11370 = vpop.f32.mrf.mxu0
    %v11371 = vpop.f32.mrf.mxu0
    %v11372 = vadd.f32 %v11211, %v11371
    %v11373 = vpop.f32.mrf.mxu0
    %11374 = vmatprep.mubr.bf16.mxu0 %v9273
    %11375 = vmatmul.mubr.bf16.gmra.mxu0 %v9272
    %v11376 = vpop.f32.mrf.mxu0
    %v11377 = vadd.f32 %v11216, %v11376
    %v11378 = vpop.f32.mrf.mxu0
    %v11379 = vpop.f32.mrf.mxu0
    %v11380 = vadd.f32 %v11219, %v11379
    %v11381 = vpop.f32.mrf.mxu0
    %11382 = vmatprep.mubr.bf16.mxu0 %v9297
    %11383 = vmatmul.mubr.bf16.gmra.mxu0 %v9296
    %v11384 = vpop.f32.mrf.mxu0
    %v11385 = vadd.f32 %v11224, %v11384
    %v11386 = vpop.f32.mrf.mxu0
    %v11387 = vpop.f32.mrf.mxu0
    %v11388 = vadd.f32 %v11227, %v11387
    %v11389 = vpop.f32.mrf.mxu0
    %11390 = vmatprep.mubr.bf16.mxu0 %v9321
    %11391 = vmatmul.mubr.bf16.gmra.mxu0 %v9320
    %v11392 = vpop.f32.mrf.mxu0
    %v11393 = vadd.f32 %v11232, %v11392
    %v11394 = vpop.f32.mrf.mxu0
    %v11395 = vpop.f32.mrf.mxu0
    %v11396 = vadd.f32 %v11235, %v11395
    %v11397 = vpop.f32.mrf.mxu0
    %11398 = vmatprep.mubr.bf16.mxu0 %v9345
    %11399 = vmatmul.mubr.bf16.gmra.mxu0 %v9344
    %v11400 = vpop.f32.mrf.mxu0
    %v11401 = vadd.f32 %v11240, %v11400
    %v11402 = vpop.f32.mrf.mxu0
    %v11403 = vpop.f32.mrf.mxu0
    %v11404 = vadd.f32 %v11243, %v11403
    %v11405 = vpop.f32.mrf.mxu0
    %11406 = vmatprep.mubr.bf16.mxu0 %v9369
    %11407 = vmatmul.mubr.bf16.gmra.mxu0 %v9368
    %v11408 = vpop.f32.mrf.mxu0
    %v11409 = vadd.f32 %v11248, %v11408
    %v11410 = vpop.f32.mrf.mxu0
    %v11411 = vpop.f32.mrf.mxu0
    %v11412 = vadd.f32 %v11251, %v11411
    %v11413 = vpop.f32.mrf.mxu0
    %11414 = vmatprep.mubr.bf16.mxu0 %v9393
    %11415 = vmatmul.mubr.bf16.gmra.mxu0 %v9392
    %v11416 = vpop.f32.mrf.mxu0
    %v11417 = vadd.f32 %v11256, %v11416
    %v11418 = vpop.f32.mrf.mxu0
    %v11419 = vpop.f32.mrf.mxu0
    %v11420 = vadd.f32 %v11259, %v11419
    %v11421 = vpop.f32.mrf.mxu0
    %11422 = vmatprep.mubr.bf16.mxu0 %v9417
    %11423 = vmatmul.mubr.bf16.gmra.mxu0 %v9416
    %v11424 = vpop.f32.mrf.mxu0
    %v11425 = vadd.f32 %v11264, %v11424
    %v11426 = vpop.f32.mrf.mxu0
    %v11427 = vpop.f32.mrf.mxu0
    %v11428 = vadd.f32 %v11267, %v11427
    %v11429 = vpop.f32.mrf.mxu0
    %11430 = vmatprep.mubr.bf16.mxu0 %v9441
    %11431 = vmatmul.mubr.bf16.gmra.mxu0 %v9440
    %v11432 = vpop.f32.mrf.mxu0
    %v11433 = vadd.f32 %v11272, %v11432
    %v11434 = vpop.f32.mrf.mxu0
    %v11435 = vpop.f32.mrf.mxu0
    %v11436 = vadd.f32 %v11275, %v11435
    %v11437 = vpop.f32.mrf.mxu0
    %11438 = vmatprep.mubr.bf16.mxu0 %v9465
    %11439 = vmatmul.mubr.bf16.gmra.mxu0 %v9464
    %v11440 = vpop.f32.mrf.mxu0
    %v11441 = vadd.f32 %v11280, %v11440
    %v11442 = vpop.f32.mrf.mxu0
    %v11443 = vpop.f32.mrf.mxu0
    %v11444 = vadd.f32 %v11283, %v11443
    %v11445 = vpop.f32.mrf.mxu0
    %11446 = vmatprep.mubr.bf16.mxu0 %v9489
    %11447 = vmatmul.mubr.bf16.gmra.mxu0 %v9488
    %v11448 = vpop.f32.mrf.mxu0
    %v11449 = vadd.f32 %v11288, %v11448
    %v11450 = vpop.f32.mrf.mxu0
    %v11451 = vpop.f32.mrf.mxu0
    %v11452 = vadd.f32 %v11291, %v11451
    %v11453 = vpop.f32.mrf.mxu0
    %11454 = vmatprep.mubr.bf16.mxu0 %v9513
    %11455 = vmatmul.mubr.bf16.gmra.mxu0 %v9512
    %v11456 = vpop.f32.mrf.mxu0
    %v11457 = vadd.f32 %v11296, %v11456
    %v11458 = vpop.f32.mrf.mxu0
    %v11459 = vpop.f32.mrf.mxu0
    %v11460 = vadd.f32 %v11299, %v11459
    %v11461 = vpop.f32.mrf.mxu0
    %11462 = vmatprep.mubr.bf16.mxu0 %v9537
    %11463 = vmatmul.mubr.bf16.gmra.mxu0 %v9536
    %v11464 = vpop.f32.mrf.mxu0
    %v11465 = vadd.f32 %v11304, %v11464
    %v11466 = vpop.f32.mrf.mxu0
    %v11467 = vpop.f32.mrf.mxu0
    %v11468 = vadd.f32 %v11307, %v11467
    %v11469 = vpop.f32.mrf.mxu0
    %11470 = vmatprep.mubr.bf16.mxu0 %v9561
    %11471 = vmatmul.mubr.bf16.gmra.mxu0 %v9560
    %v11472 = vpop.f32.mrf.mxu0
    %v11473 = vadd.f32 %v11312, %v11472
    %v11474 = vpop.f32.mrf.mxu0
    %v11475 = vpop.f32.mrf.mxu0
    %v11476 = vadd.f32 %v11315, %v11475
    %v11477 = vpop.f32.mrf.mxu0
    %11478 = vmatprep.mubr.bf16.mxu0 %v9585
    %11479 = vmatmul.mubr.bf16.gmra.mxu0 %v9584
    %v11480 = vpop.f32.mrf.mxu0
    %v11481 = vadd.f32 %v11320, %v11480
    %v11482 = vpop.f32.mrf.mxu0
    %v11483 = vpop.f32.mrf.mxu0
    %v11484 = vadd.f32 %v11323, %v11483
    %v11485 = vpop.f32.mrf.mxu0
    %11486 = vmatprep.mubr.bf16.mxu0 %v9609
    %11487 = vmatmul.mubr.bf16.gmra.mxu0 %v9608
    %v11488 = vpop.f32.mrf.mxu0
    %v11489 = vadd.f32 %v11328, %v11488
    %v11490 = vpop.f32.mrf.mxu0
    %v11491 = vpop.f32.mrf.mxu0
    %v11492 = vadd.f32 %v11331, %v11491
    %v11493 = vpop.f32.mrf.mxu0
    %11494 = vdwg.mxu0
    %11495 = vmatprep.subr.bf16.mxu0 0
    %11496 = vmatpush1.bf16.msra.mxu0 %v10828
    %11497 = vmatprep.subr.bf16.mxu0 0
    %11498 = vmatpush1.bf16.msra.mxu0 %v10827
    %11499 = vmatprep.subr.bf16.mxu0 0
    %11500 = vmatpush1.bf16.msra.mxu0 %v10826
    %11501 = vmatprep.subr.bf16.mxu0 0
    %11502 = vmatpush1.bf16.msra.mxu0 %v10825
    %11503 = vmatprep.subr.bf16.mxu0 0
    %11504 = vmatpush1.bf16.msra.mxu0 %v10824
    %11505 = vmatprep.subr.bf16.mxu0 0
    %11506 = vmatpush1.bf16.msra.mxu0 %v10823
    %11507 = vmatprep.subr.bf16.mxu0 0
    %11508 = vmatpush1.bf16.msra.mxu0 %v10822
    %11509 = vmatprep.subr.bf16.mxu0 0
    %11510 = vmatpush1.bf16.msra.mxu0 %v10821
    %11511 = vmatprep.subr.bf16.mxu0 0
    %11512 = vmatpush2.bf16.msra.mxu0 %v10836
    %11513 = vmatprep.subr.bf16.mxu0 0
    %11514 = vmatpush2.bf16.msra.mxu0 %v10835
    %11515 = vmatprep.subr.bf16.mxu0 0
    %11516 = vmatpush2.bf16.msra.mxu0 %v10834
    %11517 = vmatprep.subr.bf16.mxu0 0
    %11518 = vmatpush2.bf16.msra.mxu0 %v10833
    %11519 = vmatprep.subr.bf16.mxu0 0
    %11520 = vmatpush2.bf16.msra.mxu0 %v10832
    %11521 = vmatprep.subr.bf16.mxu0 0
    %11522 = vmatpush2.bf16.msra.mxu0 %v10831
    %11523 = vmatprep.subr.bf16.mxu0 0
    %11524 = vmatpush2.bf16.msra.mxu0 %v10830
    %11525 = vmatprep.subr.bf16.mxu0 0
    %11526 = vmatpush2.bf16.msra.mxu0 %v10829
    %11527 = vmatprep.mubr.bf16.mxu0 %v9251
    %11528 = vmatmul.mubr.bf16.gmra.mxu0 %v9250
    %v11529 = vpop.f32.mrf.mxu0
    %v11530 = vadd.f32 %v11369, %v11529
    %v11531 = vpop.f32.mrf.mxu0
    %v11532 = vpop.f32.mrf.mxu0
    %v11533 = vadd.f32 %v11372, %v11532
    %v11534 = vpop.f32.mrf.mxu0
    %11535 = vmatprep.mubr.bf16.mxu0 %v9275
    %11536 = vmatmul.mubr.bf16.gmra.mxu0 %v9274
    %v11537 = vpop.f32.mrf.mxu0
    %v11538 = vadd.f32 %v11377, %v11537
    %v11539 = vpop.f32.mrf.mxu0
    %v11540 = vpop.f32.mrf.mxu0
    %v11541 = vadd.f32 %v11380, %v11540
    %v11542 = vpop.f32.mrf.mxu0
    %11543 = vmatprep.mubr.bf16.mxu0 %v9299
    %11544 = vmatmul.mubr.bf16.gmra.mxu0 %v9298
    %v11545 = vpop.f32.mrf.mxu0
    %v11546 = vadd.f32 %v11385, %v11545
    %v11547 = vpop.f32.mrf.mxu0
    %v11548 = vpop.f32.mrf.mxu0
    %v11549 = vadd.f32 %v11388, %v11548
    %v11550 = vpop.f32.mrf.mxu0
    %11551 = vmatprep.mubr.bf16.mxu0 %v9323
    %11552 = vmatmul.mubr.bf16.gmra.mxu0 %v9322
    %v11553 = vpop.f32.mrf.mxu0
    %v11554 = vadd.f32 %v11393, %v11553
    %v11555 = vpop.f32.mrf.mxu0
    %v11556 = vpop.f32.mrf.mxu0
    %v11557 = vadd.f32 %v11396, %v11556
    %v11558 = vpop.f32.mrf.mxu0
    %11559 = vmatprep.mubr.bf16.mxu0 %v9347
    %11560 = vmatmul.mubr.bf16.gmra.mxu0 %v9346
    %v11561 = vpop.f32.mrf.mxu0
    %v11562 = vadd.f32 %v11401, %v11561
    %v11563 = vpop.f32.mrf.mxu0
    %v11564 = vpop.f32.mrf.mxu0
    %v11565 = vadd.f32 %v11404, %v11564
    %v11566 = vpop.f32.mrf.mxu0
    %11567 = vmatprep.mubr.bf16.mxu0 %v9371
    %11568 = vmatmul.mubr.bf16.gmra.mxu0 %v9370
    %v11569 = vpop.f32.mrf.mxu0
    %v11570 = vadd.f32 %v11409, %v11569
    %v11571 = vpop.f32.mrf.mxu0
    %v11572 = vpop.f32.mrf.mxu0
    %v11573 = vadd.f32 %v11412, %v11572
    %v11574 = vpop.f32.mrf.mxu0
    %11575 = vmatprep.mubr.bf16.mxu0 %v9395
    %11576 = vmatmul.mubr.bf16.gmra.mxu0 %v9394
    %v11577 = vpop.f32.mrf.mxu0
    %v11578 = vadd.f32 %v11417, %v11577
    %v11579 = vpop.f32.mrf.mxu0
    %v11580 = vpop.f32.mrf.mxu0
    %v11581 = vadd.f32 %v11420, %v11580
    %v11582 = vpop.f32.mrf.mxu0
    %11583 = vmatprep.mubr.bf16.mxu0 %v9419
    %11584 = vmatmul.mubr.bf16.gmra.mxu0 %v9418
    %v11585 = vpop.f32.mrf.mxu0
    %v11586 = vadd.f32 %v11425, %v11585
    %v11587 = vpop.f32.mrf.mxu0
    %v11588 = vpop.f32.mrf.mxu0
    %v11589 = vadd.f32 %v11428, %v11588
    %v11590 = vpop.f32.mrf.mxu0
    %11591 = vmatprep.mubr.bf16.mxu0 %v9443
    %11592 = vmatmul.mubr.bf16.gmra.mxu0 %v9442
    %v11593 = vpop.f32.mrf.mxu0
    %v11594 = vadd.f32 %v11433, %v11593
    %v11595 = vpop.f32.mrf.mxu0
    %v11596 = vpop.f32.mrf.mxu0
    %v11597 = vadd.f32 %v11436, %v11596
    %v11598 = vpop.f32.mrf.mxu0
    %11599 = vmatprep.mubr.bf16.mxu0 %v9467
    %11600 = vmatmul.mubr.bf16.gmra.mxu0 %v9466
    %v11601 = vpop.f32.mrf.mxu0
    %v11602 = vadd.f32 %v11441, %v11601
    %v11603 = vpop.f32.mrf.mxu0
    %v11604 = vpop.f32.mrf.mxu0
    %v11605 = vadd.f32 %v11444, %v11604
    %v11606 = vpop.f32.mrf.mxu0
    %11607 = vmatprep.mubr.bf16.mxu0 %v9491
    %11608 = vmatmul.mubr.bf16.gmra.mxu0 %v9490
    %v11609 = vpop.f32.mrf.mxu0
    %v11610 = vadd.f32 %v11449, %v11609
    %v11611 = vpop.f32.mrf.mxu0
    %v11612 = vpop.f32.mrf.mxu0
    %v11613 = vadd.f32 %v11452, %v11612
    %v11614 = vpop.f32.mrf.mxu0
    %11615 = vmatprep.mubr.bf16.mxu0 %v9515
    %11616 = vmatmul.mubr.bf16.gmra.mxu0 %v9514
    %v11617 = vpop.f32.mrf.mxu0
    %v11618 = vadd.f32 %v11457, %v11617
    %v11619 = vpop.f32.mrf.mxu0
    %v11620 = vpop.f32.mrf.mxu0
    %v11621 = vadd.f32 %v11460, %v11620
    %v11622 = vpop.f32.mrf.mxu0
    %11623 = vmatprep.mubr.bf16.mxu0 %v9539
    %11624 = vmatmul.mubr.bf16.gmra.mxu0 %v9538
    %v11625 = vpop.f32.mrf.mxu0
    %v11626 = vadd.f32 %v11465, %v11625
    %v11627 = vpop.f32.mrf.mxu0
    %v11628 = vpop.f32.mrf.mxu0
    %v11629 = vadd.f32 %v11468, %v11628
    %v11630 = vpop.f32.mrf.mxu0
    %11631 = vmatprep.mubr.bf16.mxu0 %v9563
    %11632 = vmatmul.mubr.bf16.gmra.mxu0 %v9562
    %v11633 = vpop.f32.mrf.mxu0
    %v11634 = vadd.f32 %v11473, %v11633
    %v11635 = vpop.f32.mrf.mxu0
    %v11636 = vpop.f32.mrf.mxu0
    %v11637 = vadd.f32 %v11476, %v11636
    %v11638 = vpop.f32.mrf.mxu0
    %11639 = vmatprep.mubr.bf16.mxu0 %v9587
    %11640 = vmatmul.mubr.bf16.gmra.mxu0 %v9586
    %v11641 = vpop.f32.mrf.mxu0
    %v11642 = vadd.f32 %v11481, %v11641
    %v11643 = vpop.f32.mrf.mxu0
    %v11644 = vpop.f32.mrf.mxu0
    %v11645 = vadd.f32 %v11484, %v11644
    %v11646 = vpop.f32.mrf.mxu0
    %11647 = vmatprep.mubr.bf16.mxu0 %v9611
    %11648 = vmatmul.mubr.bf16.gmra.mxu0 %v9610
    %v11649 = vpop.f32.mrf.mxu0
    %v11650 = vadd.f32 %v11489, %v11649
    %v11651 = vpop.f32.mrf.mxu0
    %v11652 = vpop.f32.mrf.mxu0
    %v11653 = vadd.f32 %v11492, %v11652
    %v11654 = vpop.f32.mrf.mxu0
    %11655 = vdwg.mxu0
    %11656 = vmatprep.subr.bf16.mxu0 0
    %11657 = vmatpush1.bf16.msra.mxu0 %v10844
    %11658 = vmatprep.subr.bf16.mxu0 0
    %11659 = vmatpush1.bf16.msra.mxu0 %v10843
    %11660 = vmatprep.subr.bf16.mxu0 0
    %11661 = vmatpush1.bf16.msra.mxu0 %v10842
    %11662 = vmatprep.subr.bf16.mxu0 0
    %11663 = vmatpush1.bf16.msra.mxu0 %v10841
    %11664 = vmatprep.subr.bf16.mxu0 0
    %11665 = vmatpush1.bf16.msra.mxu0 %v10840
    %11666 = vmatprep.subr.bf16.mxu0 0
    %11667 = vmatpush1.bf16.msra.mxu0 %v10839
    %11668 = vmatprep.subr.bf16.mxu0 0
    %11669 = vmatpush1.bf16.msra.mxu0 %v10838
    %11670 = vmatprep.subr.bf16.mxu0 0
    %11671 = vmatpush1.bf16.msra.mxu0 %v10837
    %11672 = vmatprep.subr.bf16.mxu0 0
    %11673 = vmatpush2.bf16.msra.mxu0 %v10852
    %11674 = vmatprep.subr.bf16.mxu0 0
    %11675 = vmatpush2.bf16.msra.mxu0 %v10851
    %11676 = vmatprep.subr.bf16.mxu0 0
    %11677 = vmatpush2.bf16.msra.mxu0 %v10850
    %11678 = vmatprep.subr.bf16.mxu0 0
    %11679 = vmatpush2.bf16.msra.mxu0 %v10849
    %11680 = vmatprep.subr.bf16.mxu0 0
    %11681 = vmatpush2.bf16.msra.mxu0 %v10848
    %11682 = vmatprep.subr.bf16.mxu0 0
    %11683 = vmatpush2.bf16.msra.mxu0 %v10847
    %11684 = vmatprep.subr.bf16.mxu0 0
    %11685 = vmatpush2.bf16.msra.mxu0 %v10846
    %11686 = vmatprep.subr.bf16.mxu0 0
    %11687 = vmatpush2.bf16.msra.mxu0 %v10845
    %11688 = vmatprep.mubr.bf16.mxu0 %v9253
    %11689 = vmatmul.mubr.bf16.gmra.mxu0 %v9252
    %v11690 = vpop.f32.mrf.mxu0
    %v11691 = vadd.f32 %v11530, %v11690
    %v11692 = vpop.f32.mrf.mxu0
    %v11693 = vpop.f32.mrf.mxu0
    %v11694 = vadd.f32 %v11533, %v11693
    %v11695 = vpop.f32.mrf.mxu0
    %11696 = vmatprep.mubr.bf16.mxu0 %v9277
    %11697 = vmatmul.mubr.bf16.gmra.mxu0 %v9276
    %v11698 = vpop.f32.mrf.mxu0
    %v11699 = vadd.f32 %v11538, %v11698
    %v11700 = vpop.f32.mrf.mxu0
    %v11701 = vpop.f32.mrf.mxu0
    %v11702 = vadd.f32 %v11541, %v11701
    %v11703 = vpop.f32.mrf.mxu0
    %11704 = vmatprep.mubr.bf16.mxu0 %v9301
    %11705 = vmatmul.mubr.bf16.gmra.mxu0 %v9300
    %v11706 = vpop.f32.mrf.mxu0
    %v11707 = vadd.f32 %v11546, %v11706
    %v11708 = vpop.f32.mrf.mxu0
    %v11709 = vpop.f32.mrf.mxu0
    %v11710 = vadd.f32 %v11549, %v11709
    %v11711 = vpop.f32.mrf.mxu0
    %11712 = vmatprep.mubr.bf16.mxu0 %v9325
    %11713 = vmatmul.mubr.bf16.gmra.mxu0 %v9324
    %v11714 = vpop.f32.mrf.mxu0
    %v11715 = vadd.f32 %v11554, %v11714
    %v11716 = vpop.f32.mrf.mxu0
    %v11717 = vpop.f32.mrf.mxu0
    %v11718 = vadd.f32 %v11557, %v11717
    %v11719 = vpop.f32.mrf.mxu0
    %11720 = vmatprep.mubr.bf16.mxu0 %v9349
    %11721 = vmatmul.mubr.bf16.gmra.mxu0 %v9348
    %v11722 = vpop.f32.mrf.mxu0
    %v11723 = vadd.f32 %v11562, %v11722
    %v11724 = vpop.f32.mrf.mxu0
    %v11725 = vpop.f32.mrf.mxu0
    %v11726 = vadd.f32 %v11565, %v11725
    %v11727 = vpop.f32.mrf.mxu0
    %11728 = vmatprep.mubr.bf16.mxu0 %v9373
    %11729 = vmatmul.mubr.bf16.gmra.mxu0 %v9372
    %v11730 = vpop.f32.mrf.mxu0
    %v11731 = vadd.f32 %v11570, %v11730
    %v11732 = vpop.f32.mrf.mxu0
    %v11733 = vpop.f32.mrf.mxu0
    %v11734 = vadd.f32 %v11573, %v11733
    %v11735 = vpop.f32.mrf.mxu0
    %11736 = vmatprep.mubr.bf16.mxu0 %v9397
    %11737 = vmatmul.mubr.bf16.gmra.mxu0 %v9396
    %v11738 = vpop.f32.mrf.mxu0
    %v11739 = vadd.f32 %v11578, %v11738
    %v11740 = vpop.f32.mrf.mxu0
    %v11741 = vpop.f32.mrf.mxu0
    %v11742 = vadd.f32 %v11581, %v11741
    %v11743 = vpop.f32.mrf.mxu0
    %11744 = vmatprep.mubr.bf16.mxu0 %v9421
    %11745 = vmatmul.mubr.bf16.gmra.mxu0 %v9420
    %v11746 = vpop.f32.mrf.mxu0
    %v11747 = vadd.f32 %v11586, %v11746
    %v11748 = vpop.f32.mrf.mxu0
    %v11749 = vpop.f32.mrf.mxu0
    %v11750 = vadd.f32 %v11589, %v11749
    %v11751 = vpop.f32.mrf.mxu0
    %11752 = vmatprep.mubr.bf16.mxu0 %v9445
    %11753 = vmatmul.mubr.bf16.gmra.mxu0 %v9444
    %v11754 = vpop.f32.mrf.mxu0
    %v11755 = vadd.f32 %v11594, %v11754
    %v11756 = vpop.f32.mrf.mxu0
    %v11757 = vpop.f32.mrf.mxu0
    %v11758 = vadd.f32 %v11597, %v11757
    %v11759 = vpop.f32.mrf.mxu0
    %11760 = vmatprep.mubr.bf16.mxu0 %v9469
    %11761 = vmatmul.mubr.bf16.gmra.mxu0 %v9468
    %v11762 = vpop.f32.mrf.mxu0
    %v11763 = vadd.f32 %v11602, %v11762
    %v11764 = vpop.f32.mrf.mxu0
    %v11765 = vpop.f32.mrf.mxu0
    %v11766 = vadd.f32 %v11605, %v11765
    %v11767 = vpop.f32.mrf.mxu0
    %11768 = vmatprep.mubr.bf16.mxu0 %v9493
    %11769 = vmatmul.mubr.bf16.gmra.mxu0 %v9492
    %v11770 = vpop.f32.mrf.mxu0
    %v11771 = vadd.f32 %v11610, %v11770
    %v11772 = vpop.f32.mrf.mxu0
    %v11773 = vpop.f32.mrf.mxu0
    %v11774 = vadd.f32 %v11613, %v11773
    %v11775 = vpop.f32.mrf.mxu0
    %11776 = vmatprep.mubr.bf16.mxu0 %v9517
    %11777 = vmatmul.mubr.bf16.gmra.mxu0 %v9516
    %v11778 = vpop.f32.mrf.mxu0
    %v11779 = vadd.f32 %v11618, %v11778
    %v11780 = vpop.f32.mrf.mxu0
    %v11781 = vpop.f32.mrf.mxu0
    %v11782 = vadd.f32 %v11621, %v11781
    %v11783 = vpop.f32.mrf.mxu0
    %11784 = vmatprep.mubr.bf16.mxu0 %v9541
    %11785 = vmatmul.mubr.bf16.gmra.mxu0 %v9540
    %v11786 = vpop.f32.mrf.mxu0
    %v11787 = vadd.f32 %v11626, %v11786
    %v11788 = vpop.f32.mrf.mxu0
    %v11789 = vpop.f32.mrf.mxu0
    %v11790 = vadd.f32 %v11629, %v11789
    %v11791 = vpop.f32.mrf.mxu0
    %11792 = vmatprep.mubr.bf16.mxu0 %v9565
    %11793 = vmatmul.mubr.bf16.gmra.mxu0 %v9564
    %v11794 = vpop.f32.mrf.mxu0
    %v11795 = vadd.f32 %v11634, %v11794
    %v11796 = vpop.f32.mrf.mxu0
    %v11797 = vpop.f32.mrf.mxu0
    %v11798 = vadd.f32 %v11637, %v11797
    %v11799 = vpop.f32.mrf.mxu0
    %11800 = vmatprep.mubr.bf16.mxu0 %v9589
    %11801 = vmatmul.mubr.bf16.gmra.mxu0 %v9588
    %v11802 = vpop.f32.mrf.mxu0
    %v11803 = vadd.f32 %v11642, %v11802
    %v11804 = vpop.f32.mrf.mxu0
    %v11805 = vpop.f32.mrf.mxu0
    %v11806 = vadd.f32 %v11645, %v11805
    %v11807 = vpop.f32.mrf.mxu0
    %11808 = vmatprep.mubr.bf16.mxu0 %v9613
    %11809 = vmatmul.mubr.bf16.gmra.mxu0 %v9612
    %v11810 = vpop.f32.mrf.mxu0
    %v11811 = vadd.f32 %v11650, %v11810
    %v11812 = vpop.f32.mrf.mxu0
    %v11813 = vpop.f32.mrf.mxu0
    %v11814 = vadd.f32 %v11653, %v11813
    %v11815 = vpop.f32.mrf.mxu0
    %11816 = vdwg.mxu0
    %11817 = vmatprep.subr.bf16.mxu0 0
    %11818 = vmatpush1.bf16.msra.mxu0 %v10860
    %11819 = vmatprep.subr.bf16.mxu0 0
    %11820 = vmatpush1.bf16.msra.mxu0 %v10859
    %11821 = vmatprep.subr.bf16.mxu0 0
    %11822 = vmatpush1.bf16.msra.mxu0 %v10858
    %11823 = vmatprep.subr.bf16.mxu0 0
    %11824 = vmatpush1.bf16.msra.mxu0 %v10857
    %11825 = vmatprep.subr.bf16.mxu0 0
    %11826 = vmatpush1.bf16.msra.mxu0 %v10856
    %11827 = vmatprep.subr.bf16.mxu0 0
    %11828 = vmatpush1.bf16.msra.mxu0 %v10855
    %11829 = vmatprep.subr.bf16.mxu0 0
    %11830 = vmatpush1.bf16.msra.mxu0 %v10854
    %11831 = vmatprep.subr.bf16.mxu0 0
    %11832 = vmatpush1.bf16.msra.mxu0 %v10853
    %11833 = vmatprep.subr.bf16.mxu0 0
    %11834 = vmatpush2.bf16.msra.mxu0 %v10868
    %11835 = vmatprep.subr.bf16.mxu0 0
    %11836 = vmatpush2.bf16.msra.mxu0 %v10867
    %11837 = vmatprep.subr.bf16.mxu0 0
    %11838 = vmatpush2.bf16.msra.mxu0 %v10866
    %11839 = vmatprep.subr.bf16.mxu0 0
    %11840 = vmatpush2.bf16.msra.mxu0 %v10865
    %11841 = vmatprep.subr.bf16.mxu0 0
    %11842 = vmatpush2.bf16.msra.mxu0 %v10864
    %11843 = vmatprep.subr.bf16.mxu0 0
    %11844 = vmatpush2.bf16.msra.mxu0 %v10863
    %11845 = vmatprep.subr.bf16.mxu0 0
    %11846 = vmatpush2.bf16.msra.mxu0 %v10862
    %11847 = vmatprep.subr.bf16.mxu0 0
    %11848 = vmatpush2.bf16.msra.mxu0 %v10861
    %11849 = vmatprep.mubr.bf16.mxu0 %v9255
    %11850 = vmatmul.mubr.bf16.gmra.mxu0 %v9254
    %v11851 = vpop.f32.mrf.mxu0
    %v11852 = vadd.f32 %v11691, %v11851
    %v11853 = vpop.f32.mrf.mxu0
    %v11854 = vpop.f32.mrf.mxu0
    %v11855 = vadd.f32 %v11694, %v11854
    %v11856 = vpop.f32.mrf.mxu0
    %11857 = vmatprep.mubr.bf16.mxu0 %v9279
    %11858 = vmatmul.mubr.bf16.gmra.mxu0 %v9278
    %v11859 = vpop.f32.mrf.mxu0
    %v11860 = vadd.f32 %v11699, %v11859
    %v11861 = vpop.f32.mrf.mxu0
    %v11862 = vpop.f32.mrf.mxu0
    %v11863 = vadd.f32 %v11702, %v11862
    %v11864 = vpop.f32.mrf.mxu0
    %11865 = vmatprep.mubr.bf16.mxu0 %v9303
    %11866 = vmatmul.mubr.bf16.gmra.mxu0 %v9302
    %v11867 = vpop.f32.mrf.mxu0
    %v11868 = vadd.f32 %v11707, %v11867
    %v11869 = vpop.f32.mrf.mxu0
    %v11870 = vpop.f32.mrf.mxu0
    %v11871 = vadd.f32 %v11710, %v11870
    %v11872 = vpop.f32.mrf.mxu0
    %11873 = vmatprep.mubr.bf16.mxu0 %v9327
    %11874 = vmatmul.mubr.bf16.gmra.mxu0 %v9326
    %v11875 = vpop.f32.mrf.mxu0
    %v11876 = vadd.f32 %v11715, %v11875
    %v11877 = vpop.f32.mrf.mxu0
    %v11878 = vpop.f32.mrf.mxu0
    %v11879 = vadd.f32 %v11718, %v11878
    %v11880 = vpop.f32.mrf.mxu0
    %11881 = vmatprep.mubr.bf16.mxu0 %v9351
    %11882 = vmatmul.mubr.bf16.gmra.mxu0 %v9350
    %v11883 = vpop.f32.mrf.mxu0
    %v11884 = vadd.f32 %v11723, %v11883
    %v11885 = vpop.f32.mrf.mxu0
    %v11886 = vpop.f32.mrf.mxu0
    %v11887 = vadd.f32 %v11726, %v11886
    %v11888 = vpop.f32.mrf.mxu0
    %11889 = vmatprep.mubr.bf16.mxu0 %v9375
    %11890 = vmatmul.mubr.bf16.gmra.mxu0 %v9374
    %v11891 = vpop.f32.mrf.mxu0
    %v11892 = vadd.f32 %v11731, %v11891
    %v11893 = vpop.f32.mrf.mxu0
    %v11894 = vpop.f32.mrf.mxu0
    %v11895 = vadd.f32 %v11734, %v11894
    %v11896 = vpop.f32.mrf.mxu0
    %11897 = vmatprep.mubr.bf16.mxu0 %v9399
    %11898 = vmatmul.mubr.bf16.gmra.mxu0 %v9398
    %v11899 = vpop.f32.mrf.mxu0
    %v11900 = vadd.f32 %v11739, %v11899
    %v11901 = vpop.f32.mrf.mxu0
    %v11902 = vpop.f32.mrf.mxu0
    %v11903 = vadd.f32 %v11742, %v11902
    %v11904 = vpop.f32.mrf.mxu0
    %11905 = vmatprep.mubr.bf16.mxu0 %v9423
    %11906 = vmatmul.mubr.bf16.gmra.mxu0 %v9422
    %v11907 = vpop.f32.mrf.mxu0
    %v11908 = vadd.f32 %v11747, %v11907
    %v11909 = vpop.f32.mrf.mxu0
    %v11910 = vpop.f32.mrf.mxu0
    %v11911 = vadd.f32 %v11750, %v11910
    %v11912 = vpop.f32.mrf.mxu0
    %11913 = vmatprep.mubr.bf16.mxu0 %v9447
    %11914 = vmatmul.mubr.bf16.gmra.mxu0 %v9446
    %v11915 = vpop.f32.mrf.mxu0
    %v11916 = vadd.f32 %v11755, %v11915
    %v11917 = vpop.f32.mrf.mxu0
    %v11918 = vpop.f32.mrf.mxu0
    %v11919 = vadd.f32 %v11758, %v11918
    %v11920 = vpop.f32.mrf.mxu0
    %11921 = vmatprep.mubr.bf16.mxu0 %v9471
    %11922 = vmatmul.mubr.bf16.gmra.mxu0 %v9470
    %v11923 = vpop.f32.mrf.mxu0
    %v11924 = vadd.f32 %v11763, %v11923
    %v11925 = vpop.f32.mrf.mxu0
    %v11926 = vpop.f32.mrf.mxu0
    %v11927 = vadd.f32 %v11766, %v11926
    %v11928 = vpop.f32.mrf.mxu0
    %11929 = vmatprep.mubr.bf16.mxu0 %v9495
    %11930 = vmatmul.mubr.bf16.gmra.mxu0 %v9494
    %v11931 = vpop.f32.mrf.mxu0
    %v11932 = vadd.f32 %v11771, %v11931
    %v11933 = vpop.f32.mrf.mxu0
    %v11934 = vpop.f32.mrf.mxu0
    %v11935 = vadd.f32 %v11774, %v11934
    %v11936 = vpop.f32.mrf.mxu0
    %11937 = vmatprep.mubr.bf16.mxu0 %v9519
    %11938 = vmatmul.mubr.bf16.gmra.mxu0 %v9518
    %v11939 = vpop.f32.mrf.mxu0
    %v11940 = vadd.f32 %v11779, %v11939
    %v11941 = vpop.f32.mrf.mxu0
    %v11942 = vpop.f32.mrf.mxu0
    %v11943 = vadd.f32 %v11782, %v11942
    %v11944 = vpop.f32.mrf.mxu0
    %11945 = vmatprep.mubr.bf16.mxu0 %v9543
    %11946 = vmatmul.mubr.bf16.gmra.mxu0 %v9542
    %v11947 = vpop.f32.mrf.mxu0
    %v11948 = vadd.f32 %v11787, %v11947
    %v11949 = vpop.f32.mrf.mxu0
    %v11950 = vpop.f32.mrf.mxu0
    %v11951 = vadd.f32 %v11790, %v11950
    %v11952 = vpop.f32.mrf.mxu0
    %11953 = vmatprep.mubr.bf16.mxu0 %v9567
    %11954 = vmatmul.mubr.bf16.gmra.mxu0 %v9566
    %v11955 = vpop.f32.mrf.mxu0
    %v11956 = vadd.f32 %v11795, %v11955
    %v11957 = vpop.f32.mrf.mxu0
    %v11958 = vpop.f32.mrf.mxu0
    %v11959 = vadd.f32 %v11798, %v11958
    %v11960 = vpop.f32.mrf.mxu0
    %11961 = vmatprep.mubr.bf16.mxu0 %v9591
    %11962 = vmatmul.mubr.bf16.gmra.mxu0 %v9590
    %v11963 = vpop.f32.mrf.mxu0
    %v11964 = vadd.f32 %v11803, %v11963
    %v11965 = vpop.f32.mrf.mxu0
    %v11966 = vpop.f32.mrf.mxu0
    %v11967 = vadd.f32 %v11806, %v11966
    %v11968 = vpop.f32.mrf.mxu0
    %11969 = vmatprep.mubr.bf16.mxu0 %v9615
    %11970 = vmatmul.mubr.bf16.gmra.mxu0 %v9614
    %v11971 = vpop.f32.mrf.mxu0
    %v11972 = vadd.f32 %v11811, %v11971
    %v11973 = vpop.f32.mrf.mxu0
    %v11974 = vpop.f32.mrf.mxu0
    %v11975 = vadd.f32 %v11814, %v11974
    %v11976 = vpop.f32.mrf.mxu0
    %11977 = vdwg.mxu0
    %11978 = vmatprep.subr.bf16.mxu0 0
    %11979 = vmatpush1.bf16.msra.mxu0 %v10876
    %11980 = vmatprep.subr.bf16.mxu0 0
    %11981 = vmatpush1.bf16.msra.mxu0 %v10875
    %11982 = vmatprep.subr.bf16.mxu0 0
    %11983 = vmatpush1.bf16.msra.mxu0 %v10874
    %11984 = vmatprep.subr.bf16.mxu0 0
    %11985 = vmatpush1.bf16.msra.mxu0 %v10873
    %11986 = vmatprep.subr.bf16.mxu0 0
    %11987 = vmatpush1.bf16.msra.mxu0 %v10872
    %11988 = vmatprep.subr.bf16.mxu0 0
    %11989 = vmatpush1.bf16.msra.mxu0 %v10871
    %11990 = vmatprep.subr.bf16.mxu0 0
    %11991 = vmatpush1.bf16.msra.mxu0 %v10870
    %11992 = vmatprep.subr.bf16.mxu0 0
    %11993 = vmatpush1.bf16.msra.mxu0 %v10869
    %11994 = vmatprep.subr.bf16.mxu0 0
    %11995 = vmatpush2.bf16.msra.mxu0 %v10884
    %11996 = vmatprep.subr.bf16.mxu0 0
    %11997 = vmatpush2.bf16.msra.mxu0 %v10883
    %11998 = vmatprep.subr.bf16.mxu0 0
    %11999 = vmatpush2.bf16.msra.mxu0 %v10882
    %12000 = vmatprep.subr.bf16.mxu0 0
    %12001 = vmatpush2.bf16.msra.mxu0 %v10881
    %12002 = vmatprep.subr.bf16.mxu0 0
    %12003 = vmatpush2.bf16.msra.mxu0 %v10880
    %12004 = vmatprep.subr.bf16.mxu0 0
    %12005 = vmatpush2.bf16.msra.mxu0 %v10879
    %12006 = vmatprep.subr.bf16.mxu0 0
    %12007 = vmatpush2.bf16.msra.mxu0 %v10878
    %12008 = vmatprep.subr.bf16.mxu0 0
    %12009 = vmatpush2.bf16.msra.mxu0 %v10877
    %12010 = vmatprep.mubr.bf16.mxu0 %v9257
    %12011 = vmatmul.mubr.bf16.gmra.mxu0 %v9256
    %v12012 = vpop.f32.mrf.mxu0
    %v12013 = vadd.f32 %v11852, %v12012
    %v12014 = vpop.f32.mrf.mxu0
    %v12015 = vpop.f32.mrf.mxu0
    %v12016 = vadd.f32 %v11855, %v12015
    %v12017 = vpop.f32.mrf.mxu0
    %12018 = vmatprep.mubr.bf16.mxu0 %v9281
    %12019 = vmatmul.mubr.bf16.gmra.mxu0 %v9280
    %v12020 = vpop.f32.mrf.mxu0
    %v12021 = vadd.f32 %v11860, %v12020
    %v12022 = vpop.f32.mrf.mxu0
    %v12023 = vpop.f32.mrf.mxu0
    %v12024 = vadd.f32 %v11863, %v12023
    %v12025 = vpop.f32.mrf.mxu0
    %12026 = vmatprep.mubr.bf16.mxu0 %v9305
    %12027 = vmatmul.mubr.bf16.gmra.mxu0 %v9304
    %v12028 = vpop.f32.mrf.mxu0
    %v12029 = vadd.f32 %v11868, %v12028
    %v12030 = vpop.f32.mrf.mxu0
    %v12031 = vpop.f32.mrf.mxu0
    %v12032 = vadd.f32 %v11871, %v12031
    %v12033 = vpop.f32.mrf.mxu0
    %12034 = vmatprep.mubr.bf16.mxu0 %v9329
    %12035 = vmatmul.mubr.bf16.gmra.mxu0 %v9328
    %v12036 = vpop.f32.mrf.mxu0
    %v12037 = vadd.f32 %v11876, %v12036
    %v12038 = vpop.f32.mrf.mxu0
    %v12039 = vpop.f32.mrf.mxu0
    %v12040 = vadd.f32 %v11879, %v12039
    %v12041 = vpop.f32.mrf.mxu0
    %12042 = vmatprep.mubr.bf16.mxu0 %v9353
    %12043 = vmatmul.mubr.bf16.gmra.mxu0 %v9352
    %v12044 = vpop.f32.mrf.mxu0
    %v12045 = vadd.f32 %v11884, %v12044
    %v12046 = vpop.f32.mrf.mxu0
    %v12047 = vpop.f32.mrf.mxu0
    %v12048 = vadd.f32 %v11887, %v12047
    %v12049 = vpop.f32.mrf.mxu0
    %12050 = vmatprep.mubr.bf16.mxu0 %v9377
    %12051 = vmatmul.mubr.bf16.gmra.mxu0 %v9376
    %v12052 = vpop.f32.mrf.mxu0
    %v12053 = vadd.f32 %v11892, %v12052
    %v12054 = vpop.f32.mrf.mxu0
    %v12055 = vpop.f32.mrf.mxu0
    %v12056 = vadd.f32 %v11895, %v12055
    %v12057 = vpop.f32.mrf.mxu0
    %12058 = vmatprep.mubr.bf16.mxu0 %v9401
    %12059 = vmatmul.mubr.bf16.gmra.mxu0 %v9400
    %v12060 = vpop.f32.mrf.mxu0
    %v12061 = vadd.f32 %v11900, %v12060
    %v12062 = vpop.f32.mrf.mxu0
    %v12063 = vpop.f32.mrf.mxu0
    %v12064 = vadd.f32 %v11903, %v12063
    %v12065 = vpop.f32.mrf.mxu0
    %12066 = vmatprep.mubr.bf16.mxu0 %v9425
    %12067 = vmatmul.mubr.bf16.gmra.mxu0 %v9424
    %v12068 = vpop.f32.mrf.mxu0
    %v12069 = vadd.f32 %v11908, %v12068
    %v12070 = vpop.f32.mrf.mxu0
    %v12071 = vpop.f32.mrf.mxu0
    %v12072 = vadd.f32 %v11911, %v12071
    %v12073 = vpop.f32.mrf.mxu0
    %12074 = vmatprep.mubr.bf16.mxu0 %v9449
    %12075 = vmatmul.mubr.bf16.gmra.mxu0 %v9448
    %v12076 = vpop.f32.mrf.mxu0
    %v12077 = vadd.f32 %v11916, %v12076
    %v12078 = vpop.f32.mrf.mxu0
    %v12079 = vpop.f32.mrf.mxu0
    %v12080 = vadd.f32 %v11919, %v12079
    %v12081 = vpop.f32.mrf.mxu0
    %12082 = vmatprep.mubr.bf16.mxu0 %v9473
    %12083 = vmatmul.mubr.bf16.gmra.mxu0 %v9472
    %v12084 = vpop.f32.mrf.mxu0
    %v12085 = vadd.f32 %v11924, %v12084
    %v12086 = vpop.f32.mrf.mxu0
    %v12087 = vpop.f32.mrf.mxu0
    %v12088 = vadd.f32 %v11927, %v12087
    %v12089 = vpop.f32.mrf.mxu0
    %12090 = vmatprep.mubr.bf16.mxu0 %v9497
    %12091 = vmatmul.mubr.bf16.gmra.mxu0 %v9496
    %v12092 = vpop.f32.mrf.mxu0
    %v12093 = vadd.f32 %v11932, %v12092
    %v12094 = vpop.f32.mrf.mxu0
    %v12095 = vpop.f32.mrf.mxu0
    %v12096 = vadd.f32 %v11935, %v12095
    %v12097 = vpop.f32.mrf.mxu0
    %12098 = vmatprep.mubr.bf16.mxu0 %v9521
    %12099 = vmatmul.mubr.bf16.gmra.mxu0 %v9520
    %v12100 = vpop.f32.mrf.mxu0
    %v12101 = vadd.f32 %v11940, %v12100
    %v12102 = vpop.f32.mrf.mxu0
    %v12103 = vpop.f32.mrf.mxu0
    %v12104 = vadd.f32 %v11943, %v12103
    %v12105 = vpop.f32.mrf.mxu0
    %12106 = vmatprep.mubr.bf16.mxu0 %v9545
    %12107 = vmatmul.mubr.bf16.gmra.mxu0 %v9544
    %v12108 = vpop.f32.mrf.mxu0
    %v12109 = vadd.f32 %v11948, %v12108
    %v12110 = vpop.f32.mrf.mxu0
    %v12111 = vpop.f32.mrf.mxu0
    %v12112 = vadd.f32 %v11951, %v12111
    %v12113 = vpop.f32.mrf.mxu0
    %12114 = vmatprep.mubr.bf16.mxu0 %v9569
    %12115 = vmatmul.mubr.bf16.gmra.mxu0 %v9568
    %v12116 = vpop.f32.mrf.mxu0
    %v12117 = vadd.f32 %v11956, %v12116
    %v12118 = vpop.f32.mrf.mxu0
    %v12119 = vpop.f32.mrf.mxu0
    %v12120 = vadd.f32 %v11959, %v12119
    %v12121 = vpop.f32.mrf.mxu0
    %12122 = vmatprep.mubr.bf16.mxu0 %v9593
    %12123 = vmatmul.mubr.bf16.gmra.mxu0 %v9592
    %v12124 = vpop.f32.mrf.mxu0
    %v12125 = vadd.f32 %v11964, %v12124
    %v12126 = vpop.f32.mrf.mxu0
    %v12127 = vpop.f32.mrf.mxu0
    %v12128 = vadd.f32 %v11967, %v12127
    %v12129 = vpop.f32.mrf.mxu0
    %12130 = vmatprep.mubr.bf16.mxu0 %v9617
    %12131 = vmatmul.mubr.bf16.gmra.mxu0 %v9616
    %v12132 = vpop.f32.mrf.mxu0
    %v12133 = vadd.f32 %v11972, %v12132
    %v12134 = vpop.f32.mrf.mxu0
    %v12135 = vpop.f32.mrf.mxu0
    %v12136 = vadd.f32 %v11975, %v12135
    %v12137 = vpop.f32.mrf.mxu0
    %12138 = vdwg.mxu0
    %12139 = vmatprep.subr.bf16.mxu0 0
    %12140 = vmatpush1.bf16.msra.mxu0 %v10892
    %12141 = vmatprep.subr.bf16.mxu0 0
    %12142 = vmatpush1.bf16.msra.mxu0 %v10891
    %12143 = vmatprep.subr.bf16.mxu0 0
    %12144 = vmatpush1.bf16.msra.mxu0 %v10890
    %12145 = vmatprep.subr.bf16.mxu0 0
    %12146 = vmatpush1.bf16.msra.mxu0 %v10889
    %12147 = vmatprep.subr.bf16.mxu0 0
    %12148 = vmatpush1.bf16.msra.mxu0 %v10888
    %12149 = vmatprep.subr.bf16.mxu0 0
    %12150 = vmatpush1.bf16.msra.mxu0 %v10887
    %12151 = vmatprep.subr.bf16.mxu0 0
    %12152 = vmatpush1.bf16.msra.mxu0 %v10886
    %12153 = vmatprep.subr.bf16.mxu0 0
    %12154 = vmatpush1.bf16.msra.mxu0 %v10885
    %12155 = vmatprep.subr.bf16.mxu0 0
    %12156 = vmatpush2.bf16.msra.mxu0 %v10900
    %12157 = vmatprep.subr.bf16.mxu0 0
    %12158 = vmatpush2.bf16.msra.mxu0 %v10899
    %12159 = vmatprep.subr.bf16.mxu0 0
    %12160 = vmatpush2.bf16.msra.mxu0 %v10898
    %12161 = vmatprep.subr.bf16.mxu0 0
    %12162 = vmatpush2.bf16.msra.mxu0 %v10897
    %12163 = vmatprep.subr.bf16.mxu0 0
    %12164 = vmatpush2.bf16.msra.mxu0 %v10896
    %12165 = vmatprep.subr.bf16.mxu0 0
    %12166 = vmatpush2.bf16.msra.mxu0 %v10895
    %12167 = vmatprep.subr.bf16.mxu0 0
    %12168 = vmatpush2.bf16.msra.mxu0 %v10894
    %12169 = vmatprep.subr.bf16.mxu0 0
    %12170 = vmatpush2.bf16.msra.mxu0 %v10893
    %12171 = vmatprep.mubr.bf16.mxu0 %v9259
    %12172 = vmatmul.mubr.bf16.gmra.mxu0 %v9258
    %v12173 = vpop.f32.mrf.mxu0
    %v12174 = vadd.f32 %v12013, %v12173
    %v12175 = vpop.f32.mrf.mxu0
    %v12176 = vpop.f32.mrf.mxu0
    %v12177 = vadd.f32 %v12016, %v12176
    %v12178 = vpop.f32.mrf.mxu0
    %12179 = vmatprep.mubr.bf16.mxu0 %v9283
    %12180 = vmatmul.mubr.bf16.gmra.mxu0 %v9282
    %v12181 = vpop.f32.mrf.mxu0
    %v12182 = vadd.f32 %v12021, %v12181
    %v12183 = vpop.f32.mrf.mxu0
    %v12184 = vpop.f32.mrf.mxu0
    %v12185 = vadd.f32 %v12024, %v12184
    %v12186 = vpop.f32.mrf.mxu0
    %12187 = vmatprep.mubr.bf16.mxu0 %v9307
    %12188 = vmatmul.mubr.bf16.gmra.mxu0 %v9306
    %v12189 = vpop.f32.mrf.mxu0
    %v12190 = vadd.f32 %v12029, %v12189
    %v12191 = vpop.f32.mrf.mxu0
    %v12192 = vpop.f32.mrf.mxu0
    %v12193 = vadd.f32 %v12032, %v12192
    %v12194 = vpop.f32.mrf.mxu0
    %12195 = vmatprep.mubr.bf16.mxu0 %v9331
    %12196 = vmatmul.mubr.bf16.gmra.mxu0 %v9330
    %v12197 = vpop.f32.mrf.mxu0
    %v12198 = vadd.f32 %v12037, %v12197
    %v12199 = vpop.f32.mrf.mxu0
    %v12200 = vpop.f32.mrf.mxu0
    %v12201 = vadd.f32 %v12040, %v12200
    %v12202 = vpop.f32.mrf.mxu0
    %12203 = vmatprep.mubr.bf16.mxu0 %v9355
    %12204 = vmatmul.mubr.bf16.gmra.mxu0 %v9354
    %v12205 = vpop.f32.mrf.mxu0
    %v12206 = vadd.f32 %v12045, %v12205
    %v12207 = vpop.f32.mrf.mxu0
    %v12208 = vpop.f32.mrf.mxu0
    %v12209 = vadd.f32 %v12048, %v12208
    %v12210 = vpop.f32.mrf.mxu0
    %12211 = vmatprep.mubr.bf16.mxu0 %v9379
    %12212 = vmatmul.mubr.bf16.gmra.mxu0 %v9378
    %v12213 = vpop.f32.mrf.mxu0
    %v12214 = vadd.f32 %v12053, %v12213
    %v12215 = vpop.f32.mrf.mxu0
    %v12216 = vpop.f32.mrf.mxu0
    %v12217 = vadd.f32 %v12056, %v12216
    %v12218 = vpop.f32.mrf.mxu0
    %12219 = vmatprep.mubr.bf16.mxu0 %v9403
    %12220 = vmatmul.mubr.bf16.gmra.mxu0 %v9402
    %v12221 = vpop.f32.mrf.mxu0
    %v12222 = vadd.f32 %v12061, %v12221
    %v12223 = vpop.f32.mrf.mxu0
    %v12224 = vpop.f32.mrf.mxu0
    %v12225 = vadd.f32 %v12064, %v12224
    %v12226 = vpop.f32.mrf.mxu0
    %12227 = vmatprep.mubr.bf16.mxu0 %v9427
    %12228 = vmatmul.mubr.bf16.gmra.mxu0 %v9426
    %v12229 = vpop.f32.mrf.mxu0
    %v12230 = vadd.f32 %v12069, %v12229
    %v12231 = vpop.f32.mrf.mxu0
    %v12232 = vpop.f32.mrf.mxu0
    %v12233 = vadd.f32 %v12072, %v12232
    %v12234 = vpop.f32.mrf.mxu0
    %12235 = vmatprep.mubr.bf16.mxu0 %v9451
    %12236 = vmatmul.mubr.bf16.gmra.mxu0 %v9450
    %v12237 = vpop.f32.mrf.mxu0
    %v12238 = vadd.f32 %v12077, %v12237
    %v12239 = vpop.f32.mrf.mxu0
    %v12240 = vpop.f32.mrf.mxu0
    %v12241 = vadd.f32 %v12080, %v12240
    %v12242 = vpop.f32.mrf.mxu0
    %12243 = vmatprep.mubr.bf16.mxu0 %v9475
    %12244 = vmatmul.mubr.bf16.gmra.mxu0 %v9474
    %v12245 = vpop.f32.mrf.mxu0
    %v12246 = vadd.f32 %v12085, %v12245
    %v12247 = vpop.f32.mrf.mxu0
    %v12248 = vpop.f32.mrf.mxu0
    %v12249 = vadd.f32 %v12088, %v12248
    %v12250 = vpop.f32.mrf.mxu0
    %12251 = vmatprep.mubr.bf16.mxu0 %v9499
    %12252 = vmatmul.mubr.bf16.gmra.mxu0 %v9498
    %v12253 = vpop.f32.mrf.mxu0
    %v12254 = vadd.f32 %v12093, %v12253
    %v12255 = vpop.f32.mrf.mxu0
    %v12256 = vpop.f32.mrf.mxu0
    %v12257 = vadd.f32 %v12096, %v12256
    %v12258 = vpop.f32.mrf.mxu0
    %12259 = vmatprep.mubr.bf16.mxu0 %v9523
    %12260 = vmatmul.mubr.bf16.gmra.mxu0 %v9522
    %v12261 = vpop.f32.mrf.mxu0
    %v12262 = vadd.f32 %v12101, %v12261
    %v12263 = vpop.f32.mrf.mxu0
    %v12264 = vpop.f32.mrf.mxu0
    %v12265 = vadd.f32 %v12104, %v12264
    %v12266 = vpop.f32.mrf.mxu0
    %12267 = vmatprep.mubr.bf16.mxu0 %v9547
    %12268 = vmatmul.mubr.bf16.gmra.mxu0 %v9546
    %v12269 = vpop.f32.mrf.mxu0
    %v12270 = vadd.f32 %v12109, %v12269
    %v12271 = vpop.f32.mrf.mxu0
    %v12272 = vpop.f32.mrf.mxu0
    %v12273 = vadd.f32 %v12112, %v12272
    %v12274 = vpop.f32.mrf.mxu0
    %12275 = vmatprep.mubr.bf16.mxu0 %v9571
    %12276 = vmatmul.mubr.bf16.gmra.mxu0 %v9570
    %v12277 = vpop.f32.mrf.mxu0
    %v12278 = vadd.f32 %v12117, %v12277
    %v12279 = vpop.f32.mrf.mxu0
    %v12280 = vpop.f32.mrf.mxu0
    %v12281 = vadd.f32 %v12120, %v12280
    %v12282 = vpop.f32.mrf.mxu0
    %12283 = vmatprep.mubr.bf16.mxu0 %v9595
    %12284 = vmatmul.mubr.bf16.gmra.mxu0 %v9594
    %v12285 = vpop.f32.mrf.mxu0
    %v12286 = vadd.f32 %v12125, %v12285
    %v12287 = vpop.f32.mrf.mxu0
    %v12288 = vpop.f32.mrf.mxu0
    %v12289 = vadd.f32 %v12128, %v12288
    %v12290 = vpop.f32.mrf.mxu0
    %12291 = vmatprep.mubr.bf16.mxu0 %v9619
    %12292 = vmatmul.mubr.bf16.gmra.mxu0 %v9618
    %v12293 = vpop.f32.mrf.mxu0
    %v12294 = vadd.f32 %v12133, %v12293
    %v12295 = vpop.f32.mrf.mxu0
    %v12296 = vpop.f32.mrf.mxu0
    %v12297 = vadd.f32 %v12136, %v12296
    %v12298 = vpop.f32.mrf.mxu0
    %12299 = vdwg.mxu0
    %12300 = vmatprep.subr.bf16.mxu0 0
    %12301 = vmatpush1.bf16.msra.mxu0 %v10908
    %12302 = vmatprep.subr.bf16.mxu0 0
    %12303 = vmatpush1.bf16.msra.mxu0 %v10907
    %12304 = vmatprep.subr.bf16.mxu0 0
    %12305 = vmatpush1.bf16.msra.mxu0 %v10906
    %12306 = vmatprep.subr.bf16.mxu0 0
    %12307 = vmatpush1.bf16.msra.mxu0 %v10905
    %12308 = vmatprep.subr.bf16.mxu0 0
    %12309 = vmatpush1.bf16.msra.mxu0 %v10904
    %12310 = vmatprep.subr.bf16.mxu0 0
    %12311 = vmatpush1.bf16.msra.mxu0 %v10903
    %12312 = vmatprep.subr.bf16.mxu0 0
    %12313 = vmatpush1.bf16.msra.mxu0 %v10902
    %12314 = vmatprep.subr.bf16.mxu0 0
    %12315 = vmatpush1.bf16.msra.mxu0 %v10901
    %12316 = vmatprep.subr.bf16.mxu0 0
    %12317 = vmatpush2.bf16.msra.mxu0 %v10916
    %12318 = vmatprep.subr.bf16.mxu0 0
    %12319 = vmatpush2.bf16.msra.mxu0 %v10915
    %12320 = vmatprep.subr.bf16.mxu0 0
    %12321 = vmatpush2.bf16.msra.mxu0 %v10914
    %12322 = vmatprep.subr.bf16.mxu0 0
    %12323 = vmatpush2.bf16.msra.mxu0 %v10913
    %12324 = vmatprep.subr.bf16.mxu0 0
    %12325 = vmatpush2.bf16.msra.mxu0 %v10912
    %12326 = vmatprep.subr.bf16.mxu0 0
    %12327 = vmatpush2.bf16.msra.mxu0 %v10911
    %12328 = vmatprep.subr.bf16.mxu0 0
    %12329 = vmatpush2.bf16.msra.mxu0 %v10910
    %12330 = vmatprep.subr.bf16.mxu0 0
    %12331 = vmatpush2.bf16.msra.mxu0 %v10909
    %12332 = vmatprep.mubr.bf16.mxu0 %v9261
    %12333 = vmatmul.mubr.bf16.gmra.mxu0 %v9260
    %v12334 = vpop.f32.mrf.mxu0
    %v12335 = vadd.f32 %v12174, %v12334
    %v12336 = vpop.f32.mrf.mxu0
    %v12337 = vpop.f32.mrf.mxu0
    %v12338 = vadd.f32 %v12177, %v12337
    %v12339 = vpop.f32.mrf.mxu0
    %12340 = vmatprep.mubr.bf16.mxu0 %v9285
    %12341 = vmatmul.mubr.bf16.gmra.mxu0 %v9284
    %v12342 = vpop.f32.mrf.mxu0
    %v12343 = vadd.f32 %v12182, %v12342
    %v12344 = vpop.f32.mrf.mxu0
    %v12345 = vpop.f32.mrf.mxu0
    %v12346 = vadd.f32 %v12185, %v12345
    %v12347 = vpop.f32.mrf.mxu0
    %12348 = vmatprep.mubr.bf16.mxu0 %v9309
    %12349 = vmatmul.mubr.bf16.gmra.mxu0 %v9308
    %v12350 = vpop.f32.mrf.mxu0
    %v12351 = vadd.f32 %v12190, %v12350
    %v12352 = vpop.f32.mrf.mxu0
    %v12353 = vpop.f32.mrf.mxu0
    %v12354 = vadd.f32 %v12193, %v12353
    %v12355 = vpop.f32.mrf.mxu0
    %12356 = vmatprep.mubr.bf16.mxu0 %v9333
    %12357 = vmatmul.mubr.bf16.gmra.mxu0 %v9332
    %v12358 = vpop.f32.mrf.mxu0
    %v12359 = vadd.f32 %v12198, %v12358
    %v12360 = vpop.f32.mrf.mxu0
    %v12361 = vpop.f32.mrf.mxu0
    %v12362 = vadd.f32 %v12201, %v12361
    %v12363 = vpop.f32.mrf.mxu0
    %12364 = vmatprep.mubr.bf16.mxu0 %v9357
    %12365 = vmatmul.mubr.bf16.gmra.mxu0 %v9356
    %v12366 = vpop.f32.mrf.mxu0
    %v12367 = vadd.f32 %v12206, %v12366
    %v12368 = vpop.f32.mrf.mxu0
    %v12369 = vpop.f32.mrf.mxu0
    %v12370 = vadd.f32 %v12209, %v12369
    %v12371 = vpop.f32.mrf.mxu0
    %12372 = vmatprep.mubr.bf16.mxu0 %v9381
    %12373 = vmatmul.mubr.bf16.gmra.mxu0 %v9380
    %v12374 = vpop.f32.mrf.mxu0
    %v12375 = vadd.f32 %v12214, %v12374
    %v12376 = vpop.f32.mrf.mxu0
    %v12377 = vpop.f32.mrf.mxu0
    %v12378 = vadd.f32 %v12217, %v12377
    %v12379 = vpop.f32.mrf.mxu0
    %12380 = vmatprep.mubr.bf16.mxu0 %v9405
    %12381 = vmatmul.mubr.bf16.gmra.mxu0 %v9404
    %v12382 = vpop.f32.mrf.mxu0
    %v12383 = vadd.f32 %v12222, %v12382
    %v12384 = vpop.f32.mrf.mxu0
    %v12385 = vpop.f32.mrf.mxu0
    %v12386 = vadd.f32 %v12225, %v12385
    %v12387 = vpop.f32.mrf.mxu0
    %12388 = vmatprep.mubr.bf16.mxu0 %v9429
    %12389 = vmatmul.mubr.bf16.gmra.mxu0 %v9428
    %v12390 = vpop.f32.mrf.mxu0
    %v12391 = vadd.f32 %v12230, %v12390
    %v12392 = vpop.f32.mrf.mxu0
    %v12393 = vpop.f32.mrf.mxu0
    %v12394 = vadd.f32 %v12233, %v12393
    %v12395 = vpop.f32.mrf.mxu0
    %12396 = vmatprep.mubr.bf16.mxu0 %v9453
    %12397 = vmatmul.mubr.bf16.gmra.mxu0 %v9452
    %v12398 = vpop.f32.mrf.mxu0
    %v12399 = vadd.f32 %v12238, %v12398
    %v12400 = vpop.f32.mrf.mxu0
    %v12401 = vpop.f32.mrf.mxu0
    %v12402 = vadd.f32 %v12241, %v12401
    %v12403 = vpop.f32.mrf.mxu0
    %12404 = vmatprep.mubr.bf16.mxu0 %v9477
    %12405 = vmatmul.mubr.bf16.gmra.mxu0 %v9476
    %v12406 = vpop.f32.mrf.mxu0
    %v12407 = vadd.f32 %v12246, %v12406
    %v12408 = vpop.f32.mrf.mxu0
    %v12409 = vpop.f32.mrf.mxu0
    %v12410 = vadd.f32 %v12249, %v12409
    %v12411 = vpop.f32.mrf.mxu0
    %12412 = vmatprep.mubr.bf16.mxu0 %v9501
    %12413 = vmatmul.mubr.bf16.gmra.mxu0 %v9500
    %v12414 = vpop.f32.mrf.mxu0
    %v12415 = vadd.f32 %v12254, %v12414
    %v12416 = vpop.f32.mrf.mxu0
    %v12417 = vpop.f32.mrf.mxu0
    %v12418 = vadd.f32 %v12257, %v12417
    %v12419 = vpop.f32.mrf.mxu0
    %12420 = vmatprep.mubr.bf16.mxu0 %v9525
    %12421 = vmatmul.mubr.bf16.gmra.mxu0 %v9524
    %v12422 = vpop.f32.mrf.mxu0
    %v12423 = vadd.f32 %v12262, %v12422
    %v12424 = vpop.f32.mrf.mxu0
    %v12425 = vpop.f32.mrf.mxu0
    %v12426 = vadd.f32 %v12265, %v12425
    %v12427 = vpop.f32.mrf.mxu0
    %12428 = vmatprep.mubr.bf16.mxu0 %v9549
    %12429 = vmatmul.mubr.bf16.gmra.mxu0 %v9548
    %v12430 = vpop.f32.mrf.mxu0
    %v12431 = vadd.f32 %v12270, %v12430
    %v12432 = vpop.f32.mrf.mxu0
    %v12433 = vpop.f32.mrf.mxu0
    %v12434 = vadd.f32 %v12273, %v12433
    %v12435 = vpop.f32.mrf.mxu0
    %12436 = vmatprep.mubr.bf16.mxu0 %v9573
    %12437 = vmatmul.mubr.bf16.gmra.mxu0 %v9572
    %v12438 = vpop.f32.mrf.mxu0
    %v12439 = vadd.f32 %v12278, %v12438
    %v12440 = vpop.f32.mrf.mxu0
    %v12441 = vpop.f32.mrf.mxu0
    %v12442 = vadd.f32 %v12281, %v12441
    %v12443 = vpop.f32.mrf.mxu0
    %12444 = vmatprep.mubr.bf16.mxu0 %v9597
    %12445 = vmatmul.mubr.bf16.gmra.mxu0 %v9596
    %v12446 = vpop.f32.mrf.mxu0
    %v12447 = vadd.f32 %v12286, %v12446
    %v12448 = vpop.f32.mrf.mxu0
    %v12449 = vpop.f32.mrf.mxu0
    %v12450 = vadd.f32 %v12289, %v12449
    %v12451 = vpop.f32.mrf.mxu0
    %12452 = vmatprep.mubr.bf16.mxu0 %v9621
    %12453 = vmatmul.mubr.bf16.gmra.mxu0 %v9620
    %v12454 = vpop.f32.mrf.mxu0
    %v12455 = vadd.f32 %v12294, %v12454
    %v12456 = vpop.f32.mrf.mxu0
    %v12457 = vpop.f32.mrf.mxu0
    %v12458 = vadd.f32 %v12297, %v12457
    %v12459 = vpop.f32.mrf.mxu0
    %12460 = vdwg.mxu0
    %12461 = vmatprep.subr.bf16.mxu0 0
    %12462 = vmatpush1.bf16.msra.mxu0 %v10924
    %12463 = vmatprep.subr.bf16.mxu0 0
    %12464 = vmatpush1.bf16.msra.mxu0 %v10923
    %12465 = vmatprep.subr.bf16.mxu0 0
    %12466 = vmatpush1.bf16.msra.mxu0 %v10922
    %12467 = vmatprep.subr.bf16.mxu0 0
    %12468 = vmatpush1.bf16.msra.mxu0 %v10921
    %12469 = vmatprep.subr.bf16.mxu0 0
    %12470 = vmatpush1.bf16.msra.mxu0 %v10920
    %12471 = vmatprep.subr.bf16.mxu0 0
    %12472 = vmatpush1.bf16.msra.mxu0 %v10919
    %12473 = vmatprep.subr.bf16.mxu0 0
    %12474 = vmatpush1.bf16.msra.mxu0 %v10918
    %12475 = vmatprep.subr.bf16.mxu0 0
    %12476 = vmatpush1.bf16.msra.mxu0 %v10917
    %12477 = vmatprep.subr.bf16.mxu0 0
    %12478 = vmatpush2.bf16.msra.mxu0 %v10932
    %12479 = vmatprep.subr.bf16.mxu0 0
    %12480 = vmatpush2.bf16.msra.mxu0 %v10931
    %12481 = vmatprep.subr.bf16.mxu0 0
    %12482 = vmatpush2.bf16.msra.mxu0 %v10930
    %12483 = vmatprep.subr.bf16.mxu0 0
    %12484 = vmatpush2.bf16.msra.mxu0 %v10929
    %12485 = vmatprep.subr.bf16.mxu0 0
    %12486 = vmatpush2.bf16.msra.mxu0 %v10928
    %12487 = vmatprep.subr.bf16.mxu0 0
    %12488 = vmatpush2.bf16.msra.mxu0 %v10927
    %12489 = vmatprep.subr.bf16.mxu0 0
    %12490 = vmatpush2.bf16.msra.mxu0 %v10926
    %12491 = vmatprep.subr.bf16.mxu0 0
    %12492 = vmatpush2.bf16.msra.mxu0 %v10925
    %12493 = vmatprep.mubr.bf16.mxu0 %v9263
    %12494 = vmatmul.mubr.bf16.gmra.mxu0 %v9262
    %v12495 = vpop.f32.mrf.mxu0
    %v12496 = vadd.f32 %v12335, %v12495
    %v12497 = vpop.f32.mrf.mxu0
    %v12498 = vpop.f32.mrf.mxu0
    %v12499 = vadd.f32 %v12338, %v12498
    %v12500 = vpop.f32.mrf.mxu0
    %12501 = vmatprep.mubr.bf16.mxu0 %v9287
    %12502 = vmatmul.mubr.bf16.gmra.mxu0 %v9286
    %v12503 = vpop.f32.mrf.mxu0
    %v12504 = vadd.f32 %v12343, %v12503
    %v12505 = vpop.f32.mrf.mxu0
    %v12506 = vpop.f32.mrf.mxu0
    %v12507 = vadd.f32 %v12346, %v12506
    %v12508 = vpop.f32.mrf.mxu0
    %12509 = vmatprep.mubr.bf16.mxu0 %v9311
    %12510 = vmatmul.mubr.bf16.gmra.mxu0 %v9310
    %v12511 = vpop.f32.mrf.mxu0
    %v12512 = vadd.f32 %v12351, %v12511
    %v12513 = vpop.f32.mrf.mxu0
    %v12514 = vpop.f32.mrf.mxu0
    %v12515 = vadd.f32 %v12354, %v12514
    %v12516 = vpop.f32.mrf.mxu0
    %12517 = vmatprep.mubr.bf16.mxu0 %v9335
    %12518 = vmatmul.mubr.bf16.gmra.mxu0 %v9334
    %v12519 = vpop.f32.mrf.mxu0
    %v12520 = vadd.f32 %v12359, %v12519
    %v12521 = vpop.f32.mrf.mxu0
    %v12522 = vpop.f32.mrf.mxu0
    %v12523 = vadd.f32 %v12362, %v12522
    %v12524 = vpop.f32.mrf.mxu0
    %12525 = vmatprep.mubr.bf16.mxu0 %v9359
    %12526 = vmatmul.mubr.bf16.gmra.mxu0 %v9358
    %v12527 = vpop.f32.mrf.mxu0
    %v12528 = vadd.f32 %v12367, %v12527
    %v12529 = vpop.f32.mrf.mxu0
    %v12530 = vpop.f32.mrf.mxu0
    %v12531 = vadd.f32 %v12370, %v12530
    %v12532 = vpop.f32.mrf.mxu0
    %12533 = vmatprep.mubr.bf16.mxu0 %v9383
    %12534 = vmatmul.mubr.bf16.gmra.mxu0 %v9382
    %v12535 = vpop.f32.mrf.mxu0
    %v12536 = vadd.f32 %v12375, %v12535
    %v12537 = vpop.f32.mrf.mxu0
    %v12538 = vpop.f32.mrf.mxu0
    %v12539 = vadd.f32 %v12378, %v12538
    %v12540 = vpop.f32.mrf.mxu0
    %12541 = vmatprep.mubr.bf16.mxu0 %v9407
    %12542 = vmatmul.mubr.bf16.gmra.mxu0 %v9406
    %v12543 = vpop.f32.mrf.mxu0
    %v12544 = vadd.f32 %v12383, %v12543
    %v12545 = vpop.f32.mrf.mxu0
    %v12546 = vpop.f32.mrf.mxu0
    %v12547 = vadd.f32 %v12386, %v12546
    %v12548 = vpop.f32.mrf.mxu0
    %12549 = vmatprep.mubr.bf16.mxu0 %v9431
    %12550 = vmatmul.mubr.bf16.gmra.mxu0 %v9430
    %v12551 = vpop.f32.mrf.mxu0
    %v12552 = vadd.f32 %v12391, %v12551
    %v12553 = vpop.f32.mrf.mxu0
    %v12554 = vpop.f32.mrf.mxu0
    %v12555 = vadd.f32 %v12394, %v12554
    %v12556 = vpop.f32.mrf.mxu0
    %12557 = vmatprep.mubr.bf16.mxu0 %v9455
    %12558 = vmatmul.mubr.bf16.gmra.mxu0 %v9454
    %v12559 = vpop.f32.mrf.mxu0
    %v12560 = vadd.f32 %v12399, %v12559
    %v12561 = vpop.f32.mrf.mxu0
    %v12562 = vpop.f32.mrf.mxu0
    %v12563 = vadd.f32 %v12402, %v12562
    %v12564 = vpop.f32.mrf.mxu0
    %12565 = vmatprep.mubr.bf16.mxu0 %v9479
    %12566 = vmatmul.mubr.bf16.gmra.mxu0 %v9478
    %v12567 = vpop.f32.mrf.mxu0
    %v12568 = vadd.f32 %v12407, %v12567
    %v12569 = vpop.f32.mrf.mxu0
    %v12570 = vpop.f32.mrf.mxu0
    %v12571 = vadd.f32 %v12410, %v12570
    %v12572 = vpop.f32.mrf.mxu0
    %12573 = vmatprep.mubr.bf16.mxu0 %v9503
    %12574 = vmatmul.mubr.bf16.gmra.mxu0 %v9502
    %v12575 = vpop.f32.mrf.mxu0
    %v12576 = vadd.f32 %v12415, %v12575
    %v12577 = vpop.f32.mrf.mxu0
    %v12578 = vpop.f32.mrf.mxu0
    %v12579 = vadd.f32 %v12418, %v12578
    %v12580 = vpop.f32.mrf.mxu0
    %12581 = vmatprep.mubr.bf16.mxu0 %v9527
    %12582 = vmatmul.mubr.bf16.gmra.mxu0 %v9526
    %v12583 = vpop.f32.mrf.mxu0
    %v12584 = vadd.f32 %v12423, %v12583
    %v12585 = vpop.f32.mrf.mxu0
    %v12586 = vpop.f32.mrf.mxu0
    %v12587 = vadd.f32 %v12426, %v12586
    %v12588 = vpop.f32.mrf.mxu0
    %12589 = vmatprep.mubr.bf16.mxu0 %v9551
    %12590 = vmatmul.mubr.bf16.gmra.mxu0 %v9550
    %v12591 = vpop.f32.mrf.mxu0
    %v12592 = vadd.f32 %v12431, %v12591
    %v12593 = vpop.f32.mrf.mxu0
    %v12594 = vpop.f32.mrf.mxu0
    %v12595 = vadd.f32 %v12434, %v12594
    %v12596 = vpop.f32.mrf.mxu0
    %12597 = vmatprep.mubr.bf16.mxu0 %v9575
    %12598 = vmatmul.mubr.bf16.gmra.mxu0 %v9574
    %v12599 = vpop.f32.mrf.mxu0
    %v12600 = vadd.f32 %v12439, %v12599
    %v12601 = vpop.f32.mrf.mxu0
    %v12602 = vpop.f32.mrf.mxu0
    %v12603 = vadd.f32 %v12442, %v12602
    %v12604 = vpop.f32.mrf.mxu0
    %12605 = vmatprep.mubr.bf16.mxu0 %v9599
    %12606 = vmatmul.mubr.bf16.gmra.mxu0 %v9598
    %v12607 = vpop.f32.mrf.mxu0
    %v12608 = vadd.f32 %v12447, %v12607
    %v12609 = vpop.f32.mrf.mxu0
    %v12610 = vpop.f32.mrf.mxu0
    %v12611 = vadd.f32 %v12450, %v12610
    %v12612 = vpop.f32.mrf.mxu0
    %12613 = vmatprep.mubr.bf16.mxu0 %v9623
    %12614 = vmatmul.mubr.bf16.gmra.mxu0 %v9622
    %v12615 = vpop.f32.mrf.mxu0
    %v12616 = vadd.f32 %v12455, %v12615
    %v12617 = vpop.f32.mrf.mxu0
    %v12618 = vpop.f32.mrf.mxu0
    %v12619 = vadd.f32 %v12458, %v12618
    %v12620 = vpop.f32.mrf.mxu0
    %12621 = vdwg.mxu0
    %12622 = vmatprep.subr.bf16.mxu0 0
    %12623 = vmatpush1.bf16.msra.mxu0 %v10940
    %12624 = vmatprep.subr.bf16.mxu0 0
    %12625 = vmatpush1.bf16.msra.mxu0 %v10939
    %12626 = vmatprep.subr.bf16.mxu0 0
    %12627 = vmatpush1.bf16.msra.mxu0 %v10938
    %12628 = vmatprep.subr.bf16.mxu0 0
    %12629 = vmatpush1.bf16.msra.mxu0 %v10937
    %12630 = vmatprep.subr.bf16.mxu0 0
    %12631 = vmatpush1.bf16.msra.mxu0 %v10936
    %12632 = vmatprep.subr.bf16.mxu0 0
    %12633 = vmatpush1.bf16.msra.mxu0 %v10935
    %12634 = vmatprep.subr.bf16.mxu0 0
    %12635 = vmatpush1.bf16.msra.mxu0 %v10934
    %12636 = vmatprep.subr.bf16.mxu0 0
    %12637 = vmatpush1.bf16.msra.mxu0 %v10933
    %12638 = vmatprep.subr.bf16.mxu0 0
    %12639 = vmatpush2.bf16.msra.mxu0 %v10948
    %12640 = vmatprep.subr.bf16.mxu0 0
    %12641 = vmatpush2.bf16.msra.mxu0 %v10947
    %12642 = vmatprep.subr.bf16.mxu0 0
    %12643 = vmatpush2.bf16.msra.mxu0 %v10946
    %12644 = vmatprep.subr.bf16.mxu0 0
    %12645 = vmatpush2.bf16.msra.mxu0 %v10945
    %12646 = vmatprep.subr.bf16.mxu0 0
    %12647 = vmatpush2.bf16.msra.mxu0 %v10944
    %12648 = vmatprep.subr.bf16.mxu0 0
    %12649 = vmatpush2.bf16.msra.mxu0 %v10943
    %12650 = vmatprep.subr.bf16.mxu0 0
    %12651 = vmatpush2.bf16.msra.mxu0 %v10942
    %12652 = vmatprep.subr.bf16.mxu0 0
    %12653 = vmatpush2.bf16.msra.mxu0 %v10941
    %12654 = vmatprep.mubr.bf16.mxu0 %v9265
    %12655 = vmatmul.mubr.bf16.gmra.mxu0 %v9264
    %v12656 = vpop.f32.mrf.mxu0
    %v12657 = vadd.f32 %v12496, %v12656
    %v12658 = vpop.f32.mrf.mxu0
    %v12659 = vpop.f32.mrf.mxu0
    %v12660 = vadd.f32 %v12499, %v12659
    %v12661 = vpop.f32.mrf.mxu0
    %12662 = vmatprep.mubr.bf16.mxu0 %v9289
    %12663 = vmatmul.mubr.bf16.gmra.mxu0 %v9288
    %v12664 = vpop.f32.mrf.mxu0
    %v12665 = vadd.f32 %v12504, %v12664
    %v12666 = vpop.f32.mrf.mxu0
    %v12667 = vpop.f32.mrf.mxu0
    %v12668 = vadd.f32 %v12507, %v12667
    %v12669 = vpop.f32.mrf.mxu0
    %12670 = vmatprep.mubr.bf16.mxu0 %v9313
    %12671 = vmatmul.mubr.bf16.gmra.mxu0 %v9312
    %v12672 = vpop.f32.mrf.mxu0
    %v12673 = vadd.f32 %v12512, %v12672
    %v12674 = vpop.f32.mrf.mxu0
    %v12675 = vpop.f32.mrf.mxu0
    %v12676 = vadd.f32 %v12515, %v12675
    %v12677 = vpop.f32.mrf.mxu0
    %12678 = vmatprep.mubr.bf16.mxu0 %v9337
    %12679 = vmatmul.mubr.bf16.gmra.mxu0 %v9336
    %v12680 = vpop.f32.mrf.mxu0
    %v12681 = vadd.f32 %v12520, %v12680
    %v12682 = vpop.f32.mrf.mxu0
    %v12683 = vpop.f32.mrf.mxu0
    %v12684 = vadd.f32 %v12523, %v12683
    %v12685 = vpop.f32.mrf.mxu0
    %12686 = vmatprep.mubr.bf16.mxu0 %v9361
    %12687 = vmatmul.mubr.bf16.gmra.mxu0 %v9360
    %v12688 = vpop.f32.mrf.mxu0
    %v12689 = vadd.f32 %v12528, %v12688
    %v12690 = vpop.f32.mrf.mxu0
    %v12691 = vpop.f32.mrf.mxu0
    %v12692 = vadd.f32 %v12531, %v12691
    %v12693 = vpop.f32.mrf.mxu0
    %12694 = vmatprep.mubr.bf16.mxu0 %v9385
    %12695 = vmatmul.mubr.bf16.gmra.mxu0 %v9384
    %v12696 = vpop.f32.mrf.mxu0
    %v12697 = vadd.f32 %v12536, %v12696
    %v12698 = vpop.f32.mrf.mxu0
    %v12699 = vpop.f32.mrf.mxu0
    %v12700 = vadd.f32 %v12539, %v12699
    %v12701 = vpop.f32.mrf.mxu0
    %12702 = vmatprep.mubr.bf16.mxu0 %v9409
    %12703 = vmatmul.mubr.bf16.gmra.mxu0 %v9408
    %v12704 = vpop.f32.mrf.mxu0
    %v12705 = vadd.f32 %v12544, %v12704
    %v12706 = vpop.f32.mrf.mxu0
    %v12707 = vpop.f32.mrf.mxu0
    %v12708 = vadd.f32 %v12547, %v12707
    %v12709 = vpop.f32.mrf.mxu0
    %12710 = vmatprep.mubr.bf16.mxu0 %v9433
    %12711 = vmatmul.mubr.bf16.gmra.mxu0 %v9432
    %v12712 = vpop.f32.mrf.mxu0
    %v12713 = vadd.f32 %v12552, %v12712
    %v12714 = vpop.f32.mrf.mxu0
    %v12715 = vpop.f32.mrf.mxu0
    %v12716 = vadd.f32 %v12555, %v12715
    %v12717 = vpop.f32.mrf.mxu0
    %12718 = vmatprep.mubr.bf16.mxu0 %v9457
    %12719 = vmatmul.mubr.bf16.gmra.mxu0 %v9456
    %v12720 = vpop.f32.mrf.mxu0
    %v12721 = vadd.f32 %v12560, %v12720
    %v12722 = vpop.f32.mrf.mxu0
    %v12723 = vpop.f32.mrf.mxu0
    %v12724 = vadd.f32 %v12563, %v12723
    %v12725 = vpop.f32.mrf.mxu0
    %12726 = vmatprep.mubr.bf16.mxu0 %v9481
    %12727 = vmatmul.mubr.bf16.gmra.mxu0 %v9480
    %v12728 = vpop.f32.mrf.mxu0
    %v12729 = vadd.f32 %v12568, %v12728
    %v12730 = vpop.f32.mrf.mxu0
    %v12731 = vpop.f32.mrf.mxu0
    %v12732 = vadd.f32 %v12571, %v12731
    %v12733 = vpop.f32.mrf.mxu0
    %12734 = vmatprep.mubr.bf16.mxu0 %v9505
    %12735 = vmatmul.mubr.bf16.gmra.mxu0 %v9504
    %v12736 = vpop.f32.mrf.mxu0
    %v12737 = vadd.f32 %v12576, %v12736
    %v12738 = vpop.f32.mrf.mxu0
    %v12739 = vpop.f32.mrf.mxu0
    %v12740 = vadd.f32 %v12579, %v12739
    %v12741 = vpop.f32.mrf.mxu0
    %12742 = vmatprep.mubr.bf16.mxu0 %v9529
    %12743 = vmatmul.mubr.bf16.gmra.mxu0 %v9528
    %v12744 = vpop.f32.mrf.mxu0
    %v12745 = vadd.f32 %v12584, %v12744
    %v12746 = vpop.f32.mrf.mxu0
    %v12747 = vpop.f32.mrf.mxu0
    %v12748 = vadd.f32 %v12587, %v12747
    %v12749 = vpop.f32.mrf.mxu0
    %12750 = vmatprep.mubr.bf16.mxu0 %v9553
    %12751 = vmatmul.mubr.bf16.gmra.mxu0 %v9552
    %v12752 = vpop.f32.mrf.mxu0
    %v12753 = vadd.f32 %v12592, %v12752
    %v12754 = vpop.f32.mrf.mxu0
    %v12755 = vpop.f32.mrf.mxu0
    %v12756 = vadd.f32 %v12595, %v12755
    %v12757 = vpop.f32.mrf.mxu0
    %12758 = vmatprep.mubr.bf16.mxu0 %v9577
    %12759 = vmatmul.mubr.bf16.gmra.mxu0 %v9576
    %v12760 = vpop.f32.mrf.mxu0
    %v12761 = vadd.f32 %v12600, %v12760
    %v12762 = vpop.f32.mrf.mxu0
    %v12763 = vpop.f32.mrf.mxu0
    %v12764 = vadd.f32 %v12603, %v12763
    %v12765 = vpop.f32.mrf.mxu0
    %12766 = vmatprep.mubr.bf16.mxu0 %v9601
    %12767 = vmatmul.mubr.bf16.gmra.mxu0 %v9600
    %v12768 = vpop.f32.mrf.mxu0
    %v12769 = vadd.f32 %v12608, %v12768
    %v12770 = vpop.f32.mrf.mxu0
    %v12771 = vpop.f32.mrf.mxu0
    %v12772 = vadd.f32 %v12611, %v12771
    %v12773 = vpop.f32.mrf.mxu0
    %12774 = vmatprep.mubr.bf16.mxu0 %v9625
    %12775 = vmatmul.mubr.bf16.gmra.mxu0 %v9624
    %v12776 = vpop.f32.mrf.mxu0
    %v12777 = vadd.f32 %v12616, %v12776
    %v12778 = vpop.f32.mrf.mxu0
    %v12779 = vpop.f32.mrf.mxu0
    %v12780 = vadd.f32 %v12619, %v12779
    %v12781 = vpop.f32.mrf.mxu0
    %12782 = vdwg.mxu0
    %12783 = vmatprep.subr.bf16.mxu0 0
    %12784 = vmatpush1.bf16.msra.mxu0 %v10956
    %12785 = vmatprep.subr.bf16.mxu0 0
    %12786 = vmatpush1.bf16.msra.mxu0 %v10955
    %12787 = vmatprep.subr.bf16.mxu0 0
    %12788 = vmatpush1.bf16.msra.mxu0 %v10954
    %12789 = vmatprep.subr.bf16.mxu0 0
    %12790 = vmatpush1.bf16.msra.mxu0 %v10953
    %12791 = vmatprep.subr.bf16.mxu0 0
    %12792 = vmatpush1.bf16.msra.mxu0 %v10952
    %12793 = vmatprep.subr.bf16.mxu0 0
    %12794 = vmatpush1.bf16.msra.mxu0 %v10951
    %12795 = vmatprep.subr.bf16.mxu0 0
    %12796 = vmatpush1.bf16.msra.mxu0 %v10950
    %12797 = vmatprep.subr.bf16.mxu0 0
    %12798 = vmatpush1.bf16.msra.mxu0 %v10949
    %12799 = vmatprep.subr.bf16.mxu0 0
    %12800 = vmatpush2.bf16.msra.mxu0 %v10964
    %12801 = vmatprep.subr.bf16.mxu0 0
    %12802 = vmatpush2.bf16.msra.mxu0 %v10963
    %12803 = vmatprep.subr.bf16.mxu0 0
    %12804 = vmatpush2.bf16.msra.mxu0 %v10962
    %12805 = vmatprep.subr.bf16.mxu0 0
    %12806 = vmatpush2.bf16.msra.mxu0 %v10961
    %12807 = vmatprep.subr.bf16.mxu0 0
    %12808 = vmatpush2.bf16.msra.mxu0 %v10960
    %12809 = vmatprep.subr.bf16.mxu0 0
    %12810 = vmatpush2.bf16.msra.mxu0 %v10959
    %12811 = vmatprep.subr.bf16.mxu0 0
    %12812 = vmatpush2.bf16.msra.mxu0 %v10958
    %12813 = vmatprep.subr.bf16.mxu0 0
    %12814 = vmatpush2.bf16.msra.mxu0 %v10957
    %12815 = vmatprep.mubr.bf16.mxu0 %v9267
    %12816 = vmatmul.mubr.bf16.gmra.mxu0 %v9266
    %v12817 = vpop.f32.mrf.mxu0
    %v12818 = vadd.f32 %v12657, %v12817
    %v12819 = vpop.f32.mrf.mxu0
    %v12820 = vpop.f32.mrf.mxu0
    %v12821 = vadd.f32 %v12660, %v12820
    %v12822 = vpop.f32.mrf.mxu0
    %12823 = vmatprep.mubr.bf16.mxu0 %v9291
    %12824 = vmatmul.mubr.bf16.gmra.mxu0 %v9290
    %v12825 = vpop.f32.mrf.mxu0
    %v12826 = vadd.f32 %v12665, %v12825
    %v12827 = vpop.f32.mrf.mxu0
    %v12828 = vpop.f32.mrf.mxu0
    %v12829 = vadd.f32 %v12668, %v12828
    %v12830 = vpop.f32.mrf.mxu0
    %12831 = vmatprep.mubr.bf16.mxu0 %v9315
    %12832 = vmatmul.mubr.bf16.gmra.mxu0 %v9314
    %v12833 = vpop.f32.mrf.mxu0
    %v12834 = vadd.f32 %v12673, %v12833
    %v12835 = vpop.f32.mrf.mxu0
    %v12836 = vpop.f32.mrf.mxu0
    %v12837 = vadd.f32 %v12676, %v12836
    %v12838 = vpop.f32.mrf.mxu0
    %12839 = vmatprep.mubr.bf16.mxu0 %v9339
    %12840 = vmatmul.mubr.bf16.gmra.mxu0 %v9338
    %v12841 = vpop.f32.mrf.mxu0
    %v12842 = vadd.f32 %v12681, %v12841
    %v12843 = vpop.f32.mrf.mxu0
    %v12844 = vpop.f32.mrf.mxu0
    %v12845 = vadd.f32 %v12684, %v12844
    %v12846 = vpop.f32.mrf.mxu0
    %12847 = vmatprep.mubr.bf16.mxu0 %v9363
    %12848 = vmatmul.mubr.bf16.gmra.mxu0 %v9362
    %v12849 = vpop.f32.mrf.mxu0
    %v12850 = vadd.f32 %v12689, %v12849
    %v12851 = vpop.f32.mrf.mxu0
    %v12852 = vpop.f32.mrf.mxu0
    %v12853 = vadd.f32 %v12692, %v12852
    %v12854 = vpop.f32.mrf.mxu0
    %12855 = vmatprep.mubr.bf16.mxu0 %v9387
    %12856 = vmatmul.mubr.bf16.gmra.mxu0 %v9386
    %v12857 = vpop.f32.mrf.mxu0
    %v12858 = vadd.f32 %v12697, %v12857
    %v12859 = vpop.f32.mrf.mxu0
    %v12860 = vpop.f32.mrf.mxu0
    %v12861 = vadd.f32 %v12700, %v12860
    %v12862 = vpop.f32.mrf.mxu0
    %12863 = vmatprep.mubr.bf16.mxu0 %v9411
    %12864 = vmatmul.mubr.bf16.gmra.mxu0 %v9410
    %v12865 = vpop.f32.mrf.mxu0
    %v12866 = vadd.f32 %v12705, %v12865
    %v12867 = vpop.f32.mrf.mxu0
    %v12868 = vpop.f32.mrf.mxu0
    %v12869 = vadd.f32 %v12708, %v12868
    %v12870 = vpop.f32.mrf.mxu0
    %12871 = vmatprep.mubr.bf16.mxu0 %v9435
    %12872 = vmatmul.mubr.bf16.gmra.mxu0 %v9434
    %v12873 = vpop.f32.mrf.mxu0
    %v12874 = vadd.f32 %v12713, %v12873
    %v12875 = vpop.f32.mrf.mxu0
    %v12876 = vpop.f32.mrf.mxu0
    %v12877 = vadd.f32 %v12716, %v12876
    %v12878 = vpop.f32.mrf.mxu0
    %12879 = vmatprep.mubr.bf16.mxu0 %v9459
    %12880 = vmatmul.mubr.bf16.gmra.mxu0 %v9458
    %v12881 = vpop.f32.mrf.mxu0
    %v12882 = vadd.f32 %v12721, %v12881
    %v12883 = vpop.f32.mrf.mxu0
    %v12884 = vpop.f32.mrf.mxu0
    %v12885 = vadd.f32 %v12724, %v12884
    %v12886 = vpop.f32.mrf.mxu0
    %12887 = vmatprep.mubr.bf16.mxu0 %v9483
    %12888 = vmatmul.mubr.bf16.gmra.mxu0 %v9482
    %v12889 = vpop.f32.mrf.mxu0
    %v12890 = vadd.f32 %v12729, %v12889
    %v12891 = vpop.f32.mrf.mxu0
    %v12892 = vpop.f32.mrf.mxu0
    %v12893 = vadd.f32 %v12732, %v12892
    %v12894 = vpop.f32.mrf.mxu0
    %12895 = vmatprep.mubr.bf16.mxu0 %v9507
    %12896 = vmatmul.mubr.bf16.gmra.mxu0 %v9506
    %v12897 = vpop.f32.mrf.mxu0
    %v12898 = vadd.f32 %v12737, %v12897
    %v12899 = vpop.f32.mrf.mxu0
    %v12900 = vpop.f32.mrf.mxu0
    %v12901 = vadd.f32 %v12740, %v12900
    %v12902 = vpop.f32.mrf.mxu0
    %12903 = vmatprep.mubr.bf16.mxu0 %v9531
    %12904 = vmatmul.mubr.bf16.gmra.mxu0 %v9530
    %v12905 = vpop.f32.mrf.mxu0
    %v12906 = vadd.f32 %v12745, %v12905
    %v12907 = vpop.f32.mrf.mxu0
    %v12908 = vpop.f32.mrf.mxu0
    %v12909 = vadd.f32 %v12748, %v12908
    %v12910 = vpop.f32.mrf.mxu0
    %12911 = vmatprep.mubr.bf16.mxu0 %v9555
    %12912 = vmatmul.mubr.bf16.gmra.mxu0 %v9554
    %v12913 = vpop.f32.mrf.mxu0
    %v12914 = vadd.f32 %v12753, %v12913
    %v12915 = vpop.f32.mrf.mxu0
    %v12916 = vpop.f32.mrf.mxu0
    %v12917 = vadd.f32 %v12756, %v12916
    %v12918 = vpop.f32.mrf.mxu0
    %12919 = vmatprep.mubr.bf16.mxu0 %v9579
    %12920 = vmatmul.mubr.bf16.gmra.mxu0 %v9578
    %v12921 = vpop.f32.mrf.mxu0
    %v12922 = vadd.f32 %v12761, %v12921
    %v12923 = vpop.f32.mrf.mxu0
    %v12924 = vpop.f32.mrf.mxu0
    %v12925 = vadd.f32 %v12764, %v12924
    %v12926 = vpop.f32.mrf.mxu0
    %12927 = vmatprep.mubr.bf16.mxu0 %v9603
    %12928 = vmatmul.mubr.bf16.gmra.mxu0 %v9602
    %v12929 = vpop.f32.mrf.mxu0
    %v12930 = vadd.f32 %v12769, %v12929
    %v12931 = vpop.f32.mrf.mxu0
    %v12932 = vpop.f32.mrf.mxu0
    %v12933 = vadd.f32 %v12772, %v12932
    %v12934 = vpop.f32.mrf.mxu0
    %12935 = vmatprep.mubr.bf16.mxu0 %v9627
    %12936 = vmatmul.mubr.bf16.gmra.mxu0 %v9626
    %v12937 = vpop.f32.mrf.mxu0
    %v12938 = vadd.f32 %v12777, %v12937
    %v12939 = vpop.f32.mrf.mxu0
    %v12940 = vpop.f32.mrf.mxu0
    %v12941 = vadd.f32 %v12780, %v12940
    %v12942 = vpop.f32.mrf.mxu0
    %12943 = vdwg.mxu0
    %12944 = vmatprep.subr.bf16.mxu0 0
    %12945 = vmatpush1.bf16.msra.mxu0 %v10972
    %12946 = vmatprep.subr.bf16.mxu0 0
    %12947 = vmatpush1.bf16.msra.mxu0 %v10971
    %12948 = vmatprep.subr.bf16.mxu0 0
    %12949 = vmatpush1.bf16.msra.mxu0 %v10970
    %12950 = vmatprep.subr.bf16.mxu0 0
    %12951 = vmatpush1.bf16.msra.mxu0 %v10969
    %12952 = vmatprep.subr.bf16.mxu0 0
    %12953 = vmatpush1.bf16.msra.mxu0 %v10968
    %12954 = vmatprep.subr.bf16.mxu0 0
    %12955 = vmatpush1.bf16.msra.mxu0 %v10967
    %12956 = vmatprep.subr.bf16.mxu0 0
    %12957 = vmatpush1.bf16.msra.mxu0 %v10966
    %12958 = vmatprep.subr.bf16.mxu0 0
    %12959 = vmatpush1.bf16.msra.mxu0 %v10965
    %12960 = vmatprep.subr.bf16.mxu0 0
    %12961 = vmatpush2.bf16.msra.mxu0 %v10980
    %12962 = vmatprep.subr.bf16.mxu0 0
    %12963 = vmatpush2.bf16.msra.mxu0 %v10979
    %12964 = vmatprep.subr.bf16.mxu0 0
    %12965 = vmatpush2.bf16.msra.mxu0 %v10978
    %12966 = vmatprep.subr.bf16.mxu0 0
    %12967 = vmatpush2.bf16.msra.mxu0 %v10977
    %12968 = vmatprep.subr.bf16.mxu0 0
    %12969 = vmatpush2.bf16.msra.mxu0 %v10976
    %12970 = vmatprep.subr.bf16.mxu0 0
    %12971 = vmatpush2.bf16.msra.mxu0 %v10975
    %12972 = vmatprep.subr.bf16.mxu0 0
    %12973 = vmatpush2.bf16.msra.mxu0 %v10974
    %12974 = vmatprep.subr.bf16.mxu0 0
    %12975 = vmatpush2.bf16.msra.mxu0 %v10973
    %12976 = vmatprep.mubr.bf16.mxu0 %v9269
    %12977 = vmatmul.mubr.bf16.gmra.mxu0 %v9268
    %v12978 = vpop.f32.mrf.mxu0
    %v12979 = vadd.f32 %v12818, %v12978
    %v12980 = vpop.f32.mrf.mxu0
    %v12981 = vpop.f32.mrf.mxu0
    %v12982 = vadd.f32 %v12821, %v12981
    %v12983 = vpop.f32.mrf.mxu0
    %12984 = vmatprep.mubr.bf16.mxu0 %v9293
    %12985 = vmatmul.mubr.bf16.gmra.mxu0 %v9292
    %v12986 = vpop.f32.mrf.mxu0
    %v12987 = vadd.f32 %v12826, %v12986
    %v12988 = vpop.f32.mrf.mxu0
    %v12989 = vpop.f32.mrf.mxu0
    %v12990 = vadd.f32 %v12829, %v12989
    %v12991 = vpop.f32.mrf.mxu0
    %12992 = vmatprep.mubr.bf16.mxu0 %v9317
    %12993 = vmatmul.mubr.bf16.gmra.mxu0 %v9316
    %v12994 = vpop.f32.mrf.mxu0
    %v12995 = vadd.f32 %v12834, %v12994
    %v12996 = vpop.f32.mrf.mxu0
    %v12997 = vpop.f32.mrf.mxu0
    %v12998 = vadd.f32 %v12837, %v12997
    %v12999 = vpop.f32.mrf.mxu0
    %13000 = vmatprep.mubr.bf16.mxu0 %v9341
    %13001 = vmatmul.mubr.bf16.gmra.mxu0 %v9340
    %v13002 = vpop.f32.mrf.mxu0
    %v13003 = vadd.f32 %v12842, %v13002
    %v13004 = vpop.f32.mrf.mxu0
    %v13005 = vpop.f32.mrf.mxu0
    %v13006 = vadd.f32 %v12845, %v13005
    %v13007 = vpop.f32.mrf.mxu0
    %13008 = vmatprep.mubr.bf16.mxu0 %v9365
    %13009 = vmatmul.mubr.bf16.gmra.mxu0 %v9364
    %v13010 = vpop.f32.mrf.mxu0
    %v13011 = vadd.f32 %v12850, %v13010
    %v13012 = vpop.f32.mrf.mxu0
    %v13013 = vpop.f32.mrf.mxu0
    %v13014 = vadd.f32 %v12853, %v13013
    %v13015 = vpop.f32.mrf.mxu0
    %13016 = vmatprep.mubr.bf16.mxu0 %v9389
    %13017 = vmatmul.mubr.bf16.gmra.mxu0 %v9388
    %v13018 = vpop.f32.mrf.mxu0
    %v13019 = vadd.f32 %v12858, %v13018
    %v13020 = vpop.f32.mrf.mxu0
    %v13021 = vpop.f32.mrf.mxu0
    %v13022 = vadd.f32 %v12861, %v13021
    %v13023 = vpop.f32.mrf.mxu0
    %13024 = vmatprep.mubr.bf16.mxu0 %v9413
    %13025 = vmatmul.mubr.bf16.gmra.mxu0 %v9412
    %v13026 = vpop.f32.mrf.mxu0
    %v13027 = vadd.f32 %v12866, %v13026
    %v13028 = vpop.f32.mrf.mxu0
    %v13029 = vpop.f32.mrf.mxu0
    %v13030 = vadd.f32 %v12869, %v13029
    %v13031 = vpop.f32.mrf.mxu0
    %13032 = vmatprep.mubr.bf16.mxu0 %v9437
    %13033 = vmatmul.mubr.bf16.gmra.mxu0 %v9436
    %v13034 = vpop.f32.mrf.mxu0
    %v13035 = vadd.f32 %v12874, %v13034
    %v13036 = vpop.f32.mrf.mxu0
    %v13037 = vpop.f32.mrf.mxu0
    %v13038 = vadd.f32 %v12877, %v13037
    %v13039 = vpop.f32.mrf.mxu0
    %13040 = vmatprep.mubr.bf16.mxu0 %v9461
    %13041 = vmatmul.mubr.bf16.gmra.mxu0 %v9460
    %v13042 = vpop.f32.mrf.mxu0
    %v13043 = vadd.f32 %v12882, %v13042
    %v13044 = vpop.f32.mrf.mxu0
    %v13045 = vpop.f32.mrf.mxu0
    %v13046 = vadd.f32 %v12885, %v13045
    %v13047 = vpop.f32.mrf.mxu0
    %13048 = vmatprep.mubr.bf16.mxu0 %v9485
    %13049 = vmatmul.mubr.bf16.gmra.mxu0 %v9484
    %v13050 = vpop.f32.mrf.mxu0
    %v13051 = vadd.f32 %v12890, %v13050
    %v13052 = vpop.f32.mrf.mxu0
    %v13053 = vpop.f32.mrf.mxu0
    %v13054 = vadd.f32 %v12893, %v13053
    %v13055 = vpop.f32.mrf.mxu0
    %13056 = vmatprep.mubr.bf16.mxu0 %v9509
    %13057 = vmatmul.mubr.bf16.gmra.mxu0 %v9508
    %v13058 = vpop.f32.mrf.mxu0
    %v13059 = vadd.f32 %v12898, %v13058
    %v13060 = vpop.f32.mrf.mxu0
    %v13061 = vpop.f32.mrf.mxu0
    %v13062 = vadd.f32 %v12901, %v13061
    %v13063 = vpop.f32.mrf.mxu0
    %13064 = vmatprep.mubr.bf16.mxu0 %v9533
    %13065 = vmatmul.mubr.bf16.gmra.mxu0 %v9532
    %v13066 = vpop.f32.mrf.mxu0
    %v13067 = vadd.f32 %v12906, %v13066
    %v13068 = vpop.f32.mrf.mxu0
    %v13069 = vpop.f32.mrf.mxu0
    %v13070 = vadd.f32 %v12909, %v13069
    %v13071 = vpop.f32.mrf.mxu0
    %13072 = vmatprep.mubr.bf16.mxu0 %v9557
    %13073 = vmatmul.mubr.bf16.gmra.mxu0 %v9556
    %v13074 = vpop.f32.mrf.mxu0
    %v13075 = vadd.f32 %v12914, %v13074
    %v13076 = vpop.f32.mrf.mxu0
    %v13077 = vpop.f32.mrf.mxu0
    %v13078 = vadd.f32 %v12917, %v13077
    %v13079 = vpop.f32.mrf.mxu0
    %13080 = vmatprep.mubr.bf16.mxu0 %v9581
    %13081 = vmatmul.mubr.bf16.gmra.mxu0 %v9580
    %v13082 = vpop.f32.mrf.mxu0
    %v13083 = vadd.f32 %v12922, %v13082
    %v13084 = vpop.f32.mrf.mxu0
    %v13085 = vpop.f32.mrf.mxu0
    %v13086 = vadd.f32 %v12925, %v13085
    %v13087 = vpop.f32.mrf.mxu0
    %13088 = vmatprep.mubr.bf16.mxu0 %v9605
    %13089 = vmatmul.mubr.bf16.gmra.mxu0 %v9604
    %v13090 = vpop.f32.mrf.mxu0
    %v13091 = vadd.f32 %v12930, %v13090
    %v13092 = vpop.f32.mrf.mxu0
    %v13093 = vpop.f32.mrf.mxu0
    %v13094 = vadd.f32 %v12933, %v13093
    %v13095 = vpop.f32.mrf.mxu0
    %13096 = vmatprep.mubr.bf16.mxu0 %v9629
    %13097 = vmatmul.mubr.bf16.gmra.mxu0 %v9628
    %v13098 = vpop.f32.mrf.mxu0
    %v13099 = vadd.f32 %v12938, %v13098
    %v13100 = vpop.f32.mrf.mxu0
    %v13101 = vpop.f32.mrf.mxu0
    %v13102 = vadd.f32 %v12941, %v13101
    %v13103 = vpop.f32.mrf.mxu0
    %13104 = vdwg.mxu0
    %v13105 = vmax.f32 %v12979, 0.0
    %v13106 = vmax.f32 %v12982, 0.0
    %v13107 = vmax.f32 %v12987, 0.0
    %v13108 = vmax.f32 %v12990, 0.0
    %v13109 = vmax.f32 %v12995, 0.0
    %v13110 = vmax.f32 %v12998, 0.0
    %v13111 = vmax.f32 %v13003, 0.0
    %v13112 = vmax.f32 %v13006, 0.0
    %v13113 = vmax.f32 %v13011, 0.0
    %v13114 = vmax.f32 %v13014, 0.0
    %v13115 = vmax.f32 %v13019, 0.0
    %v13116 = vmax.f32 %v13022, 0.0
    %v13117 = vmax.f32 %v13027, 0.0
    %v13118 = vmax.f32 %v13030, 0.0
    %v13119 = vmax.f32 %v13035, 0.0
    %v13120 = vmax.f32 %v13038, 0.0
    %v13121 = vmax.f32 %v13043, 0.0
    %v13122 = vmax.f32 %v13046, 0.0
    %v13123 = vmax.f32 %v13051, 0.0
    %v13124 = vmax.f32 %v13054, 0.0
    %v13125 = vmax.f32 %v13059, 0.0
    %v13126 = vmax.f32 %v13062, 0.0
    %v13127 = vmax.f32 %v13067, 0.0
    %v13128 = vmax.f32 %v13070, 0.0
    %v13129 = vmax.f32 %v13075, 0.0
    %v13130 = vmax.f32 %v13078, 0.0
    %v13131 = vmax.f32 %v13083, 0.0
    %v13132 = vmax.f32 %v13086, 0.0
    %v13133 = vmax.f32 %v13091, 0.0
    %v13134 = vmax.f32 %v13094, 0.0
    %v13135 = vmax.f32 %v13099, 0.0
    %v13136 = vmax.f32 %v13102, 0.0
    %13137 = vst [vmem:[#allocation5] sm:$0xff] %v13105
    %13138 = vst [vmem:[#allocation5 + $0x8] sm:$0xff] %v13106
    %13139 = vst [vmem:[#allocation5 + $0x10] sm:$0xff] %v13107
    %13140 = vst [vmem:[#allocation5 + $0x18] sm:$0xff] %v13108
    %13141 = vst [vmem:[#allocation5 + $0x20] sm:$0xff] %v13109
    %13142 = vst [vmem:[#allocation5 + $0x28] sm:$0xff] %v13110
    %13143 = vst [vmem:[#allocation5 + $0x30] sm:$0xff] %v13111
    %13144 = vst [vmem:[#allocation5 + $0x38] sm:$0xff] %v13112
    %13145 = vst [vmem:[#allocation5 + $0x40] sm:$0xff] %v13113
    %13146 = vst [vmem:[#allocation5 + $0x48] sm:$0xff] %v13114
    %13147 = vst [vmem:[#allocation5 + $0x50] sm:$0xff] %v13115
    %13148 = vst [vmem:[#allocation5 + $0x58] sm:$0xff] %v13116
    %13149 = vst [vmem:[#allocation5 + $0x60] sm:$0xff] %v13117
    %13150 = vst [vmem:[#allocation5 + $0x68] sm:$0xff] %v13118
    %13151 = vst [vmem:[#allocation5 + $0x70] sm:$0xff] %v13119
    %13152 = vst [vmem:[#allocation5 + $0x78] sm:$0xff] %v13120
    %13153 = vst [vmem:[#allocation5 + $0x80] sm:$0xff] %v13121
    %13154 = vst [vmem:[#allocation5 + $0x88] sm:$0xff] %v13122
    %13155 = vst [vmem:[#allocation5 + $0x90] sm:$0xff] %v13123
    %13156 = vst [vmem:[#allocation5 + $0x98] sm:$0xff] %v13124
    %13157 = vst [vmem:[#allocation5 + $0xa0] sm:$0xff] %v13125
    %13158 = vst [vmem:[#allocation5 + $0xa8] sm:$0xff] %v13126
    %13159 = vst [vmem:[#allocation5 + $0xb0] sm:$0xff] %v13127
    %13160 = vst [vmem:[#allocation5 + $0xb8] sm:$0xff] %v13128
    %13161 = vst [vmem:[#allocation5 + $0xc0] sm:$0xff] %v13129
    %13162 = vst [vmem:[#allocation5 + $0xc8] sm:$0xff] %v13130
    %13163 = vst [vmem:[#allocation5 + $0xd0] sm:$0xff] %v13131
    %13164 = vst [vmem:[#allocation5 + $0xd8] sm:$0xff] %v13132
    %13165 = vst [vmem:[#allocation5 + $0xe0] sm:$0xff] %v13133
    %13166 = vst [vmem:[#allocation5 + $0xe8] sm:$0xff] %v13134
    %13167 = vst [vmem:[#allocation5 + $0xf0] sm:$0xff] %v13135
    %13168 = vst [vmem:[#allocation5 + $0xf8] sm:$0xff] %v13136
    // Predicated region
    $region18: #{lazynet_forward.1} parent=1 // pred_check
      _
    $region19: #{lazynet_forward.1} parent=1 // pred_check_branch
      %13170 = sbr.rel (0) target = $region21
    $region20: #{lazynet_forward.1} parent=1 // pred_region
      %s13172 = ssub.s32 4096, 32
      %13173 = vsyncadd [#allocation4], %s13172
      %s13174 = sshll.u32 [#allocation5], 4
      %s13175 = int_to_ptr.vmem [resolvable:$true] %s13174
      %13180 = dma.vmem_to_hbm [thread:$0]  %s13175, 32, %s3, [#allocation4], 32, 32, 2
    $region21: #{lazynet_forward.1} parent=1 // pred_fallthru
      _
    // Predicated region
    $region22: #{lazynet_forward.1} parent=1 // pred_check
      _
    $region23: #{lazynet_forward.1} parent=1 // pred_check_branch
      %13182 = sbr.rel (0) target = $region25
    $region24: #{lazynet_forward.1} parent=1 // pred_region
      %13183 = dma.done [#allocation4], 4096
    $region25: #{lazynet_forward.1} parent=1 // pred_fallthru
      _
    %13184 = vsyncpa [#allocation3], 1
    %13185 = vsyncpa [#allocation4], 1

</llo_original>
